<compile_context>
chip_gen: v7x
topology: tpu7x:2x2x1
jax: 0.10.0
libtpu: 0.0.40
codegen_flags: <defaults>
</compile_context>

<pallas_src>
import jax
import jax.numpy as jnp
import numpy as np
from jax.experimental import pallas as pl
from jax.experimental.pallas import tpu as pltpu

EPS = 1e-5  # nn.InstanceNorm2d default eps, affine=False, biased variance


def _make_resblock_kernel(NB, H, W, C, Wpad):
    HW = H * W
    M = NB * HW

    def kernel(x_ref, w1_ref, w2_ref, out_ref, pad_ref):
        # Zero the padded scratch (border + alignment slack stay zero; the
        # interior is overwritten below).  Scratch is uninitialized VMEM, so
        # this must happen every invocation to stay correct under megacore
        # sharding of the grid.
        pad_ref[...] = jnp.zeros_like(pad_ref)

        x = x_ref[...]                                        # (NB,H,W,C) f32
        pad_ref[:, 1:H + 1, 1:W + 1, :] = x.astype(jnp.bfloat16)

        def conv(w_ref):
            p = pad_ref[...]                                  # (NB,H+2,Wpad,C) bf16
            taps = [p[:, dy:dy + H, dx:dx + W, :].reshape(M, C)
                    for dy in range(3) for dx in range(3)]
            patches = jnp.concatenate(taps, axis=-1)          # (M, 9*C) bf16
            return jnp.dot(patches, w_ref[...],
                           preferred_element_type=jnp.float32)  # (M, C) f32

        def inorm(acc):
            # per-sample, per-channel stats over spatial dims, one pass
            a = acc.reshape(NB, HW, C)
            s = jnp.sum(a, axis=1, keepdims=True)
            ss = jnp.sum(a * a, axis=1, keepdims=True)
            mean = s * (1.0 / HW)
            var = ss * (1.0 / HW) - mean * mean
            return (a - mean) * jax.lax.rsqrt(var + EPS)      # (NB, HW, C)

        # ---- conv1 -> instance norm 1 -> relu ----
        y = jnp.maximum(inorm(conv(w1_ref)), 0.0)

        # ---- refill padded scratch with the activation for conv2 ----
        pad_ref[:, 1:H + 1, 1:W + 1, :] = (
            y.astype(jnp.bfloat16).reshape(NB, H, W, C))

        # ---- conv2 -> instance norm 2 -> residual add ----
        y2 = inorm(conv(w2_ref))
        out_ref[...] = x + y2.reshape(NB, H, W, C)

    return kernel


def resblock_forward(x_nchw, w1, b1, w2, b2):
    """x_nchw: (N, C, H, W) f32. w1/w2: (9, C, C), b1/b2: (1, C). -> (N,C,H,W).

    b1/b2 are accepted for API parity but not used: a channel bias feeding an
    affine-free InstanceNorm is exactly cancelled by the mean subtraction.
    """
    del b1, b2
    N, C, H, W = x_nchw.shape
    x = jnp.transpose(x_nchw, (0, 2, 3, 1)).astype(jnp.float32)   # -> NHWC

    HW = H * W
    # Samples per grid step: aim for M = NB*HW >= 128 to fill the MXU rows.
    NB = max(1, min(N, -(-128 // HW)))
    if N % NB != 0:
        NB = N
    grid_n = N // NB

    # Pad the scratch width to a bf16-sublane-friendly multiple of 16.
    Wpad = ((W + 2 + 15) // 16) * 16

    # Weights flattened for im2col and cast to bf16 (MXU-native, halves DMA).
    w1b = w1.reshape(9 * C, C).astype(jnp.bfloat16)
    w2b = w2.reshape(9 * C, C).astype(jnp.bfloat16)

    out_nhwc = pl.pallas_call(
        _make_resblock_kernel(NB, H, W, C, Wpad),
        out_shape=jax.ShapeDtypeStruct((N, H, W, C), jnp.float32),
        grid_spec=pltpu.PrefetchScalarGridSpec(
            num_scalar_prefetch=0,
            grid=(grid_n,),
            in_specs=[
                pl.BlockSpec((NB, H, W, C), lambda b: (b, 0, 0, 0)),
                pl.BlockSpec((9 * C, C), lambda b: (0, 0)),
                pl.BlockSpec((9 * C, C), lambda b: (0, 0)),
            ],
            out_specs=pl.BlockSpec((NB, H, W, C), lambda b: (b, 0, 0, 0)),
            scratch_shapes=[pltpu.VMEM((NB, H + 2, Wpad, C), jnp.bfloat16)],
        ),
        compiler_params=pltpu.CompilerParams(
            dimension_semantics=("parallel",),
            vmem_limit_bytes=32 << 20,
        ),
    )(x, w1b, w2b)

    return jnp.transpose(out_nhwc, (0, 3, 1, 2))                  # back to NCHW


def resblock_reference(x_nchw, w1, b1, w2, b2):
    """Plain-JAX reference of the same forward (for sanity checking)."""
    x = jnp.transpose(x_nchw, (0, 2, 3, 1))

    def conv(v, w, b):
        wk = w.reshape(3, 3, v.shape[-1], -1)
        y = jax.lax.conv_general_dilated(
            v, wk, window_strides=(1, 1), padding=((1, 1), (1, 1)),
            dimension_numbers=("NHWC", "HWIO", "NHWC"),
            precision=jax.lax.Precision.HIGHEST)
        return y + b.reshape(1, 1, 1, -1)

    def inorm(v):
        m = jnp.mean(v, axis=(1, 2), keepdims=True)
        var = jnp.mean((v - m) ** 2, axis=(1, 2), keepdims=True)
        return (v - m) * jax.lax.rsqrt(var + EPS)

    y = jax.nn.relu(inorm(conv(x, w1, b1)))
    y = inorm(conv(y, w2, b2))
    return jnp.transpose(x + y, (0, 3, 1, 2))


if __name__ == "__main__":
    # Module fixes C=256; keep batch/spatial small.
    N, C, H, W = 2, 256, 8, 8

    key = jax.random.PRNGKey(0)
    kx, kw1, kb1, kw2, kb2 = jax.random.split(key, 5)
    x = jax.random.normal(kx, (N, C, H, W), jnp.float32)
    # Deterministic synthetic parameters (shapes from nn.Conv2d(256,256,3,1,1)).
    w1 = jax.random.normal(kw1, (9, C, C), jnp.float32) * 0.02
    b1 = jax.random.normal(kb1, (1, C), jnp.float32) * 0.02
    w2 = jax.random.normal(kw2, (9, C, C), jnp.float32) * 0.02
    b2 = jax.random.normal(kb2, (1, C), jnp.float32) * 0.02

    out = jax.block_until_ready(resblock_forward(x, w1, b1, w2, b2))
    ref = jax.block_until_ready(resblock_reference(x, w1, b1, w2, b2))

    assert out.shape == (N, C, H, W) and out.dtype == jnp.float32
    np.testing.assert_allclose(np.asarray(out), np.asarray(ref),
                               rtol=5e-2, atol=5e-2)
    print("KERNEL_OK")
</pallas_src>

<mosaic_0001>
module attributes {stable_mosaic.version = 11 : i64} {
  func.func @kernel(%arg0: i32, %arg1: memref<2x8x8x256xf32, #tpu.memory_space<vmem>>, %arg2: memref<2304x256xbf16, #tpu.memory_space<vmem>>, %arg3: memref<2304x256xbf16, #tpu.memory_space<vmem>>, %arg4: memref<2x8x8x256xf32, #tpu.memory_space<vmem>>, %arg5: memref<2x10x16x256xbf16, #tpu.memory_space<vmem>>) attributes {dimension_semantics = [#tpu.dimension_semantics<parallel>], iteration_bounds = array<i64: 1>, scalar_prefetch = 0 : i64, scratch_operands = 1 : i64, tpu.core_type = #tpu.core_type<tc>, window_params = [{transform_indices = @transform_0, window_bounds = array<i64: 2, 8, 8, 256>}, {pipeline_mode = #tpu.pipeline_mode<synchronous>, transform_indices = @transform_1, window_bounds = array<i64: 2304, 256>}, {pipeline_mode = #tpu.pipeline_mode<synchronous>, transform_indices = @transform_2, window_bounds = array<i64: 2304, 256>}, {transform_indices = @transform_3, window_bounds = array<i64: 2, 8, 8, 256>}]} {
    %cst = arith.constant 0.000000e+00 : bf16
    %0 = vector.broadcast %cst : bf16 to vector<2x10x16x256xbf16>
    %c0 = arith.constant 0 : index
    %c0_0 = arith.constant 0 : index
    %c0_1 = arith.constant 0 : index
    %c0_2 = arith.constant 0 : index
    %1 = vector.load %arg5[%c0, %c0_0, %c0_1, %c0_2] : memref<2x10x16x256xbf16, #tpu.memory_space<vmem>>, vector<2x10x16x256xbf16>
    tpu.vector_store %arg5[%c0, %c0_0, %c0_1, %c0_2], %0 {strides = array<i32>} : memref<2x10x16x256xbf16, #tpu.memory_space<vmem>>, vector<2x10x16x256xbf16>,
    %c0_3 = arith.constant 0 : index
    %c0_4 = arith.constant 0 : index
    %c0_5 = arith.constant 0 : index
    %c0_6 = arith.constant 0 : index
    %2 = vector.load %arg1[%c0_3, %c0_4, %c0_5, %c0_6] : memref<2x8x8x256xf32, #tpu.memory_space<vmem>>, vector<2x8x8x256xf32>
    %3 = arith.truncf %2 : vector<2x8x8x256xf32> to vector<2x8x8x256xbf16>
    %c0_7 = arith.constant 0 : index
    %c1 = arith.constant 1 : index
    %c1_8 = arith.constant 1 : index
    %c0_9 = arith.constant 0 : index
    %4 = vector.load %arg5[%c0_7, %c1, %c1_8, %c0_9] : memref<2x10x16x256xbf16, #tpu.memory_space<vmem>>, vector<2x8x8x256xbf16>
    tpu.vector_store %arg5[%c0_7, %c1, %c1_8, %c0_9], %3 {strides = array<i32>} : memref<2x10x16x256xbf16, #tpu.memory_space<vmem>>, vector<2x8x8x256xbf16>,
    %c0_10 = arith.constant 0 : index
    %c0_11 = arith.constant 0 : index
    %c0_12 = arith.constant 0 : index
    %c0_13 = arith.constant 0 : index
    %5 = vector.load %arg5[%c0_10, %c0_11, %c0_12, %c0_13] : memref<2x10x16x256xbf16, #tpu.memory_space<vmem>>, vector<2x10x16x256xbf16>
    %6 = vector.extract_strided_slice %5 {offsets = [0, 0, 0, 0], sizes = [2, 8, 8, 256], strides = [1, 1, 1, 1]} : vector<2x10x16x256xbf16> to vector<2x8x8x256xbf16>
    %7 = vector.shape_cast %6 : vector<2x8x8x256xbf16> to vector<128x256xbf16>
    %8 = vector.extract_strided_slice %5 {offsets = [0, 0, 1, 0], sizes = [2, 8, 8, 256], strides = [1, 1, 1, 1]} : vector<2x10x16x256xbf16> to vector<2x8x8x256xbf16>
    %9 = vector.shape_cast %8 : vector<2x8x8x256xbf16> to vector<128x256xbf16>
    %10 = vector.extract_strided_slice %5 {offsets = [0, 0, 2, 0], sizes = [2, 8, 8, 256], strides = [1, 1, 1, 1]} : vector<2x10x16x256xbf16> to vector<2x8x8x256xbf16>
    %11 = vector.shape_cast %10 : vector<2x8x8x256xbf16> to vector<128x256xbf16>
    %12 = vector.extract_strided_slice %5 {offsets = [0, 1, 0, 0], sizes = [2, 8, 8, 256], strides = [1, 1, 1, 1]} : vector<2x10x16x256xbf16> to vector<2x8x8x256xbf16>
    %13 = vector.shape_cast %12 : vector<2x8x8x256xbf16> to vector<128x256xbf16>
    %14 = vector.extract_strided_slice %5 {offsets = [0, 1, 1, 0], sizes = [2, 8, 8, 256], strides = [1, 1, 1, 1]} : vector<2x10x16x256xbf16> to vector<2x8x8x256xbf16>
    %15 = vector.shape_cast %14 : vector<2x8x8x256xbf16> to vector<128x256xbf16>
    %16 = vector.extract_strided_slice %5 {offsets = [0, 1, 2, 0], sizes = [2, 8, 8, 256], strides = [1, 1, 1, 1]} : vector<2x10x16x256xbf16> to vector<2x8x8x256xbf16>
    %17 = vector.shape_cast %16 : vector<2x8x8x256xbf16> to vector<128x256xbf16>
    %18 = vector.extract_strided_slice %5 {offsets = [0, 2, 0, 0], sizes = [2, 8, 8, 256], strides = [1, 1, 1, 1]} : vector<2x10x16x256xbf16> to vector<2x8x8x256xbf16>
    %19 = vector.shape_cast %18 : vector<2x8x8x256xbf16> to vector<128x256xbf16>
    %20 = vector.extract_strided_slice %5 {offsets = [0, 2, 1, 0], sizes = [2, 8, 8, 256], strides = [1, 1, 1, 1]} : vector<2x10x16x256xbf16> to vector<2x8x8x256xbf16>
    %21 = vector.shape_cast %20 : vector<2x8x8x256xbf16> to vector<128x256xbf16>
    %22 = vector.extract_strided_slice %5 {offsets = [0, 2, 2, 0], sizes = [2, 8, 8, 256], strides = [1, 1, 1, 1]} : vector<2x10x16x256xbf16> to vector<2x8x8x256xbf16>
    %23 = vector.shape_cast %22 : vector<2x8x8x256xbf16> to vector<128x256xbf16>
    %24 = tpu.concatenate %7, %9, %11, %13, %15, %17, %19, %21, %23 in 1 : vector<128x256xbf16>, vector<128x256xbf16>, vector<128x256xbf16>, vector<128x256xbf16>, vector<128x256xbf16>, vector<128x256xbf16>, vector<128x256xbf16>, vector<128x256xbf16>, vector<128x256xbf16> -> vector<128x2304xbf16>
    %c0_14 = arith.constant 0 : index
    %c0_15 = arith.constant 0 : index
    %25 = vector.load %arg2[%c0_14, %c0_15] : memref<2304x256xbf16, #tpu.memory_space<vmem>>, vector<2304x256xbf16>
    %cst_16 = arith.constant dense<0.000000e+00> : vector<128x256xf32>
    %26 = tpu.matmul %24, %25, %cst_16 {dimension_numbers = #tpu.dot_dimension_numbers<[1], [0], [0], [1], [0, 0, 1, 1], [], []>} : vector<128x2304xbf16>, vector<2304x256xbf16>, vector<128x256xf32> -> vector<128x256xf32>
    %27 = vector.shape_cast %26 : vector<128x256xf32> to vector<2x64x256xf32>
    %cst_17 = arith.constant dense<0.000000e+00> : vector<2x256xf32>
    %28 = vector.multi_reduction <add>, %27, %cst_17 [1] : vector<2x64x256xf32> to vector<2x256xf32>
    %29 = vector.shape_cast %28 : vector<2x256xf32> to vector<2x1x256xf32>
    %30 = arith.mulf %27, %27 : vector<2x64x256xf32>
    %cst_18 = arith.constant dense<0.000000e+00> : vector<2x256xf32>
    %31 = vector.multi_reduction <add>, %30, %cst_18 [1] : vector<2x64x256xf32> to vector<2x256xf32>
    %32 = vector.shape_cast %31 : vector<2x256xf32> to vector<2x1x256xf32>
    %cst_19 = arith.constant 1.562500e-02 : f32
    %33 = vector.broadcast %cst_19 : f32 to vector<2x1x256xf32>
    %34 = arith.mulf %29, %33 : vector<2x1x256xf32>
    %cst_20 = arith.constant 1.562500e-02 : f32
    %35 = vector.broadcast %cst_20 : f32 to vector<2x1x256xf32>
    %36 = arith.mulf %32, %35 : vector<2x1x256xf32>
    %37 = arith.mulf %34, %34 : vector<2x1x256xf32>
    %38 = arith.subf %36, %37 : vector<2x1x256xf32>
    %39 = vector.broadcast %34 : vector<2x1x256xf32> to vector<2x64x256xf32>
    %40 = arith.subf %27, %39 : vector<2x64x256xf32>
    %cst_21 = arith.constant 9.99999974E-6 : f32
    %41 = vector.broadcast %cst_21 : f32 to vector<2x1x256xf32>
    %42 = arith.addf %38, %41 : vector<2x1x256xf32>
    %43 = math.rsqrt %42 : vector<2x1x256xf32>
    %44 = vector.broadcast %43 : vector<2x1x256xf32> to vector<2x64x256xf32>
    %45 = arith.mulf %40, %44 : vector<2x64x256xf32>
    %cst_22 = arith.constant 0.000000e+00 : f32
    %46 = vector.broadcast %cst_22 : f32 to vector<2x64x256xf32>
    %47 = arith.maximumf %45, %46 : vector<2x64x256xf32>
    %48 = arith.truncf %47 : vector<2x64x256xf32> to vector<2x64x256xbf16>
    %49 = vector.shape_cast %48 : vector<2x64x256xbf16> to vector<2x8x8x256xbf16>
    %c0_23 = arith.constant 0 : index
    %c1_24 = arith.constant 1 : index
    %c1_25 = arith.constant 1 : index
    %c0_26 = arith.constant 0 : index
    %50 = vector.load %arg5[%c0_23, %c1_24, %c1_25, %c0_26] : memref<2x10x16x256xbf16, #tpu.memory_space<vmem>>, vector<2x8x8x256xbf16>
    tpu.vector_store %arg5[%c0_23, %c1_24, %c1_25, %c0_26], %49 {strides = array<i32>} : memref<2x10x16x256xbf16, #tpu.memory_space<vmem>>, vector<2x8x8x256xbf16>,
    %c0_27 = arith.constant 0 : index
    %c0_28 = arith.constant 0 : index
    %c0_29 = arith.constant 0 : index
    %c0_30 = arith.constant 0 : index
    %51 = vector.load %arg5[%c0_27, %c0_28, %c0_29, %c0_30] : memref<2x10x16x256xbf16, #tpu.memory_space<vmem>>, vector<2x10x16x256xbf16>
    %52 = vector.extract_strided_slice %51 {offsets = [0, 0, 0, 0], sizes = [2, 8, 8, 256], strides = [1, 1, 1, 1]} : vector<2x10x16x256xbf16> to vector<2x8x8x256xbf16>
    %53 = vector.shape_cast %52 : vector<2x8x8x256xbf16> to vector<128x256xbf16>
    %54 = vector.extract_strided_slice %51 {offsets = [0, 0, 1, 0], sizes = [2, 8, 8, 256], strides = [1, 1, 1, 1]} : vector<2x10x16x256xbf16> to vector<2x8x8x256xbf16>
    %55 = vector.shape_cast %54 : vector<2x8x8x256xbf16> to vector<128x256xbf16>
    %56 = vector.extract_strided_slice %51 {offsets = [0, 0, 2, 0], sizes = [2, 8, 8, 256], strides = [1, 1, 1, 1]} : vector<2x10x16x256xbf16> to vector<2x8x8x256xbf16>
    %57 = vector.shape_cast %56 : vector<2x8x8x256xbf16> to vector<128x256xbf16>
    %58 = vector.extract_strided_slice %51 {offsets = [0, 1, 0, 0], sizes = [2, 8, 8, 256], strides = [1, 1, 1, 1]} : vector<2x10x16x256xbf16> to vector<2x8x8x256xbf16>
    %59 = vector.shape_cast %58 : vector<2x8x8x256xbf16> to vector<128x256xbf16>
    %60 = vector.extract_strided_slice %51 {offsets = [0, 1, 1, 0], sizes = [2, 8, 8, 256], strides = [1, 1, 1, 1]} : vector<2x10x16x256xbf16> to vector<2x8x8x256xbf16>
    %61 = vector.shape_cast %60 : vector<2x8x8x256xbf16> to vector<128x256xbf16>
    %62 = vector.extract_strided_slice %51 {offsets = [0, 1, 2, 0], sizes = [2, 8, 8, 256], strides = [1, 1, 1, 1]} : vector<2x10x16x256xbf16> to vector<2x8x8x256xbf16>
    %63 = vector.shape_cast %62 : vector<2x8x8x256xbf16> to vector<128x256xbf16>
    %64 = vector.extract_strided_slice %51 {offsets = [0, 2, 0, 0], sizes = [2, 8, 8, 256], strides = [1, 1, 1, 1]} : vector<2x10x16x256xbf16> to vector<2x8x8x256xbf16>
    %65 = vector.shape_cast %64 : vector<2x8x8x256xbf16> to vector<128x256xbf16>
    %66 = vector.extract_strided_slice %51 {offsets = [0, 2, 1, 0], sizes = [2, 8, 8, 256], strides = [1, 1, 1, 1]} : vector<2x10x16x256xbf16> to vector<2x8x8x256xbf16>
    %67 = vector.shape_cast %66 : vector<2x8x8x256xbf16> to vector<128x256xbf16>
    %68 = vector.extract_strided_slice %51 {offsets = [0, 2, 2, 0], sizes = [2, 8, 8, 256], strides = [1, 1, 1, 1]} : vector<2x10x16x256xbf16> to vector<2x8x8x256xbf16>
    %69 = vector.shape_cast %68 : vector<2x8x8x256xbf16> to vector<128x256xbf16>
    %70 = tpu.concatenate %53, %55, %57, %59, %61, %63, %65, %67, %69 in 1 : vector<128x256xbf16>, vector<128x256xbf16>, vector<128x256xbf16>, vector<128x256xbf16>, vector<128x256xbf16>, vector<128x256xbf16>, vector<128x256xbf16>, vector<128x256xbf16>, vector<128x256xbf16> -> vector<128x2304xbf16>
    %c0_31 = arith.constant 0 : index
    %c0_32 = arith.constant 0 : index
    %71 = vector.load %arg3[%c0_31, %c0_32] : memref<2304x256xbf16, #tpu.memory_space<vmem>>, vector<2304x256xbf16>
    %cst_33 = arith.constant dense<0.000000e+00> : vector<128x256xf32>
    %72 = tpu.matmul %70, %71, %cst_33 {dimension_numbers = #tpu.dot_dimension_numbers<[1], [0], [0], [1], [0, 0, 1, 1], [], []>} : vector<128x2304xbf16>, vector<2304x256xbf16>, vector<128x256xf32> -> vector<128x256xf32>
    %73 = vector.shape_cast %72 : vector<128x256xf32> to vector<2x64x256xf32>
    %cst_34 = arith.constant dense<0.000000e+00> : vector<2x256xf32>
    %74 = vector.multi_reduction <add>, %73, %cst_34 [1] : vector<2x64x256xf32> to vector<2x256xf32>
    %75 = vector.shape_cast %74 : vector<2x256xf32> to vector<2x1x256xf32>
    %76 = arith.mulf %73, %73 : vector<2x64x256xf32>
    %cst_35 = arith.constant dense<0.000000e+00> : vector<2x256xf32>
    %77 = vector.multi_reduction <add>, %76, %cst_35 [1] : vector<2x64x256xf32> to vector<2x256xf32>
    %78 = vector.shape_cast %77 : vector<2x256xf32> to vector<2x1x256xf32>
    %cst_36 = arith.constant 1.562500e-02 : f32
    %79 = vector.broadcast %cst_36 : f32 to vector<2x1x256xf32>
    %80 = arith.mulf %75, %79 : vector<2x1x256xf32>
    %cst_37 = arith.constant 1.562500e-02 : f32
    %81 = vector.broadcast %cst_37 : f32 to vector<2x1x256xf32>
    %82 = arith.mulf %78, %81 : vector<2x1x256xf32>
    %83 = arith.mulf %80, %80 : vector<2x1x256xf32>
    %84 = arith.subf %82, %83 : vector<2x1x256xf32>
    %85 = vector.broadcast %80 : vector<2x1x256xf32> to vector<2x64x256xf32>
    %86 = arith.subf %73, %85 : vector<2x64x256xf32>
    %cst_38 = arith.constant 9.99999974E-6 : f32
    %87 = vector.broadcast %cst_38 : f32 to vector<2x1x256xf32>
    %88 = arith.addf %84, %87 : vector<2x1x256xf32>
    %89 = math.rsqrt %88 : vector<2x1x256xf32>
    %90 = vector.broadcast %89 : vector<2x1x256xf32> to vector<2x64x256xf32>
    %91 = arith.mulf %86, %90 : vector<2x64x256xf32>
    %92 = vector.shape_cast %91 : vector<2x64x256xf32> to vector<2x8x8x256xf32>
    %93 = arith.addf %2, %92 : vector<2x8x8x256xf32>
    %c0_39 = arith.constant 0 : index
    %c0_40 = arith.constant 0 : index
    %c0_41 = arith.constant 0 : index
    %c0_42 = arith.constant 0 : index
    %94 = vector.load %arg4[%c0_39, %c0_40, %c0_41, %c0_42] : memref<2x8x8x256xf32, #tpu.memory_space<vmem>>, vector<2x8x8x256xf32>
    tpu.vector_store %arg4[%c0_39, %c0_40, %c0_41, %c0_42], %93 {strides = array<i32>} : memref<2x8x8x256xf32, #tpu.memory_space<vmem>>, vector<2x8x8x256xf32>,
    return
  }
  func.func @transform_0(%arg0: i32) -> (i32, i32, i32, i32) {
    %c0_i32 = arith.constant 0 : i32
    %c0_i32_0 = arith.constant 0 : i32
    %c0_i32_1 = arith.constant 0 : i32
    %c0_i32_2 = arith.constant 0 : i32
    return %arg0, %c0_i32, %c0_i32_0, %c0_i32_1 : i32, i32, i32, i32
  }
  func.func @transform_1(%arg0: i32) -> (i32, i32) {
    %c0_i32 = arith.constant 0 : i32
    %c0_i32_0 = arith.constant 0 : i32
    %c0_i32_1 = arith.constant 0 : i32
    return %c0_i32, %c0_i32_0 : i32, i32
  }
  func.func @transform_2(%arg0: i32) -> (i32, i32) {
    %c0_i32 = arith.constant 0 : i32
    %c0_i32_0 = arith.constant 0 : i32
    %c0_i32_1 = arith.constant 0 : i32
    return %c0_i32, %c0_i32_0 : i32, i32
  }
  func.func @transform_3(%arg0: i32) -> (i32, i32, i32, i32) {
    %c0_i32 = arith.constant 0 : i32
    %c0_i32_0 = arith.constant 0 : i32
    %c0_i32_1 = arith.constant 0 : i32
    %c0_i32_2 = arith.constant 0 : i32
    return %arg0, %c0_i32, %c0_i32_0, %c0_i32_1 : i32, i32, i32, i32
  }
}

</mosaic_0001>

<llo_original>
// kernel: tpu_custom_call.1
$region0: #{tpu_custom_call.1}
  #allocation0 [shape = 'u32[]', space=smem, size = 0x4, offset = 0x4, fixed_abs, tag = 'smem constant byte address 0x4 - core index']
  #allocation1 [shape = 'u32[144,128]{1,0:T(1,128)}', space=vmem, size = 0x12000, scoped, tag = 'internal scratch']
  #allocation2 [shape = 'bf16[2,10,16,256]{3,2,1,0:T(16,128)(2,1)}', space=vmem, size = 0x28000, scoped, tag = 'scratch operand']
  %s0 = inlined_call_operand.hbm [shape: f32[2,8,8,256], index: 0, kind: input, shape index: {}]
  %s1 = inlined_call_operand.hbm [shape: bf16[2304,256], index: 1, kind: input, shape index: {}]
  %s2 = inlined_call_operand.hbm [shape: bf16[2304,256], index: 2, kind: input, shape index: {}]
  %s3 = inlined_call_operand.hbm [shape: f32[2,8,8,256], index: 3, kind: output, shape index: {}]
  %s4 = sld [smem:[#allocation0]]
  $region34: #{tpu_custom_call.1} parent=0
    _
  %s6 = ssub.s32 1, %s4
  %s7 = scalar_select 0, %s6, %s4
  $region1: #{tpu_custom_call.1} parent=0
    #allocation3 [shape = 'u8[131072]{0}', space=vmem, size = 0x20000, scoped, tag = 'input window, operand 0, single buffered']
    #allocation4 [shape = 's32[1]{0}', space=sflag, size = 0x4, scoped, tag = 'scoped memory for tpu_custom_call.1']
    #allocation5 [shape = 's32[1]{0}', space=sflag, size = 0x4, scoped, tag = 'scoped memory for tpu_custom_call.1']
    #allocation6 [shape = 'u8[1179648]{0}', space=vmem, size = 0x120000, scoped, tag = 'input window, operand 1, single buffered']
    #allocation7 [shape = 's32[1]{0}', space=sflag, size = 0x4, scoped, tag = 'scoped memory for tpu_custom_call.1']
    #allocation8 [shape = 'u8[1179648]{0}', space=vmem, size = 0x120000, scoped, tag = 'input window, operand 2, single buffered']
    #allocation9 [shape = 'u8[131072]{0}', space=vmem, size = 0x20000, scoped, tag = 'output window, operand 0, single buffered']
    %8 = vsyncpa [#allocation4], 0
    %9 = vsyncpa [#allocation7], 0
    %10 = vsyncpa [#allocation5], 0
    // Predicated region
    $region2: #{tpu_custom_call.1} parent=1 // pred_check
      _
    $region3: #{tpu_custom_call.1} parent=1 // pred_check_branch
      %12 = sbr.rel (0) target = $region5
    $region4: #{tpu_custom_call.1} parent=1 // pred_region
      %s14 = ssub.s32 4096, 4096
      %15 = vsyncadd [#allocation4], %s14
      %s16 = sshll.u32 [#allocation3], 4
      %s17 = int_to_ptr.vmem [resolvable:$true] %s16
      %22 = dma.hbm_to_vmem [thread:$0]  %s0, 4096, %s17, [#allocation4], 256, 256, 16
    $region5: #{tpu_custom_call.1} parent=1 // pred_fallthru
      _
    // Predicated region
    $region6: #{tpu_custom_call.1} parent=1 // pred_check
      _
    $region7: #{tpu_custom_call.1} parent=1 // pred_check_branch
      %24 = sbr.rel (0) target = $region9
    $region8: #{tpu_custom_call.1} parent=1 // pred_region
      %s26 = ssub.s32 36864, 36864
      %27 = vsyncadd [#allocation7], %s26
      %s28 = sshll.u32 [#allocation6], 4
      %s29 = int_to_ptr.vmem [resolvable:$true] %s28
      %34 = dma.hbm_to_vmem [thread:$0]  %s1, 36864, %s29, [#allocation7], 128, 128, 8
    $region9: #{tpu_custom_call.1} parent=1 // pred_fallthru
      _
    // Predicated region
    $region10: #{tpu_custom_call.1} parent=1 // pred_check
      _
    $region11: #{tpu_custom_call.1} parent=1 // pred_check_branch
      %36 = sbr.rel (0) target = $region13
    $region12: #{tpu_custom_call.1} parent=1 // pred_region
      %s38 = ssub.s32 36864, 36864
      %39 = vsyncadd [#allocation7], %s38
      %s40 = sshll.u32 [#allocation8], 4
      %s41 = int_to_ptr.vmem [resolvable:$true] %s40
      %46 = dma.hbm_to_vmem [thread:$0]  %s2, 36864, %s41, [#allocation7], 128, 128, 8
    $region13: #{tpu_custom_call.1} parent=1 // pred_fallthru
      _
    // Predicated region
    $region14: #{tpu_custom_call.1} parent=1 // pred_check
      _
    $region15: #{tpu_custom_call.1} parent=1 // pred_check_branch
      %48 = sbr.rel (0) target = $region17
    $region16: #{tpu_custom_call.1} parent=1 // pred_region
      %49 = dma.done [#allocation4], 4096
    $region17: #{tpu_custom_call.1} parent=1 // pred_fallthru
      _
    // Predicated region
    $region18: #{tpu_custom_call.1} parent=1 // pred_check
      _
    $region19: #{tpu_custom_call.1} parent=1 // pred_check_branch
      %51 = sbr.rel (0) target = $region21
    $region20: #{tpu_custom_call.1} parent=1 // pred_region
      %52 = dma.done [#allocation7], 36864
    $region21: #{tpu_custom_call.1} parent=1 // pred_fallthru
      _
    // Predicated region
    $region22: #{tpu_custom_call.1} parent=1 // pred_check
      _
    $region23: #{tpu_custom_call.1} parent=1 // pred_check_branch
      %54 = sbr.rel (0) target = $region25
    $region24: #{tpu_custom_call.1} parent=1 // pred_region
      %55 = dma.done [#allocation7], 36864
    $region25: #{tpu_custom_call.1} parent=1 // pred_fallthru
      _
    %57 = vst [vmem:[#allocation2] sm:$0xff] 0
    %58 = vst [vmem:[#allocation2 + $0x8] sm:$0xff] 0
    %59 = vst [vmem:[#allocation2 + $0x10] sm:$0xff] 0
    %60 = vst [vmem:[#allocation2 + $0x18] sm:$0xff] 0
    %61 = vst [vmem:[#allocation2 + $0x20] sm:$0xff] 0
    %62 = vst [vmem:[#allocation2 + $0x28] sm:$0xff] 0
    %63 = vst [vmem:[#allocation2 + $0x30] sm:$0xff] 0
    %64 = vst [vmem:[#allocation2 + $0x38] sm:$0xff] 0
    %65 = vst [vmem:[#allocation2 + $0x40] sm:$0xff] 0
    %66 = vst [vmem:[#allocation2 + $0x48] sm:$0xff] 0
    %67 = vst [vmem:[#allocation2 + $0x50] sm:$0xff] 0
    %68 = vst [vmem:[#allocation2 + $0x58] sm:$0xff] 0
    %69 = vst [vmem:[#allocation2 + $0x60] sm:$0xff] 0
    %70 = vst [vmem:[#allocation2 + $0x68] sm:$0xff] 0
    %71 = vst [vmem:[#allocation2 + $0x70] sm:$0xff] 0
    %72 = vst [vmem:[#allocation2 + $0x78] sm:$0xff] 0
    %73 = vst [vmem:[#allocation2 + $0x80] sm:$0xff] 0
    %74 = vst [vmem:[#allocation2 + $0x88] sm:$0xff] 0
    %75 = vst [vmem:[#allocation2 + $0x90] sm:$0xff] 0
    %76 = vst [vmem:[#allocation2 + $0x98] sm:$0xff] 0
    %77 = vst [vmem:[#allocation2 + $0xa0] sm:$0xff] 0
    %78 = vst [vmem:[#allocation2 + $0xa8] sm:$0xff] 0
    %79 = vst [vmem:[#allocation2 + $0xb0] sm:$0xff] 0
    %80 = vst [vmem:[#allocation2 + $0xb8] sm:$0xff] 0
    %81 = vst [vmem:[#allocation2 + $0xc0] sm:$0xff] 0
    %82 = vst [vmem:[#allocation2 + $0xc8] sm:$0xff] 0
    %83 = vst [vmem:[#allocation2 + $0xd0] sm:$0xff] 0
    %84 = vst [vmem:[#allocation2 + $0xd8] sm:$0xff] 0
    %85 = vst [vmem:[#allocation2 + $0xe0] sm:$0xff] 0
    %86 = vst [vmem:[#allocation2 + $0xe8] sm:$0xff] 0
    %87 = vst [vmem:[#allocation2 + $0xf0] sm:$0xff] 0
    %88 = vst [vmem:[#allocation2 + $0xf8] sm:$0xff] 0
    %89 = vst [vmem:[#allocation2 + $0x100] sm:$0xff] 0
    %90 = vst [vmem:[#allocation2 + $0x108] sm:$0xff] 0
    %91 = vst [vmem:[#allocation2 + $0x110] sm:$0xff] 0
    %92 = vst [vmem:[#allocation2 + $0x118] sm:$0xff] 0
    %93 = vst [vmem:[#allocation2 + $0x120] sm:$0xff] 0
    %94 = vst [vmem:[#allocation2 + $0x128] sm:$0xff] 0
    %95 = vst [vmem:[#allocation2 + $0x130] sm:$0xff] 0
    %96 = vst [vmem:[#allocation2 + $0x138] sm:$0xff] 0
    %v97 = vld [vmem:[#allocation3] sm:$0xff]
    %v98 = vld [vmem:[#allocation3 + $0x8] sm:$0xff]
    %v99 = vld [vmem:[#allocation3 + $0x10] sm:$0xff]
    %v100 = vld [vmem:[#allocation3 + $0x18] sm:$0xff]
    %v101 = vld [vmem:[#allocation3 + $0x20] sm:$0xff]
    %v102 = vld [vmem:[#allocation3 + $0x28] sm:$0xff]
    %v103 = vld [vmem:[#allocation3 + $0x30] sm:$0xff]
    %v104 = vld [vmem:[#allocation3 + $0x38] sm:$0xff]
    %v105 = vld [vmem:[#allocation3 + $0x40] sm:$0xff]
    %v106 = vld [vmem:[#allocation3 + $0x48] sm:$0xff]
    %v107 = vld [vmem:[#allocation3 + $0x50] sm:$0xff]
    %v108 = vld [vmem:[#allocation3 + $0x58] sm:$0xff]
    %v109 = vld [vmem:[#allocation3 + $0x60] sm:$0xff]
    %v110 = vld [vmem:[#allocation3 + $0x68] sm:$0xff]
    %v111 = vld [vmem:[#allocation3 + $0x70] sm:$0xff]
    %v112 = vld [vmem:[#allocation3 + $0x78] sm:$0xff]
    %v113 = vld [vmem:[#allocation3 + $0x80] sm:$0xff]
    %v114 = vld [vmem:[#allocation3 + $0x88] sm:$0xff]
    %v115 = vld [vmem:[#allocation3 + $0x90] sm:$0xff]
    %v116 = vld [vmem:[#allocation3 + $0x98] sm:$0xff]
    %v117 = vld [vmem:[#allocation3 + $0xa0] sm:$0xff]
    %v118 = vld [vmem:[#allocation3 + $0xa8] sm:$0xff]
    %v119 = vld [vmem:[#allocation3 + $0xb0] sm:$0xff]
    %v120 = vld [vmem:[#allocation3 + $0xb8] sm:$0xff]
    %v121 = vld [vmem:[#allocation3 + $0xc0] sm:$0xff]
    %v122 = vld [vmem:[#allocation3 + $0xc8] sm:$0xff]
    %v123 = vld [vmem:[#allocation3 + $0xd0] sm:$0xff]
    %v124 = vld [vmem:[#allocation3 + $0xd8] sm:$0xff]
    %v125 = vld [vmem:[#allocation3 + $0xe0] sm:$0xff]
    %v126 = vld [vmem:[#allocation3 + $0xe8] sm:$0xff]
    %v127 = vld [vmem:[#allocation3 + $0xf0] sm:$0xff]
    %v128 = vld [vmem:[#allocation3 + $0xf8] sm:$0xff]
    %v129 = vpack.c.bf16 %v97, %v97
    %v130 = vpack.c.bf16 %v98, %v98
    %v131 = vpack.c.bf16 %v99, %v99
    %v132 = vpack.c.bf16 %v100, %v100
    %v133 = vpack.c.bf16 %v101, %v101
    %v134 = vpack.c.bf16 %v102, %v102
    %v135 = vpack.c.bf16 %v103, %v103
    %v136 = vpack.c.bf16 %v104, %v104
    %v137 = vpack.c.bf16 %v105, %v105
    %v138 = vpack.c.bf16 %v106, %v106
    %v139 = vpack.c.bf16 %v107, %v107
    %v140 = vpack.c.bf16 %v108, %v108
    %v141 = vpack.c.bf16 %v109, %v109
    %v142 = vpack.c.bf16 %v110, %v110
    %v143 = vpack.c.bf16 %v111, %v111
    %v144 = vpack.c.bf16 %v112, %v112
    %v145 = vpack.c.bf16 %v113, %v113
    %v146 = vpack.c.bf16 %v114, %v114
    %v147 = vpack.c.bf16 %v115, %v115
    %v148 = vpack.c.bf16 %v116, %v116
    %v149 = vpack.c.bf16 %v117, %v117
    %v150 = vpack.c.bf16 %v118, %v118
    %v151 = vpack.c.bf16 %v119, %v119
    %v152 = vpack.c.bf16 %v120, %v120
    %v153 = vpack.c.bf16 %v121, %v121
    %v154 = vpack.c.bf16 %v122, %v122
    %v155 = vpack.c.bf16 %v123, %v123
    %v156 = vpack.c.bf16 %v124, %v124
    %v157 = vpack.c.bf16 %v125, %v125
    %v158 = vpack.c.bf16 %v126, %v126
    %v159 = vpack.c.bf16 %v127, %v127
    %v160 = vpack.c.bf16 %v128, %v128
    %v162 = vshrl.u32 %v129, 16
    %v164 = vrot.slane %v162, 7
    %v165 = vshll.u32 %v129, 16
    %v167 = vor.u32 %v164, %v165
    %v169 = vshrl.u32 %v130, 16
    %v171 = vrot.slane %v169, 7
    %v172 = vshll.u32 %v130, 16
    %v174 = vor.u32 %v171, %v172
    %v176 = vshrl.u32 %v131, 16
    %v178 = vrot.slane %v176, 7
    %v179 = vshll.u32 %v131, 16
    %v181 = vor.u32 %v178, %v179
    %v183 = vshrl.u32 %v132, 16
    %v185 = vrot.slane %v183, 7
    %v186 = vshll.u32 %v132, 16
    %v188 = vor.u32 %v185, %v186
    %v190 = vshrl.u32 %v133, 16
    %v192 = vrot.slane %v190, 7
    %v193 = vshll.u32 %v133, 16
    %v195 = vor.u32 %v192, %v193
    %v197 = vshrl.u32 %v134, 16
    %v199 = vrot.slane %v197, 7
    %v200 = vshll.u32 %v134, 16
    %v202 = vor.u32 %v199, %v200
    %v204 = vshrl.u32 %v135, 16
    %v206 = vrot.slane %v204, 7
    %v207 = vshll.u32 %v135, 16
    %v209 = vor.u32 %v206, %v207
    %v211 = vshrl.u32 %v136, 16
    %v213 = vrot.slane %v211, 7
    %v214 = vshll.u32 %v136, 16
    %v216 = vor.u32 %v213, %v214
    %v218 = vshrl.u32 %v137, 16
    %v220 = vrot.slane %v218, 7
    %v221 = vshll.u32 %v137, 16
    %v223 = vor.u32 %v220, %v221
    %v225 = vshrl.u32 %v138, 16
    %v227 = vrot.slane %v225, 7
    %v228 = vshll.u32 %v138, 16
    %v230 = vor.u32 %v227, %v228
    %v232 = vshrl.u32 %v139, 16
    %v234 = vrot.slane %v232, 7
    %v235 = vshll.u32 %v139, 16
    %v237 = vor.u32 %v234, %v235
    %v239 = vshrl.u32 %v140, 16
    %v241 = vrot.slane %v239, 7
    %v242 = vshll.u32 %v140, 16
    %v244 = vor.u32 %v241, %v242
    %v246 = vshrl.u32 %v141, 16
    %v248 = vrot.slane %v246, 7
    %v249 = vshll.u32 %v141, 16
    %v251 = vor.u32 %v248, %v249
    %v253 = vshrl.u32 %v142, 16
    %v255 = vrot.slane %v253, 7
    %v256 = vshll.u32 %v142, 16
    %v258 = vor.u32 %v255, %v256
    %v260 = vshrl.u32 %v143, 16
    %v262 = vrot.slane %v260, 7
    %v263 = vshll.u32 %v143, 16
    %v265 = vor.u32 %v262, %v263
    %v267 = vshrl.u32 %v144, 16
    %v269 = vrot.slane %v267, 7
    %v270 = vshll.u32 %v144, 16
    %v272 = vor.u32 %v269, %v270
    %v274 = vshrl.u32 %v145, 16
    %v276 = vrot.slane %v274, 7
    %v277 = vshll.u32 %v145, 16
    %v279 = vor.u32 %v276, %v277
    %v281 = vshrl.u32 %v146, 16
    %v283 = vrot.slane %v281, 7
    %v284 = vshll.u32 %v146, 16
    %v286 = vor.u32 %v283, %v284
    %v288 = vshrl.u32 %v147, 16
    %v290 = vrot.slane %v288, 7
    %v291 = vshll.u32 %v147, 16
    %v293 = vor.u32 %v290, %v291
    %v295 = vshrl.u32 %v148, 16
    %v297 = vrot.slane %v295, 7
    %v298 = vshll.u32 %v148, 16
    %v300 = vor.u32 %v297, %v298
    %v302 = vshrl.u32 %v149, 16
    %v304 = vrot.slane %v302, 7
    %v305 = vshll.u32 %v149, 16
    %v307 = vor.u32 %v304, %v305
    %v309 = vshrl.u32 %v150, 16
    %v311 = vrot.slane %v309, 7
    %v312 = vshll.u32 %v150, 16
    %v314 = vor.u32 %v311, %v312
    %v316 = vshrl.u32 %v151, 16
    %v318 = vrot.slane %v316, 7
    %v319 = vshll.u32 %v151, 16
    %v321 = vor.u32 %v318, %v319
    %v323 = vshrl.u32 %v152, 16
    %v325 = vrot.slane %v323, 7
    %v326 = vshll.u32 %v152, 16
    %v328 = vor.u32 %v325, %v326
    %v330 = vshrl.u32 %v153, 16
    %v332 = vrot.slane %v330, 7
    %v333 = vshll.u32 %v153, 16
    %v335 = vor.u32 %v332, %v333
    %v337 = vshrl.u32 %v154, 16
    %v339 = vrot.slane %v337, 7
    %v340 = vshll.u32 %v154, 16
    %v342 = vor.u32 %v339, %v340
    %v344 = vshrl.u32 %v155, 16
    %v346 = vrot.slane %v344, 7
    %v347 = vshll.u32 %v155, 16
    %v349 = vor.u32 %v346, %v347
    %v351 = vshrl.u32 %v156, 16
    %v353 = vrot.slane %v351, 7
    %v354 = vshll.u32 %v156, 16
    %v356 = vor.u32 %v353, %v354
    %v358 = vshrl.u32 %v157, 16
    %v360 = vrot.slane %v358, 7
    %v361 = vshll.u32 %v157, 16
    %v363 = vor.u32 %v360, %v361
    %v365 = vshrl.u32 %v158, 16
    %v367 = vrot.slane %v365, 7
    %v368 = vshll.u32 %v158, 16
    %v370 = vor.u32 %v367, %v368
    %v372 = vshrl.u32 %v159, 16
    %v374 = vrot.slane %v372, 7
    %v375 = vshll.u32 %v159, 16
    %v377 = vor.u32 %v374, %v375
    %v379 = vshrl.u32 %v160, 16
    %v381 = vrot.slane %v379, 7
    %v382 = vshll.u32 %v160, 16
    %v384 = vor.u32 %v381, %v382
    %s417 = scalar_lea.vmem [#allocation2], 16
    %vm418 = vcmask 1044480
    %vm419 = vsmask.f32 4354
    %vm420 = vmand %vm418, %vm419
    %v421 = vld [vmem:[%s417] sm:$0x1f]
    %v422 = vsel %vm420, %v167, %v421
    %423 = vst [vmem:[%s417] sm:$0x1f] %v422
    %v424 = vld [vmem:[%s417 + $0x8] sm:$0x1f]
    %v425 = vsel %vm420, %v174, %v424
    %426 = vst [vmem:[%s417 + $0x8] sm:$0x1f] %v425
    %v427 = vld [vmem:[%s417 + $0x10] sm:$0x1f]
    %v428 = vsel %vm420, %v181, %v427
    %429 = vst [vmem:[%s417 + $0x10] sm:$0x1f] %v428
    %v430 = vld [vmem:[%s417 + $0x18] sm:$0x1f]
    %v431 = vsel %vm420, %v188, %v430
    %432 = vst [vmem:[%s417 + $0x18] sm:$0x1f] %v431
    %v433 = vld [vmem:[%s417 + $0x20] sm:$0x1f]
    %v434 = vsel %vm420, %v195, %v433
    %435 = vst [vmem:[%s417 + $0x20] sm:$0x1f] %v434
    %v436 = vld [vmem:[%s417 + $0x28] sm:$0x1f]
    %v437 = vsel %vm420, %v202, %v436
    %438 = vst [vmem:[%s417 + $0x28] sm:$0x1f] %v437
    %v439 = vld [vmem:[%s417 + $0x30] sm:$0x1f]
    %v440 = vsel %vm420, %v209, %v439
    %441 = vst [vmem:[%s417 + $0x30] sm:$0x1f] %v440
    %v442 = vld [vmem:[%s417 + $0x38] sm:$0x1f]
    %v443 = vsel %vm420, %v216, %v442
    %444 = vst [vmem:[%s417 + $0x38] sm:$0x1f] %v443
    %v445 = vld [vmem:[%s417 + $0x40] sm:$0x1f]
    %v446 = vsel %vm420, %v223, %v445
    %447 = vst [vmem:[%s417 + $0x40] sm:$0x1f] %v446
    %v448 = vld [vmem:[%s417 + $0x48] sm:$0x1f]
    %v449 = vsel %vm420, %v230, %v448
    %450 = vst [vmem:[%s417 + $0x48] sm:$0x1f] %v449
    %v451 = vld [vmem:[%s417 + $0x50] sm:$0x1f]
    %v452 = vsel %vm420, %v237, %v451
    %453 = vst [vmem:[%s417 + $0x50] sm:$0x1f] %v452
    %v454 = vld [vmem:[%s417 + $0x58] sm:$0x1f]
    %v455 = vsel %vm420, %v244, %v454
    %456 = vst [vmem:[%s417 + $0x58] sm:$0x1f] %v455
    %v457 = vld [vmem:[%s417 + $0x60] sm:$0x1f]
    %v458 = vsel %vm420, %v251, %v457
    %459 = vst [vmem:[%s417 + $0x60] sm:$0x1f] %v458
    %v460 = vld [vmem:[%s417 + $0x68] sm:$0x1f]
    %v461 = vsel %vm420, %v258, %v460
    %462 = vst [vmem:[%s417 + $0x68] sm:$0x1f] %v461
    %v463 = vld [vmem:[%s417 + $0x70] sm:$0x1f]
    %v464 = vsel %vm420, %v265, %v463
    %465 = vst [vmem:[%s417 + $0x70] sm:$0x1f] %v464
    %v466 = vld [vmem:[%s417 + $0x78] sm:$0x1f]
    %v467 = vsel %vm420, %v272, %v466
    %468 = vst [vmem:[%s417 + $0x78] sm:$0x1f] %v467
    %v469 = vld [vmem:[%s417 + $0xa0] sm:$0x1f]
    %v470 = vsel %vm420, %v279, %v469
    %471 = vst [vmem:[%s417 + $0xa0] sm:$0x1f] %v470
    %v472 = vld [vmem:[%s417 + $0xa8] sm:$0x1f]
    %v473 = vsel %vm420, %v286, %v472
    %474 = vst [vmem:[%s417 + $0xa8] sm:$0x1f] %v473
    %v475 = vld [vmem:[%s417 + $0xb0] sm:$0x1f]
    %v476 = vsel %vm420, %v293, %v475
    %477 = vst [vmem:[%s417 + $0xb0] sm:$0x1f] %v476
    %v478 = vld [vmem:[%s417 + $0xb8] sm:$0x1f]
    %v479 = vsel %vm420, %v300, %v478
    %480 = vst [vmem:[%s417 + $0xb8] sm:$0x1f] %v479
    %v481 = vld [vmem:[%s417 + $0xc0] sm:$0x1f]
    %v482 = vsel %vm420, %v307, %v481
    %483 = vst [vmem:[%s417 + $0xc0] sm:$0x1f] %v482
    %v484 = vld [vmem:[%s417 + $0xc8] sm:$0x1f]
    %v485 = vsel %vm420, %v314, %v484
    %486 = vst [vmem:[%s417 + $0xc8] sm:$0x1f] %v485
    %v487 = vld [vmem:[%s417 + $0xd0] sm:$0x1f]
    %v488 = vsel %vm420, %v321, %v487
    %489 = vst [vmem:[%s417 + $0xd0] sm:$0x1f] %v488
    %v490 = vld [vmem:[%s417 + $0xd8] sm:$0x1f]
    %v491 = vsel %vm420, %v328, %v490
    %492 = vst [vmem:[%s417 + $0xd8] sm:$0x1f] %v491
    %v493 = vld [vmem:[%s417 + $0xe0] sm:$0x1f]
    %v494 = vsel %vm420, %v335, %v493
    %495 = vst [vmem:[%s417 + $0xe0] sm:$0x1f] %v494
    %v496 = vld [vmem:[%s417 + $0xe8] sm:$0x1f]
    %v497 = vsel %vm420, %v342, %v496
    %498 = vst [vmem:[%s417 + $0xe8] sm:$0x1f] %v497
    %v499 = vld [vmem:[%s417 + $0xf0] sm:$0x1f]
    %v500 = vsel %vm420, %v349, %v499
    %501 = vst [vmem:[%s417 + $0xf0] sm:$0x1f] %v500
    %v502 = vld [vmem:[%s417 + $0xf8] sm:$0x1f]
    %v503 = vsel %vm420, %v356, %v502
    %504 = vst [vmem:[%s417 + $0xf8] sm:$0x1f] %v503
    %v505 = vld [vmem:[%s417 + $0x100] sm:$0x1f]
    %v506 = vsel %vm420, %v363, %v505
    %507 = vst [vmem:[%s417 + $0x100] sm:$0x1f] %v506
    %v508 = vld [vmem:[%s417 + $0x108] sm:$0x1f]
    %v509 = vsel %vm420, %v370, %v508
    %510 = vst [vmem:[%s417 + $0x108] sm:$0x1f] %v509
    %v511 = vld [vmem:[%s417 + $0x110] sm:$0x1f]
    %v512 = vsel %vm420, %v377, %v511
    %513 = vst [vmem:[%s417 + $0x110] sm:$0x1f] %v512
    %v514 = vld [vmem:[%s417 + $0x118] sm:$0x1f]
    %v515 = vsel %vm420, %v384, %v514
    %516 = vst [vmem:[%s417 + $0x118] sm:$0x1f] %v515
    %v517 = vld [vmem:[#allocation2] sm:$0xff]
    %v518 = vld [vmem:[#allocation2 + $0x8] sm:$0xff]
    %v519 = vld [vmem:[#allocation2 + $0x10] sm:$0xff]
    %v520 = vld [vmem:[#allocation2 + $0x18] sm:$0xff]
    %v521 = vld [vmem:[#allocation2 + $0x20] sm:$0xff]
    %v522 = vld [vmem:[#allocation2 + $0x28] sm:$0xff]
    %v523 = vld [vmem:[#allocation2 + $0x30] sm:$0xff]
    %v524 = vld [vmem:[#allocation2 + $0x38] sm:$0xff]
    %v525 = vld [vmem:[#allocation2 + $0x40] sm:$0xff]
    %v526 = vld [vmem:[#allocation2 + $0x48] sm:$0xff]
    %v527 = vld [vmem:[#allocation2 + $0x50] sm:$0xff]
    %v528 = vld [vmem:[#allocation2 + $0x58] sm:$0xff]
    %v529 = vld [vmem:[#allocation2 + $0x60] sm:$0xff]
    %v530 = vld [vmem:[#allocation2 + $0x68] sm:$0xff]
    %v531 = vld [vmem:[#allocation2 + $0x70] sm:$0xff]
    %v532 = vld [vmem:[#allocation2 + $0x78] sm:$0xff]
    %v533 = vld [vmem:[#allocation2 + $0x80] sm:$0xff]
    %v534 = vld [vmem:[#allocation2 + $0x88] sm:$0xff]
    %v535 = vld [vmem:[#allocation2 + $0x90] sm:$0xff]
    %v536 = vld [vmem:[#allocation2 + $0x98] sm:$0xff]
    %v537 = vld [vmem:[#allocation2 + $0xa0] sm:$0xff]
    %v538 = vld [vmem:[#allocation2 + $0xa8] sm:$0xff]
    %v539 = vld [vmem:[#allocation2 + $0xb0] sm:$0xff]
    %v540 = vld [vmem:[#allocation2 + $0xb8] sm:$0xff]
    %v541 = vld [vmem:[#allocation2 + $0xc0] sm:$0xff]
    %v542 = vld [vmem:[#allocation2 + $0xc8] sm:$0xff]
    %v543 = vld [vmem:[#allocation2 + $0xd0] sm:$0xff]
    %v544 = vld [vmem:[#allocation2 + $0xd8] sm:$0xff]
    %v545 = vld [vmem:[#allocation2 + $0xe0] sm:$0xff]
    %v546 = vld [vmem:[#allocation2 + $0xe8] sm:$0xff]
    %v547 = vld [vmem:[#allocation2 + $0xf0] sm:$0xff]
    %v548 = vld [vmem:[#allocation2 + $0xf8] sm:$0xff]
    %v549 = vld [vmem:[#allocation2 + $0x100] sm:$0xff]
    %v550 = vld [vmem:[#allocation2 + $0x108] sm:$0xff]
    %v551 = vld [vmem:[#allocation2 + $0x110] sm:$0xff]
    %v552 = vld [vmem:[#allocation2 + $0x118] sm:$0xff]
    %v553 = vld [vmem:[#allocation2 + $0x120] sm:$0xff]
    %v554 = vld [vmem:[#allocation2 + $0x128] sm:$0xff]
    %v555 = vld [vmem:[#allocation2 + $0x130] sm:$0xff]
    %v556 = vld [vmem:[#allocation2 + $0x138] sm:$0xff]
    %v589 = vunpack.c.l.b16 %v517
    %v590 = vunpack.c.l.b16 %v518
    %v591 = vunpack.c.l.b16 %v519
    %v592 = vunpack.c.l.b16 %v520
    %v593 = vunpack.c.l.b16 %v521
    %v594 = vunpack.c.l.b16 %v522
    %v595 = vunpack.c.l.b16 %v523
    %v596 = vunpack.c.l.b16 %v524
    %v597 = vunpack.c.l.b16 %v525
    %v598 = vunpack.c.l.b16 %v526
    %v599 = vunpack.c.l.b16 %v527
    %v600 = vunpack.c.l.b16 %v528
    %v601 = vunpack.c.l.b16 %v529
    %v602 = vunpack.c.l.b16 %v530
    %v603 = vunpack.c.l.b16 %v531
    %v604 = vunpack.c.l.b16 %v532
    %v605 = vunpack.c.l.b16 %v537
    %v606 = vunpack.c.l.b16 %v538
    %v607 = vunpack.c.l.b16 %v539
    %v608 = vunpack.c.l.b16 %v540
    %v609 = vunpack.c.l.b16 %v541
    %v610 = vunpack.c.l.b16 %v542
    %v611 = vunpack.c.l.b16 %v543
    %v612 = vunpack.c.l.b16 %v544
    %v613 = vunpack.c.l.b16 %v545
    %v614 = vunpack.c.l.b16 %v546
    %v615 = vunpack.c.l.b16 %v547
    %v616 = vunpack.c.l.b16 %v548
    %v617 = vunpack.c.l.b16 %v549
    %v618 = vunpack.c.l.b16 %v550
    %v619 = vunpack.c.l.b16 %v551
    %v620 = vunpack.c.l.b16 %v552
    %v621 = vunpack.c.h.b16 %v517
    %v622 = vunpack.c.h.b16 %v518
    %v623 = vunpack.c.h.b16 %v519
    %v624 = vunpack.c.h.b16 %v520
    %v625 = vunpack.c.h.b16 %v521
    %v626 = vunpack.c.h.b16 %v522
    %v627 = vunpack.c.h.b16 %v523
    %v628 = vunpack.c.h.b16 %v524
    %v629 = vunpack.c.h.b16 %v525
    %v630 = vunpack.c.h.b16 %v526
    %v631 = vunpack.c.h.b16 %v527
    %v632 = vunpack.c.h.b16 %v528
    %v633 = vunpack.c.h.b16 %v529
    %v634 = vunpack.c.h.b16 %v530
    %v635 = vunpack.c.h.b16 %v531
    %v636 = vunpack.c.h.b16 %v532
    %v637 = vunpack.c.h.b16 %v537
    %v638 = vunpack.c.h.b16 %v538
    %v639 = vunpack.c.h.b16 %v539
    %v640 = vunpack.c.h.b16 %v540
    %v641 = vunpack.c.h.b16 %v541
    %v642 = vunpack.c.h.b16 %v542
    %v643 = vunpack.c.h.b16 %v543
    %v644 = vunpack.c.h.b16 %v544
    %v645 = vunpack.c.h.b16 %v545
    %v646 = vunpack.c.h.b16 %v546
    %v647 = vunpack.c.h.b16 %v547
    %v648 = vunpack.c.h.b16 %v548
    %v649 = vunpack.c.h.b16 %v549
    %v650 = vunpack.c.h.b16 %v550
    %v651 = vunpack.c.h.b16 %v551
    %v652 = vunpack.c.h.b16 %v552
    %v653 = vpack.c.b16 %v590, %v589
    %v654 = vpack.c.b16 %v622, %v621
    %v655 = vpack.c.b16 %v592, %v591
    %v656 = vpack.c.b16 %v624, %v623
    %v657 = vpack.c.b16 %v594, %v593
    %v658 = vpack.c.b16 %v626, %v625
    %v659 = vpack.c.b16 %v596, %v595
    %v660 = vpack.c.b16 %v628, %v627
    %v661 = vpack.c.b16 %v598, %v597
    %v662 = vpack.c.b16 %v630, %v629
    %v663 = vpack.c.b16 %v600, %v599
    %v664 = vpack.c.b16 %v632, %v631
    %v665 = vpack.c.b16 %v602, %v601
    %v666 = vpack.c.b16 %v634, %v633
    %v667 = vpack.c.b16 %v604, %v603
    %v668 = vpack.c.b16 %v636, %v635
    %v669 = vpack.c.b16 %v606, %v605
    %v670 = vpack.c.b16 %v638, %v637
    %v671 = vpack.c.b16 %v608, %v607
    %v672 = vpack.c.b16 %v640, %v639
    %v673 = vpack.c.b16 %v610, %v609
    %v674 = vpack.c.b16 %v642, %v641
    %v675 = vpack.c.b16 %v612, %v611
    %v676 = vpack.c.b16 %v644, %v643
    %v677 = vpack.c.b16 %v614, %v613
    %v678 = vpack.c.b16 %v646, %v645
    %v679 = vpack.c.b16 %v616, %v615
    %v680 = vpack.c.b16 %v648, %v647
    %v681 = vpack.c.b16 %v618, %v617
    %v682 = vpack.c.b16 %v650, %v649
    %v683 = vpack.c.b16 %v620, %v619
    %v684 = vpack.c.b16 %v652, %v651
    %vm685 = vsmask.f32 3328
    %vm686 = vsmask.f32 7440
    %vm687 = vmor %vm685, %vm686
    %v689 = vshrl.u32 %v653, 16
    %v691 = vrot.slane %v689, 4
    %v692 = vshll.u32 %v653, 16
    %v694 = vrot.slane %v692, 5
    %v695 = vor.u32 %v691, %v694
    %v696 = vrot.slane %v695, 4
    %v698 = vshll.u32 %v654, 16
    %v700 = vrot.slane %v698, 5
    %v701 = vsel %vm687, %v696, %v700
    %v703 = vshrl.u32 %v655, 16
    %v705 = vrot.slane %v703, 4
    %v706 = vshll.u32 %v655, 16
    %v708 = vrot.slane %v706, 5
    %v709 = vor.u32 %v705, %v708
    %v710 = vrot.slane %v709, 4
    %v712 = vshll.u32 %v656, 16
    %v714 = vrot.slane %v712, 5
    %v715 = vsel %vm687, %v710, %v714
    %v717 = vshrl.u32 %v657, 16
    %v719 = vrot.slane %v717, 4
    %v720 = vshll.u32 %v657, 16
    %v722 = vrot.slane %v720, 5
    %v723 = vor.u32 %v719, %v722
    %v724 = vrot.slane %v723, 4
    %v726 = vshll.u32 %v658, 16
    %v728 = vrot.slane %v726, 5
    %v729 = vsel %vm687, %v724, %v728
    %v731 = vshrl.u32 %v659, 16
    %v733 = vrot.slane %v731, 4
    %v734 = vshll.u32 %v659, 16
    %v736 = vrot.slane %v734, 5
    %v737 = vor.u32 %v733, %v736
    %v738 = vrot.slane %v737, 4
    %v740 = vshll.u32 %v660, 16
    %v742 = vrot.slane %v740, 5
    %v743 = vsel %vm687, %v738, %v742
    %v745 = vshrl.u32 %v661, 16
    %v747 = vrot.slane %v745, 4
    %v748 = vshll.u32 %v661, 16
    %v750 = vrot.slane %v748, 5
    %v751 = vor.u32 %v747, %v750
    %v752 = vrot.slane %v751, 4
    %v754 = vshll.u32 %v662, 16
    %v756 = vrot.slane %v754, 5
    %v757 = vsel %vm687, %v752, %v756
    %v759 = vshrl.u32 %v663, 16
    %v761 = vrot.slane %v759, 4
    %v762 = vshll.u32 %v663, 16
    %v764 = vrot.slane %v762, 5
    %v765 = vor.u32 %v761, %v764
    %v766 = vrot.slane %v765, 4
    %v768 = vshll.u32 %v664, 16
    %v770 = vrot.slane %v768, 5
    %v771 = vsel %vm687, %v766, %v770
    %v773 = vshrl.u32 %v665, 16
    %v775 = vrot.slane %v773, 4
    %v776 = vshll.u32 %v665, 16
    %v778 = vrot.slane %v776, 5
    %v779 = vor.u32 %v775, %v778
    %v780 = vrot.slane %v779, 4
    %v782 = vshll.u32 %v666, 16
    %v784 = vrot.slane %v782, 5
    %v785 = vsel %vm687, %v780, %v784
    %v787 = vshrl.u32 %v667, 16
    %v789 = vrot.slane %v787, 4
    %v790 = vshll.u32 %v667, 16
    %v792 = vrot.slane %v790, 5
    %v793 = vor.u32 %v789, %v792
    %v794 = vrot.slane %v793, 4
    %v796 = vshll.u32 %v668, 16
    %v798 = vrot.slane %v796, 5
    %v799 = vsel %vm687, %v794, %v798
    %v801 = vshrl.u32 %v669, 16
    %v803 = vrot.slane %v801, 4
    %v804 = vshll.u32 %v669, 16
    %v806 = vrot.slane %v804, 5
    %v807 = vor.u32 %v803, %v806
    %v808 = vrot.slane %v807, 4
    %v810 = vshll.u32 %v670, 16
    %v812 = vrot.slane %v810, 5
    %v813 = vsel %vm687, %v808, %v812
    %v815 = vshrl.u32 %v671, 16
    %v817 = vrot.slane %v815, 4
    %v818 = vshll.u32 %v671, 16
    %v820 = vrot.slane %v818, 5
    %v821 = vor.u32 %v817, %v820
    %v822 = vrot.slane %v821, 4
    %v824 = vshll.u32 %v672, 16
    %v826 = vrot.slane %v824, 5
    %v827 = vsel %vm687, %v822, %v826
    %v829 = vshrl.u32 %v673, 16
    %v831 = vrot.slane %v829, 4
    %v832 = vshll.u32 %v673, 16
    %v834 = vrot.slane %v832, 5
    %v835 = vor.u32 %v831, %v834
    %v836 = vrot.slane %v835, 4
    %v838 = vshll.u32 %v674, 16
    %v840 = vrot.slane %v838, 5
    %v841 = vsel %vm687, %v836, %v840
    %v843 = vshrl.u32 %v675, 16
    %v845 = vrot.slane %v843, 4
    %v846 = vshll.u32 %v675, 16
    %v848 = vrot.slane %v846, 5
    %v849 = vor.u32 %v845, %v848
    %v850 = vrot.slane %v849, 4
    %v852 = vshll.u32 %v676, 16
    %v854 = vrot.slane %v852, 5
    %v855 = vsel %vm687, %v850, %v854
    %v857 = vshrl.u32 %v677, 16
    %v859 = vrot.slane %v857, 4
    %v860 = vshll.u32 %v677, 16
    %v862 = vrot.slane %v860, 5
    %v863 = vor.u32 %v859, %v862
    %v864 = vrot.slane %v863, 4
    %v866 = vshll.u32 %v678, 16
    %v868 = vrot.slane %v866, 5
    %v869 = vsel %vm687, %v864, %v868
    %v871 = vshrl.u32 %v679, 16
    %v873 = vrot.slane %v871, 4
    %v874 = vshll.u32 %v679, 16
    %v876 = vrot.slane %v874, 5
    %v877 = vor.u32 %v873, %v876
    %v878 = vrot.slane %v877, 4
    %v880 = vshll.u32 %v680, 16
    %v882 = vrot.slane %v880, 5
    %v883 = vsel %vm687, %v878, %v882
    %v885 = vshrl.u32 %v681, 16
    %v887 = vrot.slane %v885, 4
    %v888 = vshll.u32 %v681, 16
    %v890 = vrot.slane %v888, 5
    %v891 = vor.u32 %v887, %v890
    %v892 = vrot.slane %v891, 4
    %v894 = vshll.u32 %v682, 16
    %v896 = vrot.slane %v894, 5
    %v897 = vsel %vm687, %v892, %v896
    %v899 = vshrl.u32 %v683, 16
    %v901 = vrot.slane %v899, 4
    %v902 = vshll.u32 %v683, 16
    %v904 = vrot.slane %v902, 5
    %v905 = vor.u32 %v901, %v904
    %v906 = vrot.slane %v905, 4
    %v908 = vshll.u32 %v684, 16
    %v910 = vrot.slane %v908, 5
    %v911 = vsel %vm687, %v906, %v910
    %vm912 = vcmask 1042432
    %vm913 = vcmask 1046532
    %vm914 = vmor %vm912, %vm913
    %v915 = vrot.slane %v653, 5
    %v916 = vrot.slane %v915, 4
    %v917 = vrot.slane %v654, 5
    %v918 = vsel %vm914, %v916, %v917
    %v919 = vrot.slane %v655, 5
    %v920 = vrot.slane %v919, 4
    %v921 = vrot.slane %v656, 5
    %v922 = vsel %vm914, %v920, %v921
    %v923 = vrot.slane %v657, 5
    %v924 = vrot.slane %v923, 4
    %v925 = vrot.slane %v658, 5
    %v926 = vsel %vm914, %v924, %v925
    %v927 = vrot.slane %v659, 5
    %v928 = vrot.slane %v927, 4
    %v929 = vrot.slane %v660, 5
    %v930 = vsel %vm914, %v928, %v929
    %v931 = vrot.slane %v661, 5
    %v932 = vrot.slane %v931, 4
    %v933 = vrot.slane %v662, 5
    %v934 = vsel %vm914, %v932, %v933
    %v935 = vrot.slane %v663, 5
    %v936 = vrot.slane %v935, 4
    %v937 = vrot.slane %v664, 5
    %v938 = vsel %vm914, %v936, %v937
    %v939 = vrot.slane %v665, 5
    %v940 = vrot.slane %v939, 4
    %v941 = vrot.slane %v666, 5
    %v942 = vsel %vm914, %v940, %v941
    %v943 = vrot.slane %v667, 5
    %v944 = vrot.slane %v943, 4
    %v945 = vrot.slane %v668, 5
    %v946 = vsel %vm914, %v944, %v945
    %v947 = vrot.slane %v669, 5
    %v948 = vrot.slane %v947, 4
    %v949 = vrot.slane %v670, 5
    %v950 = vsel %vm914, %v948, %v949
    %v951 = vrot.slane %v671, 5
    %v952 = vrot.slane %v951, 4
    %v953 = vrot.slane %v672, 5
    %v954 = vsel %vm914, %v952, %v953
    %v955 = vrot.slane %v673, 5
    %v956 = vrot.slane %v955, 4
    %v957 = vrot.slane %v674, 5
    %v958 = vsel %vm914, %v956, %v957
    %v959 = vrot.slane %v675, 5
    %v960 = vrot.slane %v959, 4
    %v961 = vrot.slane %v676, 5
    %v962 = vsel %vm914, %v960, %v961
    %v963 = vrot.slane %v677, 5
    %v964 = vrot.slane %v963, 4
    %v965 = vrot.slane %v678, 5
    %v966 = vsel %vm914, %v964, %v965
    %v967 = vrot.slane %v679, 5
    %v968 = vrot.slane %v967, 4
    %v969 = vrot.slane %v680, 5
    %v970 = vsel %vm914, %v968, %v969
    %v971 = vrot.slane %v681, 5
    %v972 = vrot.slane %v971, 4
    %v973 = vrot.slane %v682, 5
    %v974 = vsel %vm914, %v972, %v973
    %v975 = vrot.slane %v683, 5
    %v976 = vrot.slane %v975, 4
    %v977 = vrot.slane %v684, 5
    %v978 = vsel %vm914, %v976, %v977
    %v983 = vunpack.c.l.b16 %v533
    %v984 = vunpack.c.l.b16 %v534
    %v985 = vunpack.c.l.b16 %v553
    %v986 = vunpack.c.l.b16 %v554
    %v987 = vunpack.c.h.b16 %v533
    %v988 = vunpack.c.h.b16 %v534
    %v989 = vunpack.c.h.b16 %v553
    %v990 = vunpack.c.h.b16 %v554
    %v991 = vpack.c.b16 %v984, %v983
    %v992 = vpack.c.b16 %v988, %v987
    %v993 = vpack.c.b16 %v986, %v985
    %v994 = vpack.c.b16 %v990, %v989
    %v996 = vshrl.u32 %v991, 16
    %v998 = vrot.slane %v996, 4
    %v999 = vshll.u32 %v991, 16
    %v1001 = vrot.slane %v999, 5
    %v1002 = vor.u32 %v998, %v1001
    %v1003 = vrot.slane %v1002, 4
    %v1005 = vshll.u32 %v992, 16
    %v1007 = vrot.slane %v1005, 5
    %v1008 = vsel %vm687, %v1003, %v1007
    %v1010 = vshrl.u32 %v993, 16
    %v1012 = vrot.slane %v1010, 4
    %v1013 = vshll.u32 %v993, 16
    %v1015 = vrot.slane %v1013, 5
    %v1016 = vor.u32 %v1012, %v1015
    %v1017 = vrot.slane %v1016, 4
    %v1019 = vshll.u32 %v994, 16
    %v1021 = vrot.slane %v1019, 5
    %v1022 = vsel %vm687, %v1017, %v1021
    %v1023 = vrot.slane %v991, 5
    %v1024 = vrot.slane %v1023, 4
    %v1025 = vrot.slane %v992, 5
    %v1026 = vsel %vm914, %v1024, %v1025
    %v1027 = vrot.slane %v993, 5
    %v1028 = vrot.slane %v1027, 4
    %v1029 = vrot.slane %v994, 5
    %v1030 = vsel %vm914, %v1028, %v1029
    %v1035 = vunpack.c.l.b16 %v535
    %v1036 = vunpack.c.l.b16 %v536
    %v1037 = vunpack.c.l.b16 %v555
    %v1038 = vunpack.c.l.b16 %v556
    %v1039 = vunpack.c.h.b16 %v535
    %v1040 = vunpack.c.h.b16 %v536
    %v1041 = vunpack.c.h.b16 %v555
    %v1042 = vunpack.c.h.b16 %v556
    %v1043 = vpack.c.b16 %v1036, %v1035
    %v1044 = vpack.c.b16 %v1040, %v1039
    %v1045 = vpack.c.b16 %v1038, %v1037
    %v1046 = vpack.c.b16 %v1042, %v1041
    %v1048 = vshrl.u32 %v1043, 16
    %v1050 = vrot.slane %v1048, 4
    %v1051 = vshll.u32 %v1043, 16
    %v1053 = vrot.slane %v1051, 5
    %v1054 = vor.u32 %v1050, %v1053
    %v1055 = vrot.slane %v1054, 4
    %v1057 = vshll.u32 %v1044, 16
    %v1059 = vrot.slane %v1057, 5
    %v1060 = vsel %vm687, %v1055, %v1059
    %v1062 = vshrl.u32 %v1045, 16
    %v1064 = vrot.slane %v1062, 4
    %v1065 = vshll.u32 %v1045, 16
    %v1067 = vrot.slane %v1065, 5
    %v1068 = vor.u32 %v1064, %v1067
    %v1069 = vrot.slane %v1068, 4
    %v1071 = vshll.u32 %v1046, 16
    %v1073 = vrot.slane %v1071, 5
    %v1074 = vsel %vm687, %v1069, %v1073
    %v1075 = vrot.slane %v1043, 5
    %v1076 = vrot.slane %v1075, 4
    %v1077 = vrot.slane %v1044, 5
    %v1078 = vsel %vm914, %v1076, %v1077
    %v1079 = vrot.slane %v1045, 5
    %v1080 = vrot.slane %v1079, 4
    %v1081 = vrot.slane %v1046, 5
    %v1082 = vsel %vm914, %v1080, %v1081
    %v1083 = vpack.c.b16 %v591, %v589
    %v1084 = vpack.c.b16 %v592, %v590
    %v1085 = vpack.c.b16 %v595, %v593
    %v1086 = vpack.c.b16 %v596, %v594
    %v1087 = vpack.c.b16 %v599, %v597
    %v1088 = vpack.c.b16 %v600, %v598
    %v1089 = vpack.c.b16 %v603, %v601
    %v1090 = vpack.c.b16 %v604, %v602
    %v1091 = vpack.c.b16 %v607, %v605
    %v1092 = vpack.c.b16 %v608, %v606
    %v1093 = vpack.c.b16 %v611, %v609
    %v1094 = vpack.c.b16 %v612, %v610
    %v1095 = vpack.c.b16 %v615, %v613
    %v1096 = vpack.c.b16 %v616, %v614
    %v1097 = vpack.c.b16 %v619, %v617
    %v1098 = vpack.c.b16 %v620, %v618
    %v1115 = vunpack.c.l.b16 %v701
    %v1116 = vunpack.c.h.b16 %v701
    %v1117 = vunpack.c.l.b16 %v715
    %v1118 = vunpack.c.h.b16 %v715
    %v1119 = vunpack.c.l.b16 %v729
    %v1120 = vunpack.c.h.b16 %v729
    %v1121 = vunpack.c.l.b16 %v743
    %v1122 = vunpack.c.h.b16 %v743
    %v1123 = vunpack.c.l.b16 %v757
    %v1124 = vunpack.c.h.b16 %v757
    %v1125 = vunpack.c.l.b16 %v771
    %v1126 = vunpack.c.h.b16 %v771
    %v1127 = vunpack.c.l.b16 %v785
    %v1128 = vunpack.c.h.b16 %v785
    %v1129 = vunpack.c.l.b16 %v799
    %v1130 = vunpack.c.h.b16 %v799
    %v1131 = vunpack.c.l.b16 %v813
    %v1132 = vunpack.c.h.b16 %v813
    %v1133 = vunpack.c.l.b16 %v827
    %v1134 = vunpack.c.h.b16 %v827
    %v1135 = vunpack.c.l.b16 %v841
    %v1136 = vunpack.c.h.b16 %v841
    %v1137 = vunpack.c.l.b16 %v855
    %v1138 = vunpack.c.h.b16 %v855
    %v1139 = vunpack.c.l.b16 %v869
    %v1140 = vunpack.c.h.b16 %v869
    %v1141 = vunpack.c.l.b16 %v883
    %v1142 = vunpack.c.h.b16 %v883
    %v1143 = vunpack.c.l.b16 %v897
    %v1144 = vunpack.c.h.b16 %v897
    %v1145 = vunpack.c.l.b16 %v911
    %v1146 = vunpack.c.h.b16 %v911
    %v1147 = vpack.c.b16 %v1117, %v1115
    %v1148 = vpack.c.b16 %v1118, %v1116
    %v1149 = vpack.c.b16 %v1121, %v1119
    %v1150 = vpack.c.b16 %v1122, %v1120
    %v1151 = vpack.c.b16 %v1125, %v1123
    %v1152 = vpack.c.b16 %v1126, %v1124
    %v1153 = vpack.c.b16 %v1129, %v1127
    %v1154 = vpack.c.b16 %v1130, %v1128
    %v1155 = vpack.c.b16 %v1133, %v1131
    %v1156 = vpack.c.b16 %v1134, %v1132
    %v1157 = vpack.c.b16 %v1137, %v1135
    %v1158 = vpack.c.b16 %v1138, %v1136
    %v1159 = vpack.c.b16 %v1141, %v1139
    %v1160 = vpack.c.b16 %v1142, %v1140
    %v1161 = vpack.c.b16 %v1145, %v1143
    %v1162 = vpack.c.b16 %v1146, %v1144
    %v1179 = vunpack.c.l.b16 %v918
    %v1180 = vunpack.c.h.b16 %v918
    %v1181 = vunpack.c.l.b16 %v922
    %v1182 = vunpack.c.h.b16 %v922
    %v1183 = vunpack.c.l.b16 %v926
    %v1184 = vunpack.c.h.b16 %v926
    %v1185 = vunpack.c.l.b16 %v930
    %v1186 = vunpack.c.h.b16 %v930
    %v1187 = vunpack.c.l.b16 %v934
    %v1188 = vunpack.c.h.b16 %v934
    %v1189 = vunpack.c.l.b16 %v938
    %v1190 = vunpack.c.h.b16 %v938
    %v1191 = vunpack.c.l.b16 %v942
    %v1192 = vunpack.c.h.b16 %v942
    %v1193 = vunpack.c.l.b16 %v946
    %v1194 = vunpack.c.h.b16 %v946
    %v1195 = vunpack.c.l.b16 %v950
    %v1196 = vunpack.c.h.b16 %v950
    %v1197 = vunpack.c.l.b16 %v954
    %v1198 = vunpack.c.h.b16 %v954
    %v1199 = vunpack.c.l.b16 %v958
    %v1200 = vunpack.c.h.b16 %v958
    %v1201 = vunpack.c.l.b16 %v962
    %v1202 = vunpack.c.h.b16 %v962
    %v1203 = vunpack.c.l.b16 %v966
    %v1204 = vunpack.c.h.b16 %v966
    %v1205 = vunpack.c.l.b16 %v970
    %v1206 = vunpack.c.h.b16 %v970
    %v1207 = vunpack.c.l.b16 %v974
    %v1208 = vunpack.c.h.b16 %v974
    %v1209 = vunpack.c.l.b16 %v978
    %v1210 = vunpack.c.h.b16 %v978
    %v1211 = vpack.c.b16 %v1181, %v1179
    %v1212 = vpack.c.b16 %v1182, %v1180
    %v1213 = vpack.c.b16 %v1185, %v1183
    %v1214 = vpack.c.b16 %v1186, %v1184
    %v1215 = vpack.c.b16 %v1189, %v1187
    %v1216 = vpack.c.b16 %v1190, %v1188
    %v1217 = vpack.c.b16 %v1193, %v1191
    %v1218 = vpack.c.b16 %v1194, %v1192
    %v1219 = vpack.c.b16 %v1197, %v1195
    %v1220 = vpack.c.b16 %v1198, %v1196
    %v1221 = vpack.c.b16 %v1201, %v1199
    %v1222 = vpack.c.b16 %v1202, %v1200
    %v1223 = vpack.c.b16 %v1205, %v1203
    %v1224 = vpack.c.b16 %v1206, %v1204
    %v1225 = vpack.c.b16 %v1209, %v1207
    %v1226 = vpack.c.b16 %v1210, %v1208
    %v1243 = vpack.c.b16 %v593, %v591
    %v1244 = vpack.c.b16 %v594, %v592
    %v1245 = vpack.c.b16 %v597, %v595
    %v1246 = vpack.c.b16 %v598, %v596
    %v1247 = vpack.c.b16 %v601, %v599
    %v1248 = vpack.c.b16 %v602, %v600
    %v1249 = vpack.c.b16 %v983, %v603
    %v1250 = vpack.c.b16 %v984, %v604
    %v1251 = vpack.c.b16 %v609, %v607
    %v1252 = vpack.c.b16 %v610, %v608
    %v1253 = vpack.c.b16 %v613, %v611
    %v1254 = vpack.c.b16 %v614, %v612
    %v1255 = vpack.c.b16 %v617, %v615
    %v1256 = vpack.c.b16 %v618, %v616
    %v1257 = vpack.c.b16 %v985, %v619
    %v1258 = vpack.c.b16 %v986, %v620
    %v1275 = vunpack.c.l.b16 %v1008
    %v1276 = vunpack.c.h.b16 %v1008
    %v1277 = vunpack.c.l.b16 %v1022
    %v1278 = vunpack.c.h.b16 %v1022
    %v1279 = vpack.c.b16 %v1119, %v1117
    %v1280 = vpack.c.b16 %v1120, %v1118
    %v1281 = vpack.c.b16 %v1123, %v1121
    %v1282 = vpack.c.b16 %v1124, %v1122
    %v1283 = vpack.c.b16 %v1127, %v1125
    %v1284 = vpack.c.b16 %v1128, %v1126
    %v1285 = vpack.c.b16 %v1275, %v1129
    %v1286 = vpack.c.b16 %v1276, %v1130
    %v1287 = vpack.c.b16 %v1135, %v1133
    %v1288 = vpack.c.b16 %v1136, %v1134
    %v1289 = vpack.c.b16 %v1139, %v1137
    %v1290 = vpack.c.b16 %v1140, %v1138
    %v1291 = vpack.c.b16 %v1143, %v1141
    %v1292 = vpack.c.b16 %v1144, %v1142
    %v1293 = vpack.c.b16 %v1277, %v1145
    %v1294 = vpack.c.b16 %v1278, %v1146
    %v1311 = vunpack.c.l.b16 %v1026
    %v1312 = vunpack.c.h.b16 %v1026
    %v1313 = vunpack.c.l.b16 %v1030
    %v1314 = vunpack.c.h.b16 %v1030
    %v1315 = vpack.c.b16 %v1183, %v1181
    %v1316 = vpack.c.b16 %v1184, %v1182
    %v1317 = vpack.c.b16 %v1187, %v1185
    %v1318 = vpack.c.b16 %v1188, %v1186
    %v1319 = vpack.c.b16 %v1191, %v1189
    %v1320 = vpack.c.b16 %v1192, %v1190
    %v1321 = vpack.c.b16 %v1311, %v1193
    %v1322 = vpack.c.b16 %v1312, %v1194
    %v1323 = vpack.c.b16 %v1199, %v1197
    %v1324 = vpack.c.b16 %v1200, %v1198
    %v1325 = vpack.c.b16 %v1203, %v1201
    %v1326 = vpack.c.b16 %v1204, %v1202
    %v1327 = vpack.c.b16 %v1207, %v1205
    %v1328 = vpack.c.b16 %v1208, %v1206
    %v1329 = vpack.c.b16 %v1313, %v1209
    %v1330 = vpack.c.b16 %v1314, %v1210
    %v1347 = vpack.c.b16 %v1035, %v983
    %v1348 = vpack.c.b16 %v1036, %v984
    %v1349 = vpack.c.b16 %v1037, %v985
    %v1350 = vpack.c.b16 %v1038, %v986
    %v1355 = vunpack.c.l.b16 %v1060
    %v1356 = vunpack.c.h.b16 %v1060
    %v1357 = vunpack.c.l.b16 %v1074
    %v1358 = vunpack.c.h.b16 %v1074
    %v1359 = vpack.c.b16 %v1355, %v1275
    %v1360 = vpack.c.b16 %v1356, %v1276
    %v1361 = vpack.c.b16 %v1357, %v1277
    %v1362 = vpack.c.b16 %v1358, %v1278
    %v1367 = vunpack.c.l.b16 %v1078
    %v1368 = vunpack.c.h.b16 %v1078
    %v1369 = vunpack.c.l.b16 %v1082
    %v1370 = vunpack.c.h.b16 %v1082
    %v1371 = vpack.c.b16 %v1367, %v1311
    %v1372 = vpack.c.b16 %v1368, %v1312
    %v1373 = vpack.c.b16 %v1369, %v1313
    %v1374 = vpack.c.b16 %v1370, %v1314
    %v1379 = vld [vmem:[#allocation6] sm:$0xff]
    %v1380 = vld [vmem:[#allocation6 + $0x8] sm:$0xff]
    %v1381 = vld [vmem:[#allocation6 + $0x10] sm:$0xff]
    %v1382 = vld [vmem:[#allocation6 + $0x18] sm:$0xff]
    %v1383 = vld [vmem:[#allocation6 + $0x20] sm:$0xff]
    %v1384 = vld [vmem:[#allocation6 + $0x28] sm:$0xff]
    %v1385 = vld [vmem:[#allocation6 + $0x30] sm:$0xff]
    %v1386 = vld [vmem:[#allocation6 + $0x38] sm:$0xff]
    %v1387 = vld [vmem:[#allocation6 + $0x40] sm:$0xff]
    %v1388 = vld [vmem:[#allocation6 + $0x48] sm:$0xff]
    %v1389 = vld [vmem:[#allocation6 + $0x50] sm:$0xff]
    %v1390 = vld [vmem:[#allocation6 + $0x58] sm:$0xff]
    %v1391 = vld [vmem:[#allocation6 + $0x60] sm:$0xff]
    %v1392 = vld [vmem:[#allocation6 + $0x68] sm:$0xff]
    %v1393 = vld [vmem:[#allocation6 + $0x70] sm:$0xff]
    %v1394 = vld [vmem:[#allocation6 + $0x78] sm:$0xff]
    %v1395 = vld [vmem:[#allocation6 + $0x80] sm:$0xff]
    %v1396 = vld [vmem:[#allocation6 + $0x88] sm:$0xff]
    %v1397 = vld [vmem:[#allocation6 + $0x90] sm:$0xff]
    %v1398 = vld [vmem:[#allocation6 + $0x98] sm:$0xff]
    %v1399 = vld [vmem:[#allocation6 + $0xa0] sm:$0xff]
    %v1400 = vld [vmem:[#allocation6 + $0xa8] sm:$0xff]
    %v1401 = vld [vmem:[#allocation6 + $0xb0] sm:$0xff]
    %v1402 = vld [vmem:[#allocation6 + $0xb8] sm:$0xff]
    %v1403 = vld [vmem:[#allocation6 + $0xc0] sm:$0xff]
    %v1404 = vld [vmem:[#allocation6 + $0xc8] sm:$0xff]
    %v1405 = vld [vmem:[#allocation6 + $0xd0] sm:$0xff]
    %v1406 = vld [vmem:[#allocation6 + $0xd8] sm:$0xff]
    %v1407 = vld [vmem:[#allocation6 + $0xe0] sm:$0xff]
    %v1408 = vld [vmem:[#allocation6 + $0xe8] sm:$0xff]
    %v1409 = vld [vmem:[#allocation6 + $0xf0] sm:$0xff]
    %v1410 = vld [vmem:[#allocation6 + $0xf8] sm:$0xff]
    %v1411 = vld [vmem:[#allocation6 + $0x100] sm:$0xff]
    %v1412 = vld [vmem:[#allocation6 + $0x108] sm:$0xff]
    %v1413 = vld [vmem:[#allocation6 + $0x110] sm:$0xff]
    %v1414 = vld [vmem:[#allocation6 + $0x118] sm:$0xff]
    %v1415 = vld [vmem:[#allocation6 + $0x120] sm:$0xff]
    %v1416 = vld [vmem:[#allocation6 + $0x128] sm:$0xff]
    %v1417 = vld [vmem:[#allocation6 + $0x130] sm:$0xff]
    %v1418 = vld [vmem:[#allocation6 + $0x138] sm:$0xff]
    %v1419 = vld [vmem:[#allocation6 + $0x140] sm:$0xff]
    %v1420 = vld [vmem:[#allocation6 + $0x148] sm:$0xff]
    %v1421 = vld [vmem:[#allocation6 + $0x150] sm:$0xff]
    %v1422 = vld [vmem:[#allocation6 + $0x158] sm:$0xff]
    %v1423 = vld [vmem:[#allocation6 + $0x160] sm:$0xff]
    %v1424 = vld [vmem:[#allocation6 + $0x168] sm:$0xff]
    %v1425 = vld [vmem:[#allocation6 + $0x170] sm:$0xff]
    %v1426 = vld [vmem:[#allocation6 + $0x178] sm:$0xff]
    %v1427 = vld [vmem:[#allocation6 + $0x180] sm:$0xff]
    %v1428 = vld [vmem:[#allocation6 + $0x188] sm:$0xff]
    %v1429 = vld [vmem:[#allocation6 + $0x190] sm:$0xff]
    %v1430 = vld [vmem:[#allocation6 + $0x198] sm:$0xff]
    %v1431 = vld [vmem:[#allocation6 + $0x1a0] sm:$0xff]
    %v1432 = vld [vmem:[#allocation6 + $0x1a8] sm:$0xff]
    %v1433 = vld [vmem:[#allocation6 + $0x1b0] sm:$0xff]
    %v1434 = vld [vmem:[#allocation6 + $0x1b8] sm:$0xff]
    %v1435 = vld [vmem:[#allocation6 + $0x1c0] sm:$0xff]
    %v1436 = vld [vmem:[#allocation6 + $0x1c8] sm:$0xff]
    %v1437 = vld [vmem:[#allocation6 + $0x1d0] sm:$0xff]
    %v1438 = vld [vmem:[#allocation6 + $0x1d8] sm:$0xff]
    %v1439 = vld [vmem:[#allocation6 + $0x1e0] sm:$0xff]
    %v1440 = vld [vmem:[#allocation6 + $0x1e8] sm:$0xff]
    %v1441 = vld [vmem:[#allocation6 + $0x1f0] sm:$0xff]
    %v1442 = vld [vmem:[#allocation6 + $0x1f8] sm:$0xff]
    %v1443 = vld [vmem:[#allocation6 + $0x200] sm:$0xff]
    %v1444 = vld [vmem:[#allocation6 + $0x208] sm:$0xff]
    %v1445 = vld [vmem:[#allocation6 + $0x210] sm:$0xff]
    %v1446 = vld [vmem:[#allocation6 + $0x218] sm:$0xff]
    %v1447 = vld [vmem:[#allocation6 + $0x220] sm:$0xff]
    %v1448 = vld [vmem:[#allocation6 + $0x228] sm:$0xff]
    %v1449 = vld [vmem:[#allocation6 + $0x230] sm:$0xff]
    %v1450 = vld [vmem:[#allocation6 + $0x238] sm:$0xff]
    %v1451 = vld [vmem:[#allocation6 + $0x240] sm:$0xff]
    %v1452 = vld [vmem:[#allocation6 + $0x248] sm:$0xff]
    %v1453 = vld [vmem:[#allocation6 + $0x250] sm:$0xff]
    %v1454 = vld [vmem:[#allocation6 + $0x258] sm:$0xff]
    %v1455 = vld [vmem:[#allocation6 + $0x260] sm:$0xff]
    %v1456 = vld [vmem:[#allocation6 + $0x268] sm:$0xff]
    %v1457 = vld [vmem:[#allocation6 + $0x270] sm:$0xff]
    %v1458 = vld [vmem:[#allocation6 + $0x278] sm:$0xff]
    %v1459 = vld [vmem:[#allocation6 + $0x280] sm:$0xff]
    %v1460 = vld [vmem:[#allocation6 + $0x288] sm:$0xff]
    %v1461 = vld [vmem:[#allocation6 + $0x290] sm:$0xff]
    %v1462 = vld [vmem:[#allocation6 + $0x298] sm:$0xff]
    %v1463 = vld [vmem:[#allocation6 + $0x2a0] sm:$0xff]
    %v1464 = vld [vmem:[#allocation6 + $0x2a8] sm:$0xff]
    %v1465 = vld [vmem:[#allocation6 + $0x2b0] sm:$0xff]
    %v1466 = vld [vmem:[#allocation6 + $0x2b8] sm:$0xff]
    %v1467 = vld [vmem:[#allocation6 + $0x2c0] sm:$0xff]
    %v1468 = vld [vmem:[#allocation6 + $0x2c8] sm:$0xff]
    %v1469 = vld [vmem:[#allocation6 + $0x2d0] sm:$0xff]
    %v1470 = vld [vmem:[#allocation6 + $0x2d8] sm:$0xff]
    %v1471 = vld [vmem:[#allocation6 + $0x2e0] sm:$0xff]
    %v1472 = vld [vmem:[#allocation6 + $0x2e8] sm:$0xff]
    %v1473 = vld [vmem:[#allocation6 + $0x2f0] sm:$0xff]
    %v1474 = vld [vmem:[#allocation6 + $0x2f8] sm:$0xff]
    %v1475 = vld [vmem:[#allocation6 + $0x300] sm:$0xff]
    %v1476 = vld [vmem:[#allocation6 + $0x308] sm:$0xff]
    %v1477 = vld [vmem:[#allocation6 + $0x310] sm:$0xff]
    %v1478 = vld [vmem:[#allocation6 + $0x318] sm:$0xff]
    %v1479 = vld [vmem:[#allocation6 + $0x320] sm:$0xff]
    %v1480 = vld [vmem:[#allocation6 + $0x328] sm:$0xff]
    %v1481 = vld [vmem:[#allocation6 + $0x330] sm:$0xff]
    %v1482 = vld [vmem:[#allocation6 + $0x338] sm:$0xff]
    %v1483 = vld [vmem:[#allocation6 + $0x340] sm:$0xff]
    %v1484 = vld [vmem:[#allocation6 + $0x348] sm:$0xff]
    %v1485 = vld [vmem:[#allocation6 + $0x350] sm:$0xff]
    %v1486 = vld [vmem:[#allocation6 + $0x358] sm:$0xff]
    %v1487 = vld [vmem:[#allocation6 + $0x360] sm:$0xff]
    %v1488 = vld [vmem:[#allocation6 + $0x368] sm:$0xff]
    %v1489 = vld [vmem:[#allocation6 + $0x370] sm:$0xff]
    %v1490 = vld [vmem:[#allocation6 + $0x378] sm:$0xff]
    %v1491 = vld [vmem:[#allocation6 + $0x380] sm:$0xff]
    %v1492 = vld [vmem:[#allocation6 + $0x388] sm:$0xff]
    %v1493 = vld [vmem:[#allocation6 + $0x390] sm:$0xff]
    %v1494 = vld [vmem:[#allocation6 + $0x398] sm:$0xff]
    %v1495 = vld [vmem:[#allocation6 + $0x3a0] sm:$0xff]
    %v1496 = vld [vmem:[#allocation6 + $0x3a8] sm:$0xff]
    %v1497 = vld [vmem:[#allocation6 + $0x3b0] sm:$0xff]
    %v1498 = vld [vmem:[#allocation6 + $0x3b8] sm:$0xff]
    %v1499 = vld [vmem:[#allocation6 + $0x3c0] sm:$0xff]
    %v1500 = vld [vmem:[#allocation6 + $0x3c8] sm:$0xff]
    %v1501 = vld [vmem:[#allocation6 + $0x3d0] sm:$0xff]
    %v1502 = vld [vmem:[#allocation6 + $0x3d8] sm:$0xff]
    %v1503 = vld [vmem:[#allocation6 + $0x3e0] sm:$0xff]
    %v1504 = vld [vmem:[#allocation6 + $0x3e8] sm:$0xff]
    %v1505 = vld [vmem:[#allocation6 + $0x3f0] sm:$0xff]
    %v1506 = vld [vmem:[#allocation6 + $0x3f8] sm:$0xff]
    %v1507 = vld [vmem:[#allocation6 + $0x400] sm:$0xff]
    %v1508 = vld [vmem:[#allocation6 + $0x408] sm:$0xff]
    %v1509 = vld [vmem:[#allocation6 + $0x410] sm:$0xff]
    %v1510 = vld [vmem:[#allocation6 + $0x418] sm:$0xff]
    %v1511 = vld [vmem:[#allocation6 + $0x420] sm:$0xff]
    %v1512 = vld [vmem:[#allocation6 + $0x428] sm:$0xff]
    %v1513 = vld [vmem:[#allocation6 + $0x430] sm:$0xff]
    %v1514 = vld [vmem:[#allocation6 + $0x438] sm:$0xff]
    %v1515 = vld [vmem:[#allocation6 + $0x440] sm:$0xff]
    %v1516 = vld [vmem:[#allocation6 + $0x448] sm:$0xff]
    %v1517 = vld [vmem:[#allocation6 + $0x450] sm:$0xff]
    %v1518 = vld [vmem:[#allocation6 + $0x458] sm:$0xff]
    %v1519 = vld [vmem:[#allocation6 + $0x460] sm:$0xff]
    %v1520 = vld [vmem:[#allocation6 + $0x468] sm:$0xff]
    %v1521 = vld [vmem:[#allocation6 + $0x470] sm:$0xff]
    %v1522 = vld [vmem:[#allocation6 + $0x478] sm:$0xff]
    %v1523 = vld [vmem:[#allocation6 + $0x480] sm:$0xff]
    %v1524 = vld [vmem:[#allocation6 + $0x488] sm:$0xff]
    %v1525 = vld [vmem:[#allocation6 + $0x490] sm:$0xff]
    %v1526 = vld [vmem:[#allocation6 + $0x498] sm:$0xff]
    %v1527 = vld [vmem:[#allocation6 + $0x4a0] sm:$0xff]
    %v1528 = vld [vmem:[#allocation6 + $0x4a8] sm:$0xff]
    %v1529 = vld [vmem:[#allocation6 + $0x4b0] sm:$0xff]
    %v1530 = vld [vmem:[#allocation6 + $0x4b8] sm:$0xff]
    %v1531 = vld [vmem:[#allocation6 + $0x4c0] sm:$0xff]
    %v1532 = vld [vmem:[#allocation6 + $0x4c8] sm:$0xff]
    %v1533 = vld [vmem:[#allocation6 + $0x4d0] sm:$0xff]
    %v1534 = vld [vmem:[#allocation6 + $0x4d8] sm:$0xff]
    %v1535 = vld [vmem:[#allocation6 + $0x4e0] sm:$0xff]
    %v1536 = vld [vmem:[#allocation6 + $0x4e8] sm:$0xff]
    %v1537 = vld [vmem:[#allocation6 + $0x4f0] sm:$0xff]
    %v1538 = vld [vmem:[#allocation6 + $0x4f8] sm:$0xff]
    %v1539 = vld [vmem:[#allocation6 + $0x500] sm:$0xff]
    %v1540 = vld [vmem:[#allocation6 + $0x508] sm:$0xff]
    %v1541 = vld [vmem:[#allocation6 + $0x510] sm:$0xff]
    %v1542 = vld [vmem:[#allocation6 + $0x518] sm:$0xff]
    %v1543 = vld [vmem:[#allocation6 + $0x520] sm:$0xff]
    %v1544 = vld [vmem:[#allocation6 + $0x528] sm:$0xff]
    %v1545 = vld [vmem:[#allocation6 + $0x530] sm:$0xff]
    %v1546 = vld [vmem:[#allocation6 + $0x538] sm:$0xff]
    %v1547 = vld [vmem:[#allocation6 + $0x540] sm:$0xff]
    %v1548 = vld [vmem:[#allocation6 + $0x548] sm:$0xff]
    %v1549 = vld [vmem:[#allocation6 + $0x550] sm:$0xff]
    %v1550 = vld [vmem:[#allocation6 + $0x558] sm:$0xff]
    %v1551 = vld [vmem:[#allocation6 + $0x560] sm:$0xff]
    %v1552 = vld [vmem:[#allocation6 + $0x568] sm:$0xff]
    %v1553 = vld [vmem:[#allocation6 + $0x570] sm:$0xff]
    %v1554 = vld [vmem:[#allocation6 + $0x578] sm:$0xff]
    %v1555 = vld [vmem:[#allocation6 + $0x580] sm:$0xff]
    %v1556 = vld [vmem:[#allocation6 + $0x588] sm:$0xff]
    %v1557 = vld [vmem:[#allocation6 + $0x590] sm:$0xff]
    %v1558 = vld [vmem:[#allocation6 + $0x598] sm:$0xff]
    %v1559 = vld [vmem:[#allocation6 + $0x5a0] sm:$0xff]
    %v1560 = vld [vmem:[#allocation6 + $0x5a8] sm:$0xff]
    %v1561 = vld [vmem:[#allocation6 + $0x5b0] sm:$0xff]
    %v1562 = vld [vmem:[#allocation6 + $0x5b8] sm:$0xff]
    %v1563 = vld [vmem:[#allocation6 + $0x5c0] sm:$0xff]
    %v1564 = vld [vmem:[#allocation6 + $0x5c8] sm:$0xff]
    %v1565 = vld [vmem:[#allocation6 + $0x5d0] sm:$0xff]
    %v1566 = vld [vmem:[#allocation6 + $0x5d8] sm:$0xff]
    %v1567 = vld [vmem:[#allocation6 + $0x5e0] sm:$0xff]
    %v1568 = vld [vmem:[#allocation6 + $0x5e8] sm:$0xff]
    %v1569 = vld [vmem:[#allocation6 + $0x5f0] sm:$0xff]
    %v1570 = vld [vmem:[#allocation6 + $0x5f8] sm:$0xff]
    %v1571 = vld [vmem:[#allocation6 + $0x600] sm:$0xff]
    %v1572 = vld [vmem:[#allocation6 + $0x608] sm:$0xff]
    %v1573 = vld [vmem:[#allocation6 + $0x610] sm:$0xff]
    %v1574 = vld [vmem:[#allocation6 + $0x618] sm:$0xff]
    %v1575 = vld [vmem:[#allocation6 + $0x620] sm:$0xff]
    %v1576 = vld [vmem:[#allocation6 + $0x628] sm:$0xff]
    %v1577 = vld [vmem:[#allocation6 + $0x630] sm:$0xff]
    %v1578 = vld [vmem:[#allocation6 + $0x638] sm:$0xff]
    %v1579 = vld [vmem:[#allocation6 + $0x640] sm:$0xff]
    %v1580 = vld [vmem:[#allocation6 + $0x648] sm:$0xff]
    %v1581 = vld [vmem:[#allocation6 + $0x650] sm:$0xff]
    %v1582 = vld [vmem:[#allocation6 + $0x658] sm:$0xff]
    %v1583 = vld [vmem:[#allocation6 + $0x660] sm:$0xff]
    %v1584 = vld [vmem:[#allocation6 + $0x668] sm:$0xff]
    %v1585 = vld [vmem:[#allocation6 + $0x670] sm:$0xff]
    %v1586 = vld [vmem:[#allocation6 + $0x678] sm:$0xff]
    %v1587 = vld [vmem:[#allocation6 + $0x680] sm:$0xff]
    %v1588 = vld [vmem:[#allocation6 + $0x688] sm:$0xff]
    %v1589 = vld [vmem:[#allocation6 + $0x690] sm:$0xff]
    %v1590 = vld [vmem:[#allocation6 + $0x698] sm:$0xff]
    %v1591 = vld [vmem:[#allocation6 + $0x6a0] sm:$0xff]
    %v1592 = vld [vmem:[#allocation6 + $0x6a8] sm:$0xff]
    %v1593 = vld [vmem:[#allocation6 + $0x6b0] sm:$0xff]
    %v1594 = vld [vmem:[#allocation6 + $0x6b8] sm:$0xff]
    %v1595 = vld [vmem:[#allocation6 + $0x6c0] sm:$0xff]
    %v1596 = vld [vmem:[#allocation6 + $0x6c8] sm:$0xff]
    %v1597 = vld [vmem:[#allocation6 + $0x6d0] sm:$0xff]
    %v1598 = vld [vmem:[#allocation6 + $0x6d8] sm:$0xff]
    %v1599 = vld [vmem:[#allocation6 + $0x6e0] sm:$0xff]
    %v1600 = vld [vmem:[#allocation6 + $0x6e8] sm:$0xff]
    %v1601 = vld [vmem:[#allocation6 + $0x6f0] sm:$0xff]
    %v1602 = vld [vmem:[#allocation6 + $0x6f8] sm:$0xff]
    %v1603 = vld [vmem:[#allocation6 + $0x700] sm:$0xff]
    %v1604 = vld [vmem:[#allocation6 + $0x708] sm:$0xff]
    %v1605 = vld [vmem:[#allocation6 + $0x710] sm:$0xff]
    %v1606 = vld [vmem:[#allocation6 + $0x718] sm:$0xff]
    %v1607 = vld [vmem:[#allocation6 + $0x720] sm:$0xff]
    %v1608 = vld [vmem:[#allocation6 + $0x728] sm:$0xff]
    %v1609 = vld [vmem:[#allocation6 + $0x730] sm:$0xff]
    %v1610 = vld [vmem:[#allocation6 + $0x738] sm:$0xff]
    %v1611 = vld [vmem:[#allocation6 + $0x740] sm:$0xff]
    %v1612 = vld [vmem:[#allocation6 + $0x748] sm:$0xff]
    %v1613 = vld [vmem:[#allocation6 + $0x750] sm:$0xff]
    %v1614 = vld [vmem:[#allocation6 + $0x758] sm:$0xff]
    %v1615 = vld [vmem:[#allocation6 + $0x760] sm:$0xff]
    %v1616 = vld [vmem:[#allocation6 + $0x768] sm:$0xff]
    %v1617 = vld [vmem:[#allocation6 + $0x770] sm:$0xff]
    %v1618 = vld [vmem:[#allocation6 + $0x778] sm:$0xff]
    %v1619 = vld [vmem:[#allocation6 + $0x780] sm:$0xff]
    %v1620 = vld [vmem:[#allocation6 + $0x788] sm:$0xff]
    %v1621 = vld [vmem:[#allocation6 + $0x790] sm:$0xff]
    %v1622 = vld [vmem:[#allocation6 + $0x798] sm:$0xff]
    %v1623 = vld [vmem:[#allocation6 + $0x7a0] sm:$0xff]
    %v1624 = vld [vmem:[#allocation6 + $0x7a8] sm:$0xff]
    %v1625 = vld [vmem:[#allocation6 + $0x7b0] sm:$0xff]
    %v1626 = vld [vmem:[#allocation6 + $0x7b8] sm:$0xff]
    %v1627 = vld [vmem:[#allocation6 + $0x7c0] sm:$0xff]
    %v1628 = vld [vmem:[#allocation6 + $0x7c8] sm:$0xff]
    %v1629 = vld [vmem:[#allocation6 + $0x7d0] sm:$0xff]
    %v1630 = vld [vmem:[#allocation6 + $0x7d8] sm:$0xff]
    %v1631 = vld [vmem:[#allocation6 + $0x7e0] sm:$0xff]
    %v1632 = vld [vmem:[#allocation6 + $0x7e8] sm:$0xff]
    %v1633 = vld [vmem:[#allocation6 + $0x7f0] sm:$0xff]
    %v1634 = vld [vmem:[#allocation6 + $0x7f8] sm:$0xff]
    %v1635 = vld [vmem:[#allocation6 + $0x800] sm:$0xff]
    %v1636 = vld [vmem:[#allocation6 + $0x808] sm:$0xff]
    %v1637 = vld [vmem:[#allocation6 + $0x810] sm:$0xff]
    %v1638 = vld [vmem:[#allocation6 + $0x818] sm:$0xff]
    %v1639 = vld [vmem:[#allocation6 + $0x820] sm:$0xff]
    %v1640 = vld [vmem:[#allocation6 + $0x828] sm:$0xff]
    %v1641 = vld [vmem:[#allocation6 + $0x830] sm:$0xff]
    %v1642 = vld [vmem:[#allocation6 + $0x838] sm:$0xff]
    %v1643 = vld [vmem:[#allocation6 + $0x840] sm:$0xff]
    %v1644 = vld [vmem:[#allocation6 + $0x848] sm:$0xff]
    %v1645 = vld [vmem:[#allocation6 + $0x850] sm:$0xff]
    %v1646 = vld [vmem:[#allocation6 + $0x858] sm:$0xff]
    %v1647 = vld [vmem:[#allocation6 + $0x860] sm:$0xff]
    %v1648 = vld [vmem:[#allocation6 + $0x868] sm:$0xff]
    %v1649 = vld [vmem:[#allocation6 + $0x870] sm:$0xff]
    %v1650 = vld [vmem:[#allocation6 + $0x878] sm:$0xff]
    %v1651 = vld [vmem:[#allocation6 + $0x880] sm:$0xff]
    %v1652 = vld [vmem:[#allocation6 + $0x888] sm:$0xff]
    %v1653 = vld [vmem:[#allocation6 + $0x890] sm:$0xff]
    %v1654 = vld [vmem:[#allocation6 + $0x898] sm:$0xff]
    %v1655 = vld [vmem:[#allocation6 + $0x8a0] sm:$0xff]
    %v1656 = vld [vmem:[#allocation6 + $0x8a8] sm:$0xff]
    %v1657 = vld [vmem:[#allocation6 + $0x8b0] sm:$0xff]
    %v1658 = vld [vmem:[#allocation6 + $0x8b8] sm:$0xff]
    %v1659 = vld [vmem:[#allocation6 + $0x8c0] sm:$0xff]
    %v1660 = vld [vmem:[#allocation6 + $0x8c8] sm:$0xff]
    %v1661 = vld [vmem:[#allocation6 + $0x8d0] sm:$0xff]
    %v1662 = vld [vmem:[#allocation6 + $0x8d8] sm:$0xff]
    %v1663 = vld [vmem:[#allocation6 + $0x8e0] sm:$0xff]
    %v1664 = vld [vmem:[#allocation6 + $0x8e8] sm:$0xff]
    %v1665 = vld [vmem:[#allocation6 + $0x8f0] sm:$0xff]
    %v1666 = vld [vmem:[#allocation6 + $0x8f8] sm:$0xff]
    %v1955 = vunpack.c.l.b16 %v1379
    %v1956 = vunpack.c.h.b16 %v1379
    %v1957 = vunpack.c.l.b16 %v1380
    %v1958 = vunpack.c.h.b16 %v1380
    %v1959 = vunpack.c.l.b16 %v1381
    %v1960 = vunpack.c.h.b16 %v1381
    %v1961 = vunpack.c.l.b16 %v1382
    %v1962 = vunpack.c.h.b16 %v1382
    %v1963 = vunpack.c.l.b16 %v1383
    %v1964 = vunpack.c.h.b16 %v1383
    %v1965 = vunpack.c.l.b16 %v1384
    %v1966 = vunpack.c.h.b16 %v1384
    %v1967 = vunpack.c.l.b16 %v1385
    %v1968 = vunpack.c.h.b16 %v1385
    %v1969 = vunpack.c.l.b16 %v1386
    %v1970 = vunpack.c.h.b16 %v1386
    %v1971 = vunpack.c.l.b16 %v1387
    %v1972 = vunpack.c.h.b16 %v1387
    %v1973 = vunpack.c.l.b16 %v1388
    %v1974 = vunpack.c.h.b16 %v1388
    %v1975 = vunpack.c.l.b16 %v1389
    %v1976 = vunpack.c.h.b16 %v1389
    %v1977 = vunpack.c.l.b16 %v1390
    %v1978 = vunpack.c.h.b16 %v1390
    %v1979 = vunpack.c.l.b16 %v1391
    %v1980 = vunpack.c.h.b16 %v1391
    %v1981 = vunpack.c.l.b16 %v1392
    %v1982 = vunpack.c.h.b16 %v1392
    %v1983 = vunpack.c.l.b16 %v1393
    %v1984 = vunpack.c.h.b16 %v1393
    %v1985 = vunpack.c.l.b16 %v1394
    %v1986 = vunpack.c.h.b16 %v1394
    %v1987 = vunpack.c.l.b16 %v1395
    %v1988 = vunpack.c.h.b16 %v1395
    %v1989 = vunpack.c.l.b16 %v1396
    %v1990 = vunpack.c.h.b16 %v1396
    %v1991 = vunpack.c.l.b16 %v1397
    %v1992 = vunpack.c.h.b16 %v1397
    %v1993 = vunpack.c.l.b16 %v1398
    %v1994 = vunpack.c.h.b16 %v1398
    %v1995 = vunpack.c.l.b16 %v1399
    %v1996 = vunpack.c.h.b16 %v1399
    %v1997 = vunpack.c.l.b16 %v1400
    %v1998 = vunpack.c.h.b16 %v1400
    %v1999 = vunpack.c.l.b16 %v1401
    %v2000 = vunpack.c.h.b16 %v1401
    %v2001 = vunpack.c.l.b16 %v1402
    %v2002 = vunpack.c.h.b16 %v1402
    %v2003 = vunpack.c.l.b16 %v1403
    %v2004 = vunpack.c.h.b16 %v1403
    %v2005 = vunpack.c.l.b16 %v1404
    %v2006 = vunpack.c.h.b16 %v1404
    %v2007 = vunpack.c.l.b16 %v1405
    %v2008 = vunpack.c.h.b16 %v1405
    %v2009 = vunpack.c.l.b16 %v1406
    %v2010 = vunpack.c.h.b16 %v1406
    %v2011 = vunpack.c.l.b16 %v1407
    %v2012 = vunpack.c.h.b16 %v1407
    %v2013 = vunpack.c.l.b16 %v1408
    %v2014 = vunpack.c.h.b16 %v1408
    %v2015 = vunpack.c.l.b16 %v1409
    %v2016 = vunpack.c.h.b16 %v1409
    %v2017 = vunpack.c.l.b16 %v1410
    %v2018 = vunpack.c.h.b16 %v1410
    %v2019 = vunpack.c.l.b16 %v1411
    %v2020 = vunpack.c.h.b16 %v1411
    %v2021 = vunpack.c.l.b16 %v1412
    %v2022 = vunpack.c.h.b16 %v1412
    %v2023 = vunpack.c.l.b16 %v1413
    %v2024 = vunpack.c.h.b16 %v1413
    %v2025 = vunpack.c.l.b16 %v1414
    %v2026 = vunpack.c.h.b16 %v1414
    %v2027 = vunpack.c.l.b16 %v1415
    %v2028 = vunpack.c.h.b16 %v1415
    %v2029 = vunpack.c.l.b16 %v1416
    %v2030 = vunpack.c.h.b16 %v1416
    %v2031 = vunpack.c.l.b16 %v1417
    %v2032 = vunpack.c.h.b16 %v1417
    %v2033 = vunpack.c.l.b16 %v1418
    %v2034 = vunpack.c.h.b16 %v1418
    %v2035 = vunpack.c.l.b16 %v1419
    %v2036 = vunpack.c.h.b16 %v1419
    %v2037 = vunpack.c.l.b16 %v1420
    %v2038 = vunpack.c.h.b16 %v1420
    %v2039 = vunpack.c.l.b16 %v1421
    %v2040 = vunpack.c.h.b16 %v1421
    %v2041 = vunpack.c.l.b16 %v1422
    %v2042 = vunpack.c.h.b16 %v1422
    %v2043 = vunpack.c.l.b16 %v1423
    %v2044 = vunpack.c.h.b16 %v1423
    %v2045 = vunpack.c.l.b16 %v1424
    %v2046 = vunpack.c.h.b16 %v1424
    %v2047 = vunpack.c.l.b16 %v1425
    %v2048 = vunpack.c.h.b16 %v1425
    %v2049 = vunpack.c.l.b16 %v1426
    %v2050 = vunpack.c.h.b16 %v1426
    %v2051 = vunpack.c.l.b16 %v1427
    %v2052 = vunpack.c.h.b16 %v1427
    %v2053 = vunpack.c.l.b16 %v1428
    %v2054 = vunpack.c.h.b16 %v1428
    %v2055 = vunpack.c.l.b16 %v1429
    %v2056 = vunpack.c.h.b16 %v1429
    %v2057 = vunpack.c.l.b16 %v1430
    %v2058 = vunpack.c.h.b16 %v1430
    %v2059 = vunpack.c.l.b16 %v1431
    %v2060 = vunpack.c.h.b16 %v1431
    %v2061 = vunpack.c.l.b16 %v1432
    %v2062 = vunpack.c.h.b16 %v1432
    %v2063 = vunpack.c.l.b16 %v1433
    %v2064 = vunpack.c.h.b16 %v1433
    %v2065 = vunpack.c.l.b16 %v1434
    %v2066 = vunpack.c.h.b16 %v1434
    %v2067 = vunpack.c.l.b16 %v1435
    %v2068 = vunpack.c.h.b16 %v1435
    %v2069 = vunpack.c.l.b16 %v1436
    %v2070 = vunpack.c.h.b16 %v1436
    %v2071 = vunpack.c.l.b16 %v1437
    %v2072 = vunpack.c.h.b16 %v1437
    %v2073 = vunpack.c.l.b16 %v1438
    %v2074 = vunpack.c.h.b16 %v1438
    %v2075 = vunpack.c.l.b16 %v1439
    %v2076 = vunpack.c.h.b16 %v1439
    %v2077 = vunpack.c.l.b16 %v1440
    %v2078 = vunpack.c.h.b16 %v1440
    %v2079 = vunpack.c.l.b16 %v1441
    %v2080 = vunpack.c.h.b16 %v1441
    %v2081 = vunpack.c.l.b16 %v1442
    %v2082 = vunpack.c.h.b16 %v1442
    %v2083 = vunpack.c.l.b16 %v1443
    %v2084 = vunpack.c.h.b16 %v1443
    %v2085 = vunpack.c.l.b16 %v1444
    %v2086 = vunpack.c.h.b16 %v1444
    %v2087 = vunpack.c.l.b16 %v1445
    %v2088 = vunpack.c.h.b16 %v1445
    %v2089 = vunpack.c.l.b16 %v1446
    %v2090 = vunpack.c.h.b16 %v1446
    %v2091 = vunpack.c.l.b16 %v1447
    %v2092 = vunpack.c.h.b16 %v1447
    %v2093 = vunpack.c.l.b16 %v1448
    %v2094 = vunpack.c.h.b16 %v1448
    %v2095 = vunpack.c.l.b16 %v1449
    %v2096 = vunpack.c.h.b16 %v1449
    %v2097 = vunpack.c.l.b16 %v1450
    %v2098 = vunpack.c.h.b16 %v1450
    %v2099 = vunpack.c.l.b16 %v1451
    %v2100 = vunpack.c.h.b16 %v1451
    %v2101 = vunpack.c.l.b16 %v1452
    %v2102 = vunpack.c.h.b16 %v1452
    %v2103 = vunpack.c.l.b16 %v1453
    %v2104 = vunpack.c.h.b16 %v1453
    %v2105 = vunpack.c.l.b16 %v1454
    %v2106 = vunpack.c.h.b16 %v1454
    %v2107 = vunpack.c.l.b16 %v1455
    %v2108 = vunpack.c.h.b16 %v1455
    %v2109 = vunpack.c.l.b16 %v1456
    %v2110 = vunpack.c.h.b16 %v1456
    %v2111 = vunpack.c.l.b16 %v1457
    %v2112 = vunpack.c.h.b16 %v1457
    %v2113 = vunpack.c.l.b16 %v1458
    %v2114 = vunpack.c.h.b16 %v1458
    %v2115 = vunpack.c.l.b16 %v1459
    %v2116 = vunpack.c.h.b16 %v1459
    %v2117 = vunpack.c.l.b16 %v1460
    %v2118 = vunpack.c.h.b16 %v1460
    %v2119 = vunpack.c.l.b16 %v1461
    %v2120 = vunpack.c.h.b16 %v1461
    %v2121 = vunpack.c.l.b16 %v1462
    %v2122 = vunpack.c.h.b16 %v1462
    %v2123 = vunpack.c.l.b16 %v1463
    %v2124 = vunpack.c.h.b16 %v1463
    %v2125 = vunpack.c.l.b16 %v1464
    %v2126 = vunpack.c.h.b16 %v1464
    %v2127 = vunpack.c.l.b16 %v1465
    %v2128 = vunpack.c.h.b16 %v1465
    %v2129 = vunpack.c.l.b16 %v1466
    %v2130 = vunpack.c.h.b16 %v1466
    %v2131 = vunpack.c.l.b16 %v1467
    %v2132 = vunpack.c.h.b16 %v1467
    %v2133 = vunpack.c.l.b16 %v1468
    %v2134 = vunpack.c.h.b16 %v1468
    %v2135 = vunpack.c.l.b16 %v1469
    %v2136 = vunpack.c.h.b16 %v1469
    %v2137 = vunpack.c.l.b16 %v1470
    %v2138 = vunpack.c.h.b16 %v1470
    %v2139 = vunpack.c.l.b16 %v1471
    %v2140 = vunpack.c.h.b16 %v1471
    %v2141 = vunpack.c.l.b16 %v1472
    %v2142 = vunpack.c.h.b16 %v1472
    %v2143 = vunpack.c.l.b16 %v1473
    %v2144 = vunpack.c.h.b16 %v1473
    %v2145 = vunpack.c.l.b16 %v1474
    %v2146 = vunpack.c.h.b16 %v1474
    %v2147 = vunpack.c.l.b16 %v1475
    %v2148 = vunpack.c.h.b16 %v1475
    %v2149 = vunpack.c.l.b16 %v1476
    %v2150 = vunpack.c.h.b16 %v1476
    %v2151 = vunpack.c.l.b16 %v1477
    %v2152 = vunpack.c.h.b16 %v1477
    %v2153 = vunpack.c.l.b16 %v1478
    %v2154 = vunpack.c.h.b16 %v1478
    %v2155 = vunpack.c.l.b16 %v1479
    %v2156 = vunpack.c.h.b16 %v1479
    %v2157 = vunpack.c.l.b16 %v1480
    %v2158 = vunpack.c.h.b16 %v1480
    %v2159 = vunpack.c.l.b16 %v1481
    %v2160 = vunpack.c.h.b16 %v1481
    %v2161 = vunpack.c.l.b16 %v1482
    %v2162 = vunpack.c.h.b16 %v1482
    %v2163 = vunpack.c.l.b16 %v1483
    %v2164 = vunpack.c.h.b16 %v1483
    %v2165 = vunpack.c.l.b16 %v1484
    %v2166 = vunpack.c.h.b16 %v1484
    %v2167 = vunpack.c.l.b16 %v1485
    %v2168 = vunpack.c.h.b16 %v1485
    %v2169 = vunpack.c.l.b16 %v1486
    %v2170 = vunpack.c.h.b16 %v1486
    %v2171 = vunpack.c.l.b16 %v1487
    %v2172 = vunpack.c.h.b16 %v1487
    %v2173 = vunpack.c.l.b16 %v1488
    %v2174 = vunpack.c.h.b16 %v1488
    %v2175 = vunpack.c.l.b16 %v1489
    %v2176 = vunpack.c.h.b16 %v1489
    %v2177 = vunpack.c.l.b16 %v1490
    %v2178 = vunpack.c.h.b16 %v1490
    %v2179 = vunpack.c.l.b16 %v1491
    %v2180 = vunpack.c.h.b16 %v1491
    %v2181 = vunpack.c.l.b16 %v1492
    %v2182 = vunpack.c.h.b16 %v1492
    %v2183 = vunpack.c.l.b16 %v1493
    %v2184 = vunpack.c.h.b16 %v1493
    %v2185 = vunpack.c.l.b16 %v1494
    %v2186 = vunpack.c.h.b16 %v1494
    %v2187 = vunpack.c.l.b16 %v1495
    %v2188 = vunpack.c.h.b16 %v1495
    %v2189 = vunpack.c.l.b16 %v1496
    %v2190 = vunpack.c.h.b16 %v1496
    %v2191 = vunpack.c.l.b16 %v1497
    %v2192 = vunpack.c.h.b16 %v1497
    %v2193 = vunpack.c.l.b16 %v1498
    %v2194 = vunpack.c.h.b16 %v1498
    %v2195 = vunpack.c.l.b16 %v1499
    %v2196 = vunpack.c.h.b16 %v1499
    %v2197 = vunpack.c.l.b16 %v1500
    %v2198 = vunpack.c.h.b16 %v1500
    %v2199 = vunpack.c.l.b16 %v1501
    %v2200 = vunpack.c.h.b16 %v1501
    %v2201 = vunpack.c.l.b16 %v1502
    %v2202 = vunpack.c.h.b16 %v1502
    %v2203 = vunpack.c.l.b16 %v1503
    %v2204 = vunpack.c.h.b16 %v1503
    %v2205 = vunpack.c.l.b16 %v1504
    %v2206 = vunpack.c.h.b16 %v1504
    %v2207 = vunpack.c.l.b16 %v1505
    %v2208 = vunpack.c.h.b16 %v1505
    %v2209 = vunpack.c.l.b16 %v1506
    %v2210 = vunpack.c.h.b16 %v1506
    %v2211 = vunpack.c.l.b16 %v1507
    %v2212 = vunpack.c.h.b16 %v1507
    %v2213 = vunpack.c.l.b16 %v1508
    %v2214 = vunpack.c.h.b16 %v1508
    %v2215 = vunpack.c.l.b16 %v1509
    %v2216 = vunpack.c.h.b16 %v1509
    %v2217 = vunpack.c.l.b16 %v1510
    %v2218 = vunpack.c.h.b16 %v1510
    %v2219 = vunpack.c.l.b16 %v1511
    %v2220 = vunpack.c.h.b16 %v1511
    %v2221 = vunpack.c.l.b16 %v1512
    %v2222 = vunpack.c.h.b16 %v1512
    %v2223 = vunpack.c.l.b16 %v1513
    %v2224 = vunpack.c.h.b16 %v1513
    %v2225 = vunpack.c.l.b16 %v1514
    %v2226 = vunpack.c.h.b16 %v1514
    %v2227 = vunpack.c.l.b16 %v1515
    %v2228 = vunpack.c.h.b16 %v1515
    %v2229 = vunpack.c.l.b16 %v1516
    %v2230 = vunpack.c.h.b16 %v1516
    %v2231 = vunpack.c.l.b16 %v1517
    %v2232 = vunpack.c.h.b16 %v1517
    %v2233 = vunpack.c.l.b16 %v1518
    %v2234 = vunpack.c.h.b16 %v1518
    %v2235 = vunpack.c.l.b16 %v1519
    %v2236 = vunpack.c.h.b16 %v1519
    %v2237 = vunpack.c.l.b16 %v1520
    %v2238 = vunpack.c.h.b16 %v1520
    %v2239 = vunpack.c.l.b16 %v1521
    %v2240 = vunpack.c.h.b16 %v1521
    %v2241 = vunpack.c.l.b16 %v1522
    %v2242 = vunpack.c.h.b16 %v1522
    %v2243 = vunpack.c.l.b16 %v1523
    %v2244 = vunpack.c.h.b16 %v1523
    %v2245 = vunpack.c.l.b16 %v1524
    %v2246 = vunpack.c.h.b16 %v1524
    %v2247 = vunpack.c.l.b16 %v1525
    %v2248 = vunpack.c.h.b16 %v1525
    %v2249 = vunpack.c.l.b16 %v1526
    %v2250 = vunpack.c.h.b16 %v1526
    %v2251 = vunpack.c.l.b16 %v1527
    %v2252 = vunpack.c.h.b16 %v1527
    %v2253 = vunpack.c.l.b16 %v1528
    %v2254 = vunpack.c.h.b16 %v1528
    %v2255 = vunpack.c.l.b16 %v1529
    %v2256 = vunpack.c.h.b16 %v1529
    %v2257 = vunpack.c.l.b16 %v1530
    %v2258 = vunpack.c.h.b16 %v1530
    %v2259 = vunpack.c.l.b16 %v1531
    %v2260 = vunpack.c.h.b16 %v1531
    %v2261 = vunpack.c.l.b16 %v1532
    %v2262 = vunpack.c.h.b16 %v1532
    %v2263 = vunpack.c.l.b16 %v1533
    %v2264 = vunpack.c.h.b16 %v1533
    %v2265 = vunpack.c.l.b16 %v1534
    %v2266 = vunpack.c.h.b16 %v1534
    %v2267 = vunpack.c.l.b16 %v1535
    %v2268 = vunpack.c.h.b16 %v1535
    %v2269 = vunpack.c.l.b16 %v1536
    %v2270 = vunpack.c.h.b16 %v1536
    %v2271 = vunpack.c.l.b16 %v1537
    %v2272 = vunpack.c.h.b16 %v1537
    %v2273 = vunpack.c.l.b16 %v1538
    %v2274 = vunpack.c.h.b16 %v1538
    %v2275 = vunpack.c.l.b16 %v1539
    %v2276 = vunpack.c.h.b16 %v1539
    %v2277 = vunpack.c.l.b16 %v1540
    %v2278 = vunpack.c.h.b16 %v1540
    %v2279 = vunpack.c.l.b16 %v1541
    %v2280 = vunpack.c.h.b16 %v1541
    %v2281 = vunpack.c.l.b16 %v1542
    %v2282 = vunpack.c.h.b16 %v1542
    %v2283 = vunpack.c.l.b16 %v1543
    %v2284 = vunpack.c.h.b16 %v1543
    %v2285 = vunpack.c.l.b16 %v1544
    %v2286 = vunpack.c.h.b16 %v1544
    %v2287 = vunpack.c.l.b16 %v1545
    %v2288 = vunpack.c.h.b16 %v1545
    %v2289 = vunpack.c.l.b16 %v1546
    %v2290 = vunpack.c.h.b16 %v1546
    %v2291 = vunpack.c.l.b16 %v1547
    %v2292 = vunpack.c.h.b16 %v1547
    %v2293 = vunpack.c.l.b16 %v1548
    %v2294 = vunpack.c.h.b16 %v1548
    %v2295 = vunpack.c.l.b16 %v1549
    %v2296 = vunpack.c.h.b16 %v1549
    %v2297 = vunpack.c.l.b16 %v1550
    %v2298 = vunpack.c.h.b16 %v1550
    %v2299 = vunpack.c.l.b16 %v1551
    %v2300 = vunpack.c.h.b16 %v1551
    %v2301 = vunpack.c.l.b16 %v1552
    %v2302 = vunpack.c.h.b16 %v1552
    %v2303 = vunpack.c.l.b16 %v1553
    %v2304 = vunpack.c.h.b16 %v1553
    %v2305 = vunpack.c.l.b16 %v1554
    %v2306 = vunpack.c.h.b16 %v1554
    %v2307 = vunpack.c.l.b16 %v1555
    %v2308 = vunpack.c.h.b16 %v1555
    %v2309 = vunpack.c.l.b16 %v1556
    %v2310 = vunpack.c.h.b16 %v1556
    %v2311 = vunpack.c.l.b16 %v1557
    %v2312 = vunpack.c.h.b16 %v1557
    %v2313 = vunpack.c.l.b16 %v1558
    %v2314 = vunpack.c.h.b16 %v1558
    %v2315 = vunpack.c.l.b16 %v1559
    %v2316 = vunpack.c.h.b16 %v1559
    %v2317 = vunpack.c.l.b16 %v1560
    %v2318 = vunpack.c.h.b16 %v1560
    %v2319 = vunpack.c.l.b16 %v1561
    %v2320 = vunpack.c.h.b16 %v1561
    %v2321 = vunpack.c.l.b16 %v1562
    %v2322 = vunpack.c.h.b16 %v1562
    %v2323 = vunpack.c.l.b16 %v1563
    %v2324 = vunpack.c.h.b16 %v1563
    %v2325 = vunpack.c.l.b16 %v1564
    %v2326 = vunpack.c.h.b16 %v1564
    %v2327 = vunpack.c.l.b16 %v1565
    %v2328 = vunpack.c.h.b16 %v1565
    %v2329 = vunpack.c.l.b16 %v1566
    %v2330 = vunpack.c.h.b16 %v1566
    %v2331 = vunpack.c.l.b16 %v1567
    %v2332 = vunpack.c.h.b16 %v1567
    %v2333 = vunpack.c.l.b16 %v1568
    %v2334 = vunpack.c.h.b16 %v1568
    %v2335 = vunpack.c.l.b16 %v1569
    %v2336 = vunpack.c.h.b16 %v1569
    %v2337 = vunpack.c.l.b16 %v1570
    %v2338 = vunpack.c.h.b16 %v1570
    %v2339 = vunpack.c.l.b16 %v1571
    %v2340 = vunpack.c.h.b16 %v1571
    %v2341 = vunpack.c.l.b16 %v1572
    %v2342 = vunpack.c.h.b16 %v1572
    %v2343 = vunpack.c.l.b16 %v1573
    %v2344 = vunpack.c.h.b16 %v1573
    %v2345 = vunpack.c.l.b16 %v1574
    %v2346 = vunpack.c.h.b16 %v1574
    %v2347 = vunpack.c.l.b16 %v1575
    %v2348 = vunpack.c.h.b16 %v1575
    %v2349 = vunpack.c.l.b16 %v1576
    %v2350 = vunpack.c.h.b16 %v1576
    %v2351 = vunpack.c.l.b16 %v1577
    %v2352 = vunpack.c.h.b16 %v1577
    %v2353 = vunpack.c.l.b16 %v1578
    %v2354 = vunpack.c.h.b16 %v1578
    %v2355 = vunpack.c.l.b16 %v1579
    %v2356 = vunpack.c.h.b16 %v1579
    %v2357 = vunpack.c.l.b16 %v1580
    %v2358 = vunpack.c.h.b16 %v1580
    %v2359 = vunpack.c.l.b16 %v1581
    %v2360 = vunpack.c.h.b16 %v1581
    %v2361 = vunpack.c.l.b16 %v1582
    %v2362 = vunpack.c.h.b16 %v1582
    %v2363 = vunpack.c.l.b16 %v1583
    %v2364 = vunpack.c.h.b16 %v1583
    %v2365 = vunpack.c.l.b16 %v1584
    %v2366 = vunpack.c.h.b16 %v1584
    %v2367 = vunpack.c.l.b16 %v1585
    %v2368 = vunpack.c.h.b16 %v1585
    %v2369 = vunpack.c.l.b16 %v1586
    %v2370 = vunpack.c.h.b16 %v1586
    %v2371 = vunpack.c.l.b16 %v1587
    %v2372 = vunpack.c.h.b16 %v1587
    %v2373 = vunpack.c.l.b16 %v1588
    %v2374 = vunpack.c.h.b16 %v1588
    %v2375 = vunpack.c.l.b16 %v1589
    %v2376 = vunpack.c.h.b16 %v1589
    %v2377 = vunpack.c.l.b16 %v1590
    %v2378 = vunpack.c.h.b16 %v1590
    %v2379 = vunpack.c.l.b16 %v1591
    %v2380 = vunpack.c.h.b16 %v1591
    %v2381 = vunpack.c.l.b16 %v1592
    %v2382 = vunpack.c.h.b16 %v1592
    %v2383 = vunpack.c.l.b16 %v1593
    %v2384 = vunpack.c.h.b16 %v1593
    %v2385 = vunpack.c.l.b16 %v1594
    %v2386 = vunpack.c.h.b16 %v1594
    %v2387 = vunpack.c.l.b16 %v1595
    %v2388 = vunpack.c.h.b16 %v1595
    %v2389 = vunpack.c.l.b16 %v1596
    %v2390 = vunpack.c.h.b16 %v1596
    %v2391 = vunpack.c.l.b16 %v1597
    %v2392 = vunpack.c.h.b16 %v1597
    %v2393 = vunpack.c.l.b16 %v1598
    %v2394 = vunpack.c.h.b16 %v1598
    %v2395 = vunpack.c.l.b16 %v1599
    %v2396 = vunpack.c.h.b16 %v1599
    %v2397 = vunpack.c.l.b16 %v1600
    %v2398 = vunpack.c.h.b16 %v1600
    %v2399 = vunpack.c.l.b16 %v1601
    %v2400 = vunpack.c.h.b16 %v1601
    %v2401 = vunpack.c.l.b16 %v1602
    %v2402 = vunpack.c.h.b16 %v1602
    %v2403 = vunpack.c.l.b16 %v1603
    %v2404 = vunpack.c.h.b16 %v1603
    %v2405 = vunpack.c.l.b16 %v1604
    %v2406 = vunpack.c.h.b16 %v1604
    %v2407 = vunpack.c.l.b16 %v1605
    %v2408 = vunpack.c.h.b16 %v1605
    %v2409 = vunpack.c.l.b16 %v1606
    %v2410 = vunpack.c.h.b16 %v1606
    %v2411 = vunpack.c.l.b16 %v1607
    %v2412 = vunpack.c.h.b16 %v1607
    %v2413 = vunpack.c.l.b16 %v1608
    %v2414 = vunpack.c.h.b16 %v1608
    %v2415 = vunpack.c.l.b16 %v1609
    %v2416 = vunpack.c.h.b16 %v1609
    %v2417 = vunpack.c.l.b16 %v1610
    %v2418 = vunpack.c.h.b16 %v1610
    %v2419 = vunpack.c.l.b16 %v1611
    %v2420 = vunpack.c.h.b16 %v1611
    %v2421 = vunpack.c.l.b16 %v1612
    %v2422 = vunpack.c.h.b16 %v1612
    %v2423 = vunpack.c.l.b16 %v1613
    %v2424 = vunpack.c.h.b16 %v1613
    %v2425 = vunpack.c.l.b16 %v1614
    %v2426 = vunpack.c.h.b16 %v1614
    %v2427 = vunpack.c.l.b16 %v1615
    %v2428 = vunpack.c.h.b16 %v1615
    %v2429 = vunpack.c.l.b16 %v1616
    %v2430 = vunpack.c.h.b16 %v1616
    %v2431 = vunpack.c.l.b16 %v1617
    %v2432 = vunpack.c.h.b16 %v1617
    %v2433 = vunpack.c.l.b16 %v1618
    %v2434 = vunpack.c.h.b16 %v1618
    %v2435 = vunpack.c.l.b16 %v1619
    %v2436 = vunpack.c.h.b16 %v1619
    %v2437 = vunpack.c.l.b16 %v1620
    %v2438 = vunpack.c.h.b16 %v1620
    %v2439 = vunpack.c.l.b16 %v1621
    %v2440 = vunpack.c.h.b16 %v1621
    %v2441 = vunpack.c.l.b16 %v1622
    %v2442 = vunpack.c.h.b16 %v1622
    %v2443 = vunpack.c.l.b16 %v1623
    %v2444 = vunpack.c.h.b16 %v1623
    %v2445 = vunpack.c.l.b16 %v1624
    %v2446 = vunpack.c.h.b16 %v1624
    %v2447 = vunpack.c.l.b16 %v1625
    %v2448 = vunpack.c.h.b16 %v1625
    %v2449 = vunpack.c.l.b16 %v1626
    %v2450 = vunpack.c.h.b16 %v1626
    %v2451 = vunpack.c.l.b16 %v1627
    %v2452 = vunpack.c.h.b16 %v1627
    %v2453 = vunpack.c.l.b16 %v1628
    %v2454 = vunpack.c.h.b16 %v1628
    %v2455 = vunpack.c.l.b16 %v1629
    %v2456 = vunpack.c.h.b16 %v1629
    %v2457 = vunpack.c.l.b16 %v1630
    %v2458 = vunpack.c.h.b16 %v1630
    %v2459 = vunpack.c.l.b16 %v1631
    %v2460 = vunpack.c.h.b16 %v1631
    %v2461 = vunpack.c.l.b16 %v1632
    %v2462 = vunpack.c.h.b16 %v1632
    %v2463 = vunpack.c.l.b16 %v1633
    %v2464 = vunpack.c.h.b16 %v1633
    %v2465 = vunpack.c.l.b16 %v1634
    %v2466 = vunpack.c.h.b16 %v1634
    %v2467 = vunpack.c.l.b16 %v1635
    %v2468 = vunpack.c.h.b16 %v1635
    %v2469 = vunpack.c.l.b16 %v1636
    %v2470 = vunpack.c.h.b16 %v1636
    %v2471 = vunpack.c.l.b16 %v1637
    %v2472 = vunpack.c.h.b16 %v1637
    %v2473 = vunpack.c.l.b16 %v1638
    %v2474 = vunpack.c.h.b16 %v1638
    %v2475 = vunpack.c.l.b16 %v1639
    %v2476 = vunpack.c.h.b16 %v1639
    %v2477 = vunpack.c.l.b16 %v1640
    %v2478 = vunpack.c.h.b16 %v1640
    %v2479 = vunpack.c.l.b16 %v1641
    %v2480 = vunpack.c.h.b16 %v1641
    %v2481 = vunpack.c.l.b16 %v1642
    %v2482 = vunpack.c.h.b16 %v1642
    %v2483 = vunpack.c.l.b16 %v1643
    %v2484 = vunpack.c.h.b16 %v1643
    %v2485 = vunpack.c.l.b16 %v1644
    %v2486 = vunpack.c.h.b16 %v1644
    %v2487 = vunpack.c.l.b16 %v1645
    %v2488 = vunpack.c.h.b16 %v1645
    %v2489 = vunpack.c.l.b16 %v1646
    %v2490 = vunpack.c.h.b16 %v1646
    %v2491 = vunpack.c.l.b16 %v1647
    %v2492 = vunpack.c.h.b16 %v1647
    %v2493 = vunpack.c.l.b16 %v1648
    %v2494 = vunpack.c.h.b16 %v1648
    %v2495 = vunpack.c.l.b16 %v1649
    %v2496 = vunpack.c.h.b16 %v1649
    %v2497 = vunpack.c.l.b16 %v1650
    %v2498 = vunpack.c.h.b16 %v1650
    %v2499 = vunpack.c.l.b16 %v1651
    %v2500 = vunpack.c.h.b16 %v1651
    %v2501 = vunpack.c.l.b16 %v1652
    %v2502 = vunpack.c.h.b16 %v1652
    %v2503 = vunpack.c.l.b16 %v1653
    %v2504 = vunpack.c.h.b16 %v1653
    %v2505 = vunpack.c.l.b16 %v1654
    %v2506 = vunpack.c.h.b16 %v1654
    %v2507 = vunpack.c.l.b16 %v1655
    %v2508 = vunpack.c.h.b16 %v1655
    %v2509 = vunpack.c.l.b16 %v1656
    %v2510 = vunpack.c.h.b16 %v1656
    %v2511 = vunpack.c.l.b16 %v1657
    %v2512 = vunpack.c.h.b16 %v1657
    %v2513 = vunpack.c.l.b16 %v1658
    %v2514 = vunpack.c.h.b16 %v1658
    %v2515 = vunpack.c.l.b16 %v1659
    %v2516 = vunpack.c.h.b16 %v1659
    %v2517 = vunpack.c.l.b16 %v1660
    %v2518 = vunpack.c.h.b16 %v1660
    %v2519 = vunpack.c.l.b16 %v1661
    %v2520 = vunpack.c.h.b16 %v1661
    %v2521 = vunpack.c.l.b16 %v1662
    %v2522 = vunpack.c.h.b16 %v1662
    %v2523 = vunpack.c.l.b16 %v1663
    %v2524 = vunpack.c.h.b16 %v1663
    %v2525 = vunpack.c.l.b16 %v1664
    %v2526 = vunpack.c.h.b16 %v1664
    %v2527 = vunpack.c.l.b16 %v1665
    %v2528 = vunpack.c.h.b16 %v1665
    %v2529 = vunpack.c.l.b16 %v1666
    %v2530 = vunpack.c.h.b16 %v1666
    %v2531 = vpack.c.b16 %v1957, %v1955
    %v2532 = vpack.c.b16 %v1958, %v1956
    %v2533 = vpack.c.b16 %v1961, %v1959
    %v2534 = vpack.c.b16 %v1962, %v1960
    %v2535 = vpack.c.b16 %v1965, %v1963
    %v2536 = vpack.c.b16 %v1966, %v1964
    %v2537 = vpack.c.b16 %v1969, %v1967
    %v2538 = vpack.c.b16 %v1970, %v1968
    %v2539 = vpack.c.b16 %v1973, %v1971
    %v2540 = vpack.c.b16 %v1974, %v1972
    %v2541 = vpack.c.b16 %v1977, %v1975
    %v2542 = vpack.c.b16 %v1978, %v1976
    %v2543 = vpack.c.b16 %v1981, %v1979
    %v2544 = vpack.c.b16 %v1982, %v1980
    %v2545 = vpack.c.b16 %v1985, %v1983
    %v2546 = vpack.c.b16 %v1986, %v1984
    %v2547 = vpack.c.b16 %v1989, %v1987
    %v2548 = vpack.c.b16 %v1990, %v1988
    %v2549 = vpack.c.b16 %v1993, %v1991
    %v2550 = vpack.c.b16 %v1994, %v1992
    %v2551 = vpack.c.b16 %v1997, %v1995
    %v2552 = vpack.c.b16 %v1998, %v1996
    %v2553 = vpack.c.b16 %v2001, %v1999
    %v2554 = vpack.c.b16 %v2002, %v2000
    %v2555 = vpack.c.b16 %v2005, %v2003
    %v2556 = vpack.c.b16 %v2006, %v2004
    %v2557 = vpack.c.b16 %v2009, %v2007
    %v2558 = vpack.c.b16 %v2010, %v2008
    %v2559 = vpack.c.b16 %v2013, %v2011
    %v2560 = vpack.c.b16 %v2014, %v2012
    %v2561 = vpack.c.b16 %v2017, %v2015
    %v2562 = vpack.c.b16 %v2018, %v2016
    %v2563 = vpack.c.b16 %v2021, %v2019
    %v2564 = vpack.c.b16 %v2022, %v2020
    %v2565 = vpack.c.b16 %v2025, %v2023
    %v2566 = vpack.c.b16 %v2026, %v2024
    %v2567 = vpack.c.b16 %v2029, %v2027
    %v2568 = vpack.c.b16 %v2030, %v2028
    %v2569 = vpack.c.b16 %v2033, %v2031
    %v2570 = vpack.c.b16 %v2034, %v2032
    %v2571 = vpack.c.b16 %v2037, %v2035
    %v2572 = vpack.c.b16 %v2038, %v2036
    %v2573 = vpack.c.b16 %v2041, %v2039
    %v2574 = vpack.c.b16 %v2042, %v2040
    %v2575 = vpack.c.b16 %v2045, %v2043
    %v2576 = vpack.c.b16 %v2046, %v2044
    %v2577 = vpack.c.b16 %v2049, %v2047
    %v2578 = vpack.c.b16 %v2050, %v2048
    %v2579 = vpack.c.b16 %v2053, %v2051
    %v2580 = vpack.c.b16 %v2054, %v2052
    %v2581 = vpack.c.b16 %v2057, %v2055
    %v2582 = vpack.c.b16 %v2058, %v2056
    %v2583 = vpack.c.b16 %v2061, %v2059
    %v2584 = vpack.c.b16 %v2062, %v2060
    %v2585 = vpack.c.b16 %v2065, %v2063
    %v2586 = vpack.c.b16 %v2066, %v2064
    %v2587 = vpack.c.b16 %v2069, %v2067
    %v2588 = vpack.c.b16 %v2070, %v2068
    %v2589 = vpack.c.b16 %v2073, %v2071
    %v2590 = vpack.c.b16 %v2074, %v2072
    %v2591 = vpack.c.b16 %v2077, %v2075
    %v2592 = vpack.c.b16 %v2078, %v2076
    %v2593 = vpack.c.b16 %v2081, %v2079
    %v2594 = vpack.c.b16 %v2082, %v2080
    %v2595 = vpack.c.b16 %v2085, %v2083
    %v2596 = vpack.c.b16 %v2086, %v2084
    %v2597 = vpack.c.b16 %v2089, %v2087
    %v2598 = vpack.c.b16 %v2090, %v2088
    %v2599 = vpack.c.b16 %v2093, %v2091
    %v2600 = vpack.c.b16 %v2094, %v2092
    %v2601 = vpack.c.b16 %v2097, %v2095
    %v2602 = vpack.c.b16 %v2098, %v2096
    %v2603 = vpack.c.b16 %v2101, %v2099
    %v2604 = vpack.c.b16 %v2102, %v2100
    %v2605 = vpack.c.b16 %v2105, %v2103
    %v2606 = vpack.c.b16 %v2106, %v2104
    %v2607 = vpack.c.b16 %v2109, %v2107
    %v2608 = vpack.c.b16 %v2110, %v2108
    %v2609 = vpack.c.b16 %v2113, %v2111
    %v2610 = vpack.c.b16 %v2114, %v2112
    %v2611 = vpack.c.b16 %v2117, %v2115
    %v2612 = vpack.c.b16 %v2118, %v2116
    %v2613 = vpack.c.b16 %v2121, %v2119
    %v2614 = vpack.c.b16 %v2122, %v2120
    %v2615 = vpack.c.b16 %v2125, %v2123
    %v2616 = vpack.c.b16 %v2126, %v2124
    %v2617 = vpack.c.b16 %v2129, %v2127
    %v2618 = vpack.c.b16 %v2130, %v2128
    %v2619 = vpack.c.b16 %v2133, %v2131
    %v2620 = vpack.c.b16 %v2134, %v2132
    %v2621 = vpack.c.b16 %v2137, %v2135
    %v2622 = vpack.c.b16 %v2138, %v2136
    %v2623 = vpack.c.b16 %v2141, %v2139
    %v2624 = vpack.c.b16 %v2142, %v2140
    %v2625 = vpack.c.b16 %v2145, %v2143
    %v2626 = vpack.c.b16 %v2146, %v2144
    %v2627 = vpack.c.b16 %v2149, %v2147
    %v2628 = vpack.c.b16 %v2150, %v2148
    %v2629 = vpack.c.b16 %v2153, %v2151
    %v2630 = vpack.c.b16 %v2154, %v2152
    %v2631 = vpack.c.b16 %v2157, %v2155
    %v2632 = vpack.c.b16 %v2158, %v2156
    %v2633 = vpack.c.b16 %v2161, %v2159
    %v2634 = vpack.c.b16 %v2162, %v2160
    %v2635 = vpack.c.b16 %v2165, %v2163
    %v2636 = vpack.c.b16 %v2166, %v2164
    %v2637 = vpack.c.b16 %v2169, %v2167
    %v2638 = vpack.c.b16 %v2170, %v2168
    %v2639 = vpack.c.b16 %v2173, %v2171
    %v2640 = vpack.c.b16 %v2174, %v2172
    %v2641 = vpack.c.b16 %v2177, %v2175
    %v2642 = vpack.c.b16 %v2178, %v2176
    %v2643 = vpack.c.b16 %v2181, %v2179
    %v2644 = vpack.c.b16 %v2182, %v2180
    %v2645 = vpack.c.b16 %v2185, %v2183
    %v2646 = vpack.c.b16 %v2186, %v2184
    %v2647 = vpack.c.b16 %v2189, %v2187
    %v2648 = vpack.c.b16 %v2190, %v2188
    %v2649 = vpack.c.b16 %v2193, %v2191
    %v2650 = vpack.c.b16 %v2194, %v2192
    %v2651 = vpack.c.b16 %v2197, %v2195
    %v2652 = vpack.c.b16 %v2198, %v2196
    %v2653 = vpack.c.b16 %v2201, %v2199
    %v2654 = vpack.c.b16 %v2202, %v2200
    %v2655 = vpack.c.b16 %v2205, %v2203
    %v2656 = vpack.c.b16 %v2206, %v2204
    %v2657 = vpack.c.b16 %v2209, %v2207
    %v2658 = vpack.c.b16 %v2210, %v2208
    %v2659 = vpack.c.b16 %v2213, %v2211
    %v2660 = vpack.c.b16 %v2214, %v2212
    %v2661 = vpack.c.b16 %v2217, %v2215
    %v2662 = vpack.c.b16 %v2218, %v2216
    %v2663 = vpack.c.b16 %v2221, %v2219
    %v2664 = vpack.c.b16 %v2222, %v2220
    %v2665 = vpack.c.b16 %v2225, %v2223
    %v2666 = vpack.c.b16 %v2226, %v2224
    %v2667 = vpack.c.b16 %v2229, %v2227
    %v2668 = vpack.c.b16 %v2230, %v2228
    %v2669 = vpack.c.b16 %v2233, %v2231
    %v2670 = vpack.c.b16 %v2234, %v2232
    %v2671 = vpack.c.b16 %v2237, %v2235
    %v2672 = vpack.c.b16 %v2238, %v2236
    %v2673 = vpack.c.b16 %v2241, %v2239
    %v2674 = vpack.c.b16 %v2242, %v2240
    %v2675 = vpack.c.b16 %v2245, %v2243
    %v2676 = vpack.c.b16 %v2246, %v2244
    %v2677 = vpack.c.b16 %v2249, %v2247
    %v2678 = vpack.c.b16 %v2250, %v2248
    %v2679 = vpack.c.b16 %v2253, %v2251
    %v2680 = vpack.c.b16 %v2254, %v2252
    %v2681 = vpack.c.b16 %v2257, %v2255
    %v2682 = vpack.c.b16 %v2258, %v2256
    %v2683 = vpack.c.b16 %v2261, %v2259
    %v2684 = vpack.c.b16 %v2262, %v2260
    %v2685 = vpack.c.b16 %v2265, %v2263
    %v2686 = vpack.c.b16 %v2266, %v2264
    %v2687 = vpack.c.b16 %v2269, %v2267
    %v2688 = vpack.c.b16 %v2270, %v2268
    %v2689 = vpack.c.b16 %v2273, %v2271
    %v2690 = vpack.c.b16 %v2274, %v2272
    %v2691 = vpack.c.b16 %v2277, %v2275
    %v2692 = vpack.c.b16 %v2278, %v2276
    %v2693 = vpack.c.b16 %v2281, %v2279
    %v2694 = vpack.c.b16 %v2282, %v2280
    %v2695 = vpack.c.b16 %v2285, %v2283
    %v2696 = vpack.c.b16 %v2286, %v2284
    %v2697 = vpack.c.b16 %v2289, %v2287
    %v2698 = vpack.c.b16 %v2290, %v2288
    %v2699 = vpack.c.b16 %v2293, %v2291
    %v2700 = vpack.c.b16 %v2294, %v2292
    %v2701 = vpack.c.b16 %v2297, %v2295
    %v2702 = vpack.c.b16 %v2298, %v2296
    %v2703 = vpack.c.b16 %v2301, %v2299
    %v2704 = vpack.c.b16 %v2302, %v2300
    %v2705 = vpack.c.b16 %v2305, %v2303
    %v2706 = vpack.c.b16 %v2306, %v2304
    %v2707 = vpack.c.b16 %v2309, %v2307
    %v2708 = vpack.c.b16 %v2310, %v2308
    %v2709 = vpack.c.b16 %v2313, %v2311
    %v2710 = vpack.c.b16 %v2314, %v2312
    %v2711 = vpack.c.b16 %v2317, %v2315
    %v2712 = vpack.c.b16 %v2318, %v2316
    %v2713 = vpack.c.b16 %v2321, %v2319
    %v2714 = vpack.c.b16 %v2322, %v2320
    %v2715 = vpack.c.b16 %v2325, %v2323
    %v2716 = vpack.c.b16 %v2326, %v2324
    %v2717 = vpack.c.b16 %v2329, %v2327
    %v2718 = vpack.c.b16 %v2330, %v2328
    %v2719 = vpack.c.b16 %v2333, %v2331
    %v2720 = vpack.c.b16 %v2334, %v2332
    %v2721 = vpack.c.b16 %v2337, %v2335
    %v2722 = vpack.c.b16 %v2338, %v2336
    %v2723 = vpack.c.b16 %v2341, %v2339
    %v2724 = vpack.c.b16 %v2342, %v2340
    %v2725 = vpack.c.b16 %v2345, %v2343
    %v2726 = vpack.c.b16 %v2346, %v2344
    %v2727 = vpack.c.b16 %v2349, %v2347
    %v2728 = vpack.c.b16 %v2350, %v2348
    %v2729 = vpack.c.b16 %v2353, %v2351
    %v2730 = vpack.c.b16 %v2354, %v2352
    %v2731 = vpack.c.b16 %v2357, %v2355
    %v2732 = vpack.c.b16 %v2358, %v2356
    %v2733 = vpack.c.b16 %v2361, %v2359
    %v2734 = vpack.c.b16 %v2362, %v2360
    %v2735 = vpack.c.b16 %v2365, %v2363
    %v2736 = vpack.c.b16 %v2366, %v2364
    %v2737 = vpack.c.b16 %v2369, %v2367
    %v2738 = vpack.c.b16 %v2370, %v2368
    %v2739 = vpack.c.b16 %v2373, %v2371
    %v2740 = vpack.c.b16 %v2374, %v2372
    %v2741 = vpack.c.b16 %v2377, %v2375
    %v2742 = vpack.c.b16 %v2378, %v2376
    %v2743 = vpack.c.b16 %v2381, %v2379
    %v2744 = vpack.c.b16 %v2382, %v2380
    %v2745 = vpack.c.b16 %v2385, %v2383
    %v2746 = vpack.c.b16 %v2386, %v2384
    %v2747 = vpack.c.b16 %v2389, %v2387
    %v2748 = vpack.c.b16 %v2390, %v2388
    %v2749 = vpack.c.b16 %v2393, %v2391
    %v2750 = vpack.c.b16 %v2394, %v2392
    %v2751 = vpack.c.b16 %v2397, %v2395
    %v2752 = vpack.c.b16 %v2398, %v2396
    %v2753 = vpack.c.b16 %v2401, %v2399
    %v2754 = vpack.c.b16 %v2402, %v2400
    %v2755 = vpack.c.b16 %v2405, %v2403
    %v2756 = vpack.c.b16 %v2406, %v2404
    %v2757 = vpack.c.b16 %v2409, %v2407
    %v2758 = vpack.c.b16 %v2410, %v2408
    %v2759 = vpack.c.b16 %v2413, %v2411
    %v2760 = vpack.c.b16 %v2414, %v2412
    %v2761 = vpack.c.b16 %v2417, %v2415
    %v2762 = vpack.c.b16 %v2418, %v2416
    %v2763 = vpack.c.b16 %v2421, %v2419
    %v2764 = vpack.c.b16 %v2422, %v2420
    %v2765 = vpack.c.b16 %v2425, %v2423
    %v2766 = vpack.c.b16 %v2426, %v2424
    %v2767 = vpack.c.b16 %v2429, %v2427
    %v2768 = vpack.c.b16 %v2430, %v2428
    %v2769 = vpack.c.b16 %v2433, %v2431
    %v2770 = vpack.c.b16 %v2434, %v2432
    %v2771 = vpack.c.b16 %v2437, %v2435
    %v2772 = vpack.c.b16 %v2438, %v2436
    %v2773 = vpack.c.b16 %v2441, %v2439
    %v2774 = vpack.c.b16 %v2442, %v2440
    %v2775 = vpack.c.b16 %v2445, %v2443
    %v2776 = vpack.c.b16 %v2446, %v2444
    %v2777 = vpack.c.b16 %v2449, %v2447
    %v2778 = vpack.c.b16 %v2450, %v2448
    %v2779 = vpack.c.b16 %v2453, %v2451
    %v2780 = vpack.c.b16 %v2454, %v2452
    %v2781 = vpack.c.b16 %v2457, %v2455
    %v2782 = vpack.c.b16 %v2458, %v2456
    %v2783 = vpack.c.b16 %v2461, %v2459
    %v2784 = vpack.c.b16 %v2462, %v2460
    %v2785 = vpack.c.b16 %v2465, %v2463
    %v2786 = vpack.c.b16 %v2466, %v2464
    %v2787 = vpack.c.b16 %v2469, %v2467
    %v2788 = vpack.c.b16 %v2470, %v2468
    %v2789 = vpack.c.b16 %v2473, %v2471
    %v2790 = vpack.c.b16 %v2474, %v2472
    %v2791 = vpack.c.b16 %v2477, %v2475
    %v2792 = vpack.c.b16 %v2478, %v2476
    %v2793 = vpack.c.b16 %v2481, %v2479
    %v2794 = vpack.c.b16 %v2482, %v2480
    %v2795 = vpack.c.b16 %v2485, %v2483
    %v2796 = vpack.c.b16 %v2486, %v2484
    %v2797 = vpack.c.b16 %v2489, %v2487
    %v2798 = vpack.c.b16 %v2490, %v2488
    %v2799 = vpack.c.b16 %v2493, %v2491
    %v2800 = vpack.c.b16 %v2494, %v2492
    %v2801 = vpack.c.b16 %v2497, %v2495
    %v2802 = vpack.c.b16 %v2498, %v2496
    %v2803 = vpack.c.b16 %v2501, %v2499
    %v2804 = vpack.c.b16 %v2502, %v2500
    %v2805 = vpack.c.b16 %v2505, %v2503
    %v2806 = vpack.c.b16 %v2506, %v2504
    %v2807 = vpack.c.b16 %v2509, %v2507
    %v2808 = vpack.c.b16 %v2510, %v2508
    %v2809 = vpack.c.b16 %v2513, %v2511
    %v2810 = vpack.c.b16 %v2514, %v2512
    %v2811 = vpack.c.b16 %v2517, %v2515
    %v2812 = vpack.c.b16 %v2518, %v2516
    %v2813 = vpack.c.b16 %v2521, %v2519
    %v2814 = vpack.c.b16 %v2522, %v2520
    %v2815 = vpack.c.b16 %v2525, %v2523
    %v2816 = vpack.c.b16 %v2526, %v2524
    %v2817 = vpack.c.b16 %v2529, %v2527
    %v2818 = vpack.c.b16 %v2530, %v2528
    %3107 = vmatprep.subr.bf16.mxu0 %v2532
    %3108 = vmatpush1.bf16.msra.mxu0 %v2531
    %3109 = vmatprep.subr.bf16.mxu0 %v2534
    %3110 = vmatpush1.bf16.msra.mxu0 %v2533
    %3111 = vmatprep.subr.bf16.mxu0 %v2536
    %3112 = vmatpush1.bf16.msra.mxu0 %v2535
    %3113 = vmatprep.subr.bf16.mxu0 %v2538
    %3114 = vmatpush1.bf16.msra.mxu0 %v2537
    %3115 = vmatprep.subr.bf16.mxu0 %v2540
    %3116 = vmatpush1.bf16.msra.mxu0 %v2539
    %3117 = vmatprep.subr.bf16.mxu0 %v2542
    %3118 = vmatpush1.bf16.msra.mxu0 %v2541
    %3119 = vmatprep.subr.bf16.mxu0 %v2544
    %3120 = vmatpush1.bf16.msra.mxu0 %v2543
    %3121 = vmatprep.subr.bf16.mxu0 %v2546
    %3122 = vmatpush1.bf16.msra.mxu0 %v2545
    %3123 = vmatprep.subr.bf16.mxu0 %v2548
    %3124 = vmatpush1.bf16.msra.mxu0 %v2547
    %3125 = vmatprep.subr.bf16.mxu0 %v2550
    %3126 = vmatpush1.bf16.msra.mxu0 %v2549
    %3127 = vmatprep.subr.bf16.mxu0 %v2552
    %3128 = vmatpush1.bf16.msra.mxu0 %v2551
    %3129 = vmatprep.subr.bf16.mxu0 %v2554
    %3130 = vmatpush1.bf16.msra.mxu0 %v2553
    %3131 = vmatprep.subr.bf16.mxu0 %v2556
    %3132 = vmatpush1.bf16.msra.mxu0 %v2555
    %3133 = vmatprep.subr.bf16.mxu0 %v2558
    %3134 = vmatpush1.bf16.msra.mxu0 %v2557
    %3135 = vmatprep.subr.bf16.mxu0 %v2560
    %3136 = vmatpush1.bf16.msra.mxu0 %v2559
    %3137 = vmatprep.subr.bf16.mxu0 %v2562
    %3138 = vmatpush1.bf16.msra.mxu0 %v2561
    %3139 = vmatprep.mubr.bf16.mxu0 %v1084
    %3140 = vmatmul.mubr.bf16.gmra.mrb[0].mxu0 %v1083
    %v3141 = vpop.f32.mrb[0].mxu0
    %v3142 = vadd.f32 0.0, %v3141
    %v3143 = vpop.f32.mrb[0].mxu0
    %v3144 = vadd.f32 0.0, %v3143
    %v3145 = vpop.f32.mrb[0].mxu0
    %v3146 = vadd.f32 0.0, %v3145
    %v3147 = vpop.f32.mrb[0].mxu0
    %v3148 = vadd.f32 0.0, %v3147
    %3149 = vmatprep.mubr.bf16.mxu0 %v1086
    %3150 = vmatmul.mubr.bf16.gmra.mrb[0].mxu0 %v1085
    %v3151 = vpop.f32.mrb[0].mxu0
    %v3152 = vadd.f32 0.0, %v3151
    %v3153 = vpop.f32.mrb[0].mxu0
    %v3154 = vadd.f32 0.0, %v3153
    %v3155 = vpop.f32.mrb[0].mxu0
    %v3156 = vadd.f32 0.0, %v3155
    %v3157 = vpop.f32.mrb[0].mxu0
    %v3158 = vadd.f32 0.0, %v3157
    %3159 = vmatprep.mubr.bf16.mxu0 %v1088
    %3160 = vmatmul.mubr.bf16.gmra.mrb[0].mxu0 %v1087
    %v3161 = vpop.f32.mrb[0].mxu0
    %v3162 = vadd.f32 0.0, %v3161
    %v3163 = vpop.f32.mrb[0].mxu0
    %v3164 = vadd.f32 0.0, %v3163
    %v3165 = vpop.f32.mrb[0].mxu0
    %v3166 = vadd.f32 0.0, %v3165
    %v3167 = vpop.f32.mrb[0].mxu0
    %v3168 = vadd.f32 0.0, %v3167
    %3169 = vmatprep.mubr.bf16.mxu0 %v1090
    %3170 = vmatmul.mubr.bf16.gmra.mrb[0].mxu0 %v1089
    %v3171 = vpop.f32.mrb[0].mxu0
    %v3172 = vadd.f32 0.0, %v3171
    %v3173 = vpop.f32.mrb[0].mxu0
    %v3174 = vadd.f32 0.0, %v3173
    %v3175 = vpop.f32.mrb[0].mxu0
    %v3176 = vadd.f32 0.0, %v3175
    %v3177 = vpop.f32.mrb[0].mxu0
    %v3178 = vadd.f32 0.0, %v3177
    %3179 = vmatprep.mubr.bf16.mxu0 %v1092
    %3180 = vmatmul.mubr.bf16.gmra.mrb[0].mxu0 %v1091
    %v3181 = vpop.f32.mrb[0].mxu0
    %v3182 = vadd.f32 0.0, %v3181
    %v3183 = vpop.f32.mrb[0].mxu0
    %v3184 = vadd.f32 0.0, %v3183
    %v3185 = vpop.f32.mrb[0].mxu0
    %v3186 = vadd.f32 0.0, %v3185
    %v3187 = vpop.f32.mrb[0].mxu0
    %v3188 = vadd.f32 0.0, %v3187
    %3189 = vmatprep.mubr.bf16.mxu0 %v1094
    %3190 = vmatmul.mubr.bf16.gmra.mrb[0].mxu0 %v1093
    %v3191 = vpop.f32.mrb[0].mxu0
    %v3192 = vadd.f32 0.0, %v3191
    %v3193 = vpop.f32.mrb[0].mxu0
    %v3194 = vadd.f32 0.0, %v3193
    %v3195 = vpop.f32.mrb[0].mxu0
    %v3196 = vadd.f32 0.0, %v3195
    %v3197 = vpop.f32.mrb[0].mxu0
    %v3198 = vadd.f32 0.0, %v3197
    %3199 = vmatprep.mubr.bf16.mxu0 %v1096
    %3200 = vmatmul.mubr.bf16.gmra.mrb[0].mxu0 %v1095
    %v3201 = vpop.f32.mrb[0].mxu0
    %v3202 = vadd.f32 0.0, %v3201
    %v3203 = vpop.f32.mrb[0].mxu0
    %v3204 = vadd.f32 0.0, %v3203
    %v3205 = vpop.f32.mrb[0].mxu0
    %v3206 = vadd.f32 0.0, %v3205
    %v3207 = vpop.f32.mrb[0].mxu0
    %v3208 = vadd.f32 0.0, %v3207
    %3209 = vmatprep.mubr.bf16.mxu0 %v1098
    %3210 = vmatmul.mubr.bf16.gmra.mrb[0].mxu0 %v1097
    %v3211 = vpop.f32.mrb[0].mxu0
    %v3212 = vadd.f32 0.0, %v3211
    %v3213 = vpop.f32.mrb[0].mxu0
    %v3214 = vadd.f32 0.0, %v3213
    %v3215 = vpop.f32.mrb[0].mxu0
    %v3216 = vadd.f32 0.0, %v3215
    %v3217 = vpop.f32.mrb[0].mxu0
    %v3218 = vadd.f32 0.0, %v3217
    %3219 = vdwg.mxu0
    %3220 = vmatprep.subr.bf16.mxu0 %v2564
    %3221 = vmatpush1.bf16.msra.mxu0 %v2563
    %3222 = vmatprep.subr.bf16.mxu0 %v2566
    %3223 = vmatpush1.bf16.msra.mxu0 %v2565
    %3224 = vmatprep.subr.bf16.mxu0 %v2568
    %3225 = vmatpush1.bf16.msra.mxu0 %v2567
    %3226 = vmatprep.subr.bf16.mxu0 %v2570
    %3227 = vmatpush1.bf16.msra.mxu0 %v2569
    %3228 = vmatprep.subr.bf16.mxu0 %v2572
    %3229 = vmatpush1.bf16.msra.mxu0 %v2571
    %3230 = vmatprep.subr.bf16.mxu0 %v2574
    %3231 = vmatpush1.bf16.msra.mxu0 %v2573
    %3232 = vmatprep.subr.bf16.mxu0 %v2576
    %3233 = vmatpush1.bf16.msra.mxu0 %v2575
    %3234 = vmatprep.subr.bf16.mxu0 %v2578
    %3235 = vmatpush1.bf16.msra.mxu0 %v2577
    %3236 = vmatprep.subr.bf16.mxu0 %v2580
    %3237 = vmatpush1.bf16.msra.mxu0 %v2579
    %3238 = vmatprep.subr.bf16.mxu0 %v2582
    %3239 = vmatpush1.bf16.msra.mxu0 %v2581
    %3240 = vmatprep.subr.bf16.mxu0 %v2584
    %3241 = vmatpush1.bf16.msra.mxu0 %v2583
    %3242 = vmatprep.subr.bf16.mxu0 %v2586
    %3243 = vmatpush1.bf16.msra.mxu0 %v2585
    %3244 = vmatprep.subr.bf16.mxu0 %v2588
    %3245 = vmatpush1.bf16.msra.mxu0 %v2587
    %3246 = vmatprep.subr.bf16.mxu0 %v2590
    %3247 = vmatpush1.bf16.msra.mxu0 %v2589
    %3248 = vmatprep.subr.bf16.mxu0 %v2592
    %3249 = vmatpush1.bf16.msra.mxu0 %v2591
    %3250 = vmatprep.subr.bf16.mxu0 %v2594
    %3251 = vmatpush1.bf16.msra.mxu0 %v2593
    %3252 = vmatprep.mubr.bf16.mxu0 %v1148
    %3253 = vmatmul.mubr.bf16.gmra.mrb[0].mxu0 %v1147
    %v3254 = vpop.f32.mrb[0].mxu0
    %v3255 = vadd.f32 %v3142, %v3254
    %v3256 = vpop.f32.mrb[0].mxu0
    %v3257 = vadd.f32 %v3144, %v3256
    %v3258 = vpop.f32.mrb[0].mxu0
    %v3259 = vadd.f32 %v3146, %v3258
    %v3260 = vpop.f32.mrb[0].mxu0
    %v3261 = vadd.f32 %v3148, %v3260
    %3262 = vmatprep.mubr.bf16.mxu0 %v1150
    %3263 = vmatmul.mubr.bf16.gmra.mrb[0].mxu0 %v1149
    %v3264 = vpop.f32.mrb[0].mxu0
    %v3265 = vadd.f32 %v3152, %v3264
    %v3266 = vpop.f32.mrb[0].mxu0
    %v3267 = vadd.f32 %v3154, %v3266
    %v3268 = vpop.f32.mrb[0].mxu0
    %v3269 = vadd.f32 %v3156, %v3268
    %v3270 = vpop.f32.mrb[0].mxu0
    %v3271 = vadd.f32 %v3158, %v3270
    %3272 = vmatprep.mubr.bf16.mxu0 %v1152
    %3273 = vmatmul.mubr.bf16.gmra.mrb[0].mxu0 %v1151
    %v3274 = vpop.f32.mrb[0].mxu0
    %v3275 = vadd.f32 %v3162, %v3274
    %v3276 = vpop.f32.mrb[0].mxu0
    %v3277 = vadd.f32 %v3164, %v3276
    %v3278 = vpop.f32.mrb[0].mxu0
    %v3279 = vadd.f32 %v3166, %v3278
    %v3280 = vpop.f32.mrb[0].mxu0
    %v3281 = vadd.f32 %v3168, %v3280
    %3282 = vmatprep.mubr.bf16.mxu0 %v1154
    %3283 = vmatmul.mubr.bf16.gmra.mrb[0].mxu0 %v1153
    %v3284 = vpop.f32.mrb[0].mxu0
    %v3285 = vadd.f32 %v3172, %v3284
    %v3286 = vpop.f32.mrb[0].mxu0
    %v3287 = vadd.f32 %v3174, %v3286
    %v3288 = vpop.f32.mrb[0].mxu0
    %v3289 = vadd.f32 %v3176, %v3288
    %v3290 = vpop.f32.mrb[0].mxu0
    %v3291 = vadd.f32 %v3178, %v3290
    %3292 = vmatprep.mubr.bf16.mxu0 %v1156
    %3293 = vmatmul.mubr.bf16.gmra.mrb[0].mxu0 %v1155
    %v3294 = vpop.f32.mrb[0].mxu0
    %v3295 = vadd.f32 %v3182, %v3294
    %v3296 = vpop.f32.mrb[0].mxu0
    %v3297 = vadd.f32 %v3184, %v3296
    %v3298 = vpop.f32.mrb[0].mxu0
    %v3299 = vadd.f32 %v3186, %v3298
    %v3300 = vpop.f32.mrb[0].mxu0
    %v3301 = vadd.f32 %v3188, %v3300
    %3302 = vmatprep.mubr.bf16.mxu0 %v1158
    %3303 = vmatmul.mubr.bf16.gmra.mrb[0].mxu0 %v1157
    %v3304 = vpop.f32.mrb[0].mxu0
    %v3305 = vadd.f32 %v3192, %v3304
    %v3306 = vpop.f32.mrb[0].mxu0
    %v3307 = vadd.f32 %v3194, %v3306
    %v3308 = vpop.f32.mrb[0].mxu0
    %v3309 = vadd.f32 %v3196, %v3308
    %v3310 = vpop.f32.mrb[0].mxu0
    %v3311 = vadd.f32 %v3198, %v3310
    %3312 = vmatprep.mubr.bf16.mxu0 %v1160
    %3313 = vmatmul.mubr.bf16.gmra.mrb[0].mxu0 %v1159
    %v3314 = vpop.f32.mrb[0].mxu0
    %v3315 = vadd.f32 %v3202, %v3314
    %v3316 = vpop.f32.mrb[0].mxu0
    %v3317 = vadd.f32 %v3204, %v3316
    %v3318 = vpop.f32.mrb[0].mxu0
    %v3319 = vadd.f32 %v3206, %v3318
    %v3320 = vpop.f32.mrb[0].mxu0
    %v3321 = vadd.f32 %v3208, %v3320
    %3322 = vmatprep.mubr.bf16.mxu0 %v1162
    %3323 = vmatmul.mubr.bf16.gmra.mrb[0].mxu0 %v1161
    %v3324 = vpop.f32.mrb[0].mxu0
    %v3325 = vadd.f32 %v3212, %v3324
    %v3326 = vpop.f32.mrb[0].mxu0
    %v3327 = vadd.f32 %v3214, %v3326
    %v3328 = vpop.f32.mrb[0].mxu0
    %v3329 = vadd.f32 %v3216, %v3328
    %v3330 = vpop.f32.mrb[0].mxu0
    %v3331 = vadd.f32 %v3218, %v3330
    %3332 = vdwg.mxu0
    %3333 = vmatprep.subr.bf16.mxu0 %v2596
    %3334 = vmatpush1.bf16.msra.mxu0 %v2595
    %3335 = vmatprep.subr.bf16.mxu0 %v2598
    %3336 = vmatpush1.bf16.msra.mxu0 %v2597
    %3337 = vmatprep.subr.bf16.mxu0 %v2600
    %3338 = vmatpush1.bf16.msra.mxu0 %v2599
    %3339 = vmatprep.subr.bf16.mxu0 %v2602
    %3340 = vmatpush1.bf16.msra.mxu0 %v2601
    %3341 = vmatprep.subr.bf16.mxu0 %v2604
    %3342 = vmatpush1.bf16.msra.mxu0 %v2603
    %3343 = vmatprep.subr.bf16.mxu0 %v2606
    %3344 = vmatpush1.bf16.msra.mxu0 %v2605
    %3345 = vmatprep.subr.bf16.mxu0 %v2608
    %3346 = vmatpush1.bf16.msra.mxu0 %v2607
    %3347 = vmatprep.subr.bf16.mxu0 %v2610
    %3348 = vmatpush1.bf16.msra.mxu0 %v2609
    %3349 = vmatprep.subr.bf16.mxu0 %v2612
    %3350 = vmatpush1.bf16.msra.mxu0 %v2611
    %3351 = vmatprep.subr.bf16.mxu0 %v2614
    %3352 = vmatpush1.bf16.msra.mxu0 %v2613
    %3353 = vmatprep.subr.bf16.mxu0 %v2616
    %3354 = vmatpush1.bf16.msra.mxu0 %v2615
    %3355 = vmatprep.subr.bf16.mxu0 %v2618
    %3356 = vmatpush1.bf16.msra.mxu0 %v2617
    %3357 = vmatprep.subr.bf16.mxu0 %v2620
    %3358 = vmatpush1.bf16.msra.mxu0 %v2619
    %3359 = vmatprep.subr.bf16.mxu0 %v2622
    %3360 = vmatpush1.bf16.msra.mxu0 %v2621
    %3361 = vmatprep.subr.bf16.mxu0 %v2624
    %3362 = vmatpush1.bf16.msra.mxu0 %v2623
    %3363 = vmatprep.subr.bf16.mxu0 %v2626
    %3364 = vmatpush1.bf16.msra.mxu0 %v2625
    %3365 = vmatprep.mubr.bf16.mxu0 %v1212
    %3366 = vmatmul.mubr.bf16.gmra.mrb[0].mxu0 %v1211
    %v3367 = vpop.f32.mrb[0].mxu0
    %v3368 = vadd.f32 %v3255, %v3367
    %v3369 = vpop.f32.mrb[0].mxu0
    %v3370 = vadd.f32 %v3257, %v3369
    %v3371 = vpop.f32.mrb[0].mxu0
    %v3372 = vadd.f32 %v3259, %v3371
    %v3373 = vpop.f32.mrb[0].mxu0
    %v3374 = vadd.f32 %v3261, %v3373
    %3375 = vmatprep.mubr.bf16.mxu0 %v1214
    %3376 = vmatmul.mubr.bf16.gmra.mrb[0].mxu0 %v1213
    %v3377 = vpop.f32.mrb[0].mxu0
    %v3378 = vadd.f32 %v3265, %v3377
    %v3379 = vpop.f32.mrb[0].mxu0
    %v3380 = vadd.f32 %v3267, %v3379
    %v3381 = vpop.f32.mrb[0].mxu0
    %v3382 = vadd.f32 %v3269, %v3381
    %v3383 = vpop.f32.mrb[0].mxu0
    %v3384 = vadd.f32 %v3271, %v3383
    %3385 = vmatprep.mubr.bf16.mxu0 %v1216
    %3386 = vmatmul.mubr.bf16.gmra.mrb[0].mxu0 %v1215
    %v3387 = vpop.f32.mrb[0].mxu0
    %v3388 = vadd.f32 %v3275, %v3387
    %v3389 = vpop.f32.mrb[0].mxu0
    %v3390 = vadd.f32 %v3277, %v3389
    %v3391 = vpop.f32.mrb[0].mxu0
    %v3392 = vadd.f32 %v3279, %v3391
    %v3393 = vpop.f32.mrb[0].mxu0
    %v3394 = vadd.f32 %v3281, %v3393
    %3395 = vmatprep.mubr.bf16.mxu0 %v1218
    %3396 = vmatmul.mubr.bf16.gmra.mrb[0].mxu0 %v1217
    %v3397 = vpop.f32.mrb[0].mxu0
    %v3398 = vadd.f32 %v3285, %v3397
    %v3399 = vpop.f32.mrb[0].mxu0
    %v3400 = vadd.f32 %v3287, %v3399
    %v3401 = vpop.f32.mrb[0].mxu0
    %v3402 = vadd.f32 %v3289, %v3401
    %v3403 = vpop.f32.mrb[0].mxu0
    %v3404 = vadd.f32 %v3291, %v3403
    %3405 = vmatprep.mubr.bf16.mxu0 %v1220
    %3406 = vmatmul.mubr.bf16.gmra.mrb[0].mxu0 %v1219
    %v3407 = vpop.f32.mrb[0].mxu0
    %v3408 = vadd.f32 %v3295, %v3407
    %v3409 = vpop.f32.mrb[0].mxu0
    %v3410 = vadd.f32 %v3297, %v3409
    %v3411 = vpop.f32.mrb[0].mxu0
    %v3412 = vadd.f32 %v3299, %v3411
    %v3413 = vpop.f32.mrb[0].mxu0
    %v3414 = vadd.f32 %v3301, %v3413
    %3415 = vmatprep.mubr.bf16.mxu0 %v1222
    %3416 = vmatmul.mubr.bf16.gmra.mrb[0].mxu0 %v1221
    %v3417 = vpop.f32.mrb[0].mxu0
    %v3418 = vadd.f32 %v3305, %v3417
    %v3419 = vpop.f32.mrb[0].mxu0
    %v3420 = vadd.f32 %v3307, %v3419
    %v3421 = vpop.f32.mrb[0].mxu0
    %v3422 = vadd.f32 %v3309, %v3421
    %v3423 = vpop.f32.mrb[0].mxu0
    %v3424 = vadd.f32 %v3311, %v3423
    %3425 = vmatprep.mubr.bf16.mxu0 %v1224
    %3426 = vmatmul.mubr.bf16.gmra.mrb[0].mxu0 %v1223
    %v3427 = vpop.f32.mrb[0].mxu0
    %v3428 = vadd.f32 %v3315, %v3427
    %v3429 = vpop.f32.mrb[0].mxu0
    %v3430 = vadd.f32 %v3317, %v3429
    %v3431 = vpop.f32.mrb[0].mxu0
    %v3432 = vadd.f32 %v3319, %v3431
    %v3433 = vpop.f32.mrb[0].mxu0
    %v3434 = vadd.f32 %v3321, %v3433
    %3435 = vmatprep.mubr.bf16.mxu0 %v1226
    %3436 = vmatmul.mubr.bf16.gmra.mrb[0].mxu0 %v1225
    %v3437 = vpop.f32.mrb[0].mxu0
    %v3438 = vadd.f32 %v3325, %v3437
    %v3439 = vpop.f32.mrb[0].mxu0
    %v3440 = vadd.f32 %v3327, %v3439
    %v3441 = vpop.f32.mrb[0].mxu0
    %v3442 = vadd.f32 %v3329, %v3441
    %v3443 = vpop.f32.mrb[0].mxu0
    %v3444 = vadd.f32 %v3331, %v3443
    %3445 = vdwg.mxu0
    %3446 = vmatprep.subr.bf16.mxu0 %v2628
    %3447 = vmatpush1.bf16.msra.mxu0 %v2627
    %3448 = vmatprep.subr.bf16.mxu0 %v2630
    %3449 = vmatpush1.bf16.msra.mxu0 %v2629
    %3450 = vmatprep.subr.bf16.mxu0 %v2632
    %3451 = vmatpush1.bf16.msra.mxu0 %v2631
    %3452 = vmatprep.subr.bf16.mxu0 %v2634
    %3453 = vmatpush1.bf16.msra.mxu0 %v2633
    %3454 = vmatprep.subr.bf16.mxu0 %v2636
    %3455 = vmatpush1.bf16.msra.mxu0 %v2635
    %3456 = vmatprep.subr.bf16.mxu0 %v2638
    %3457 = vmatpush1.bf16.msra.mxu0 %v2637
    %3458 = vmatprep.subr.bf16.mxu0 %v2640
    %3459 = vmatpush1.bf16.msra.mxu0 %v2639
    %3460 = vmatprep.subr.bf16.mxu0 %v2642
    %3461 = vmatpush1.bf16.msra.mxu0 %v2641
    %3462 = vmatprep.subr.bf16.mxu0 %v2644
    %3463 = vmatpush1.bf16.msra.mxu0 %v2643
    %3464 = vmatprep.subr.bf16.mxu0 %v2646
    %3465 = vmatpush1.bf16.msra.mxu0 %v2645
    %3466 = vmatprep.subr.bf16.mxu0 %v2648
    %3467 = vmatpush1.bf16.msra.mxu0 %v2647
    %3468 = vmatprep.subr.bf16.mxu0 %v2650
    %3469 = vmatpush1.bf16.msra.mxu0 %v2649
    %3470 = vmatprep.subr.bf16.mxu0 %v2652
    %3471 = vmatpush1.bf16.msra.mxu0 %v2651
    %3472 = vmatprep.subr.bf16.mxu0 %v2654
    %3473 = vmatpush1.bf16.msra.mxu0 %v2653
    %3474 = vmatprep.subr.bf16.mxu0 %v2656
    %3475 = vmatpush1.bf16.msra.mxu0 %v2655
    %3476 = vmatprep.subr.bf16.mxu0 %v2658
    %3477 = vmatpush1.bf16.msra.mxu0 %v2657
    %3478 = vmatprep.mubr.bf16.mxu0 %v1244
    %3479 = vmatmul.mubr.bf16.gmra.mrb[0].mxu0 %v1243
    %v3480 = vpop.f32.mrb[0].mxu0
    %v3481 = vadd.f32 %v3368, %v3480
    %v3482 = vpop.f32.mrb[0].mxu0
    %v3483 = vadd.f32 %v3370, %v3482
    %v3484 = vpop.f32.mrb[0].mxu0
    %v3485 = vadd.f32 %v3372, %v3484
    %v3486 = vpop.f32.mrb[0].mxu0
    %v3487 = vadd.f32 %v3374, %v3486
    %3488 = vmatprep.mubr.bf16.mxu0 %v1246
    %3489 = vmatmul.mubr.bf16.gmra.mrb[0].mxu0 %v1245
    %v3490 = vpop.f32.mrb[0].mxu0
    %v3491 = vadd.f32 %v3378, %v3490
    %v3492 = vpop.f32.mrb[0].mxu0
    %v3493 = vadd.f32 %v3380, %v3492
    %v3494 = vpop.f32.mrb[0].mxu0
    %v3495 = vadd.f32 %v3382, %v3494
    %v3496 = vpop.f32.mrb[0].mxu0
    %v3497 = vadd.f32 %v3384, %v3496
    %3498 = vmatprep.mubr.bf16.mxu0 %v1248
    %3499 = vmatmul.mubr.bf16.gmra.mrb[0].mxu0 %v1247
    %v3500 = vpop.f32.mrb[0].mxu0
    %v3501 = vadd.f32 %v3388, %v3500
    %v3502 = vpop.f32.mrb[0].mxu0
    %v3503 = vadd.f32 %v3390, %v3502
    %v3504 = vpop.f32.mrb[0].mxu0
    %v3505 = vadd.f32 %v3392, %v3504
    %v3506 = vpop.f32.mrb[0].mxu0
    %v3507 = vadd.f32 %v3394, %v3506
    %3508 = vmatprep.mubr.bf16.mxu0 %v1250
    %3509 = vmatmul.mubr.bf16.gmra.mrb[0].mxu0 %v1249
    %v3510 = vpop.f32.mrb[0].mxu0
    %v3511 = vadd.f32 %v3398, %v3510
    %v3512 = vpop.f32.mrb[0].mxu0
    %v3513 = vadd.f32 %v3400, %v3512
    %v3514 = vpop.f32.mrb[0].mxu0
    %v3515 = vadd.f32 %v3402, %v3514
    %v3516 = vpop.f32.mrb[0].mxu0
    %v3517 = vadd.f32 %v3404, %v3516
    %3518 = vmatprep.mubr.bf16.mxu0 %v1252
    %3519 = vmatmul.mubr.bf16.gmra.mrb[0].mxu0 %v1251
    %v3520 = vpop.f32.mrb[0].mxu0
    %v3521 = vadd.f32 %v3408, %v3520
    %v3522 = vpop.f32.mrb[0].mxu0
    %v3523 = vadd.f32 %v3410, %v3522
    %v3524 = vpop.f32.mrb[0].mxu0
    %v3525 = vadd.f32 %v3412, %v3524
    %v3526 = vpop.f32.mrb[0].mxu0
    %v3527 = vadd.f32 %v3414, %v3526
    %3528 = vmatprep.mubr.bf16.mxu0 %v1254
    %3529 = vmatmul.mubr.bf16.gmra.mrb[0].mxu0 %v1253
    %v3530 = vpop.f32.mrb[0].mxu0
    %v3531 = vadd.f32 %v3418, %v3530
    %v3532 = vpop.f32.mrb[0].mxu0
    %v3533 = vadd.f32 %v3420, %v3532
    %v3534 = vpop.f32.mrb[0].mxu0
    %v3535 = vadd.f32 %v3422, %v3534
    %v3536 = vpop.f32.mrb[0].mxu0
    %v3537 = vadd.f32 %v3424, %v3536
    %3538 = vmatprep.mubr.bf16.mxu0 %v1256
    %3539 = vmatmul.mubr.bf16.gmra.mrb[0].mxu0 %v1255
    %v3540 = vpop.f32.mrb[0].mxu0
    %v3541 = vadd.f32 %v3428, %v3540
    %v3542 = vpop.f32.mrb[0].mxu0
    %v3543 = vadd.f32 %v3430, %v3542
    %v3544 = vpop.f32.mrb[0].mxu0
    %v3545 = vadd.f32 %v3432, %v3544
    %v3546 = vpop.f32.mrb[0].mxu0
    %v3547 = vadd.f32 %v3434, %v3546
    %3548 = vmatprep.mubr.bf16.mxu0 %v1258
    %3549 = vmatmul.mubr.bf16.gmra.mrb[0].mxu0 %v1257
    %v3550 = vpop.f32.mrb[0].mxu0
    %v3551 = vadd.f32 %v3438, %v3550
    %v3552 = vpop.f32.mrb[0].mxu0
    %v3553 = vadd.f32 %v3440, %v3552
    %v3554 = vpop.f32.mrb[0].mxu0
    %v3555 = vadd.f32 %v3442, %v3554
    %v3556 = vpop.f32.mrb[0].mxu0
    %v3557 = vadd.f32 %v3444, %v3556
    %3558 = vdwg.mxu0
    %3559 = vmatprep.subr.bf16.mxu0 %v2660
    %3560 = vmatpush1.bf16.msra.mxu0 %v2659
    %3561 = vmatprep.subr.bf16.mxu0 %v2662
    %3562 = vmatpush1.bf16.msra.mxu0 %v2661
    %3563 = vmatprep.subr.bf16.mxu0 %v2664
    %3564 = vmatpush1.bf16.msra.mxu0 %v2663
    %3565 = vmatprep.subr.bf16.mxu0 %v2666
    %3566 = vmatpush1.bf16.msra.mxu0 %v2665
    %3567 = vmatprep.subr.bf16.mxu0 %v2668
    %3568 = vmatpush1.bf16.msra.mxu0 %v2667
    %3569 = vmatprep.subr.bf16.mxu0 %v2670
    %3570 = vmatpush1.bf16.msra.mxu0 %v2669
    %3571 = vmatprep.subr.bf16.mxu0 %v2672
    %3572 = vmatpush1.bf16.msra.mxu0 %v2671
    %3573 = vmatprep.subr.bf16.mxu0 %v2674
    %3574 = vmatpush1.bf16.msra.mxu0 %v2673
    %3575 = vmatprep.subr.bf16.mxu0 %v2676
    %3576 = vmatpush1.bf16.msra.mxu0 %v2675
    %3577 = vmatprep.subr.bf16.mxu0 %v2678
    %3578 = vmatpush1.bf16.msra.mxu0 %v2677
    %3579 = vmatprep.subr.bf16.mxu0 %v2680
    %3580 = vmatpush1.bf16.msra.mxu0 %v2679
    %3581 = vmatprep.subr.bf16.mxu0 %v2682
    %3582 = vmatpush1.bf16.msra.mxu0 %v2681
    %3583 = vmatprep.subr.bf16.mxu0 %v2684
    %3584 = vmatpush1.bf16.msra.mxu0 %v2683
    %3585 = vmatprep.subr.bf16.mxu0 %v2686
    %3586 = vmatpush1.bf16.msra.mxu0 %v2685
    %3587 = vmatprep.subr.bf16.mxu0 %v2688
    %3588 = vmatpush1.bf16.msra.mxu0 %v2687
    %3589 = vmatprep.subr.bf16.mxu0 %v2690
    %3590 = vmatpush1.bf16.msra.mxu0 %v2689
    %3591 = vmatprep.mubr.bf16.mxu0 %v1280
    %3592 = vmatmul.mubr.bf16.gmra.mrb[0].mxu0 %v1279
    %v3593 = vpop.f32.mrb[0].mxu0
    %v3594 = vadd.f32 %v3481, %v3593
    %v3595 = vpop.f32.mrb[0].mxu0
    %v3596 = vadd.f32 %v3483, %v3595
    %v3597 = vpop.f32.mrb[0].mxu0
    %v3598 = vadd.f32 %v3485, %v3597
    %v3599 = vpop.f32.mrb[0].mxu0
    %v3600 = vadd.f32 %v3487, %v3599
    %3601 = vmatprep.mubr.bf16.mxu0 %v1282
    %3602 = vmatmul.mubr.bf16.gmra.mrb[0].mxu0 %v1281
    %v3603 = vpop.f32.mrb[0].mxu0
    %v3604 = vadd.f32 %v3491, %v3603
    %v3605 = vpop.f32.mrb[0].mxu0
    %v3606 = vadd.f32 %v3493, %v3605
    %v3607 = vpop.f32.mrb[0].mxu0
    %v3608 = vadd.f32 %v3495, %v3607
    %v3609 = vpop.f32.mrb[0].mxu0
    %v3610 = vadd.f32 %v3497, %v3609
    %3611 = vmatprep.mubr.bf16.mxu0 %v1284
    %3612 = vmatmul.mubr.bf16.gmra.mrb[0].mxu0 %v1283
    %v3613 = vpop.f32.mrb[0].mxu0
    %v3614 = vadd.f32 %v3501, %v3613
    %v3615 = vpop.f32.mrb[0].mxu0
    %v3616 = vadd.f32 %v3503, %v3615
    %v3617 = vpop.f32.mrb[0].mxu0
    %v3618 = vadd.f32 %v3505, %v3617
    %v3619 = vpop.f32.mrb[0].mxu0
    %v3620 = vadd.f32 %v3507, %v3619
    %3621 = vmatprep.mubr.bf16.mxu0 %v1286
    %3622 = vmatmul.mubr.bf16.gmra.mrb[0].mxu0 %v1285
    %v3623 = vpop.f32.mrb[0].mxu0
    %v3624 = vadd.f32 %v3511, %v3623
    %v3625 = vpop.f32.mrb[0].mxu0
    %v3626 = vadd.f32 %v3513, %v3625
    %v3627 = vpop.f32.mrb[0].mxu0
    %v3628 = vadd.f32 %v3515, %v3627
    %v3629 = vpop.f32.mrb[0].mxu0
    %v3630 = vadd.f32 %v3517, %v3629
    %3631 = vmatprep.mubr.bf16.mxu0 %v1288
    %3632 = vmatmul.mubr.bf16.gmra.mrb[0].mxu0 %v1287
    %v3633 = vpop.f32.mrb[0].mxu0
    %v3634 = vadd.f32 %v3521, %v3633
    %v3635 = vpop.f32.mrb[0].mxu0
    %v3636 = vadd.f32 %v3523, %v3635
    %v3637 = vpop.f32.mrb[0].mxu0
    %v3638 = vadd.f32 %v3525, %v3637
    %v3639 = vpop.f32.mrb[0].mxu0
    %v3640 = vadd.f32 %v3527, %v3639
    %3641 = vmatprep.mubr.bf16.mxu0 %v1290
    %3642 = vmatmul.mubr.bf16.gmra.mrb[0].mxu0 %v1289
    %v3643 = vpop.f32.mrb[0].mxu0
    %v3644 = vadd.f32 %v3531, %v3643
    %v3645 = vpop.f32.mrb[0].mxu0
    %v3646 = vadd.f32 %v3533, %v3645
    %v3647 = vpop.f32.mrb[0].mxu0
    %v3648 = vadd.f32 %v3535, %v3647
    %v3649 = vpop.f32.mrb[0].mxu0
    %v3650 = vadd.f32 %v3537, %v3649
    %3651 = vmatprep.mubr.bf16.mxu0 %v1292
    %3652 = vmatmul.mubr.bf16.gmra.mrb[0].mxu0 %v1291
    %v3653 = vpop.f32.mrb[0].mxu0
    %v3654 = vadd.f32 %v3541, %v3653
    %v3655 = vpop.f32.mrb[0].mxu0
    %v3656 = vadd.f32 %v3543, %v3655
    %v3657 = vpop.f32.mrb[0].mxu0
    %v3658 = vadd.f32 %v3545, %v3657
    %v3659 = vpop.f32.mrb[0].mxu0
    %v3660 = vadd.f32 %v3547, %v3659
    %3661 = vmatprep.mubr.bf16.mxu0 %v1294
    %3662 = vmatmul.mubr.bf16.gmra.mrb[0].mxu0 %v1293
    %v3663 = vpop.f32.mrb[0].mxu0
    %v3664 = vadd.f32 %v3551, %v3663
    %v3665 = vpop.f32.mrb[0].mxu0
    %v3666 = vadd.f32 %v3553, %v3665
    %v3667 = vpop.f32.mrb[0].mxu0
    %v3668 = vadd.f32 %v3555, %v3667
    %v3669 = vpop.f32.mrb[0].mxu0
    %v3670 = vadd.f32 %v3557, %v3669
    %3671 = vdwg.mxu0
    %3672 = vmatprep.subr.bf16.mxu0 %v2692
    %3673 = vmatpush1.bf16.msra.mxu0 %v2691
    %3674 = vmatprep.subr.bf16.mxu0 %v2694
    %3675 = vmatpush1.bf16.msra.mxu0 %v2693
    %3676 = vmatprep.subr.bf16.mxu0 %v2696
    %3677 = vmatpush1.bf16.msra.mxu0 %v2695
    %3678 = vmatprep.subr.bf16.mxu0 %v2698
    %3679 = vmatpush1.bf16.msra.mxu0 %v2697
    %3680 = vmatprep.subr.bf16.mxu0 %v2700
    %3681 = vmatpush1.bf16.msra.mxu0 %v2699
    %3682 = vmatprep.subr.bf16.mxu0 %v2702
    %3683 = vmatpush1.bf16.msra.mxu0 %v2701
    %3684 = vmatprep.subr.bf16.mxu0 %v2704
    %3685 = vmatpush1.bf16.msra.mxu0 %v2703
    %3686 = vmatprep.subr.bf16.mxu0 %v2706
    %3687 = vmatpush1.bf16.msra.mxu0 %v2705
    %3688 = vmatprep.subr.bf16.mxu0 %v2708
    %3689 = vmatpush1.bf16.msra.mxu0 %v2707
    %3690 = vmatprep.subr.bf16.mxu0 %v2710
    %3691 = vmatpush1.bf16.msra.mxu0 %v2709
    %3692 = vmatprep.subr.bf16.mxu0 %v2712
    %3693 = vmatpush1.bf16.msra.mxu0 %v2711
    %3694 = vmatprep.subr.bf16.mxu0 %v2714
    %3695 = vmatpush1.bf16.msra.mxu0 %v2713
    %3696 = vmatprep.subr.bf16.mxu0 %v2716
    %3697 = vmatpush1.bf16.msra.mxu0 %v2715
    %3698 = vmatprep.subr.bf16.mxu0 %v2718
    %3699 = vmatpush1.bf16.msra.mxu0 %v2717
    %3700 = vmatprep.subr.bf16.mxu0 %v2720
    %3701 = vmatpush1.bf16.msra.mxu0 %v2719
    %3702 = vmatprep.subr.bf16.mxu0 %v2722
    %3703 = vmatpush1.bf16.msra.mxu0 %v2721
    %3704 = vmatprep.mubr.bf16.mxu0 %v1316
    %3705 = vmatmul.mubr.bf16.gmra.mrb[0].mxu0 %v1315
    %v3706 = vpop.f32.mrb[0].mxu0
    %v3707 = vadd.f32 %v3594, %v3706
    %v3708 = vpop.f32.mrb[0].mxu0
    %v3709 = vadd.f32 %v3596, %v3708
    %v3710 = vpop.f32.mrb[0].mxu0
    %v3711 = vadd.f32 %v3598, %v3710
    %v3712 = vpop.f32.mrb[0].mxu0
    %v3713 = vadd.f32 %v3600, %v3712
    %3714 = vmatprep.mubr.bf16.mxu0 %v1318
    %3715 = vmatmul.mubr.bf16.gmra.mrb[0].mxu0 %v1317
    %v3716 = vpop.f32.mrb[0].mxu0
    %v3717 = vadd.f32 %v3604, %v3716
    %v3718 = vpop.f32.mrb[0].mxu0
    %v3719 = vadd.f32 %v3606, %v3718
    %v3720 = vpop.f32.mrb[0].mxu0
    %v3721 = vadd.f32 %v3608, %v3720
    %v3722 = vpop.f32.mrb[0].mxu0
    %v3723 = vadd.f32 %v3610, %v3722
    %3724 = vmatprep.mubr.bf16.mxu0 %v1320
    %3725 = vmatmul.mubr.bf16.gmra.mrb[0].mxu0 %v1319
    %v3726 = vpop.f32.mrb[0].mxu0
    %v3727 = vadd.f32 %v3614, %v3726
    %v3728 = vpop.f32.mrb[0].mxu0
    %v3729 = vadd.f32 %v3616, %v3728
    %v3730 = vpop.f32.mrb[0].mxu0
    %v3731 = vadd.f32 %v3618, %v3730
    %v3732 = vpop.f32.mrb[0].mxu0
    %v3733 = vadd.f32 %v3620, %v3732
    %3734 = vmatprep.mubr.bf16.mxu0 %v1322
    %3735 = vmatmul.mubr.bf16.gmra.mrb[0].mxu0 %v1321
    %v3736 = vpop.f32.mrb[0].mxu0
    %v3737 = vadd.f32 %v3624, %v3736
    %v3738 = vpop.f32.mrb[0].mxu0
    %v3739 = vadd.f32 %v3626, %v3738
    %v3740 = vpop.f32.mrb[0].mxu0
    %v3741 = vadd.f32 %v3628, %v3740
    %v3742 = vpop.f32.mrb[0].mxu0
    %v3743 = vadd.f32 %v3630, %v3742
    %3744 = vmatprep.mubr.bf16.mxu0 %v1324
    %3745 = vmatmul.mubr.bf16.gmra.mrb[0].mxu0 %v1323
    %v3746 = vpop.f32.mrb[0].mxu0
    %v3747 = vadd.f32 %v3634, %v3746
    %v3748 = vpop.f32.mrb[0].mxu0
    %v3749 = vadd.f32 %v3636, %v3748
    %v3750 = vpop.f32.mrb[0].mxu0
    %v3751 = vadd.f32 %v3638, %v3750
    %v3752 = vpop.f32.mrb[0].mxu0
    %v3753 = vadd.f32 %v3640, %v3752
    %3754 = vmatprep.mubr.bf16.mxu0 %v1326
    %3755 = vmatmul.mubr.bf16.gmra.mrb[0].mxu0 %v1325
    %v3756 = vpop.f32.mrb[0].mxu0
    %v3757 = vadd.f32 %v3644, %v3756
    %v3758 = vpop.f32.mrb[0].mxu0
    %v3759 = vadd.f32 %v3646, %v3758
    %v3760 = vpop.f32.mrb[0].mxu0
    %v3761 = vadd.f32 %v3648, %v3760
    %v3762 = vpop.f32.mrb[0].mxu0
    %v3763 = vadd.f32 %v3650, %v3762
    %3764 = vmatprep.mubr.bf16.mxu0 %v1328
    %3765 = vmatmul.mubr.bf16.gmra.mrb[0].mxu0 %v1327
    %v3766 = vpop.f32.mrb[0].mxu0
    %v3767 = vadd.f32 %v3654, %v3766
    %v3768 = vpop.f32.mrb[0].mxu0
    %v3769 = vadd.f32 %v3656, %v3768
    %v3770 = vpop.f32.mrb[0].mxu0
    %v3771 = vadd.f32 %v3658, %v3770
    %v3772 = vpop.f32.mrb[0].mxu0
    %v3773 = vadd.f32 %v3660, %v3772
    %3774 = vmatprep.mubr.bf16.mxu0 %v1330
    %3775 = vmatmul.mubr.bf16.gmra.mrb[0].mxu0 %v1329
    %v3776 = vpop.f32.mrb[0].mxu0
    %v3777 = vadd.f32 %v3664, %v3776
    %v3778 = vpop.f32.mrb[0].mxu0
    %v3779 = vadd.f32 %v3666, %v3778
    %v3780 = vpop.f32.mrb[0].mxu0
    %v3781 = vadd.f32 %v3668, %v3780
    %v3782 = vpop.f32.mrb[0].mxu0
    %v3783 = vadd.f32 %v3670, %v3782
    %3784 = vdwg.mxu0
    %3785 = vmatprep.subr.bf16.mxu0 %v2724
    %3786 = vmatpush1.bf16.msra.mxu0 %v2723
    %3787 = vmatprep.subr.bf16.mxu0 %v2726
    %3788 = vmatpush1.bf16.msra.mxu0 %v2725
    %3789 = vmatprep.subr.bf16.mxu0 %v2728
    %3790 = vmatpush1.bf16.msra.mxu0 %v2727
    %3791 = vmatprep.subr.bf16.mxu0 %v2730
    %3792 = vmatpush1.bf16.msra.mxu0 %v2729
    %3793 = vmatprep.subr.bf16.mxu0 %v2732
    %3794 = vmatpush1.bf16.msra.mxu0 %v2731
    %3795 = vmatprep.subr.bf16.mxu0 %v2734
    %3796 = vmatpush1.bf16.msra.mxu0 %v2733
    %3797 = vmatprep.subr.bf16.mxu0 %v2736
    %3798 = vmatpush1.bf16.msra.mxu0 %v2735
    %3799 = vmatprep.subr.bf16.mxu0 %v2738
    %3800 = vmatpush1.bf16.msra.mxu0 %v2737
    %3801 = vmatprep.subr.bf16.mxu0 %v2740
    %3802 = vmatpush1.bf16.msra.mxu0 %v2739
    %3803 = vmatprep.subr.bf16.mxu0 %v2742
    %3804 = vmatpush1.bf16.msra.mxu0 %v2741
    %3805 = vmatprep.subr.bf16.mxu0 %v2744
    %3806 = vmatpush1.bf16.msra.mxu0 %v2743
    %3807 = vmatprep.subr.bf16.mxu0 %v2746
    %3808 = vmatpush1.bf16.msra.mxu0 %v2745
    %3809 = vmatprep.subr.bf16.mxu0 %v2748
    %3810 = vmatpush1.bf16.msra.mxu0 %v2747
    %3811 = vmatprep.subr.bf16.mxu0 %v2750
    %3812 = vmatpush1.bf16.msra.mxu0 %v2749
    %3813 = vmatprep.subr.bf16.mxu0 %v2752
    %3814 = vmatpush1.bf16.msra.mxu0 %v2751
    %3815 = vmatprep.subr.bf16.mxu0 %v2754
    %3816 = vmatpush1.bf16.msra.mxu0 %v2753
    %3817 = vmatprep.mubr.bf16.mxu0 %v1086
    %3818 = vmatmul.mubr.bf16.gmra.mrb[0].mxu0 %v1085
    %v3819 = vpop.f32.mrb[0].mxu0
    %v3820 = vadd.f32 %v3707, %v3819
    %v3821 = vpop.f32.mrb[0].mxu0
    %v3822 = vadd.f32 %v3709, %v3821
    %v3823 = vpop.f32.mrb[0].mxu0
    %v3824 = vadd.f32 %v3711, %v3823
    %v3825 = vpop.f32.mrb[0].mxu0
    %v3826 = vadd.f32 %v3713, %v3825
    %3827 = vmatprep.mubr.bf16.mxu0 %v1088
    %3828 = vmatmul.mubr.bf16.gmra.mrb[0].mxu0 %v1087
    %v3829 = vpop.f32.mrb[0].mxu0
    %v3830 = vadd.f32 %v3717, %v3829
    %v3831 = vpop.f32.mrb[0].mxu0
    %v3832 = vadd.f32 %v3719, %v3831
    %v3833 = vpop.f32.mrb[0].mxu0
    %v3834 = vadd.f32 %v3721, %v3833
    %v3835 = vpop.f32.mrb[0].mxu0
    %v3836 = vadd.f32 %v3723, %v3835
    %3837 = vmatprep.mubr.bf16.mxu0 %v1090
    %3838 = vmatmul.mubr.bf16.gmra.mrb[0].mxu0 %v1089
    %v3839 = vpop.f32.mrb[0].mxu0
    %v3840 = vadd.f32 %v3727, %v3839
    %v3841 = vpop.f32.mrb[0].mxu0
    %v3842 = vadd.f32 %v3729, %v3841
    %v3843 = vpop.f32.mrb[0].mxu0
    %v3844 = vadd.f32 %v3731, %v3843
    %v3845 = vpop.f32.mrb[0].mxu0
    %v3846 = vadd.f32 %v3733, %v3845
    %3847 = vmatprep.mubr.bf16.mxu0 %v1348
    %3848 = vmatmul.mubr.bf16.gmra.mrb[0].mxu0 %v1347
    %v3849 = vpop.f32.mrb[0].mxu0
    %v3850 = vadd.f32 %v3737, %v3849
    %v3851 = vpop.f32.mrb[0].mxu0
    %v3852 = vadd.f32 %v3739, %v3851
    %v3853 = vpop.f32.mrb[0].mxu0
    %v3854 = vadd.f32 %v3741, %v3853
    %v3855 = vpop.f32.mrb[0].mxu0
    %v3856 = vadd.f32 %v3743, %v3855
    %3857 = vmatprep.mubr.bf16.mxu0 %v1094
    %3858 = vmatmul.mubr.bf16.gmra.mrb[0].mxu0 %v1093
    %v3859 = vpop.f32.mrb[0].mxu0
    %v3860 = vadd.f32 %v3747, %v3859
    %v3861 = vpop.f32.mrb[0].mxu0
    %v3862 = vadd.f32 %v3749, %v3861
    %v3863 = vpop.f32.mrb[0].mxu0
    %v3864 = vadd.f32 %v3751, %v3863
    %v3865 = vpop.f32.mrb[0].mxu0
    %v3866 = vadd.f32 %v3753, %v3865
    %3867 = vmatprep.mubr.bf16.mxu0 %v1096
    %3868 = vmatmul.mubr.bf16.gmra.mrb[0].mxu0 %v1095
    %v3869 = vpop.f32.mrb[0].mxu0
    %v3870 = vadd.f32 %v3757, %v3869
    %v3871 = vpop.f32.mrb[0].mxu0
    %v3872 = vadd.f32 %v3759, %v3871
    %v3873 = vpop.f32.mrb[0].mxu0
    %v3874 = vadd.f32 %v3761, %v3873
    %v3875 = vpop.f32.mrb[0].mxu0
    %v3876 = vadd.f32 %v3763, %v3875
    %3877 = vmatprep.mubr.bf16.mxu0 %v1098
    %3878 = vmatmul.mubr.bf16.gmra.mrb[0].mxu0 %v1097
    %v3879 = vpop.f32.mrb[0].mxu0
    %v3880 = vadd.f32 %v3767, %v3879
    %v3881 = vpop.f32.mrb[0].mxu0
    %v3882 = vadd.f32 %v3769, %v3881
    %v3883 = vpop.f32.mrb[0].mxu0
    %v3884 = vadd.f32 %v3771, %v3883
    %v3885 = vpop.f32.mrb[0].mxu0
    %v3886 = vadd.f32 %v3773, %v3885
    %3887 = vmatprep.mubr.bf16.mxu0 %v1350
    %3888 = vmatmul.mubr.bf16.gmra.mrb[0].mxu0 %v1349
    %v3889 = vpop.f32.mrb[0].mxu0
    %v3890 = vadd.f32 %v3777, %v3889
    %v3891 = vpop.f32.mrb[0].mxu0
    %v3892 = vadd.f32 %v3779, %v3891
    %v3893 = vpop.f32.mrb[0].mxu0
    %v3894 = vadd.f32 %v3781, %v3893
    %v3895 = vpop.f32.mrb[0].mxu0
    %v3896 = vadd.f32 %v3783, %v3895
    %3897 = vdwg.mxu0
    %3898 = vmatprep.subr.bf16.mxu0 %v2756
    %3899 = vmatpush1.bf16.msra.mxu0 %v2755
    %3900 = vmatprep.subr.bf16.mxu0 %v2758
    %3901 = vmatpush1.bf16.msra.mxu0 %v2757
    %3902 = vmatprep.subr.bf16.mxu0 %v2760
    %3903 = vmatpush1.bf16.msra.mxu0 %v2759
    %3904 = vmatprep.subr.bf16.mxu0 %v2762
    %3905 = vmatpush1.bf16.msra.mxu0 %v2761
    %3906 = vmatprep.subr.bf16.mxu0 %v2764
    %3907 = vmatpush1.bf16.msra.mxu0 %v2763
    %3908 = vmatprep.subr.bf16.mxu0 %v2766
    %3909 = vmatpush1.bf16.msra.mxu0 %v2765
    %3910 = vmatprep.subr.bf16.mxu0 %v2768
    %3911 = vmatpush1.bf16.msra.mxu0 %v2767
    %3912 = vmatprep.subr.bf16.mxu0 %v2770
    %3913 = vmatpush1.bf16.msra.mxu0 %v2769
    %3914 = vmatprep.subr.bf16.mxu0 %v2772
    %3915 = vmatpush1.bf16.msra.mxu0 %v2771
    %3916 = vmatprep.subr.bf16.mxu0 %v2774
    %3917 = vmatpush1.bf16.msra.mxu0 %v2773
    %3918 = vmatprep.subr.bf16.mxu0 %v2776
    %3919 = vmatpush1.bf16.msra.mxu0 %v2775
    %3920 = vmatprep.subr.bf16.mxu0 %v2778
    %3921 = vmatpush1.bf16.msra.mxu0 %v2777
    %3922 = vmatprep.subr.bf16.mxu0 %v2780
    %3923 = vmatpush1.bf16.msra.mxu0 %v2779
    %3924 = vmatprep.subr.bf16.mxu0 %v2782
    %3925 = vmatpush1.bf16.msra.mxu0 %v2781
    %3926 = vmatprep.subr.bf16.mxu0 %v2784
    %3927 = vmatpush1.bf16.msra.mxu0 %v2783
    %3928 = vmatprep.subr.bf16.mxu0 %v2786
    %3929 = vmatpush1.bf16.msra.mxu0 %v2785
    %3930 = vmatprep.mubr.bf16.mxu0 %v1150
    %3931 = vmatmul.mubr.bf16.gmra.mrb[0].mxu0 %v1149
    %v3932 = vpop.f32.mrb[0].mxu0
    %v3933 = vadd.f32 %v3820, %v3932
    %v3934 = vpop.f32.mrb[0].mxu0
    %v3935 = vadd.f32 %v3822, %v3934
    %v3936 = vpop.f32.mrb[0].mxu0
    %v3937 = vadd.f32 %v3824, %v3936
    %v3938 = vpop.f32.mrb[0].mxu0
    %v3939 = vadd.f32 %v3826, %v3938
    %3940 = vmatprep.mubr.bf16.mxu0 %v1152
    %3941 = vmatmul.mubr.bf16.gmra.mrb[0].mxu0 %v1151
    %v3942 = vpop.f32.mrb[0].mxu0
    %v3943 = vadd.f32 %v3830, %v3942
    %v3944 = vpop.f32.mrb[0].mxu0
    %v3945 = vadd.f32 %v3832, %v3944
    %v3946 = vpop.f32.mrb[0].mxu0
    %v3947 = vadd.f32 %v3834, %v3946
    %v3948 = vpop.f32.mrb[0].mxu0
    %v3949 = vadd.f32 %v3836, %v3948
    %3950 = vmatprep.mubr.bf16.mxu0 %v1154
    %3951 = vmatmul.mubr.bf16.gmra.mrb[0].mxu0 %v1153
    %v3952 = vpop.f32.mrb[0].mxu0
    %v3953 = vadd.f32 %v3840, %v3952
    %v3954 = vpop.f32.mrb[0].mxu0
    %v3955 = vadd.f32 %v3842, %v3954
    %v3956 = vpop.f32.mrb[0].mxu0
    %v3957 = vadd.f32 %v3844, %v3956
    %v3958 = vpop.f32.mrb[0].mxu0
    %v3959 = vadd.f32 %v3846, %v3958
    %3960 = vmatprep.mubr.bf16.mxu0 %v1360
    %3961 = vmatmul.mubr.bf16.gmra.mrb[0].mxu0 %v1359
    %v3962 = vpop.f32.mrb[0].mxu0
    %v3963 = vadd.f32 %v3850, %v3962
    %v3964 = vpop.f32.mrb[0].mxu0
    %v3965 = vadd.f32 %v3852, %v3964
    %v3966 = vpop.f32.mrb[0].mxu0
    %v3967 = vadd.f32 %v3854, %v3966
    %v3968 = vpop.f32.mrb[0].mxu0
    %v3969 = vadd.f32 %v3856, %v3968
    %3970 = vmatprep.mubr.bf16.mxu0 %v1158
    %3971 = vmatmul.mubr.bf16.gmra.mrb[0].mxu0 %v1157
    %v3972 = vpop.f32.mrb[0].mxu0
    %v3973 = vadd.f32 %v3860, %v3972
    %v3974 = vpop.f32.mrb[0].mxu0
    %v3975 = vadd.f32 %v3862, %v3974
    %v3976 = vpop.f32.mrb[0].mxu0
    %v3977 = vadd.f32 %v3864, %v3976
    %v3978 = vpop.f32.mrb[0].mxu0
    %v3979 = vadd.f32 %v3866, %v3978
    %3980 = vmatprep.mubr.bf16.mxu0 %v1160
    %3981 = vmatmul.mubr.bf16.gmra.mrb[0].mxu0 %v1159
    %v3982 = vpop.f32.mrb[0].mxu0
    %v3983 = vadd.f32 %v3870, %v3982
    %v3984 = vpop.f32.mrb[0].mxu0
    %v3985 = vadd.f32 %v3872, %v3984
    %v3986 = vpop.f32.mrb[0].mxu0
    %v3987 = vadd.f32 %v3874, %v3986
    %v3988 = vpop.f32.mrb[0].mxu0
    %v3989 = vadd.f32 %v3876, %v3988
    %3990 = vmatprep.mubr.bf16.mxu0 %v1162
    %3991 = vmatmul.mubr.bf16.gmra.mrb[0].mxu0 %v1161
    %v3992 = vpop.f32.mrb[0].mxu0
    %v3993 = vadd.f32 %v3880, %v3992
    %v3994 = vpop.f32.mrb[0].mxu0
    %v3995 = vadd.f32 %v3882, %v3994
    %v3996 = vpop.f32.mrb[0].mxu0
    %v3997 = vadd.f32 %v3884, %v3996
    %v3998 = vpop.f32.mrb[0].mxu0
    %v3999 = vadd.f32 %v3886, %v3998
    %4000 = vmatprep.mubr.bf16.mxu0 %v1362
    %4001 = vmatmul.mubr.bf16.gmra.mrb[0].mxu0 %v1361
    %v4002 = vpop.f32.mrb[0].mxu0
    %v4003 = vadd.f32 %v3890, %v4002
    %v4004 = vpop.f32.mrb[0].mxu0
    %v4005 = vadd.f32 %v3892, %v4004
    %v4006 = vpop.f32.mrb[0].mxu0
    %v4007 = vadd.f32 %v3894, %v4006
    %v4008 = vpop.f32.mrb[0].mxu0
    %v4009 = vadd.f32 %v3896, %v4008
    %4010 = vdwg.mxu0
    %4011 = vmatprep.subr.bf16.mxu0 %v2788
    %4012 = vmatpush1.bf16.msra.mxu0 %v2787
    %4013 = vmatprep.subr.bf16.mxu0 %v2790
    %4014 = vmatpush1.bf16.msra.mxu0 %v2789
    %4015 = vmatprep.subr.bf16.mxu0 %v2792
    %4016 = vmatpush1.bf16.msra.mxu0 %v2791
    %4017 = vmatprep.subr.bf16.mxu0 %v2794
    %4018 = vmatpush1.bf16.msra.mxu0 %v2793
    %4019 = vmatprep.subr.bf16.mxu0 %v2796
    %4020 = vmatpush1.bf16.msra.mxu0 %v2795
    %4021 = vmatprep.subr.bf16.mxu0 %v2798
    %4022 = vmatpush1.bf16.msra.mxu0 %v2797
    %4023 = vmatprep.subr.bf16.mxu0 %v2800
    %4024 = vmatpush1.bf16.msra.mxu0 %v2799
    %4025 = vmatprep.subr.bf16.mxu0 %v2802
    %4026 = vmatpush1.bf16.msra.mxu0 %v2801
    %4027 = vmatprep.subr.bf16.mxu0 %v2804
    %4028 = vmatpush1.bf16.msra.mxu0 %v2803
    %4029 = vmatprep.subr.bf16.mxu0 %v2806
    %4030 = vmatpush1.bf16.msra.mxu0 %v2805
    %4031 = vmatprep.subr.bf16.mxu0 %v2808
    %4032 = vmatpush1.bf16.msra.mxu0 %v2807
    %4033 = vmatprep.subr.bf16.mxu0 %v2810
    %4034 = vmatpush1.bf16.msra.mxu0 %v2809
    %4035 = vmatprep.subr.bf16.mxu0 %v2812
    %4036 = vmatpush1.bf16.msra.mxu0 %v2811
    %4037 = vmatprep.subr.bf16.mxu0 %v2814
    %4038 = vmatpush1.bf16.msra.mxu0 %v2813
    %4039 = vmatprep.subr.bf16.mxu0 %v2816
    %4040 = vmatpush1.bf16.msra.mxu0 %v2815
    %4041 = vmatprep.subr.bf16.mxu0 %v2818
    %4042 = vmatpush1.bf16.msra.mxu0 %v2817
    %4043 = vmatprep.mubr.bf16.mxu0 %v1214
    %4044 = vmatmul.mubr.bf16.gmra.mrb[0].mxu0 %v1213
    %v4045 = vpop.f32.mrb[0].mxu0
    %v4046 = vadd.f32 %v3933, %v4045
    %v4047 = vpop.f32.mrb[0].mxu0
    %v4048 = vadd.f32 %v3935, %v4047
    %v4049 = vpop.f32.mrb[0].mxu0
    %v4050 = vadd.f32 %v3937, %v4049
    %v4051 = vpop.f32.mrb[0].mxu0
    %v4052 = vadd.f32 %v3939, %v4051
    %4053 = vmatprep.mubr.bf16.mxu0 %v1216
    %4054 = vmatmul.mubr.bf16.gmra.mrb[0].mxu0 %v1215
    %v4055 = vpop.f32.mrb[0].mxu0
    %v4056 = vadd.f32 %v3943, %v4055
    %v4057 = vpop.f32.mrb[0].mxu0
    %v4058 = vadd.f32 %v3945, %v4057
    %v4059 = vpop.f32.mrb[0].mxu0
    %v4060 = vadd.f32 %v3947, %v4059
    %v4061 = vpop.f32.mrb[0].mxu0
    %v4062 = vadd.f32 %v3949, %v4061
    %4063 = vmatprep.mubr.bf16.mxu0 %v1218
    %4064 = vmatmul.mubr.bf16.gmra.mrb[0].mxu0 %v1217
    %v4065 = vpop.f32.mrb[0].mxu0
    %v4066 = vadd.f32 %v3953, %v4065
    %v4067 = vpop.f32.mrb[0].mxu0
    %v4068 = vadd.f32 %v3955, %v4067
    %v4069 = vpop.f32.mrb[0].mxu0
    %v4070 = vadd.f32 %v3957, %v4069
    %v4071 = vpop.f32.mrb[0].mxu0
    %v4072 = vadd.f32 %v3959, %v4071
    %4073 = vmatprep.mubr.bf16.mxu0 %v1372
    %4074 = vmatmul.mubr.bf16.gmra.mrb[0].mxu0 %v1371
    %v4075 = vpop.f32.mrb[0].mxu0
    %v4076 = vadd.f32 %v3963, %v4075
    %v4077 = vpop.f32.mrb[0].mxu0
    %v4078 = vadd.f32 %v3965, %v4077
    %v4079 = vpop.f32.mrb[0].mxu0
    %v4080 = vadd.f32 %v3967, %v4079
    %v4081 = vpop.f32.mrb[0].mxu0
    %v4082 = vadd.f32 %v3969, %v4081
    %4083 = vmatprep.mubr.bf16.mxu0 %v1222
    %4084 = vmatmul.mubr.bf16.gmra.mrb[0].mxu0 %v1221
    %v4085 = vpop.f32.mrb[0].mxu0
    %v4086 = vadd.f32 %v3973, %v4085
    %v4087 = vpop.f32.mrb[0].mxu0
    %v4088 = vadd.f32 %v3975, %v4087
    %v4089 = vpop.f32.mrb[0].mxu0
    %v4090 = vadd.f32 %v3977, %v4089
    %v4091 = vpop.f32.mrb[0].mxu0
    %v4092 = vadd.f32 %v3979, %v4091
    %4093 = vmatprep.mubr.bf16.mxu0 %v1224
    %4094 = vmatmul.mubr.bf16.gmra.mrb[0].mxu0 %v1223
    %v4095 = vpop.f32.mrb[0].mxu0
    %v4096 = vadd.f32 %v3983, %v4095
    %v4097 = vpop.f32.mrb[0].mxu0
    %v4098 = vadd.f32 %v3985, %v4097
    %v4099 = vpop.f32.mrb[0].mxu0
    %v4100 = vadd.f32 %v3987, %v4099
    %v4101 = vpop.f32.mrb[0].mxu0
    %v4102 = vadd.f32 %v3989, %v4101
    %4103 = vmatprep.mubr.bf16.mxu0 %v1226
    %4104 = vmatmul.mubr.bf16.gmra.mrb[0].mxu0 %v1225
    %v4105 = vpop.f32.mrb[0].mxu0
    %v4106 = vadd.f32 %v3993, %v4105
    %v4107 = vpop.f32.mrb[0].mxu0
    %v4108 = vadd.f32 %v3995, %v4107
    %v4109 = vpop.f32.mrb[0].mxu0
    %v4110 = vadd.f32 %v3997, %v4109
    %v4111 = vpop.f32.mrb[0].mxu0
    %v4112 = vadd.f32 %v3999, %v4111
    %4113 = vmatprep.mubr.bf16.mxu0 %v1374
    %4114 = vmatmul.mubr.bf16.gmra.mrb[0].mxu0 %v1373
    %v4115 = vpop.f32.mrb[0].mxu0
    %v4116 = vadd.f32 %v4003, %v4115
    %v4117 = vpop.f32.mrb[0].mxu0
    %v4118 = vadd.f32 %v4005, %v4117
    %v4119 = vpop.f32.mrb[0].mxu0
    %v4120 = vadd.f32 %v4007, %v4119
    %v4121 = vpop.f32.mrb[0].mxu0
    %v4122 = vadd.f32 %v4009, %v4121
    %4123 = vdwg.mxu0
    %v4124 = vadd.f32 %v4046, %v4050
    %v4125 = vadd.f32 %v4124, %v4056
    %v4126 = vadd.f32 %v4125, %v4060
    %v4127 = vadd.f32 %v4126, %v4066
    %v4128 = vadd.f32 %v4127, %v4070
    %v4129 = vadd.f32 %v4128, %v4076
    %v4130 = vadd.f32 %v4129, %v4080
    %v4131 = vrot.slane %v4130, 4
    %v4132 = vadd.f32 %v4130, %v4131
    %v4133 = vrot.slane %v4132, 2
    %v4134 = vadd.f32 %v4132, %v4133
    %v4135 = vrot.slane %v4134, 1
    %v4136 = vadd.f32 %v4134, %v4135
    %v4137 = vadd.f32 %v4048, %v4052
    %v4138 = vadd.f32 %v4137, %v4058
    %v4139 = vadd.f32 %v4138, %v4062
    %v4140 = vadd.f32 %v4139, %v4068
    %v4141 = vadd.f32 %v4140, %v4072
    %v4142 = vadd.f32 %v4141, %v4078
    %v4143 = vadd.f32 %v4142, %v4082
    %v4144 = vrot.slane %v4143, 4
    %v4145 = vadd.f32 %v4143, %v4144
    %v4146 = vrot.slane %v4145, 2
    %v4147 = vadd.f32 %v4145, %v4146
    %v4148 = vrot.slane %v4147, 1
    %v4149 = vadd.f32 %v4147, %v4148
    %v4150 = vadd.f32 %v4086, %v4090
    %v4151 = vadd.f32 %v4150, %v4096
    %v4152 = vadd.f32 %v4151, %v4100
    %v4153 = vadd.f32 %v4152, %v4106
    %v4154 = vadd.f32 %v4153, %v4110
    %v4155 = vadd.f32 %v4154, %v4116
    %v4156 = vadd.f32 %v4155, %v4120
    %v4157 = vrot.slane %v4156, 4
    %v4158 = vadd.f32 %v4156, %v4157
    %v4159 = vrot.slane %v4158, 2
    %v4160 = vadd.f32 %v4158, %v4159
    %v4161 = vrot.slane %v4160, 1
    %v4162 = vadd.f32 %v4160, %v4161
    %v4163 = vadd.f32 %v4088, %v4092
    %v4164 = vadd.f32 %v4163, %v4098
    %v4165 = vadd.f32 %v4164, %v4102
    %v4166 = vadd.f32 %v4165, %v4108
    %v4167 = vadd.f32 %v4166, %v4112
    %v4168 = vadd.f32 %v4167, %v4118
    %v4169 = vadd.f32 %v4168, %v4122
    %v4170 = vrot.slane %v4169, 4
    %v4171 = vadd.f32 %v4169, %v4170
    %v4172 = vrot.slane %v4171, 2
    %v4173 = vadd.f32 %v4171, %v4172
    %v4174 = vrot.slane %v4173, 1
    %v4175 = vadd.f32 %v4173, %v4174
    %v4176 = vmul.f32 %v4046, %v4046
    %v4177 = vmul.f32 %v4048, %v4048
    %v4178 = vmul.f32 %v4050, %v4050
    %v4179 = vmul.f32 %v4052, %v4052
    %v4180 = vmul.f32 %v4056, %v4056
    %v4181 = vmul.f32 %v4058, %v4058
    %v4182 = vmul.f32 %v4060, %v4060
    %v4183 = vmul.f32 %v4062, %v4062
    %v4184 = vmul.f32 %v4066, %v4066
    %v4185 = vmul.f32 %v4068, %v4068
    %v4186 = vmul.f32 %v4070, %v4070
    %v4187 = vmul.f32 %v4072, %v4072
    %v4188 = vmul.f32 %v4076, %v4076
    %v4189 = vmul.f32 %v4078, %v4078
    %v4190 = vmul.f32 %v4080, %v4080
    %v4191 = vmul.f32 %v4082, %v4082
    %v4192 = vmul.f32 %v4086, %v4086
    %v4193 = vmul.f32 %v4088, %v4088
    %v4194 = vmul.f32 %v4090, %v4090
    %v4195 = vmul.f32 %v4092, %v4092
    %v4196 = vmul.f32 %v4096, %v4096
    %v4197 = vmul.f32 %v4098, %v4098
    %v4198 = vmul.f32 %v4100, %v4100
    %v4199 = vmul.f32 %v4102, %v4102
    %v4200 = vmul.f32 %v4106, %v4106
    %v4201 = vmul.f32 %v4108, %v4108
    %v4202 = vmul.f32 %v4110, %v4110
    %v4203 = vmul.f32 %v4112, %v4112
    %v4204 = vmul.f32 %v4116, %v4116
    %v4205 = vmul.f32 %v4118, %v4118
    %v4206 = vmul.f32 %v4120, %v4120
    %v4207 = vmul.f32 %v4122, %v4122
    %v4208 = vadd.f32 %v4176, %v4178
    %v4209 = vadd.f32 %v4208, %v4180
    %v4210 = vadd.f32 %v4209, %v4182
    %v4211 = vadd.f32 %v4210, %v4184
    %v4212 = vadd.f32 %v4211, %v4186
    %v4213 = vadd.f32 %v4212, %v4188
    %v4214 = vadd.f32 %v4213, %v4190
    %v4215 = vrot.slane %v4214, 4
    %v4216 = vadd.f32 %v4214, %v4215
    %v4217 = vrot.slane %v4216, 2
    %v4218 = vadd.f32 %v4216, %v4217
    %v4219 = vrot.slane %v4218, 1
    %v4220 = vadd.f32 %v4218, %v4219
    %v4221 = vadd.f32 %v4177, %v4179
    %v4222 = vadd.f32 %v4221, %v4181
    %v4223 = vadd.f32 %v4222, %v4183
    %v4224 = vadd.f32 %v4223, %v4185
    %v4225 = vadd.f32 %v4224, %v4187
    %v4226 = vadd.f32 %v4225, %v4189
    %v4227 = vadd.f32 %v4226, %v4191
    %v4228 = vrot.slane %v4227, 4
    %v4229 = vadd.f32 %v4227, %v4228
    %v4230 = vrot.slane %v4229, 2
    %v4231 = vadd.f32 %v4229, %v4230
    %v4232 = vrot.slane %v4231, 1
    %v4233 = vadd.f32 %v4231, %v4232
    %v4234 = vadd.f32 %v4192, %v4194
    %v4235 = vadd.f32 %v4234, %v4196
    %v4236 = vadd.f32 %v4235, %v4198
    %v4237 = vadd.f32 %v4236, %v4200
    %v4238 = vadd.f32 %v4237, %v4202
    %v4239 = vadd.f32 %v4238, %v4204
    %v4240 = vadd.f32 %v4239, %v4206
    %v4241 = vrot.slane %v4240, 4
    %v4242 = vadd.f32 %v4240, %v4241
    %v4243 = vrot.slane %v4242, 2
    %v4244 = vadd.f32 %v4242, %v4243
    %v4245 = vrot.slane %v4244, 1
    %v4246 = vadd.f32 %v4244, %v4245
    %v4247 = vadd.f32 %v4193, %v4195
    %v4248 = vadd.f32 %v4247, %v4197
    %v4249 = vadd.f32 %v4248, %v4199
    %v4250 = vadd.f32 %v4249, %v4201
    %v4251 = vadd.f32 %v4250, %v4203
    %v4252 = vadd.f32 %v4251, %v4205
    %v4253 = vadd.f32 %v4252, %v4207
    %v4254 = vrot.slane %v4253, 4
    %v4255 = vadd.f32 %v4253, %v4254
    %v4256 = vrot.slane %v4255, 2
    %v4257 = vadd.f32 %v4255, %v4256
    %v4258 = vrot.slane %v4257, 1
    %v4259 = vadd.f32 %v4257, %v4258
    %v4260 = vmul.f32 %v4136, 0.015625
    %v4261 = vmul.f32 %v4149, 0.015625
    %v4262 = vmul.f32 %v4162, 0.015625
    %v4263 = vmul.f32 %v4175, 0.015625
    %v4264 = vmul.f32 %v4220, 0.015625
    %v4265 = vmul.f32 %v4233, 0.015625
    %v4266 = vmul.f32 %v4246, 0.015625
    %v4267 = vmul.f32 %v4259, 0.015625
    %v4268 = vmul.f32 %v4260, %v4260
    %v4269 = vmul.f32 %v4261, %v4261
    %v4270 = vmul.f32 %v4262, %v4262
    %v4271 = vmul.f32 %v4263, %v4263
    %v4272 = vsub.f32 %v4264, %v4268
    %v4273 = vsub.f32 %v4265, %v4269
    %v4274 = vsub.f32 %v4266, %v4270
    %v4275 = vsub.f32 %v4267, %v4271
    %v4276 = vsub.f32 %v4046, %v4260
    %v4277 = vsub.f32 %v4048, %v4261
    %v4278 = vsub.f32 %v4050, %v4260
    %v4279 = vsub.f32 %v4052, %v4261
    %v4280 = vsub.f32 %v4056, %v4260
    %v4281 = vsub.f32 %v4058, %v4261
    %v4282 = vsub.f32 %v4060, %v4260
    %v4283 = vsub.f32 %v4062, %v4261
    %v4284 = vsub.f32 %v4066, %v4260
    %v4285 = vsub.f32 %v4068, %v4261
    %v4286 = vsub.f32 %v4070, %v4260
    %v4287 = vsub.f32 %v4072, %v4261
    %v4288 = vsub.f32 %v4076, %v4260
    %v4289 = vsub.f32 %v4078, %v4261
    %v4290 = vsub.f32 %v4080, %v4260
    %v4291 = vsub.f32 %v4082, %v4261
    %v4292 = vsub.f32 %v4086, %v4262
    %v4293 = vsub.f32 %v4088, %v4263
    %v4294 = vsub.f32 %v4090, %v4262
    %v4295 = vsub.f32 %v4092, %v4263
    %v4296 = vsub.f32 %v4096, %v4262
    %v4297 = vsub.f32 %v4098, %v4263
    %v4298 = vsub.f32 %v4100, %v4262
    %v4299 = vsub.f32 %v4102, %v4263
    %v4300 = vsub.f32 %v4106, %v4262
    %v4301 = vsub.f32 %v4108, %v4263
    %v4302 = vsub.f32 %v4110, %v4262
    %v4303 = vsub.f32 %v4112, %v4263
    %v4304 = vsub.f32 %v4116, %v4262
    %v4305 = vsub.f32 %v4118, %v4263
    %v4306 = vsub.f32 %v4120, %v4262
    %v4307 = vsub.f32 %v4122, %v4263
    %v4308 = vadd.f32 %v4272, 1e-05
    %v4309 = vadd.f32 %v4273, 1e-05
    %v4310 = vadd.f32 %v4274, 1e-05
    %v4311 = vadd.f32 %v4275, 1e-05
    %v4312 = vrsqrt.pop %v4308
    %v4313 = vrsqrt.pop %v4309
    %v4314 = vrsqrt.pop %v4310
    %v4315 = vrsqrt.pop %v4311
    %v4316 = vmul.f32 %v4276, %v4312
    %v4317 = vmul.f32 %v4277, %v4313
    %v4318 = vmul.f32 %v4278, %v4312
    %v4319 = vmul.f32 %v4279, %v4313
    %v4320 = vmul.f32 %v4280, %v4312
    %v4321 = vmul.f32 %v4281, %v4313
    %v4322 = vmul.f32 %v4282, %v4312
    %v4323 = vmul.f32 %v4283, %v4313
    %v4324 = vmul.f32 %v4284, %v4312
    %v4325 = vmul.f32 %v4285, %v4313
    %v4326 = vmul.f32 %v4286, %v4312
    %v4327 = vmul.f32 %v4287, %v4313
    %v4328 = vmul.f32 %v4288, %v4312
    %v4329 = vmul.f32 %v4289, %v4313
    %v4330 = vmul.f32 %v4290, %v4312
    %v4331 = vmul.f32 %v4291, %v4313
    %v4332 = vmul.f32 %v4292, %v4314
    %v4333 = vmul.f32 %v4293, %v4315
    %v4334 = vmul.f32 %v4294, %v4314
    %v4335 = vmul.f32 %v4295, %v4315
    %v4336 = vmul.f32 %v4296, %v4314
    %v4337 = vmul.f32 %v4297, %v4315
    %v4338 = vmul.f32 %v4298, %v4314
    %v4339 = vmul.f32 %v4299, %v4315
    %v4340 = vmul.f32 %v4300, %v4314
    %v4341 = vmul.f32 %v4301, %v4315
    %v4342 = vmul.f32 %v4302, %v4314
    %v4343 = vmul.f32 %v4303, %v4315
    %v4344 = vmul.f32 %v4304, %v4314
    %v4345 = vmul.f32 %v4305, %v4315
    %v4346 = vmul.f32 %v4306, %v4314
    %v4347 = vmul.f32 %v4307, %v4315
    %v4348 = vmax.f32 %v4316, 0.0
    %v4349 = vmax.f32 %v4317, 0.0
    %v4350 = vmax.f32 %v4318, 0.0
    %v4351 = vmax.f32 %v4319, 0.0
    %v4352 = vmax.f32 %v4320, 0.0
    %v4353 = vmax.f32 %v4321, 0.0
    %v4354 = vmax.f32 %v4322, 0.0
    %v4355 = vmax.f32 %v4323, 0.0
    %v4356 = vmax.f32 %v4324, 0.0
    %v4357 = vmax.f32 %v4325, 0.0
    %v4358 = vmax.f32 %v4326, 0.0
    %v4359 = vmax.f32 %v4327, 0.0
    %v4360 = vmax.f32 %v4328, 0.0
    %v4361 = vmax.f32 %v4329, 0.0
    %v4362 = vmax.f32 %v4330, 0.0
    %v4363 = vmax.f32 %v4331, 0.0
    %v4364 = vmax.f32 %v4332, 0.0
    %v4365 = vmax.f32 %v4333, 0.0
    %v4366 = vmax.f32 %v4334, 0.0
    %v4367 = vmax.f32 %v4335, 0.0
    %v4368 = vmax.f32 %v4336, 0.0
    %v4369 = vmax.f32 %v4337, 0.0
    %v4370 = vmax.f32 %v4338, 0.0
    %v4371 = vmax.f32 %v4339, 0.0
    %v4372 = vmax.f32 %v4340, 0.0
    %v4373 = vmax.f32 %v4341, 0.0
    %v4374 = vmax.f32 %v4342, 0.0
    %v4375 = vmax.f32 %v4343, 0.0
    %v4376 = vmax.f32 %v4344, 0.0
    %v4377 = vmax.f32 %v4345, 0.0
    %v4378 = vmax.f32 %v4346, 0.0
    %v4379 = vmax.f32 %v4347, 0.0
    %v4380 = vpack.c.bf16 %v4350, %v4348
    %v4381 = vpack.c.bf16 %v4351, %v4349
    %v4382 = vpack.c.bf16 %v4354, %v4352
    %v4383 = vpack.c.bf16 %v4355, %v4353
    %v4384 = vpack.c.bf16 %v4358, %v4356
    %v4385 = vpack.c.bf16 %v4359, %v4357
    %v4386 = vpack.c.bf16 %v4362, %v4360
    %v4387 = vpack.c.bf16 %v4363, %v4361
    %v4388 = vpack.c.bf16 %v4366, %v4364
    %v4389 = vpack.c.bf16 %v4367, %v4365
    %v4390 = vpack.c.bf16 %v4370, %v4368
    %v4391 = vpack.c.bf16 %v4371, %v4369
    %v4392 = vpack.c.bf16 %v4374, %v4372
    %v4393 = vpack.c.bf16 %v4375, %v4373
    %v4394 = vpack.c.bf16 %v4378, %v4376
    %v4395 = vpack.c.bf16 %v4379, %v4377
    %v4412 = vunpack.c.l.b16 %v4380
    %v4413 = vunpack.c.l.b16 %v4381
    %v4414 = vunpack.c.h.b16 %v4380
    %v4415 = vunpack.c.h.b16 %v4381
    %v4416 = vunpack.c.l.b16 %v4382
    %v4417 = vunpack.c.l.b16 %v4383
    %v4418 = vunpack.c.h.b16 %v4382
    %v4419 = vunpack.c.h.b16 %v4383
    %v4420 = vunpack.c.l.b16 %v4384
    %v4421 = vunpack.c.l.b16 %v4385
    %v4422 = vunpack.c.h.b16 %v4384
    %v4423 = vunpack.c.h.b16 %v4385
    %v4424 = vunpack.c.l.b16 %v4386
    %v4425 = vunpack.c.l.b16 %v4387
    %v4426 = vunpack.c.h.b16 %v4386
    %v4427 = vunpack.c.h.b16 %v4387
    %v4428 = vunpack.c.l.b16 %v4388
    %v4429 = vunpack.c.l.b16 %v4389
    %v4430 = vunpack.c.h.b16 %v4388
    %v4431 = vunpack.c.h.b16 %v4389
    %v4432 = vunpack.c.l.b16 %v4390
    %v4433 = vunpack.c.l.b16 %v4391
    %v4434 = vunpack.c.h.b16 %v4390
    %v4435 = vunpack.c.h.b16 %v4391
    %v4436 = vunpack.c.l.b16 %v4392
    %v4437 = vunpack.c.l.b16 %v4393
    %v4438 = vunpack.c.h.b16 %v4392
    %v4439 = vunpack.c.h.b16 %v4393
    %v4440 = vunpack.c.l.b16 %v4394
    %v4441 = vunpack.c.l.b16 %v4395
    %v4442 = vunpack.c.h.b16 %v4394
    %v4443 = vunpack.c.h.b16 %v4395
    %v4444 = vpack.c.b16 %v4412, %v4412
    %v4445 = vpack.c.b16 %v4413, %v4413
    %v4446 = vpack.c.b16 %v4414, %v4414
    %v4447 = vpack.c.b16 %v4415, %v4415
    %v4448 = vpack.c.b16 %v4416, %v4416
    %v4449 = vpack.c.b16 %v4417, %v4417
    %v4450 = vpack.c.b16 %v4418, %v4418
    %v4451 = vpack.c.b16 %v4419, %v4419
    %v4452 = vpack.c.b16 %v4420, %v4420
    %v4453 = vpack.c.b16 %v4421, %v4421
    %v4454 = vpack.c.b16 %v4422, %v4422
    %v4455 = vpack.c.b16 %v4423, %v4423
    %v4456 = vpack.c.b16 %v4424, %v4424
    %v4457 = vpack.c.b16 %v4425, %v4425
    %v4458 = vpack.c.b16 %v4426, %v4426
    %v4459 = vpack.c.b16 %v4427, %v4427
    %v4460 = vpack.c.b16 %v4428, %v4428
    %v4461 = vpack.c.b16 %v4429, %v4429
    %v4462 = vpack.c.b16 %v4430, %v4430
    %v4463 = vpack.c.b16 %v4431, %v4431
    %v4464 = vpack.c.b16 %v4432, %v4432
    %v4465 = vpack.c.b16 %v4433, %v4433
    %v4466 = vpack.c.b16 %v4434, %v4434
    %v4467 = vpack.c.b16 %v4435, %v4435
    %v4468 = vpack.c.b16 %v4436, %v4436
    %v4469 = vpack.c.b16 %v4437, %v4437
    %v4470 = vpack.c.b16 %v4438, %v4438
    %v4471 = vpack.c.b16 %v4439, %v4439
    %v4472 = vpack.c.b16 %v4440, %v4440
    %v4473 = vpack.c.b16 %v4441, %v4441
    %v4474 = vpack.c.b16 %v4442, %v4442
    %v4475 = vpack.c.b16 %v4443, %v4443
    %v4477 = vshrl.u32 %v4444, 16
    %v4479 = vrot.slane %v4477, 7
    %v4480 = vshll.u32 %v4444, 16
    %v4482 = vor.u32 %v4479, %v4480
    %v4484 = vshrl.u32 %v4445, 16
    %v4486 = vrot.slane %v4484, 7
    %v4487 = vshll.u32 %v4445, 16
    %v4489 = vor.u32 %v4486, %v4487
    %v4491 = vshrl.u32 %v4446, 16
    %v4493 = vrot.slane %v4491, 7
    %v4494 = vshll.u32 %v4446, 16
    %v4496 = vor.u32 %v4493, %v4494
    %v4498 = vshrl.u32 %v4447, 16
    %v4500 = vrot.slane %v4498, 7
    %v4501 = vshll.u32 %v4447, 16
    %v4503 = vor.u32 %v4500, %v4501
    %v4505 = vshrl.u32 %v4448, 16
    %v4507 = vrot.slane %v4505, 7
    %v4508 = vshll.u32 %v4448, 16
    %v4510 = vor.u32 %v4507, %v4508
    %v4512 = vshrl.u32 %v4449, 16
    %v4514 = vrot.slane %v4512, 7
    %v4515 = vshll.u32 %v4449, 16
    %v4517 = vor.u32 %v4514, %v4515
    %v4519 = vshrl.u32 %v4450, 16
    %v4521 = vrot.slane %v4519, 7
    %v4522 = vshll.u32 %v4450, 16
    %v4524 = vor.u32 %v4521, %v4522
    %v4526 = vshrl.u32 %v4451, 16
    %v4528 = vrot.slane %v4526, 7
    %v4529 = vshll.u32 %v4451, 16
    %v4531 = vor.u32 %v4528, %v4529
    %v4533 = vshrl.u32 %v4452, 16
    %v4535 = vrot.slane %v4533, 7
    %v4536 = vshll.u32 %v4452, 16
    %v4538 = vor.u32 %v4535, %v4536
    %v4540 = vshrl.u32 %v4453, 16
    %v4542 = vrot.slane %v4540, 7
    %v4543 = vshll.u32 %v4453, 16
    %v4545 = vor.u32 %v4542, %v4543
    %v4547 = vshrl.u32 %v4454, 16
    %v4549 = vrot.slane %v4547, 7
    %v4550 = vshll.u32 %v4454, 16
    %v4552 = vor.u32 %v4549, %v4550
    %v4554 = vshrl.u32 %v4455, 16
    %v4556 = vrot.slane %v4554, 7
    %v4557 = vshll.u32 %v4455, 16
    %v4559 = vor.u32 %v4556, %v4557
    %v4561 = vshrl.u32 %v4456, 16
    %v4563 = vrot.slane %v4561, 7
    %v4564 = vshll.u32 %v4456, 16
    %v4566 = vor.u32 %v4563, %v4564
    %v4568 = vshrl.u32 %v4457, 16
    %v4570 = vrot.slane %v4568, 7
    %v4571 = vshll.u32 %v4457, 16
    %v4573 = vor.u32 %v4570, %v4571
    %v4575 = vshrl.u32 %v4458, 16
    %v4577 = vrot.slane %v4575, 7
    %v4578 = vshll.u32 %v4458, 16
    %v4580 = vor.u32 %v4577, %v4578
    %v4582 = vshrl.u32 %v4459, 16
    %v4584 = vrot.slane %v4582, 7
    %v4585 = vshll.u32 %v4459, 16
    %v4587 = vor.u32 %v4584, %v4585
    %v4589 = vshrl.u32 %v4460, 16
    %v4591 = vrot.slane %v4589, 7
    %v4592 = vshll.u32 %v4460, 16
    %v4594 = vor.u32 %v4591, %v4592
    %v4596 = vshrl.u32 %v4461, 16
    %v4598 = vrot.slane %v4596, 7
    %v4599 = vshll.u32 %v4461, 16
    %v4601 = vor.u32 %v4598, %v4599
    %v4603 = vshrl.u32 %v4462, 16
    %v4605 = vrot.slane %v4603, 7
    %v4606 = vshll.u32 %v4462, 16
    %v4608 = vor.u32 %v4605, %v4606
    %v4610 = vshrl.u32 %v4463, 16
    %v4612 = vrot.slane %v4610, 7
    %v4613 = vshll.u32 %v4463, 16
    %v4615 = vor.u32 %v4612, %v4613
    %v4617 = vshrl.u32 %v4464, 16
    %v4619 = vrot.slane %v4617, 7
    %v4620 = vshll.u32 %v4464, 16
    %v4622 = vor.u32 %v4619, %v4620
    %v4624 = vshrl.u32 %v4465, 16
    %v4626 = vrot.slane %v4624, 7
    %v4627 = vshll.u32 %v4465, 16
    %v4629 = vor.u32 %v4626, %v4627
    %v4631 = vshrl.u32 %v4466, 16
    %v4633 = vrot.slane %v4631, 7
    %v4634 = vshll.u32 %v4466, 16
    %v4636 = vor.u32 %v4633, %v4634
    %v4638 = vshrl.u32 %v4467, 16
    %v4640 = vrot.slane %v4638, 7
    %v4641 = vshll.u32 %v4467, 16
    %v4643 = vor.u32 %v4640, %v4641
    %v4645 = vshrl.u32 %v4468, 16
    %v4647 = vrot.slane %v4645, 7
    %v4648 = vshll.u32 %v4468, 16
    %v4650 = vor.u32 %v4647, %v4648
    %v4652 = vshrl.u32 %v4469, 16
    %v4654 = vrot.slane %v4652, 7
    %v4655 = vshll.u32 %v4469, 16
    %v4657 = vor.u32 %v4654, %v4655
    %v4659 = vshrl.u32 %v4470, 16
    %v4661 = vrot.slane %v4659, 7
    %v4662 = vshll.u32 %v4470, 16
    %v4664 = vor.u32 %v4661, %v4662
    %v4666 = vshrl.u32 %v4471, 16
    %v4668 = vrot.slane %v4666, 7
    %v4669 = vshll.u32 %v4471, 16
    %v4671 = vor.u32 %v4668, %v4669
    %v4673 = vshrl.u32 %v4472, 16
    %v4675 = vrot.slane %v4673, 7
    %v4676 = vshll.u32 %v4472, 16
    %v4678 = vor.u32 %v4675, %v4676
    %v4680 = vshrl.u32 %v4473, 16
    %v4682 = vrot.slane %v4680, 7
    %v4683 = vshll.u32 %v4473, 16
    %v4685 = vor.u32 %v4682, %v4683
    %v4687 = vshrl.u32 %v4474, 16
    %v4689 = vrot.slane %v4687, 7
    %v4690 = vshll.u32 %v4474, 16
    %v4692 = vor.u32 %v4689, %v4690
    %v4694 = vshrl.u32 %v4475, 16
    %v4696 = vrot.slane %v4694, 7
    %v4697 = vshll.u32 %v4475, 16
    %v4699 = vor.u32 %v4696, %v4697
    %v4732 = vld [vmem:[%s417] sm:$0x1f]
    %v4733 = vsel %vm420, %v4482, %v4732
    %4734 = vst [vmem:[%s417] sm:$0x1f] %v4733
    %v4735 = vld [vmem:[%s417 + $0x8] sm:$0x1f]
    %v4736 = vsel %vm420, %v4489, %v4735
    %4737 = vst [vmem:[%s417 + $0x8] sm:$0x1f] %v4736
    %v4738 = vld [vmem:[%s417 + $0x10] sm:$0x1f]
    %v4739 = vsel %vm420, %v4496, %v4738
    %4740 = vst [vmem:[%s417 + $0x10] sm:$0x1f] %v4739
    %v4741 = vld [vmem:[%s417 + $0x18] sm:$0x1f]
    %v4742 = vsel %vm420, %v4503, %v4741
    %4743 = vst [vmem:[%s417 + $0x18] sm:$0x1f] %v4742
    %v4744 = vld [vmem:[%s417 + $0x20] sm:$0x1f]
    %v4745 = vsel %vm420, %v4510, %v4744
    %4746 = vst [vmem:[%s417 + $0x20] sm:$0x1f] %v4745
    %v4747 = vld [vmem:[%s417 + $0x28] sm:$0x1f]
    %v4748 = vsel %vm420, %v4517, %v4747
    %4749 = vst [vmem:[%s417 + $0x28] sm:$0x1f] %v4748
    %v4750 = vld [vmem:[%s417 + $0x30] sm:$0x1f]
    %v4751 = vsel %vm420, %v4524, %v4750
    %4752 = vst [vmem:[%s417 + $0x30] sm:$0x1f] %v4751
    %v4753 = vld [vmem:[%s417 + $0x38] sm:$0x1f]
    %v4754 = vsel %vm420, %v4531, %v4753
    %4755 = vst [vmem:[%s417 + $0x38] sm:$0x1f] %v4754
    %v4756 = vld [vmem:[%s417 + $0x40] sm:$0x1f]
    %v4757 = vsel %vm420, %v4538, %v4756
    %4758 = vst [vmem:[%s417 + $0x40] sm:$0x1f] %v4757
    %v4759 = vld [vmem:[%s417 + $0x48] sm:$0x1f]
    %v4760 = vsel %vm420, %v4545, %v4759
    %4761 = vst [vmem:[%s417 + $0x48] sm:$0x1f] %v4760
    %v4762 = vld [vmem:[%s417 + $0x50] sm:$0x1f]
    %v4763 = vsel %vm420, %v4552, %v4762
    %4764 = vst [vmem:[%s417 + $0x50] sm:$0x1f] %v4763
    %v4765 = vld [vmem:[%s417 + $0x58] sm:$0x1f]
    %v4766 = vsel %vm420, %v4559, %v4765
    %4767 = vst [vmem:[%s417 + $0x58] sm:$0x1f] %v4766
    %v4768 = vld [vmem:[%s417 + $0x60] sm:$0x1f]
    %v4769 = vsel %vm420, %v4566, %v4768
    %4770 = vst [vmem:[%s417 + $0x60] sm:$0x1f] %v4769
    %v4771 = vld [vmem:[%s417 + $0x68] sm:$0x1f]
    %v4772 = vsel %vm420, %v4573, %v4771
    %4773 = vst [vmem:[%s417 + $0x68] sm:$0x1f] %v4772
    %v4774 = vld [vmem:[%s417 + $0x70] sm:$0x1f]
    %v4775 = vsel %vm420, %v4580, %v4774
    %4776 = vst [vmem:[%s417 + $0x70] sm:$0x1f] %v4775
    %v4777 = vld [vmem:[%s417 + $0x78] sm:$0x1f]
    %v4778 = vsel %vm420, %v4587, %v4777
    %4779 = vst [vmem:[%s417 + $0x78] sm:$0x1f] %v4778
    %v4780 = vld [vmem:[%s417 + $0xa0] sm:$0x1f]
    %v4781 = vsel %vm420, %v4594, %v4780
    %4782 = vst [vmem:[%s417 + $0xa0] sm:$0x1f] %v4781
    %v4783 = vld [vmem:[%s417 + $0xa8] sm:$0x1f]
    %v4784 = vsel %vm420, %v4601, %v4783
    %4785 = vst [vmem:[%s417 + $0xa8] sm:$0x1f] %v4784
    %v4786 = vld [vmem:[%s417 + $0xb0] sm:$0x1f]
    %v4787 = vsel %vm420, %v4608, %v4786
    %4788 = vst [vmem:[%s417 + $0xb0] sm:$0x1f] %v4787
    %v4789 = vld [vmem:[%s417 + $0xb8] sm:$0x1f]
    %v4790 = vsel %vm420, %v4615, %v4789
    %4791 = vst [vmem:[%s417 + $0xb8] sm:$0x1f] %v4790
    %v4792 = vld [vmem:[%s417 + $0xc0] sm:$0x1f]
    %v4793 = vsel %vm420, %v4622, %v4792
    %4794 = vst [vmem:[%s417 + $0xc0] sm:$0x1f] %v4793
    %v4795 = vld [vmem:[%s417 + $0xc8] sm:$0x1f]
    %v4796 = vsel %vm420, %v4629, %v4795
    %4797 = vst [vmem:[%s417 + $0xc8] sm:$0x1f] %v4796
    %v4798 = vld [vmem:[%s417 + $0xd0] sm:$0x1f]
    %v4799 = vsel %vm420, %v4636, %v4798
    %4800 = vst [vmem:[%s417 + $0xd0] sm:$0x1f] %v4799
    %v4801 = vld [vmem:[%s417 + $0xd8] sm:$0x1f]
    %v4802 = vsel %vm420, %v4643, %v4801
    %4803 = vst [vmem:[%s417 + $0xd8] sm:$0x1f] %v4802
    %v4804 = vld [vmem:[%s417 + $0xe0] sm:$0x1f]
    %v4805 = vsel %vm420, %v4650, %v4804
    %4806 = vst [vmem:[%s417 + $0xe0] sm:$0x1f] %v4805
    %v4807 = vld [vmem:[%s417 + $0xe8] sm:$0x1f]
    %v4808 = vsel %vm420, %v4657, %v4807
    %4809 = vst [vmem:[%s417 + $0xe8] sm:$0x1f] %v4808
    %v4810 = vld [vmem:[%s417 + $0xf0] sm:$0x1f]
    %v4811 = vsel %vm420, %v4664, %v4810
    %4812 = vst [vmem:[%s417 + $0xf0] sm:$0x1f] %v4811
    %v4813 = vld [vmem:[%s417 + $0xf8] sm:$0x1f]
    %v4814 = vsel %vm420, %v4671, %v4813
    %4815 = vst [vmem:[%s417 + $0xf8] sm:$0x1f] %v4814
    %v4816 = vld [vmem:[%s417 + $0x100] sm:$0x1f]
    %v4817 = vsel %vm420, %v4678, %v4816
    %4818 = vst [vmem:[%s417 + $0x100] sm:$0x1f] %v4817
    %v4819 = vld [vmem:[%s417 + $0x108] sm:$0x1f]
    %v4820 = vsel %vm420, %v4685, %v4819
    %4821 = vst [vmem:[%s417 + $0x108] sm:$0x1f] %v4820
    %v4822 = vld [vmem:[%s417 + $0x110] sm:$0x1f]
    %v4823 = vsel %vm420, %v4692, %v4822
    %4824 = vst [vmem:[%s417 + $0x110] sm:$0x1f] %v4823
    %v4825 = vld [vmem:[%s417 + $0x118] sm:$0x1f]
    %v4826 = vsel %vm420, %v4699, %v4825
    %4827 = vst [vmem:[%s417 + $0x118] sm:$0x1f] %v4826
    %v4828 = vld [vmem:[#allocation2] sm:$0xff]
    %v4829 = vld [vmem:[#allocation2 + $0x8] sm:$0xff]
    %v4830 = vld [vmem:[#allocation2 + $0x10] sm:$0xff]
    %v4831 = vld [vmem:[#allocation2 + $0x18] sm:$0xff]
    %v4832 = vld [vmem:[#allocation2 + $0x20] sm:$0xff]
    %v4833 = vld [vmem:[#allocation2 + $0x28] sm:$0xff]
    %v4834 = vld [vmem:[#allocation2 + $0x30] sm:$0xff]
    %v4835 = vld [vmem:[#allocation2 + $0x38] sm:$0xff]
    %v4836 = vld [vmem:[#allocation2 + $0x40] sm:$0xff]
    %v4837 = vld [vmem:[#allocation2 + $0x48] sm:$0xff]
    %v4838 = vld [vmem:[#allocation2 + $0x50] sm:$0xff]
    %v4839 = vld [vmem:[#allocation2 + $0x58] sm:$0xff]
    %v4840 = vld [vmem:[#allocation2 + $0x60] sm:$0xff]
    %v4841 = vld [vmem:[#allocation2 + $0x68] sm:$0xff]
    %v4842 = vld [vmem:[#allocation2 + $0x70] sm:$0xff]
    %v4843 = vld [vmem:[#allocation2 + $0x78] sm:$0xff]
    %v4844 = vld [vmem:[#allocation2 + $0x80] sm:$0xff]
    %v4845 = vld [vmem:[#allocation2 + $0x88] sm:$0xff]
    %v4846 = vld [vmem:[#allocation2 + $0x90] sm:$0xff]
    %v4847 = vld [vmem:[#allocation2 + $0x98] sm:$0xff]
    %v4848 = vld [vmem:[#allocation2 + $0xa0] sm:$0xff]
    %v4849 = vld [vmem:[#allocation2 + $0xa8] sm:$0xff]
    %v4850 = vld [vmem:[#allocation2 + $0xb0] sm:$0xff]
    %v4851 = vld [vmem:[#allocation2 + $0xb8] sm:$0xff]
    %v4852 = vld [vmem:[#allocation2 + $0xc0] sm:$0xff]
    %v4853 = vld [vmem:[#allocation2 + $0xc8] sm:$0xff]
    %v4854 = vld [vmem:[#allocation2 + $0xd0] sm:$0xff]
    %v4855 = vld [vmem:[#allocation2 + $0xd8] sm:$0xff]
    %v4856 = vld [vmem:[#allocation2 + $0xe0] sm:$0xff]
    %v4857 = vld [vmem:[#allocation2 + $0xe8] sm:$0xff]
    %v4858 = vld [vmem:[#allocation2 + $0xf0] sm:$0xff]
    %v4859 = vld [vmem:[#allocation2 + $0xf8] sm:$0xff]
    %v4860 = vld [vmem:[#allocation2 + $0x100] sm:$0xff]
    %v4861 = vld [vmem:[#allocation2 + $0x108] sm:$0xff]
    %v4862 = vld [vmem:[#allocation2 + $0x110] sm:$0xff]
    %v4863 = vld [vmem:[#allocation2 + $0x118] sm:$0xff]
    %v4864 = vld [vmem:[#allocation2 + $0x120] sm:$0xff]
    %v4865 = vld [vmem:[#allocation2 + $0x128] sm:$0xff]
    %v4866 = vld [vmem:[#allocation2 + $0x130] sm:$0xff]
    %v4867 = vld [vmem:[#allocation2 + $0x138] sm:$0xff]
    %v4900 = vunpack.c.l.b16 %v4828
    %v4901 = vunpack.c.l.b16 %v4829
    %v4902 = vunpack.c.l.b16 %v4830
    %v4903 = vunpack.c.l.b16 %v4831
    %v4904 = vunpack.c.l.b16 %v4832
    %v4905 = vunpack.c.l.b16 %v4833
    %v4906 = vunpack.c.l.b16 %v4834
    %v4907 = vunpack.c.l.b16 %v4835
    %v4908 = vunpack.c.l.b16 %v4836
    %v4909 = vunpack.c.l.b16 %v4837
    %v4910 = vunpack.c.l.b16 %v4838
    %v4911 = vunpack.c.l.b16 %v4839
    %v4912 = vunpack.c.l.b16 %v4840
    %v4913 = vunpack.c.l.b16 %v4841
    %v4914 = vunpack.c.l.b16 %v4842
    %v4915 = vunpack.c.l.b16 %v4843
    %v4916 = vunpack.c.l.b16 %v4848
    %v4917 = vunpack.c.l.b16 %v4849
    %v4918 = vunpack.c.l.b16 %v4850
    %v4919 = vunpack.c.l.b16 %v4851
    %v4920 = vunpack.c.l.b16 %v4852
    %v4921 = vunpack.c.l.b16 %v4853
    %v4922 = vunpack.c.l.b16 %v4854
    %v4923 = vunpack.c.l.b16 %v4855
    %v4924 = vunpack.c.l.b16 %v4856
    %v4925 = vunpack.c.l.b16 %v4857
    %v4926 = vunpack.c.l.b16 %v4858
    %v4927 = vunpack.c.l.b16 %v4859
    %v4928 = vunpack.c.l.b16 %v4860
    %v4929 = vunpack.c.l.b16 %v4861
    %v4930 = vunpack.c.l.b16 %v4862
    %v4931 = vunpack.c.l.b16 %v4863
    %v4932 = vunpack.c.h.b16 %v4828
    %v4933 = vunpack.c.h.b16 %v4829
    %v4934 = vunpack.c.h.b16 %v4830
    %v4935 = vunpack.c.h.b16 %v4831
    %v4936 = vunpack.c.h.b16 %v4832
    %v4937 = vunpack.c.h.b16 %v4833
    %v4938 = vunpack.c.h.b16 %v4834
    %v4939 = vunpack.c.h.b16 %v4835
    %v4940 = vunpack.c.h.b16 %v4836
    %v4941 = vunpack.c.h.b16 %v4837
    %v4942 = vunpack.c.h.b16 %v4838
    %v4943 = vunpack.c.h.b16 %v4839
    %v4944 = vunpack.c.h.b16 %v4840
    %v4945 = vunpack.c.h.b16 %v4841
    %v4946 = vunpack.c.h.b16 %v4842
    %v4947 = vunpack.c.h.b16 %v4843
    %v4948 = vunpack.c.h.b16 %v4848
    %v4949 = vunpack.c.h.b16 %v4849
    %v4950 = vunpack.c.h.b16 %v4850
    %v4951 = vunpack.c.h.b16 %v4851
    %v4952 = vunpack.c.h.b16 %v4852
    %v4953 = vunpack.c.h.b16 %v4853
    %v4954 = vunpack.c.h.b16 %v4854
    %v4955 = vunpack.c.h.b16 %v4855
    %v4956 = vunpack.c.h.b16 %v4856
    %v4957 = vunpack.c.h.b16 %v4857
    %v4958 = vunpack.c.h.b16 %v4858
    %v4959 = vunpack.c.h.b16 %v4859
    %v4960 = vunpack.c.h.b16 %v4860
    %v4961 = vunpack.c.h.b16 %v4861
    %v4962 = vunpack.c.h.b16 %v4862
    %v4963 = vunpack.c.h.b16 %v4863
    %v4964 = vpack.c.b16 %v4901, %v4900
    %v4965 = vpack.c.b16 %v4933, %v4932
    %v4966 = vpack.c.b16 %v4903, %v4902
    %v4967 = vpack.c.b16 %v4935, %v4934
    %v4968 = vpack.c.b16 %v4905, %v4904
    %v4969 = vpack.c.b16 %v4937, %v4936
    %v4970 = vpack.c.b16 %v4907, %v4906
    %v4971 = vpack.c.b16 %v4939, %v4938
    %v4972 = vpack.c.b16 %v4909, %v4908
    %v4973 = vpack.c.b16 %v4941, %v4940
    %v4974 = vpack.c.b16 %v4911, %v4910
    %v4975 = vpack.c.b16 %v4943, %v4942
    %v4976 = vpack.c.b16 %v4913, %v4912
    %v4977 = vpack.c.b16 %v4945, %v4944
    %v4978 = vpack.c.b16 %v4915, %v4914
    %v4979 = vpack.c.b16 %v4947, %v4946
    %v4980 = vpack.c.b16 %v4917, %v4916
    %v4981 = vpack.c.b16 %v4949, %v4948
    %v4982 = vpack.c.b16 %v4919, %v4918
    %v4983 = vpack.c.b16 %v4951, %v4950
    %v4984 = vpack.c.b16 %v4921, %v4920
    %v4985 = vpack.c.b16 %v4953, %v4952
    %v4986 = vpack.c.b16 %v4923, %v4922
    %v4987 = vpack.c.b16 %v4955, %v4954
    %v4988 = vpack.c.b16 %v4925, %v4924
    %v4989 = vpack.c.b16 %v4957, %v4956
    %v4990 = vpack.c.b16 %v4927, %v4926
    %v4991 = vpack.c.b16 %v4959, %v4958
    %v4992 = vpack.c.b16 %v4929, %v4928
    %v4993 = vpack.c.b16 %v4961, %v4960
    %v4994 = vpack.c.b16 %v4931, %v4930
    %v4995 = vpack.c.b16 %v4963, %v4962
    %v4997 = vshrl.u32 %v4964, 16
    %v4999 = vrot.slane %v4997, 4
    %v5000 = vshll.u32 %v4964, 16
    %v5002 = vrot.slane %v5000, 5
    %v5003 = vor.u32 %v4999, %v5002
    %v5004 = vrot.slane %v5003, 4
    %v5006 = vshll.u32 %v4965, 16
    %v5008 = vrot.slane %v5006, 5
    %v5009 = vsel %vm687, %v5004, %v5008
    %v5011 = vshrl.u32 %v4966, 16
    %v5013 = vrot.slane %v5011, 4
    %v5014 = vshll.u32 %v4966, 16
    %v5016 = vrot.slane %v5014, 5
    %v5017 = vor.u32 %v5013, %v5016
    %v5018 = vrot.slane %v5017, 4
    %v5020 = vshll.u32 %v4967, 16
    %v5022 = vrot.slane %v5020, 5
    %v5023 = vsel %vm687, %v5018, %v5022
    %v5025 = vshrl.u32 %v4968, 16
    %v5027 = vrot.slane %v5025, 4
    %v5028 = vshll.u32 %v4968, 16
    %v5030 = vrot.slane %v5028, 5
    %v5031 = vor.u32 %v5027, %v5030
    %v5032 = vrot.slane %v5031, 4
    %v5034 = vshll.u32 %v4969, 16
    %v5036 = vrot.slane %v5034, 5
    %v5037 = vsel %vm687, %v5032, %v5036
    %v5039 = vshrl.u32 %v4970, 16
    %v5041 = vrot.slane %v5039, 4
    %v5042 = vshll.u32 %v4970, 16
    %v5044 = vrot.slane %v5042, 5
    %v5045 = vor.u32 %v5041, %v5044
    %v5046 = vrot.slane %v5045, 4
    %v5048 = vshll.u32 %v4971, 16
    %v5050 = vrot.slane %v5048, 5
    %v5051 = vsel %vm687, %v5046, %v5050
    %v5053 = vshrl.u32 %v4972, 16
    %v5055 = vrot.slane %v5053, 4
    %v5056 = vshll.u32 %v4972, 16
    %v5058 = vrot.slane %v5056, 5
    %v5059 = vor.u32 %v5055, %v5058
    %v5060 = vrot.slane %v5059, 4
    %v5062 = vshll.u32 %v4973, 16
    %v5064 = vrot.slane %v5062, 5
    %v5065 = vsel %vm687, %v5060, %v5064
    %v5067 = vshrl.u32 %v4974, 16
    %v5069 = vrot.slane %v5067, 4
    %v5070 = vshll.u32 %v4974, 16
    %v5072 = vrot.slane %v5070, 5
    %v5073 = vor.u32 %v5069, %v5072
    %v5074 = vrot.slane %v5073, 4
    %v5076 = vshll.u32 %v4975, 16
    %v5078 = vrot.slane %v5076, 5
    %v5079 = vsel %vm687, %v5074, %v5078
    %v5081 = vshrl.u32 %v4976, 16
    %v5083 = vrot.slane %v5081, 4
    %v5084 = vshll.u32 %v4976, 16
    %v5086 = vrot.slane %v5084, 5
    %v5087 = vor.u32 %v5083, %v5086
    %v5088 = vrot.slane %v5087, 4
    %v5090 = vshll.u32 %v4977, 16
    %v5092 = vrot.slane %v5090, 5
    %v5093 = vsel %vm687, %v5088, %v5092
    %v5095 = vshrl.u32 %v4978, 16
    %v5097 = vrot.slane %v5095, 4
    %v5098 = vshll.u32 %v4978, 16
    %v5100 = vrot.slane %v5098, 5
    %v5101 = vor.u32 %v5097, %v5100
    %v5102 = vrot.slane %v5101, 4
    %v5104 = vshll.u32 %v4979, 16
    %v5106 = vrot.slane %v5104, 5
    %v5107 = vsel %vm687, %v5102, %v5106
    %v5109 = vshrl.u32 %v4980, 16
    %v5111 = vrot.slane %v5109, 4
    %v5112 = vshll.u32 %v4980, 16
    %v5114 = vrot.slane %v5112, 5
    %v5115 = vor.u32 %v5111, %v5114
    %v5116 = vrot.slane %v5115, 4
    %v5118 = vshll.u32 %v4981, 16
    %v5120 = vrot.slane %v5118, 5
    %v5121 = vsel %vm687, %v5116, %v5120
    %v5123 = vshrl.u32 %v4982, 16
    %v5125 = vrot.slane %v5123, 4
    %v5126 = vshll.u32 %v4982, 16
    %v5128 = vrot.slane %v5126, 5
    %v5129 = vor.u32 %v5125, %v5128
    %v5130 = vrot.slane %v5129, 4
    %v5132 = vshll.u32 %v4983, 16
    %v5134 = vrot.slane %v5132, 5
    %v5135 = vsel %vm687, %v5130, %v5134
    %v5137 = vshrl.u32 %v4984, 16
    %v5139 = vrot.slane %v5137, 4
    %v5140 = vshll.u32 %v4984, 16
    %v5142 = vrot.slane %v5140, 5
    %v5143 = vor.u32 %v5139, %v5142
    %v5144 = vrot.slane %v5143, 4
    %v5146 = vshll.u32 %v4985, 16
    %v5148 = vrot.slane %v5146, 5
    %v5149 = vsel %vm687, %v5144, %v5148
    %v5151 = vshrl.u32 %v4986, 16
    %v5153 = vrot.slane %v5151, 4
    %v5154 = vshll.u32 %v4986, 16
    %v5156 = vrot.slane %v5154, 5
    %v5157 = vor.u32 %v5153, %v5156
    %v5158 = vrot.slane %v5157, 4
    %v5160 = vshll.u32 %v4987, 16
    %v5162 = vrot.slane %v5160, 5
    %v5163 = vsel %vm687, %v5158, %v5162
    %v5165 = vshrl.u32 %v4988, 16
    %v5167 = vrot.slane %v5165, 4
    %v5168 = vshll.u32 %v4988, 16
    %v5170 = vrot.slane %v5168, 5
    %v5171 = vor.u32 %v5167, %v5170
    %v5172 = vrot.slane %v5171, 4
    %v5174 = vshll.u32 %v4989, 16
    %v5176 = vrot.slane %v5174, 5
    %v5177 = vsel %vm687, %v5172, %v5176
    %v5179 = vshrl.u32 %v4990, 16
    %v5181 = vrot.slane %v5179, 4
    %v5182 = vshll.u32 %v4990, 16
    %v5184 = vrot.slane %v5182, 5
    %v5185 = vor.u32 %v5181, %v5184
    %v5186 = vrot.slane %v5185, 4
    %v5188 = vshll.u32 %v4991, 16
    %v5190 = vrot.slane %v5188, 5
    %v5191 = vsel %vm687, %v5186, %v5190
    %v5193 = vshrl.u32 %v4992, 16
    %v5195 = vrot.slane %v5193, 4
    %v5196 = vshll.u32 %v4992, 16
    %v5198 = vrot.slane %v5196, 5
    %v5199 = vor.u32 %v5195, %v5198
    %v5200 = vrot.slane %v5199, 4
    %v5202 = vshll.u32 %v4993, 16
    %v5204 = vrot.slane %v5202, 5
    %v5205 = vsel %vm687, %v5200, %v5204
    %v5207 = vshrl.u32 %v4994, 16
    %v5209 = vrot.slane %v5207, 4
    %v5210 = vshll.u32 %v4994, 16
    %v5212 = vrot.slane %v5210, 5
    %v5213 = vor.u32 %v5209, %v5212
    %v5214 = vrot.slane %v5213, 4
    %v5216 = vshll.u32 %v4995, 16
    %v5218 = vrot.slane %v5216, 5
    %v5219 = vsel %vm687, %v5214, %v5218
    %v5220 = vrot.slane %v4964, 5
    %v5221 = vrot.slane %v5220, 4
    %v5222 = vrot.slane %v4965, 5
    %v5223 = vsel %vm914, %v5221, %v5222
    %v5224 = vrot.slane %v4966, 5
    %v5225 = vrot.slane %v5224, 4
    %v5226 = vrot.slane %v4967, 5
    %v5227 = vsel %vm914, %v5225, %v5226
    %v5228 = vrot.slane %v4968, 5
    %v5229 = vrot.slane %v5228, 4
    %v5230 = vrot.slane %v4969, 5
    %v5231 = vsel %vm914, %v5229, %v5230
    %v5232 = vrot.slane %v4970, 5
    %v5233 = vrot.slane %v5232, 4
    %v5234 = vrot.slane %v4971, 5
    %v5235 = vsel %vm914, %v5233, %v5234
    %v5236 = vrot.slane %v4972, 5
    %v5237 = vrot.slane %v5236, 4
    %v5238 = vrot.slane %v4973, 5
    %v5239 = vsel %vm914, %v5237, %v5238
    %v5240 = vrot.slane %v4974, 5
    %v5241 = vrot.slane %v5240, 4
    %v5242 = vrot.slane %v4975, 5
    %v5243 = vsel %vm914, %v5241, %v5242
    %v5244 = vrot.slane %v4976, 5
    %v5245 = vrot.slane %v5244, 4
    %v5246 = vrot.slane %v4977, 5
    %v5247 = vsel %vm914, %v5245, %v5246
    %v5248 = vrot.slane %v4978, 5
    %v5249 = vrot.slane %v5248, 4
    %v5250 = vrot.slane %v4979, 5
    %v5251 = vsel %vm914, %v5249, %v5250
    %v5252 = vrot.slane %v4980, 5
    %v5253 = vrot.slane %v5252, 4
    %v5254 = vrot.slane %v4981, 5
    %v5255 = vsel %vm914, %v5253, %v5254
    %v5256 = vrot.slane %v4982, 5
    %v5257 = vrot.slane %v5256, 4
    %v5258 = vrot.slane %v4983, 5
    %v5259 = vsel %vm914, %v5257, %v5258
    %v5260 = vrot.slane %v4984, 5
    %v5261 = vrot.slane %v5260, 4
    %v5262 = vrot.slane %v4985, 5
    %v5263 = vsel %vm914, %v5261, %v5262
    %v5264 = vrot.slane %v4986, 5
    %v5265 = vrot.slane %v5264, 4
    %v5266 = vrot.slane %v4987, 5
    %v5267 = vsel %vm914, %v5265, %v5266
    %v5268 = vrot.slane %v4988, 5
    %v5269 = vrot.slane %v5268, 4
    %v5270 = vrot.slane %v4989, 5
    %v5271 = vsel %vm914, %v5269, %v5270
    %v5272 = vrot.slane %v4990, 5
    %v5273 = vrot.slane %v5272, 4
    %v5274 = vrot.slane %v4991, 5
    %v5275 = vsel %vm914, %v5273, %v5274
    %v5276 = vrot.slane %v4992, 5
    %v5277 = vrot.slane %v5276, 4
    %v5278 = vrot.slane %v4993, 5
    %v5279 = vsel %vm914, %v5277, %v5278
    %v5280 = vrot.slane %v4994, 5
    %v5281 = vrot.slane %v5280, 4
    %v5282 = vrot.slane %v4995, 5
    %v5283 = vsel %vm914, %v5281, %v5282
    %v5288 = vunpack.c.l.b16 %v4844
    %v5289 = vunpack.c.l.b16 %v4845
    %v5290 = vunpack.c.l.b16 %v4864
    %v5291 = vunpack.c.l.b16 %v4865
    %v5292 = vunpack.c.h.b16 %v4844
    %v5293 = vunpack.c.h.b16 %v4845
    %v5294 = vunpack.c.h.b16 %v4864
    %v5295 = vunpack.c.h.b16 %v4865
    %v5296 = vpack.c.b16 %v5289, %v5288
    %v5297 = vpack.c.b16 %v5293, %v5292
    %v5298 = vpack.c.b16 %v5291, %v5290
    %v5299 = vpack.c.b16 %v5295, %v5294
    %v5301 = vshrl.u32 %v5296, 16
    %v5303 = vrot.slane %v5301, 4
    %v5304 = vshll.u32 %v5296, 16
    %v5306 = vrot.slane %v5304, 5
    %v5307 = vor.u32 %v5303, %v5306
    %v5308 = vrot.slane %v5307, 4
    %v5310 = vshll.u32 %v5297, 16
    %v5312 = vrot.slane %v5310, 5
    %v5313 = vsel %vm687, %v5308, %v5312
    %v5315 = vshrl.u32 %v5298, 16
    %v5317 = vrot.slane %v5315, 4
    %v5318 = vshll.u32 %v5298, 16
    %v5320 = vrot.slane %v5318, 5
    %v5321 = vor.u32 %v5317, %v5320
    %v5322 = vrot.slane %v5321, 4
    %v5324 = vshll.u32 %v5299, 16
    %v5326 = vrot.slane %v5324, 5
    %v5327 = vsel %vm687, %v5322, %v5326
    %v5328 = vrot.slane %v5296, 5
    %v5329 = vrot.slane %v5328, 4
    %v5330 = vrot.slane %v5297, 5
    %v5331 = vsel %vm914, %v5329, %v5330
    %v5332 = vrot.slane %v5298, 5
    %v5333 = vrot.slane %v5332, 4
    %v5334 = vrot.slane %v5299, 5
    %v5335 = vsel %vm914, %v5333, %v5334
    %v5340 = vunpack.c.l.b16 %v4846
    %v5341 = vunpack.c.l.b16 %v4847
    %v5342 = vunpack.c.l.b16 %v4866
    %v5343 = vunpack.c.l.b16 %v4867
    %v5344 = vunpack.c.h.b16 %v4846
    %v5345 = vunpack.c.h.b16 %v4847
    %v5346 = vunpack.c.h.b16 %v4866
    %v5347 = vunpack.c.h.b16 %v4867
    %v5348 = vpack.c.b16 %v5341, %v5340
    %v5349 = vpack.c.b16 %v5345, %v5344
    %v5350 = vpack.c.b16 %v5343, %v5342
    %v5351 = vpack.c.b16 %v5347, %v5346
    %v5353 = vshrl.u32 %v5348, 16
    %v5355 = vrot.slane %v5353, 4
    %v5356 = vshll.u32 %v5348, 16
    %v5358 = vrot.slane %v5356, 5
    %v5359 = vor.u32 %v5355, %v5358
    %v5360 = vrot.slane %v5359, 4
    %v5362 = vshll.u32 %v5349, 16
    %v5364 = vrot.slane %v5362, 5
    %v5365 = vsel %vm687, %v5360, %v5364
    %v5367 = vshrl.u32 %v5350, 16
    %v5369 = vrot.slane %v5367, 4
    %v5370 = vshll.u32 %v5350, 16
    %v5372 = vrot.slane %v5370, 5
    %v5373 = vor.u32 %v5369, %v5372
    %v5374 = vrot.slane %v5373, 4
    %v5376 = vshll.u32 %v5351, 16
    %v5378 = vrot.slane %v5376, 5
    %v5379 = vsel %vm687, %v5374, %v5378
    %v5380 = vrot.slane %v5348, 5
    %v5381 = vrot.slane %v5380, 4
    %v5382 = vrot.slane %v5349, 5
    %v5383 = vsel %vm914, %v5381, %v5382
    %v5384 = vrot.slane %v5350, 5
    %v5385 = vrot.slane %v5384, 4
    %v5386 = vrot.slane %v5351, 5
    %v5387 = vsel %vm914, %v5385, %v5386
    %v5388 = vpack.c.b16 %v4902, %v4900
    %v5389 = vpack.c.b16 %v4903, %v4901
    %v5390 = vpack.c.b16 %v4906, %v4904
    %v5391 = vpack.c.b16 %v4907, %v4905
    %v5392 = vpack.c.b16 %v4910, %v4908
    %v5393 = vpack.c.b16 %v4911, %v4909
    %v5394 = vpack.c.b16 %v4914, %v4912
    %v5395 = vpack.c.b16 %v4915, %v4913
    %v5396 = vpack.c.b16 %v4918, %v4916
    %v5397 = vpack.c.b16 %v4919, %v4917
    %v5398 = vpack.c.b16 %v4922, %v4920
    %v5399 = vpack.c.b16 %v4923, %v4921
    %v5400 = vpack.c.b16 %v4926, %v4924
    %v5401 = vpack.c.b16 %v4927, %v4925
    %v5402 = vpack.c.b16 %v4930, %v4928
    %v5403 = vpack.c.b16 %v4931, %v4929
    %v5420 = vunpack.c.l.b16 %v5009
    %v5421 = vunpack.c.h.b16 %v5009
    %v5422 = vunpack.c.l.b16 %v5023
    %v5423 = vunpack.c.h.b16 %v5023
    %v5424 = vunpack.c.l.b16 %v5037
    %v5425 = vunpack.c.h.b16 %v5037
    %v5426 = vunpack.c.l.b16 %v5051
    %v5427 = vunpack.c.h.b16 %v5051
    %v5428 = vunpack.c.l.b16 %v5065
    %v5429 = vunpack.c.h.b16 %v5065
    %v5430 = vunpack.c.l.b16 %v5079
    %v5431 = vunpack.c.h.b16 %v5079
    %v5432 = vunpack.c.l.b16 %v5093
    %v5433 = vunpack.c.h.b16 %v5093
    %v5434 = vunpack.c.l.b16 %v5107
    %v5435 = vunpack.c.h.b16 %v5107
    %v5436 = vunpack.c.l.b16 %v5121
    %v5437 = vunpack.c.h.b16 %v5121
    %v5438 = vunpack.c.l.b16 %v5135
    %v5439 = vunpack.c.h.b16 %v5135
    %v5440 = vunpack.c.l.b16 %v5149
    %v5441 = vunpack.c.h.b16 %v5149
    %v5442 = vunpack.c.l.b16 %v5163
    %v5443 = vunpack.c.h.b16 %v5163
    %v5444 = vunpack.c.l.b16 %v5177
    %v5445 = vunpack.c.h.b16 %v5177
    %v5446 = vunpack.c.l.b16 %v5191
    %v5447 = vunpack.c.h.b16 %v5191
    %v5448 = vunpack.c.l.b16 %v5205
    %v5449 = vunpack.c.h.b16 %v5205
    %v5450 = vunpack.c.l.b16 %v5219
    %v5451 = vunpack.c.h.b16 %v5219
    %v5452 = vpack.c.b16 %v5422, %v5420
    %v5453 = vpack.c.b16 %v5423, %v5421
    %v5454 = vpack.c.b16 %v5426, %v5424
    %v5455 = vpack.c.b16 %v5427, %v5425
    %v5456 = vpack.c.b16 %v5430, %v5428
    %v5457 = vpack.c.b16 %v5431, %v5429
    %v5458 = vpack.c.b16 %v5434, %v5432
    %v5459 = vpack.c.b16 %v5435, %v5433
    %v5460 = vpack.c.b16 %v5438, %v5436
    %v5461 = vpack.c.b16 %v5439, %v5437
    %v5462 = vpack.c.b16 %v5442, %v5440
    %v5463 = vpack.c.b16 %v5443, %v5441
    %v5464 = vpack.c.b16 %v5446, %v5444
    %v5465 = vpack.c.b16 %v5447, %v5445
    %v5466 = vpack.c.b16 %v5450, %v5448
    %v5467 = vpack.c.b16 %v5451, %v5449
    %v5484 = vunpack.c.l.b16 %v5223
    %v5485 = vunpack.c.h.b16 %v5223
    %v5486 = vunpack.c.l.b16 %v5227
    %v5487 = vunpack.c.h.b16 %v5227
    %v5488 = vunpack.c.l.b16 %v5231
    %v5489 = vunpack.c.h.b16 %v5231
    %v5490 = vunpack.c.l.b16 %v5235
    %v5491 = vunpack.c.h.b16 %v5235
    %v5492 = vunpack.c.l.b16 %v5239
    %v5493 = vunpack.c.h.b16 %v5239
    %v5494 = vunpack.c.l.b16 %v5243
    %v5495 = vunpack.c.h.b16 %v5243
    %v5496 = vunpack.c.l.b16 %v5247
    %v5497 = vunpack.c.h.b16 %v5247
    %v5498 = vunpack.c.l.b16 %v5251
    %v5499 = vunpack.c.h.b16 %v5251
    %v5500 = vunpack.c.l.b16 %v5255
    %v5501 = vunpack.c.h.b16 %v5255
    %v5502 = vunpack.c.l.b16 %v5259
    %v5503 = vunpack.c.h.b16 %v5259
    %v5504 = vunpack.c.l.b16 %v5263
    %v5505 = vunpack.c.h.b16 %v5263
    %v5506 = vunpack.c.l.b16 %v5267
    %v5507 = vunpack.c.h.b16 %v5267
    %v5508 = vunpack.c.l.b16 %v5271
    %v5509 = vunpack.c.h.b16 %v5271
    %v5510 = vunpack.c.l.b16 %v5275
    %v5511 = vunpack.c.h.b16 %v5275
    %v5512 = vunpack.c.l.b16 %v5279
    %v5513 = vunpack.c.h.b16 %v5279
    %v5514 = vunpack.c.l.b16 %v5283
    %v5515 = vunpack.c.h.b16 %v5283
    %v5516 = vpack.c.b16 %v5486, %v5484
    %v5517 = vpack.c.b16 %v5487, %v5485
    %v5518 = vpack.c.b16 %v5490, %v5488
    %v5519 = vpack.c.b16 %v5491, %v5489
    %v5520 = vpack.c.b16 %v5494, %v5492
    %v5521 = vpack.c.b16 %v5495, %v5493
    %v5522 = vpack.c.b16 %v5498, %v5496
    %v5523 = vpack.c.b16 %v5499, %v5497
    %v5524 = vpack.c.b16 %v5502, %v5500
    %v5525 = vpack.c.b16 %v5503, %v5501
    %v5526 = vpack.c.b16 %v5506, %v5504
    %v5527 = vpack.c.b16 %v5507, %v5505
    %v5528 = vpack.c.b16 %v5510, %v5508
    %v5529 = vpack.c.b16 %v5511, %v5509
    %v5530 = vpack.c.b16 %v5514, %v5512
    %v5531 = vpack.c.b16 %v5515, %v5513
    %v5548 = vpack.c.b16 %v4904, %v4902
    %v5549 = vpack.c.b16 %v4905, %v4903
    %v5550 = vpack.c.b16 %v4908, %v4906
    %v5551 = vpack.c.b16 %v4909, %v4907
    %v5552 = vpack.c.b16 %v4912, %v4910
    %v5553 = vpack.c.b16 %v4913, %v4911
    %v5554 = vpack.c.b16 %v5288, %v4914
    %v5555 = vpack.c.b16 %v5289, %v4915
    %v5556 = vpack.c.b16 %v4920, %v4918
    %v5557 = vpack.c.b16 %v4921, %v4919
    %v5558 = vpack.c.b16 %v4924, %v4922
    %v5559 = vpack.c.b16 %v4925, %v4923
    %v5560 = vpack.c.b16 %v4928, %v4926
    %v5561 = vpack.c.b16 %v4929, %v4927
    %v5562 = vpack.c.b16 %v5290, %v4930
    %v5563 = vpack.c.b16 %v5291, %v4931
    %v5580 = vunpack.c.l.b16 %v5313
    %v5581 = vunpack.c.h.b16 %v5313
    %v5582 = vunpack.c.l.b16 %v5327
    %v5583 = vunpack.c.h.b16 %v5327
    %v5584 = vpack.c.b16 %v5424, %v5422
    %v5585 = vpack.c.b16 %v5425, %v5423
    %v5586 = vpack.c.b16 %v5428, %v5426
    %v5587 = vpack.c.b16 %v5429, %v5427
    %v5588 = vpack.c.b16 %v5432, %v5430
    %v5589 = vpack.c.b16 %v5433, %v5431
    %v5590 = vpack.c.b16 %v5580, %v5434
    %v5591 = vpack.c.b16 %v5581, %v5435
    %v5592 = vpack.c.b16 %v5440, %v5438
    %v5593 = vpack.c.b16 %v5441, %v5439
    %v5594 = vpack.c.b16 %v5444, %v5442
    %v5595 = vpack.c.b16 %v5445, %v5443
    %v5596 = vpack.c.b16 %v5448, %v5446
    %v5597 = vpack.c.b16 %v5449, %v5447
    %v5598 = vpack.c.b16 %v5582, %v5450
    %v5599 = vpack.c.b16 %v5583, %v5451
    %v5616 = vunpack.c.l.b16 %v5331
    %v5617 = vunpack.c.h.b16 %v5331
    %v5618 = vunpack.c.l.b16 %v5335
    %v5619 = vunpack.c.h.b16 %v5335
    %v5620 = vpack.c.b16 %v5488, %v5486
    %v5621 = vpack.c.b16 %v5489, %v5487
    %v5622 = vpack.c.b16 %v5492, %v5490
    %v5623 = vpack.c.b16 %v5493, %v5491
    %v5624 = vpack.c.b16 %v5496, %v5494
    %v5625 = vpack.c.b16 %v5497, %v5495
    %v5626 = vpack.c.b16 %v5616, %v5498
    %v5627 = vpack.c.b16 %v5617, %v5499
    %v5628 = vpack.c.b16 %v5504, %v5502
    %v5629 = vpack.c.b16 %v5505, %v5503
    %v5630 = vpack.c.b16 %v5508, %v5506
    %v5631 = vpack.c.b16 %v5509, %v5507
    %v5632 = vpack.c.b16 %v5512, %v5510
    %v5633 = vpack.c.b16 %v5513, %v5511
    %v5634 = vpack.c.b16 %v5618, %v5514
    %v5635 = vpack.c.b16 %v5619, %v5515
    %v5652 = vpack.c.b16 %v5340, %v5288
    %v5653 = vpack.c.b16 %v5341, %v5289
    %v5654 = vpack.c.b16 %v5342, %v5290
    %v5655 = vpack.c.b16 %v5343, %v5291
    %v5660 = vunpack.c.l.b16 %v5365
    %v5661 = vunpack.c.h.b16 %v5365
    %v5662 = vunpack.c.l.b16 %v5379
    %v5663 = vunpack.c.h.b16 %v5379
    %v5664 = vpack.c.b16 %v5660, %v5580
    %v5665 = vpack.c.b16 %v5661, %v5581
    %v5666 = vpack.c.b16 %v5662, %v5582
    %v5667 = vpack.c.b16 %v5663, %v5583
    %v5672 = vunpack.c.l.b16 %v5383
    %v5673 = vunpack.c.h.b16 %v5383
    %v5674 = vunpack.c.l.b16 %v5387
    %v5675 = vunpack.c.h.b16 %v5387
    %v5676 = vpack.c.b16 %v5672, %v5616
    %v5677 = vpack.c.b16 %v5673, %v5617
    %v5678 = vpack.c.b16 %v5674, %v5618
    %v5679 = vpack.c.b16 %v5675, %v5619
    %v5684 = vld [vmem:[#allocation8] sm:$0xff]
    %v5685 = vld [vmem:[#allocation8 + $0x8] sm:$0xff]
    %v5686 = vld [vmem:[#allocation8 + $0x10] sm:$0xff]
    %v5687 = vld [vmem:[#allocation8 + $0x18] sm:$0xff]
    %v5688 = vld [vmem:[#allocation8 + $0x20] sm:$0xff]
    %v5689 = vld [vmem:[#allocation8 + $0x28] sm:$0xff]
    %v5690 = vld [vmem:[#allocation8 + $0x30] sm:$0xff]
    %v5691 = vld [vmem:[#allocation8 + $0x38] sm:$0xff]
    %v5692 = vld [vmem:[#allocation8 + $0x40] sm:$0xff]
    %v5693 = vld [vmem:[#allocation8 + $0x48] sm:$0xff]
    %v5694 = vld [vmem:[#allocation8 + $0x50] sm:$0xff]
    %v5695 = vld [vmem:[#allocation8 + $0x58] sm:$0xff]
    %v5696 = vld [vmem:[#allocation8 + $0x60] sm:$0xff]
    %v5697 = vld [vmem:[#allocation8 + $0x68] sm:$0xff]
    %v5698 = vld [vmem:[#allocation8 + $0x70] sm:$0xff]
    %v5699 = vld [vmem:[#allocation8 + $0x78] sm:$0xff]
    %v5700 = vld [vmem:[#allocation8 + $0x80] sm:$0xff]
    %v5701 = vld [vmem:[#allocation8 + $0x88] sm:$0xff]
    %v5702 = vld [vmem:[#allocation8 + $0x90] sm:$0xff]
    %v5703 = vld [vmem:[#allocation8 + $0x98] sm:$0xff]
    %v5704 = vld [vmem:[#allocation8 + $0xa0] sm:$0xff]
    %v5705 = vld [vmem:[#allocation8 + $0xa8] sm:$0xff]
    %v5706 = vld [vmem:[#allocation8 + $0xb0] sm:$0xff]
    %v5707 = vld [vmem:[#allocation8 + $0xb8] sm:$0xff]
    %v5708 = vld [vmem:[#allocation8 + $0xc0] sm:$0xff]
    %v5709 = vld [vmem:[#allocation8 + $0xc8] sm:$0xff]
    %v5710 = vld [vmem:[#allocation8 + $0xd0] sm:$0xff]
    %v5711 = vld [vmem:[#allocation8 + $0xd8] sm:$0xff]
    %v5712 = vld [vmem:[#allocation8 + $0xe0] sm:$0xff]
    %v5713 = vld [vmem:[#allocation8 + $0xe8] sm:$0xff]
    %v5714 = vld [vmem:[#allocation8 + $0xf0] sm:$0xff]
    %v5715 = vld [vmem:[#allocation8 + $0xf8] sm:$0xff]
    %v5716 = vld [vmem:[#allocation8 + $0x100] sm:$0xff]
    %v5717 = vld [vmem:[#allocation8 + $0x108] sm:$0xff]
    %v5718 = vld [vmem:[#allocation8 + $0x110] sm:$0xff]
    %v5719 = vld [vmem:[#allocation8 + $0x118] sm:$0xff]
    %v5720 = vld [vmem:[#allocation8 + $0x120] sm:$0xff]
    %v5721 = vld [vmem:[#allocation8 + $0x128] sm:$0xff]
    %v5722 = vld [vmem:[#allocation8 + $0x130] sm:$0xff]
    %v5723 = vld [vmem:[#allocation8 + $0x138] sm:$0xff]
    %v5724 = vld [vmem:[#allocation8 + $0x140] sm:$0xff]
    %v5725 = vld [vmem:[#allocation8 + $0x148] sm:$0xff]
    %v5726 = vld [vmem:[#allocation8 + $0x150] sm:$0xff]
    %v5727 = vld [vmem:[#allocation8 + $0x158] sm:$0xff]
    %v5728 = vld [vmem:[#allocation8 + $0x160] sm:$0xff]
    %v5729 = vld [vmem:[#allocation8 + $0x168] sm:$0xff]
    %v5730 = vld [vmem:[#allocation8 + $0x170] sm:$0xff]
    %v5731 = vld [vmem:[#allocation8 + $0x178] sm:$0xff]
    %v5732 = vld [vmem:[#allocation8 + $0x180] sm:$0xff]
    %v5733 = vld [vmem:[#allocation8 + $0x188] sm:$0xff]
    %v5734 = vld [vmem:[#allocation8 + $0x190] sm:$0xff]
    %v5735 = vld [vmem:[#allocation8 + $0x198] sm:$0xff]
    %v5736 = vld [vmem:[#allocation8 + $0x1a0] sm:$0xff]
    %v5737 = vld [vmem:[#allocation8 + $0x1a8] sm:$0xff]
    %v5738 = vld [vmem:[#allocation8 + $0x1b0] sm:$0xff]
    %v5739 = vld [vmem:[#allocation8 + $0x1b8] sm:$0xff]
    %v5740 = vld [vmem:[#allocation8 + $0x1c0] sm:$0xff]
    %v5741 = vld [vmem:[#allocation8 + $0x1c8] sm:$0xff]
    %v5742 = vld [vmem:[#allocation8 + $0x1d0] sm:$0xff]
    %v5743 = vld [vmem:[#allocation8 + $0x1d8] sm:$0xff]
    %v5744 = vld [vmem:[#allocation8 + $0x1e0] sm:$0xff]
    %v5745 = vld [vmem:[#allocation8 + $0x1e8] sm:$0xff]
    %v5746 = vld [vmem:[#allocation8 + $0x1f0] sm:$0xff]
    %v5747 = vld [vmem:[#allocation8 + $0x1f8] sm:$0xff]
    %v5748 = vld [vmem:[#allocation8 + $0x200] sm:$0xff]
    %v5749 = vld [vmem:[#allocation8 + $0x208] sm:$0xff]
    %v5750 = vld [vmem:[#allocation8 + $0x210] sm:$0xff]
    %v5751 = vld [vmem:[#allocation8 + $0x218] sm:$0xff]
    %v5752 = vld [vmem:[#allocation8 + $0x220] sm:$0xff]
    %v5753 = vld [vmem:[#allocation8 + $0x228] sm:$0xff]
    %v5754 = vld [vmem:[#allocation8 + $0x230] sm:$0xff]
    %v5755 = vld [vmem:[#allocation8 + $0x238] sm:$0xff]
    %v5756 = vld [vmem:[#allocation8 + $0x240] sm:$0xff]
    %v5757 = vld [vmem:[#allocation8 + $0x248] sm:$0xff]
    %v5758 = vld [vmem:[#allocation8 + $0x250] sm:$0xff]
    %v5759 = vld [vmem:[#allocation8 + $0x258] sm:$0xff]
    %v5760 = vld [vmem:[#allocation8 + $0x260] sm:$0xff]
    %v5761 = vld [vmem:[#allocation8 + $0x268] sm:$0xff]
    %v5762 = vld [vmem:[#allocation8 + $0x270] sm:$0xff]
    %v5763 = vld [vmem:[#allocation8 + $0x278] sm:$0xff]
    %v5764 = vld [vmem:[#allocation8 + $0x280] sm:$0xff]
    %v5765 = vld [vmem:[#allocation8 + $0x288] sm:$0xff]
    %v5766 = vld [vmem:[#allocation8 + $0x290] sm:$0xff]
    %v5767 = vld [vmem:[#allocation8 + $0x298] sm:$0xff]
    %v5768 = vld [vmem:[#allocation8 + $0x2a0] sm:$0xff]
    %v5769 = vld [vmem:[#allocation8 + $0x2a8] sm:$0xff]
    %v5770 = vld [vmem:[#allocation8 + $0x2b0] sm:$0xff]
    %v5771 = vld [vmem:[#allocation8 + $0x2b8] sm:$0xff]
    %v5772 = vld [vmem:[#allocation8 + $0x2c0] sm:$0xff]
    %v5773 = vld [vmem:[#allocation8 + $0x2c8] sm:$0xff]
    %v5774 = vld [vmem:[#allocation8 + $0x2d0] sm:$0xff]
    %v5775 = vld [vmem:[#allocation8 + $0x2d8] sm:$0xff]
    %v5776 = vld [vmem:[#allocation8 + $0x2e0] sm:$0xff]
    %v5777 = vld [vmem:[#allocation8 + $0x2e8] sm:$0xff]
    %v5778 = vld [vmem:[#allocation8 + $0x2f0] sm:$0xff]
    %v5779 = vld [vmem:[#allocation8 + $0x2f8] sm:$0xff]
    %v5780 = vld [vmem:[#allocation8 + $0x300] sm:$0xff]
    %v5781 = vld [vmem:[#allocation8 + $0x308] sm:$0xff]
    %v5782 = vld [vmem:[#allocation8 + $0x310] sm:$0xff]
    %v5783 = vld [vmem:[#allocation8 + $0x318] sm:$0xff]
    %v5784 = vld [vmem:[#allocation8 + $0x320] sm:$0xff]
    %v5785 = vld [vmem:[#allocation8 + $0x328] sm:$0xff]
    %v5786 = vld [vmem:[#allocation8 + $0x330] sm:$0xff]
    %v5787 = vld [vmem:[#allocation8 + $0x338] sm:$0xff]
    %v5788 = vld [vmem:[#allocation8 + $0x340] sm:$0xff]
    %v5789 = vld [vmem:[#allocation8 + $0x348] sm:$0xff]
    %v5790 = vld [vmem:[#allocation8 + $0x350] sm:$0xff]
    %v5791 = vld [vmem:[#allocation8 + $0x358] sm:$0xff]
    %v5792 = vld [vmem:[#allocation8 + $0x360] sm:$0xff]
    %v5793 = vld [vmem:[#allocation8 + $0x368] sm:$0xff]
    %v5794 = vld [vmem:[#allocation8 + $0x370] sm:$0xff]
    %v5795 = vld [vmem:[#allocation8 + $0x378] sm:$0xff]
    %v5796 = vld [vmem:[#allocation8 + $0x380] sm:$0xff]
    %v5797 = vld [vmem:[#allocation8 + $0x388] sm:$0xff]
    %v5798 = vld [vmem:[#allocation8 + $0x390] sm:$0xff]
    %v5799 = vld [vmem:[#allocation8 + $0x398] sm:$0xff]
    %v5800 = vld [vmem:[#allocation8 + $0x3a0] sm:$0xff]
    %v5801 = vld [vmem:[#allocation8 + $0x3a8] sm:$0xff]
    %v5802 = vld [vmem:[#allocation8 + $0x3b0] sm:$0xff]
    %v5803 = vld [vmem:[#allocation8 + $0x3b8] sm:$0xff]
    %v5804 = vld [vmem:[#allocation8 + $0x3c0] sm:$0xff]
    %v5805 = vld [vmem:[#allocation8 + $0x3c8] sm:$0xff]
    %v5806 = vld [vmem:[#allocation8 + $0x3d0] sm:$0xff]
    %v5807 = vld [vmem:[#allocation8 + $0x3d8] sm:$0xff]
    %v5808 = vld [vmem:[#allocation8 + $0x3e0] sm:$0xff]
    %v5809 = vld [vmem:[#allocation8 + $0x3e8] sm:$0xff]
    %v5810 = vld [vmem:[#allocation8 + $0x3f0] sm:$0xff]
    %v5811 = vld [vmem:[#allocation8 + $0x3f8] sm:$0xff]
    %v5812 = vld [vmem:[#allocation8 + $0x400] sm:$0xff]
    %v5813 = vld [vmem:[#allocation8 + $0x408] sm:$0xff]
    %v5814 = vld [vmem:[#allocation8 + $0x410] sm:$0xff]
    %v5815 = vld [vmem:[#allocation8 + $0x418] sm:$0xff]
    %v5816 = vld [vmem:[#allocation8 + $0x420] sm:$0xff]
    %v5817 = vld [vmem:[#allocation8 + $0x428] sm:$0xff]
    %v5818 = vld [vmem:[#allocation8 + $0x430] sm:$0xff]
    %v5819 = vld [vmem:[#allocation8 + $0x438] sm:$0xff]
    %v5820 = vld [vmem:[#allocation8 + $0x440] sm:$0xff]
    %v5821 = vld [vmem:[#allocation8 + $0x448] sm:$0xff]
    %v5822 = vld [vmem:[#allocation8 + $0x450] sm:$0xff]
    %v5823 = vld [vmem:[#allocation8 + $0x458] sm:$0xff]
    %v5824 = vld [vmem:[#allocation8 + $0x460] sm:$0xff]
    %v5825 = vld [vmem:[#allocation8 + $0x468] sm:$0xff]
    %v5826 = vld [vmem:[#allocation8 + $0x470] sm:$0xff]
    %v5827 = vld [vmem:[#allocation8 + $0x478] sm:$0xff]
    %v5828 = vld [vmem:[#allocation8 + $0x480] sm:$0xff]
    %v5829 = vld [vmem:[#allocation8 + $0x488] sm:$0xff]
    %v5830 = vld [vmem:[#allocation8 + $0x490] sm:$0xff]
    %v5831 = vld [vmem:[#allocation8 + $0x498] sm:$0xff]
    %v5832 = vld [vmem:[#allocation8 + $0x4a0] sm:$0xff]
    %v5833 = vld [vmem:[#allocation8 + $0x4a8] sm:$0xff]
    %v5834 = vld [vmem:[#allocation8 + $0x4b0] sm:$0xff]
    %v5835 = vld [vmem:[#allocation8 + $0x4b8] sm:$0xff]
    %v5836 = vld [vmem:[#allocation8 + $0x4c0] sm:$0xff]
    %v5837 = vld [vmem:[#allocation8 + $0x4c8] sm:$0xff]
    %v5838 = vld [vmem:[#allocation8 + $0x4d0] sm:$0xff]
    %v5839 = vld [vmem:[#allocation8 + $0x4d8] sm:$0xff]
    %v5840 = vld [vmem:[#allocation8 + $0x4e0] sm:$0xff]
    %v5841 = vld [vmem:[#allocation8 + $0x4e8] sm:$0xff]
    %v5842 = vld [vmem:[#allocation8 + $0x4f0] sm:$0xff]
    %v5843 = vld [vmem:[#allocation8 + $0x4f8] sm:$0xff]
    %v5844 = vld [vmem:[#allocation8 + $0x500] sm:$0xff]
    %v5845 = vld [vmem:[#allocation8 + $0x508] sm:$0xff]
    %v5846 = vld [vmem:[#allocation8 + $0x510] sm:$0xff]
    %v5847 = vld [vmem:[#allocation8 + $0x518] sm:$0xff]
    %v5848 = vld [vmem:[#allocation8 + $0x520] sm:$0xff]
    %v5849 = vld [vmem:[#allocation8 + $0x528] sm:$0xff]
    %v5850 = vld [vmem:[#allocation8 + $0x530] sm:$0xff]
    %v5851 = vld [vmem:[#allocation8 + $0x538] sm:$0xff]
    %v5852 = vld [vmem:[#allocation8 + $0x540] sm:$0xff]
    %v5853 = vld [vmem:[#allocation8 + $0x548] sm:$0xff]
    %v5854 = vld [vmem:[#allocation8 + $0x550] sm:$0xff]
    %v5855 = vld [vmem:[#allocation8 + $0x558] sm:$0xff]
    %v5856 = vld [vmem:[#allocation8 + $0x560] sm:$0xff]
    %v5857 = vld [vmem:[#allocation8 + $0x568] sm:$0xff]
    %v5858 = vld [vmem:[#allocation8 + $0x570] sm:$0xff]
    %v5859 = vld [vmem:[#allocation8 + $0x578] sm:$0xff]
    %v5860 = vld [vmem:[#allocation8 + $0x580] sm:$0xff]
    %v5861 = vld [vmem:[#allocation8 + $0x588] sm:$0xff]
    %v5862 = vld [vmem:[#allocation8 + $0x590] sm:$0xff]
    %v5863 = vld [vmem:[#allocation8 + $0x598] sm:$0xff]
    %v5864 = vld [vmem:[#allocation8 + $0x5a0] sm:$0xff]
    %v5865 = vld [vmem:[#allocation8 + $0x5a8] sm:$0xff]
    %v5866 = vld [vmem:[#allocation8 + $0x5b0] sm:$0xff]
    %v5867 = vld [vmem:[#allocation8 + $0x5b8] sm:$0xff]
    %v5868 = vld [vmem:[#allocation8 + $0x5c0] sm:$0xff]
    %v5869 = vld [vmem:[#allocation8 + $0x5c8] sm:$0xff]
    %v5870 = vld [vmem:[#allocation8 + $0x5d0] sm:$0xff]
    %v5871 = vld [vmem:[#allocation8 + $0x5d8] sm:$0xff]
    %v5872 = vld [vmem:[#allocation8 + $0x5e0] sm:$0xff]
    %v5873 = vld [vmem:[#allocation8 + $0x5e8] sm:$0xff]
    %v5874 = vld [vmem:[#allocation8 + $0x5f0] sm:$0xff]
    %v5875 = vld [vmem:[#allocation8 + $0x5f8] sm:$0xff]
    %v5876 = vld [vmem:[#allocation8 + $0x600] sm:$0xff]
    %v5877 = vld [vmem:[#allocation8 + $0x608] sm:$0xff]
    %v5878 = vld [vmem:[#allocation8 + $0x610] sm:$0xff]
    %v5879 = vld [vmem:[#allocation8 + $0x618] sm:$0xff]
    %v5880 = vld [vmem:[#allocation8 + $0x620] sm:$0xff]
    %v5881 = vld [vmem:[#allocation8 + $0x628] sm:$0xff]
    %v5882 = vld [vmem:[#allocation8 + $0x630] sm:$0xff]
    %v5883 = vld [vmem:[#allocation8 + $0x638] sm:$0xff]
    %v5884 = vld [vmem:[#allocation8 + $0x640] sm:$0xff]
    %v5885 = vld [vmem:[#allocation8 + $0x648] sm:$0xff]
    %v5886 = vld [vmem:[#allocation8 + $0x650] sm:$0xff]
    %v5887 = vld [vmem:[#allocation8 + $0x658] sm:$0xff]
    %v5888 = vld [vmem:[#allocation8 + $0x660] sm:$0xff]
    %v5889 = vld [vmem:[#allocation8 + $0x668] sm:$0xff]
    %v5890 = vld [vmem:[#allocation8 + $0x670] sm:$0xff]
    %v5891 = vld [vmem:[#allocation8 + $0x678] sm:$0xff]
    %v5892 = vld [vmem:[#allocation8 + $0x680] sm:$0xff]
    %v5893 = vld [vmem:[#allocation8 + $0x688] sm:$0xff]
    %v5894 = vld [vmem:[#allocation8 + $0x690] sm:$0xff]
    %v5895 = vld [vmem:[#allocation8 + $0x698] sm:$0xff]
    %v5896 = vld [vmem:[#allocation8 + $0x6a0] sm:$0xff]
    %v5897 = vld [vmem:[#allocation8 + $0x6a8] sm:$0xff]
    %v5898 = vld [vmem:[#allocation8 + $0x6b0] sm:$0xff]
    %v5899 = vld [vmem:[#allocation8 + $0x6b8] sm:$0xff]
    %v5900 = vld [vmem:[#allocation8 + $0x6c0] sm:$0xff]
    %v5901 = vld [vmem:[#allocation8 + $0x6c8] sm:$0xff]
    %v5902 = vld [vmem:[#allocation8 + $0x6d0] sm:$0xff]
    %v5903 = vld [vmem:[#allocation8 + $0x6d8] sm:$0xff]
    %v5904 = vld [vmem:[#allocation8 + $0x6e0] sm:$0xff]
    %v5905 = vld [vmem:[#allocation8 + $0x6e8] sm:$0xff]
    %v5906 = vld [vmem:[#allocation8 + $0x6f0] sm:$0xff]
    %v5907 = vld [vmem:[#allocation8 + $0x6f8] sm:$0xff]
    %v5908 = vld [vmem:[#allocation8 + $0x700] sm:$0xff]
    %v5909 = vld [vmem:[#allocation8 + $0x708] sm:$0xff]
    %v5910 = vld [vmem:[#allocation8 + $0x710] sm:$0xff]
    %v5911 = vld [vmem:[#allocation8 + $0x718] sm:$0xff]
    %v5912 = vld [vmem:[#allocation8 + $0x720] sm:$0xff]
    %v5913 = vld [vmem:[#allocation8 + $0x728] sm:$0xff]
    %v5914 = vld [vmem:[#allocation8 + $0x730] sm:$0xff]
    %v5915 = vld [vmem:[#allocation8 + $0x738] sm:$0xff]
    %v5916 = vld [vmem:[#allocation8 + $0x740] sm:$0xff]
    %v5917 = vld [vmem:[#allocation8 + $0x748] sm:$0xff]
    %v5918 = vld [vmem:[#allocation8 + $0x750] sm:$0xff]
    %v5919 = vld [vmem:[#allocation8 + $0x758] sm:$0xff]
    %v5920 = vld [vmem:[#allocation8 + $0x760] sm:$0xff]
    %v5921 = vld [vmem:[#allocation8 + $0x768] sm:$0xff]
    %v5922 = vld [vmem:[#allocation8 + $0x770] sm:$0xff]
    %v5923 = vld [vmem:[#allocation8 + $0x778] sm:$0xff]
    %v5924 = vld [vmem:[#allocation8 + $0x780] sm:$0xff]
    %v5925 = vld [vmem:[#allocation8 + $0x788] sm:$0xff]
    %v5926 = vld [vmem:[#allocation8 + $0x790] sm:$0xff]
    %v5927 = vld [vmem:[#allocation8 + $0x798] sm:$0xff]
    %v5928 = vld [vmem:[#allocation8 + $0x7a0] sm:$0xff]
    %v5929 = vld [vmem:[#allocation8 + $0x7a8] sm:$0xff]
    %v5930 = vld [vmem:[#allocation8 + $0x7b0] sm:$0xff]
    %v5931 = vld [vmem:[#allocation8 + $0x7b8] sm:$0xff]
    %v5932 = vld [vmem:[#allocation8 + $0x7c0] sm:$0xff]
    %v5933 = vld [vmem:[#allocation8 + $0x7c8] sm:$0xff]
    %v5934 = vld [vmem:[#allocation8 + $0x7d0] sm:$0xff]
    %v5935 = vld [vmem:[#allocation8 + $0x7d8] sm:$0xff]
    %v5936 = vld [vmem:[#allocation8 + $0x7e0] sm:$0xff]
    %v5937 = vld [vmem:[#allocation8 + $0x7e8] sm:$0xff]
    %v5938 = vld [vmem:[#allocation8 + $0x7f0] sm:$0xff]
    %v5939 = vld [vmem:[#allocation8 + $0x7f8] sm:$0xff]
    %v5940 = vld [vmem:[#allocation8 + $0x800] sm:$0xff]
    %v5941 = vld [vmem:[#allocation8 + $0x808] sm:$0xff]
    %v5942 = vld [vmem:[#allocation8 + $0x810] sm:$0xff]
    %v5943 = vld [vmem:[#allocation8 + $0x818] sm:$0xff]
    %v5944 = vld [vmem:[#allocation8 + $0x820] sm:$0xff]
    %v5945 = vld [vmem:[#allocation8 + $0x828] sm:$0xff]
    %v5946 = vld [vmem:[#allocation8 + $0x830] sm:$0xff]
    %v5947 = vld [vmem:[#allocation8 + $0x838] sm:$0xff]
    %v5948 = vld [vmem:[#allocation8 + $0x840] sm:$0xff]
    %v5949 = vld [vmem:[#allocation8 + $0x848] sm:$0xff]
    %v5950 = vld [vmem:[#allocation8 + $0x850] sm:$0xff]
    %v5951 = vld [vmem:[#allocation8 + $0x858] sm:$0xff]
    %v5952 = vld [vmem:[#allocation8 + $0x860] sm:$0xff]
    %v5953 = vld [vmem:[#allocation8 + $0x868] sm:$0xff]
    %v5954 = vld [vmem:[#allocation8 + $0x870] sm:$0xff]
    %v5955 = vld [vmem:[#allocation8 + $0x878] sm:$0xff]
    %v5956 = vld [vmem:[#allocation8 + $0x880] sm:$0xff]
    %v5957 = vld [vmem:[#allocation8 + $0x888] sm:$0xff]
    %v5958 = vld [vmem:[#allocation8 + $0x890] sm:$0xff]
    %v5959 = vld [vmem:[#allocation8 + $0x898] sm:$0xff]
    %v5960 = vld [vmem:[#allocation8 + $0x8a0] sm:$0xff]
    %v5961 = vld [vmem:[#allocation8 + $0x8a8] sm:$0xff]
    %v5962 = vld [vmem:[#allocation8 + $0x8b0] sm:$0xff]
    %v5963 = vld [vmem:[#allocation8 + $0x8b8] sm:$0xff]
    %v5964 = vld [vmem:[#allocation8 + $0x8c0] sm:$0xff]
    %v5965 = vld [vmem:[#allocation8 + $0x8c8] sm:$0xff]
    %v5966 = vld [vmem:[#allocation8 + $0x8d0] sm:$0xff]
    %v5967 = vld [vmem:[#allocation8 + $0x8d8] sm:$0xff]
    %v5968 = vld [vmem:[#allocation8 + $0x8e0] sm:$0xff]
    %v5969 = vld [vmem:[#allocation8 + $0x8e8] sm:$0xff]
    %v5970 = vld [vmem:[#allocation8 + $0x8f0] sm:$0xff]
    %v5971 = vld [vmem:[#allocation8 + $0x8f8] sm:$0xff]
    %v6260 = vunpack.c.l.b16 %v5684
    %v6261 = vunpack.c.h.b16 %v5684
    %v6262 = vunpack.c.l.b16 %v5685
    %v6263 = vunpack.c.h.b16 %v5685
    %v6264 = vunpack.c.l.b16 %v5686
    %v6265 = vunpack.c.h.b16 %v5686
    %v6266 = vunpack.c.l.b16 %v5687
    %v6267 = vunpack.c.h.b16 %v5687
    %v6268 = vunpack.c.l.b16 %v5688
    %v6269 = vunpack.c.h.b16 %v5688
    %v6270 = vunpack.c.l.b16 %v5689
    %v6271 = vunpack.c.h.b16 %v5689
    %v6272 = vunpack.c.l.b16 %v5690
    %v6273 = vunpack.c.h.b16 %v5690
    %v6274 = vunpack.c.l.b16 %v5691
    %v6275 = vunpack.c.h.b16 %v5691
    %v6276 = vunpack.c.l.b16 %v5692
    %v6277 = vunpack.c.h.b16 %v5692
    %v6278 = vunpack.c.l.b16 %v5693
    %v6279 = vunpack.c.h.b16 %v5693
    %v6280 = vunpack.c.l.b16 %v5694
    %v6281 = vunpack.c.h.b16 %v5694
    %v6282 = vunpack.c.l.b16 %v5695
    %v6283 = vunpack.c.h.b16 %v5695
    %v6284 = vunpack.c.l.b16 %v5696
    %v6285 = vunpack.c.h.b16 %v5696
    %v6286 = vunpack.c.l.b16 %v5697
    %v6287 = vunpack.c.h.b16 %v5697
    %v6288 = vunpack.c.l.b16 %v5698
    %v6289 = vunpack.c.h.b16 %v5698
    %v6290 = vunpack.c.l.b16 %v5699
    %v6291 = vunpack.c.h.b16 %v5699
    %v6292 = vunpack.c.l.b16 %v5700
    %v6293 = vunpack.c.h.b16 %v5700
    %v6294 = vunpack.c.l.b16 %v5701
    %v6295 = vunpack.c.h.b16 %v5701
    %v6296 = vunpack.c.l.b16 %v5702
    %v6297 = vunpack.c.h.b16 %v5702
    %v6298 = vunpack.c.l.b16 %v5703
    %v6299 = vunpack.c.h.b16 %v5703
    %v6300 = vunpack.c.l.b16 %v5704
    %v6301 = vunpack.c.h.b16 %v5704
    %v6302 = vunpack.c.l.b16 %v5705
    %v6303 = vunpack.c.h.b16 %v5705
    %v6304 = vunpack.c.l.b16 %v5706
    %v6305 = vunpack.c.h.b16 %v5706
    %v6306 = vunpack.c.l.b16 %v5707
    %v6307 = vunpack.c.h.b16 %v5707
    %v6308 = vunpack.c.l.b16 %v5708
    %v6309 = vunpack.c.h.b16 %v5708
    %v6310 = vunpack.c.l.b16 %v5709
    %v6311 = vunpack.c.h.b16 %v5709
    %v6312 = vunpack.c.l.b16 %v5710
    %v6313 = vunpack.c.h.b16 %v5710
    %v6314 = vunpack.c.l.b16 %v5711
    %v6315 = vunpack.c.h.b16 %v5711
    %v6316 = vunpack.c.l.b16 %v5712
    %v6317 = vunpack.c.h.b16 %v5712
    %v6318 = vunpack.c.l.b16 %v5713
    %v6319 = vunpack.c.h.b16 %v5713
    %v6320 = vunpack.c.l.b16 %v5714
    %v6321 = vunpack.c.h.b16 %v5714
    %v6322 = vunpack.c.l.b16 %v5715
    %v6323 = vunpack.c.h.b16 %v5715
    %v6324 = vunpack.c.l.b16 %v5716
    %v6325 = vunpack.c.h.b16 %v5716
    %v6326 = vunpack.c.l.b16 %v5717
    %v6327 = vunpack.c.h.b16 %v5717
    %v6328 = vunpack.c.l.b16 %v5718
    %v6329 = vunpack.c.h.b16 %v5718
    %v6330 = vunpack.c.l.b16 %v5719
    %v6331 = vunpack.c.h.b16 %v5719
    %v6332 = vunpack.c.l.b16 %v5720
    %v6333 = vunpack.c.h.b16 %v5720
    %v6334 = vunpack.c.l.b16 %v5721
    %v6335 = vunpack.c.h.b16 %v5721
    %v6336 = vunpack.c.l.b16 %v5722
    %v6337 = vunpack.c.h.b16 %v5722
    %v6338 = vunpack.c.l.b16 %v5723
    %v6339 = vunpack.c.h.b16 %v5723
    %v6340 = vunpack.c.l.b16 %v5724
    %v6341 = vunpack.c.h.b16 %v5724
    %v6342 = vunpack.c.l.b16 %v5725
    %v6343 = vunpack.c.h.b16 %v5725
    %v6344 = vunpack.c.l.b16 %v5726
    %v6345 = vunpack.c.h.b16 %v5726
    %v6346 = vunpack.c.l.b16 %v5727
    %v6347 = vunpack.c.h.b16 %v5727
    %v6348 = vunpack.c.l.b16 %v5728
    %v6349 = vunpack.c.h.b16 %v5728
    %v6350 = vunpack.c.l.b16 %v5729
    %v6351 = vunpack.c.h.b16 %v5729
    %v6352 = vunpack.c.l.b16 %v5730
    %v6353 = vunpack.c.h.b16 %v5730
    %v6354 = vunpack.c.l.b16 %v5731
    %v6355 = vunpack.c.h.b16 %v5731
    %v6356 = vunpack.c.l.b16 %v5732
    %v6357 = vunpack.c.h.b16 %v5732
    %v6358 = vunpack.c.l.b16 %v5733
    %v6359 = vunpack.c.h.b16 %v5733
    %v6360 = vunpack.c.l.b16 %v5734
    %v6361 = vunpack.c.h.b16 %v5734
    %v6362 = vunpack.c.l.b16 %v5735
    %v6363 = vunpack.c.h.b16 %v5735
    %v6364 = vunpack.c.l.b16 %v5736
    %v6365 = vunpack.c.h.b16 %v5736
    %v6366 = vunpack.c.l.b16 %v5737
    %v6367 = vunpack.c.h.b16 %v5737
    %v6368 = vunpack.c.l.b16 %v5738
    %v6369 = vunpack.c.h.b16 %v5738
    %v6370 = vunpack.c.l.b16 %v5739
    %v6371 = vunpack.c.h.b16 %v5739
    %v6372 = vunpack.c.l.b16 %v5740
    %v6373 = vunpack.c.h.b16 %v5740
    %v6374 = vunpack.c.l.b16 %v5741
    %v6375 = vunpack.c.h.b16 %v5741
    %v6376 = vunpack.c.l.b16 %v5742
    %v6377 = vunpack.c.h.b16 %v5742
    %v6378 = vunpack.c.l.b16 %v5743
    %v6379 = vunpack.c.h.b16 %v5743
    %v6380 = vunpack.c.l.b16 %v5744
    %v6381 = vunpack.c.h.b16 %v5744
    %v6382 = vunpack.c.l.b16 %v5745
    %v6383 = vunpack.c.h.b16 %v5745
    %v6384 = vunpack.c.l.b16 %v5746
    %v6385 = vunpack.c.h.b16 %v5746
    %v6386 = vunpack.c.l.b16 %v5747
    %v6387 = vunpack.c.h.b16 %v5747
    %v6388 = vunpack.c.l.b16 %v5748
    %v6389 = vunpack.c.h.b16 %v5748
    %v6390 = vunpack.c.l.b16 %v5749
    %v6391 = vunpack.c.h.b16 %v5749
    %v6392 = vunpack.c.l.b16 %v5750
    %v6393 = vunpack.c.h.b16 %v5750
    %v6394 = vunpack.c.l.b16 %v5751
    %v6395 = vunpack.c.h.b16 %v5751
    %v6396 = vunpack.c.l.b16 %v5752
    %v6397 = vunpack.c.h.b16 %v5752
    %v6398 = vunpack.c.l.b16 %v5753
    %v6399 = vunpack.c.h.b16 %v5753
    %v6400 = vunpack.c.l.b16 %v5754
    %v6401 = vunpack.c.h.b16 %v5754
    %v6402 = vunpack.c.l.b16 %v5755
    %v6403 = vunpack.c.h.b16 %v5755
    %v6404 = vunpack.c.l.b16 %v5756
    %v6405 = vunpack.c.h.b16 %v5756
    %v6406 = vunpack.c.l.b16 %v5757
    %v6407 = vunpack.c.h.b16 %v5757
    %v6408 = vunpack.c.l.b16 %v5758
    %v6409 = vunpack.c.h.b16 %v5758
    %v6410 = vunpack.c.l.b16 %v5759
    %v6411 = vunpack.c.h.b16 %v5759
    %v6412 = vunpack.c.l.b16 %v5760
    %v6413 = vunpack.c.h.b16 %v5760
    %v6414 = vunpack.c.l.b16 %v5761
    %v6415 = vunpack.c.h.b16 %v5761
    %v6416 = vunpack.c.l.b16 %v5762
    %v6417 = vunpack.c.h.b16 %v5762
    %v6418 = vunpack.c.l.b16 %v5763
    %v6419 = vunpack.c.h.b16 %v5763
    %v6420 = vunpack.c.l.b16 %v5764
    %v6421 = vunpack.c.h.b16 %v5764
    %v6422 = vunpack.c.l.b16 %v5765
    %v6423 = vunpack.c.h.b16 %v5765
    %v6424 = vunpack.c.l.b16 %v5766
    %v6425 = vunpack.c.h.b16 %v5766
    %v6426 = vunpack.c.l.b16 %v5767
    %v6427 = vunpack.c.h.b16 %v5767
    %v6428 = vunpack.c.l.b16 %v5768
    %v6429 = vunpack.c.h.b16 %v5768
    %v6430 = vunpack.c.l.b16 %v5769
    %v6431 = vunpack.c.h.b16 %v5769
    %v6432 = vunpack.c.l.b16 %v5770
    %v6433 = vunpack.c.h.b16 %v5770
    %v6434 = vunpack.c.l.b16 %v5771
    %v6435 = vunpack.c.h.b16 %v5771
    %v6436 = vunpack.c.l.b16 %v5772
    %v6437 = vunpack.c.h.b16 %v5772
    %v6438 = vunpack.c.l.b16 %v5773
    %v6439 = vunpack.c.h.b16 %v5773
    %v6440 = vunpack.c.l.b16 %v5774
    %v6441 = vunpack.c.h.b16 %v5774
    %v6442 = vunpack.c.l.b16 %v5775
    %v6443 = vunpack.c.h.b16 %v5775
    %v6444 = vunpack.c.l.b16 %v5776
    %v6445 = vunpack.c.h.b16 %v5776
    %v6446 = vunpack.c.l.b16 %v5777
    %v6447 = vunpack.c.h.b16 %v5777
    %v6448 = vunpack.c.l.b16 %v5778
    %v6449 = vunpack.c.h.b16 %v5778
    %v6450 = vunpack.c.l.b16 %v5779
    %v6451 = vunpack.c.h.b16 %v5779
    %v6452 = vunpack.c.l.b16 %v5780
    %v6453 = vunpack.c.h.b16 %v5780
    %v6454 = vunpack.c.l.b16 %v5781
    %v6455 = vunpack.c.h.b16 %v5781
    %v6456 = vunpack.c.l.b16 %v5782
    %v6457 = vunpack.c.h.b16 %v5782
    %v6458 = vunpack.c.l.b16 %v5783
    %v6459 = vunpack.c.h.b16 %v5783
    %v6460 = vunpack.c.l.b16 %v5784
    %v6461 = vunpack.c.h.b16 %v5784
    %v6462 = vunpack.c.l.b16 %v5785
    %v6463 = vunpack.c.h.b16 %v5785
    %v6464 = vunpack.c.l.b16 %v5786
    %v6465 = vunpack.c.h.b16 %v5786
    %v6466 = vunpack.c.l.b16 %v5787
    %v6467 = vunpack.c.h.b16 %v5787
    %v6468 = vunpack.c.l.b16 %v5788
    %v6469 = vunpack.c.h.b16 %v5788
    %v6470 = vunpack.c.l.b16 %v5789
    %v6471 = vunpack.c.h.b16 %v5789
    %v6472 = vunpack.c.l.b16 %v5790
    %v6473 = vunpack.c.h.b16 %v5790
    %v6474 = vunpack.c.l.b16 %v5791
    %v6475 = vunpack.c.h.b16 %v5791
    %v6476 = vunpack.c.l.b16 %v5792
    %v6477 = vunpack.c.h.b16 %v5792
    %v6478 = vunpack.c.l.b16 %v5793
    %v6479 = vunpack.c.h.b16 %v5793
    %v6480 = vunpack.c.l.b16 %v5794
    %v6481 = vunpack.c.h.b16 %v5794
    %v6482 = vunpack.c.l.b16 %v5795
    %v6483 = vunpack.c.h.b16 %v5795
    %v6484 = vunpack.c.l.b16 %v5796
    %v6485 = vunpack.c.h.b16 %v5796
    %v6486 = vunpack.c.l.b16 %v5797
    %v6487 = vunpack.c.h.b16 %v5797
    %v6488 = vunpack.c.l.b16 %v5798
    %v6489 = vunpack.c.h.b16 %v5798
    %v6490 = vunpack.c.l.b16 %v5799
    %v6491 = vunpack.c.h.b16 %v5799
    %v6492 = vunpack.c.l.b16 %v5800
    %v6493 = vunpack.c.h.b16 %v5800
    %v6494 = vunpack.c.l.b16 %v5801
    %v6495 = vunpack.c.h.b16 %v5801
    %v6496 = vunpack.c.l.b16 %v5802
    %v6497 = vunpack.c.h.b16 %v5802
    %v6498 = vunpack.c.l.b16 %v5803
    %v6499 = vunpack.c.h.b16 %v5803
    %v6500 = vunpack.c.l.b16 %v5804
    %v6501 = vunpack.c.h.b16 %v5804
    %v6502 = vunpack.c.l.b16 %v5805
    %v6503 = vunpack.c.h.b16 %v5805
    %v6504 = vunpack.c.l.b16 %v5806
    %v6505 = vunpack.c.h.b16 %v5806
    %v6506 = vunpack.c.l.b16 %v5807
    %v6507 = vunpack.c.h.b16 %v5807
    %v6508 = vunpack.c.l.b16 %v5808
    %v6509 = vunpack.c.h.b16 %v5808
    %v6510 = vunpack.c.l.b16 %v5809
    %v6511 = vunpack.c.h.b16 %v5809
    %v6512 = vunpack.c.l.b16 %v5810
    %v6513 = vunpack.c.h.b16 %v5810
    %v6514 = vunpack.c.l.b16 %v5811
    %v6515 = vunpack.c.h.b16 %v5811
    %v6516 = vunpack.c.l.b16 %v5812
    %v6517 = vunpack.c.h.b16 %v5812
    %v6518 = vunpack.c.l.b16 %v5813
    %v6519 = vunpack.c.h.b16 %v5813
    %v6520 = vunpack.c.l.b16 %v5814
    %v6521 = vunpack.c.h.b16 %v5814
    %v6522 = vunpack.c.l.b16 %v5815
    %v6523 = vunpack.c.h.b16 %v5815
    %v6524 = vunpack.c.l.b16 %v5816
    %v6525 = vunpack.c.h.b16 %v5816
    %v6526 = vunpack.c.l.b16 %v5817
    %v6527 = vunpack.c.h.b16 %v5817
    %v6528 = vunpack.c.l.b16 %v5818
    %v6529 = vunpack.c.h.b16 %v5818
    %v6530 = vunpack.c.l.b16 %v5819
    %v6531 = vunpack.c.h.b16 %v5819
    %v6532 = vunpack.c.l.b16 %v5820
    %v6533 = vunpack.c.h.b16 %v5820
    %v6534 = vunpack.c.l.b16 %v5821
    %v6535 = vunpack.c.h.b16 %v5821
    %v6536 = vunpack.c.l.b16 %v5822
    %v6537 = vunpack.c.h.b16 %v5822
    %v6538 = vunpack.c.l.b16 %v5823
    %v6539 = vunpack.c.h.b16 %v5823
    %v6540 = vunpack.c.l.b16 %v5824
    %v6541 = vunpack.c.h.b16 %v5824
    %v6542 = vunpack.c.l.b16 %v5825
    %v6543 = vunpack.c.h.b16 %v5825
    %v6544 = vunpack.c.l.b16 %v5826
    %v6545 = vunpack.c.h.b16 %v5826
    %v6546 = vunpack.c.l.b16 %v5827
    %v6547 = vunpack.c.h.b16 %v5827
    %v6548 = vunpack.c.l.b16 %v5828
    %v6549 = vunpack.c.h.b16 %v5828
    %v6550 = vunpack.c.l.b16 %v5829
    %v6551 = vunpack.c.h.b16 %v5829
    %v6552 = vunpack.c.l.b16 %v5830
    %v6553 = vunpack.c.h.b16 %v5830
    %v6554 = vunpack.c.l.b16 %v5831
    %v6555 = vunpack.c.h.b16 %v5831
    %v6556 = vunpack.c.l.b16 %v5832
    %v6557 = vunpack.c.h.b16 %v5832
    %v6558 = vunpack.c.l.b16 %v5833
    %v6559 = vunpack.c.h.b16 %v5833
    %v6560 = vunpack.c.l.b16 %v5834
    %v6561 = vunpack.c.h.b16 %v5834
    %v6562 = vunpack.c.l.b16 %v5835
    %v6563 = vunpack.c.h.b16 %v5835
    %v6564 = vunpack.c.l.b16 %v5836
    %v6565 = vunpack.c.h.b16 %v5836
    %v6566 = vunpack.c.l.b16 %v5837
    %v6567 = vunpack.c.h.b16 %v5837
    %v6568 = vunpack.c.l.b16 %v5838
    %v6569 = vunpack.c.h.b16 %v5838
    %v6570 = vunpack.c.l.b16 %v5839
    %v6571 = vunpack.c.h.b16 %v5839
    %v6572 = vunpack.c.l.b16 %v5840
    %v6573 = vunpack.c.h.b16 %v5840
    %v6574 = vunpack.c.l.b16 %v5841
    %v6575 = vunpack.c.h.b16 %v5841
    %v6576 = vunpack.c.l.b16 %v5842
    %v6577 = vunpack.c.h.b16 %v5842
    %v6578 = vunpack.c.l.b16 %v5843
    %v6579 = vunpack.c.h.b16 %v5843
    %v6580 = vunpack.c.l.b16 %v5844
    %v6581 = vunpack.c.h.b16 %v5844
    %v6582 = vunpack.c.l.b16 %v5845
    %v6583 = vunpack.c.h.b16 %v5845
    %v6584 = vunpack.c.l.b16 %v5846
    %v6585 = vunpack.c.h.b16 %v5846
    %v6586 = vunpack.c.l.b16 %v5847
    %v6587 = vunpack.c.h.b16 %v5847
    %v6588 = vunpack.c.l.b16 %v5848
    %v6589 = vunpack.c.h.b16 %v5848
    %v6590 = vunpack.c.l.b16 %v5849
    %v6591 = vunpack.c.h.b16 %v5849
    %v6592 = vunpack.c.l.b16 %v5850
    %v6593 = vunpack.c.h.b16 %v5850
    %v6594 = vunpack.c.l.b16 %v5851
    %v6595 = vunpack.c.h.b16 %v5851
    %v6596 = vunpack.c.l.b16 %v5852
    %v6597 = vunpack.c.h.b16 %v5852
    %v6598 = vunpack.c.l.b16 %v5853
    %v6599 = vunpack.c.h.b16 %v5853
    %v6600 = vunpack.c.l.b16 %v5854
    %v6601 = vunpack.c.h.b16 %v5854
    %v6602 = vunpack.c.l.b16 %v5855
    %v6603 = vunpack.c.h.b16 %v5855
    %v6604 = vunpack.c.l.b16 %v5856
    %v6605 = vunpack.c.h.b16 %v5856
    %v6606 = vunpack.c.l.b16 %v5857
    %v6607 = vunpack.c.h.b16 %v5857
    %v6608 = vunpack.c.l.b16 %v5858
    %v6609 = vunpack.c.h.b16 %v5858
    %v6610 = vunpack.c.l.b16 %v5859
    %v6611 = vunpack.c.h.b16 %v5859
    %v6612 = vunpack.c.l.b16 %v5860
    %v6613 = vunpack.c.h.b16 %v5860
    %v6614 = vunpack.c.l.b16 %v5861
    %v6615 = vunpack.c.h.b16 %v5861
    %v6616 = vunpack.c.l.b16 %v5862
    %v6617 = vunpack.c.h.b16 %v5862
    %v6618 = vunpack.c.l.b16 %v5863
    %v6619 = vunpack.c.h.b16 %v5863
    %v6620 = vunpack.c.l.b16 %v5864
    %v6621 = vunpack.c.h.b16 %v5864
    %v6622 = vunpack.c.l.b16 %v5865
    %v6623 = vunpack.c.h.b16 %v5865
    %v6624 = vunpack.c.l.b16 %v5866
    %v6625 = vunpack.c.h.b16 %v5866
    %v6626 = vunpack.c.l.b16 %v5867
    %v6627 = vunpack.c.h.b16 %v5867
    %v6628 = vunpack.c.l.b16 %v5868
    %v6629 = vunpack.c.h.b16 %v5868
    %v6630 = vunpack.c.l.b16 %v5869
    %v6631 = vunpack.c.h.b16 %v5869
    %v6632 = vunpack.c.l.b16 %v5870
    %v6633 = vunpack.c.h.b16 %v5870
    %v6634 = vunpack.c.l.b16 %v5871
    %v6635 = vunpack.c.h.b16 %v5871
    %v6636 = vunpack.c.l.b16 %v5872
    %v6637 = vunpack.c.h.b16 %v5872
    %v6638 = vunpack.c.l.b16 %v5873
    %v6639 = vunpack.c.h.b16 %v5873
    %v6640 = vunpack.c.l.b16 %v5874
    %v6641 = vunpack.c.h.b16 %v5874
    %v6642 = vunpack.c.l.b16 %v5875
    %v6643 = vunpack.c.h.b16 %v5875
    %v6644 = vunpack.c.l.b16 %v5876
    %v6645 = vunpack.c.h.b16 %v5876
    %v6646 = vunpack.c.l.b16 %v5877
    %v6647 = vunpack.c.h.b16 %v5877
    %v6648 = vunpack.c.l.b16 %v5878
    %v6649 = vunpack.c.h.b16 %v5878
    %v6650 = vunpack.c.l.b16 %v5879
    %v6651 = vunpack.c.h.b16 %v5879
    %v6652 = vunpack.c.l.b16 %v5880
    %v6653 = vunpack.c.h.b16 %v5880
    %v6654 = vunpack.c.l.b16 %v5881
    %v6655 = vunpack.c.h.b16 %v5881
    %v6656 = vunpack.c.l.b16 %v5882
    %v6657 = vunpack.c.h.b16 %v5882
    %v6658 = vunpack.c.l.b16 %v5883
    %v6659 = vunpack.c.h.b16 %v5883
    %v6660 = vunpack.c.l.b16 %v5884
    %v6661 = vunpack.c.h.b16 %v5884
    %v6662 = vunpack.c.l.b16 %v5885
    %v6663 = vunpack.c.h.b16 %v5885
    %v6664 = vunpack.c.l.b16 %v5886
    %v6665 = vunpack.c.h.b16 %v5886
    %v6666 = vunpack.c.l.b16 %v5887
    %v6667 = vunpack.c.h.b16 %v5887
    %v6668 = vunpack.c.l.b16 %v5888
    %v6669 = vunpack.c.h.b16 %v5888
    %v6670 = vunpack.c.l.b16 %v5889
    %v6671 = vunpack.c.h.b16 %v5889
    %v6672 = vunpack.c.l.b16 %v5890
    %v6673 = vunpack.c.h.b16 %v5890
    %v6674 = vunpack.c.l.b16 %v5891
    %v6675 = vunpack.c.h.b16 %v5891
    %v6676 = vunpack.c.l.b16 %v5892
    %v6677 = vunpack.c.h.b16 %v5892
    %v6678 = vunpack.c.l.b16 %v5893
    %v6679 = vunpack.c.h.b16 %v5893
    %v6680 = vunpack.c.l.b16 %v5894
    %v6681 = vunpack.c.h.b16 %v5894
    %v6682 = vunpack.c.l.b16 %v5895
    %v6683 = vunpack.c.h.b16 %v5895
    %v6684 = vunpack.c.l.b16 %v5896
    %v6685 = vunpack.c.h.b16 %v5896
    %v6686 = vunpack.c.l.b16 %v5897
    %v6687 = vunpack.c.h.b16 %v5897
    %v6688 = vunpack.c.l.b16 %v5898
    %v6689 = vunpack.c.h.b16 %v5898
    %v6690 = vunpack.c.l.b16 %v5899
    %v6691 = vunpack.c.h.b16 %v5899
    %v6692 = vunpack.c.l.b16 %v5900
    %v6693 = vunpack.c.h.b16 %v5900
    %v6694 = vunpack.c.l.b16 %v5901
    %v6695 = vunpack.c.h.b16 %v5901
    %v6696 = vunpack.c.l.b16 %v5902
    %v6697 = vunpack.c.h.b16 %v5902
    %v6698 = vunpack.c.l.b16 %v5903
    %v6699 = vunpack.c.h.b16 %v5903
    %v6700 = vunpack.c.l.b16 %v5904
    %v6701 = vunpack.c.h.b16 %v5904
    %v6702 = vunpack.c.l.b16 %v5905
    %v6703 = vunpack.c.h.b16 %v5905
    %v6704 = vunpack.c.l.b16 %v5906
    %v6705 = vunpack.c.h.b16 %v5906
    %v6706 = vunpack.c.l.b16 %v5907
    %v6707 = vunpack.c.h.b16 %v5907
    %v6708 = vunpack.c.l.b16 %v5908
    %v6709 = vunpack.c.h.b16 %v5908
    %v6710 = vunpack.c.l.b16 %v5909
    %v6711 = vunpack.c.h.b16 %v5909
    %v6712 = vunpack.c.l.b16 %v5910
    %v6713 = vunpack.c.h.b16 %v5910
    %v6714 = vunpack.c.l.b16 %v5911
    %v6715 = vunpack.c.h.b16 %v5911
    %v6716 = vunpack.c.l.b16 %v5912
    %v6717 = vunpack.c.h.b16 %v5912
    %v6718 = vunpack.c.l.b16 %v5913
    %v6719 = vunpack.c.h.b16 %v5913
    %v6720 = vunpack.c.l.b16 %v5914
    %v6721 = vunpack.c.h.b16 %v5914
    %v6722 = vunpack.c.l.b16 %v5915
    %v6723 = vunpack.c.h.b16 %v5915
    %v6724 = vunpack.c.l.b16 %v5916
    %v6725 = vunpack.c.h.b16 %v5916
    %v6726 = vunpack.c.l.b16 %v5917
    %v6727 = vunpack.c.h.b16 %v5917
    %v6728 = vunpack.c.l.b16 %v5918
    %v6729 = vunpack.c.h.b16 %v5918
    %v6730 = vunpack.c.l.b16 %v5919
    %v6731 = vunpack.c.h.b16 %v5919
    %v6732 = vunpack.c.l.b16 %v5920
    %v6733 = vunpack.c.h.b16 %v5920
    %v6734 = vunpack.c.l.b16 %v5921
    %v6735 = vunpack.c.h.b16 %v5921
    %v6736 = vunpack.c.l.b16 %v5922
    %v6737 = vunpack.c.h.b16 %v5922
    %v6738 = vunpack.c.l.b16 %v5923
    %v6739 = vunpack.c.h.b16 %v5923
    %v6740 = vunpack.c.l.b16 %v5924
    %v6741 = vunpack.c.h.b16 %v5924
    %v6742 = vunpack.c.l.b16 %v5925
    %v6743 = vunpack.c.h.b16 %v5925
    %v6744 = vunpack.c.l.b16 %v5926
    %v6745 = vunpack.c.h.b16 %v5926
    %v6746 = vunpack.c.l.b16 %v5927
    %v6747 = vunpack.c.h.b16 %v5927
    %v6748 = vunpack.c.l.b16 %v5928
    %v6749 = vunpack.c.h.b16 %v5928
    %v6750 = vunpack.c.l.b16 %v5929
    %v6751 = vunpack.c.h.b16 %v5929
    %v6752 = vunpack.c.l.b16 %v5930
    %v6753 = vunpack.c.h.b16 %v5930
    %v6754 = vunpack.c.l.b16 %v5931
    %v6755 = vunpack.c.h.b16 %v5931
    %v6756 = vunpack.c.l.b16 %v5932
    %v6757 = vunpack.c.h.b16 %v5932
    %v6758 = vunpack.c.l.b16 %v5933
    %v6759 = vunpack.c.h.b16 %v5933
    %v6760 = vunpack.c.l.b16 %v5934
    %v6761 = vunpack.c.h.b16 %v5934
    %v6762 = vunpack.c.l.b16 %v5935
    %v6763 = vunpack.c.h.b16 %v5935
    %v6764 = vunpack.c.l.b16 %v5936
    %v6765 = vunpack.c.h.b16 %v5936
    %v6766 = vunpack.c.l.b16 %v5937
    %v6767 = vunpack.c.h.b16 %v5937
    %v6768 = vunpack.c.l.b16 %v5938
    %v6769 = vunpack.c.h.b16 %v5938
    %v6770 = vunpack.c.l.b16 %v5939
    %v6771 = vunpack.c.h.b16 %v5939
    %v6772 = vunpack.c.l.b16 %v5940
    %v6773 = vunpack.c.h.b16 %v5940
    %v6774 = vunpack.c.l.b16 %v5941
    %v6775 = vunpack.c.h.b16 %v5941
    %v6776 = vunpack.c.l.b16 %v5942
    %v6777 = vunpack.c.h.b16 %v5942
    %v6778 = vunpack.c.l.b16 %v5943
    %v6779 = vunpack.c.h.b16 %v5943
    %v6780 = vunpack.c.l.b16 %v5944
    %v6781 = vunpack.c.h.b16 %v5944
    %v6782 = vunpack.c.l.b16 %v5945
    %v6783 = vunpack.c.h.b16 %v5945
    %v6784 = vunpack.c.l.b16 %v5946
    %v6785 = vunpack.c.h.b16 %v5946
    %v6786 = vunpack.c.l.b16 %v5947
    %v6787 = vunpack.c.h.b16 %v5947
    %v6788 = vunpack.c.l.b16 %v5948
    %v6789 = vunpack.c.h.b16 %v5948
    %v6790 = vunpack.c.l.b16 %v5949
    %v6791 = vunpack.c.h.b16 %v5949
    %v6792 = vunpack.c.l.b16 %v5950
    %v6793 = vunpack.c.h.b16 %v5950
    %v6794 = vunpack.c.l.b16 %v5951
    %v6795 = vunpack.c.h.b16 %v5951
    %v6796 = vunpack.c.l.b16 %v5952
    %v6797 = vunpack.c.h.b16 %v5952
    %v6798 = vunpack.c.l.b16 %v5953
    %v6799 = vunpack.c.h.b16 %v5953
    %v6800 = vunpack.c.l.b16 %v5954
    %v6801 = vunpack.c.h.b16 %v5954
    %v6802 = vunpack.c.l.b16 %v5955
    %v6803 = vunpack.c.h.b16 %v5955
    %v6804 = vunpack.c.l.b16 %v5956
    %v6805 = vunpack.c.h.b16 %v5956
    %v6806 = vunpack.c.l.b16 %v5957
    %v6807 = vunpack.c.h.b16 %v5957
    %v6808 = vunpack.c.l.b16 %v5958
    %v6809 = vunpack.c.h.b16 %v5958
    %v6810 = vunpack.c.l.b16 %v5959
    %v6811 = vunpack.c.h.b16 %v5959
    %v6812 = vunpack.c.l.b16 %v5960
    %v6813 = vunpack.c.h.b16 %v5960
    %v6814 = vunpack.c.l.b16 %v5961
    %v6815 = vunpack.c.h.b16 %v5961
    %v6816 = vunpack.c.l.b16 %v5962
    %v6817 = vunpack.c.h.b16 %v5962
    %v6818 = vunpack.c.l.b16 %v5963
    %v6819 = vunpack.c.h.b16 %v5963
    %v6820 = vunpack.c.l.b16 %v5964
    %v6821 = vunpack.c.h.b16 %v5964
    %v6822 = vunpack.c.l.b16 %v5965
    %v6823 = vunpack.c.h.b16 %v5965
    %v6824 = vunpack.c.l.b16 %v5966
    %v6825 = vunpack.c.h.b16 %v5966
    %v6826 = vunpack.c.l.b16 %v5967
    %v6827 = vunpack.c.h.b16 %v5967
    %v6828 = vunpack.c.l.b16 %v5968
    %v6829 = vunpack.c.h.b16 %v5968
    %v6830 = vunpack.c.l.b16 %v5969
    %v6831 = vunpack.c.h.b16 %v5969
    %v6832 = vunpack.c.l.b16 %v5970
    %v6833 = vunpack.c.h.b16 %v5970
    %v6834 = vunpack.c.l.b16 %v5971
    %v6835 = vunpack.c.h.b16 %v5971
    %v6836 = vpack.c.b16 %v6262, %v6260
    %v6837 = vpack.c.b16 %v6263, %v6261
    %v6838 = vpack.c.b16 %v6266, %v6264
    %v6839 = vpack.c.b16 %v6267, %v6265
    %v6840 = vpack.c.b16 %v6270, %v6268
    %v6841 = vpack.c.b16 %v6271, %v6269
    %v6842 = vpack.c.b16 %v6274, %v6272
    %v6843 = vpack.c.b16 %v6275, %v6273
    %v6844 = vpack.c.b16 %v6278, %v6276
    %v6845 = vpack.c.b16 %v6279, %v6277
    %v6846 = vpack.c.b16 %v6282, %v6280
    %v6847 = vpack.c.b16 %v6283, %v6281
    %v6848 = vpack.c.b16 %v6286, %v6284
    %v6849 = vpack.c.b16 %v6287, %v6285
    %v6850 = vpack.c.b16 %v6290, %v6288
    %v6851 = vpack.c.b16 %v6291, %v6289
    %v6852 = vpack.c.b16 %v6294, %v6292
    %v6853 = vpack.c.b16 %v6295, %v6293
    %v6854 = vpack.c.b16 %v6298, %v6296
    %v6855 = vpack.c.b16 %v6299, %v6297
    %v6856 = vpack.c.b16 %v6302, %v6300
    %v6857 = vpack.c.b16 %v6303, %v6301
    %v6858 = vpack.c.b16 %v6306, %v6304
    %v6859 = vpack.c.b16 %v6307, %v6305
    %v6860 = vpack.c.b16 %v6310, %v6308
    %v6861 = vpack.c.b16 %v6311, %v6309
    %v6862 = vpack.c.b16 %v6314, %v6312
    %v6863 = vpack.c.b16 %v6315, %v6313
    %v6864 = vpack.c.b16 %v6318, %v6316
    %v6865 = vpack.c.b16 %v6319, %v6317
    %v6866 = vpack.c.b16 %v6322, %v6320
    %v6867 = vpack.c.b16 %v6323, %v6321
    %v6868 = vpack.c.b16 %v6326, %v6324
    %v6869 = vpack.c.b16 %v6327, %v6325
    %v6870 = vpack.c.b16 %v6330, %v6328
    %v6871 = vpack.c.b16 %v6331, %v6329
    %v6872 = vpack.c.b16 %v6334, %v6332
    %v6873 = vpack.c.b16 %v6335, %v6333
    %v6874 = vpack.c.b16 %v6338, %v6336
    %v6875 = vpack.c.b16 %v6339, %v6337
    %v6876 = vpack.c.b16 %v6342, %v6340
    %v6877 = vpack.c.b16 %v6343, %v6341
    %v6878 = vpack.c.b16 %v6346, %v6344
    %v6879 = vpack.c.b16 %v6347, %v6345
    %v6880 = vpack.c.b16 %v6350, %v6348
    %v6881 = vpack.c.b16 %v6351, %v6349
    %v6882 = vpack.c.b16 %v6354, %v6352
    %v6883 = vpack.c.b16 %v6355, %v6353
    %v6884 = vpack.c.b16 %v6358, %v6356
    %v6885 = vpack.c.b16 %v6359, %v6357
    %v6886 = vpack.c.b16 %v6362, %v6360
    %v6887 = vpack.c.b16 %v6363, %v6361
    %v6888 = vpack.c.b16 %v6366, %v6364
    %v6889 = vpack.c.b16 %v6367, %v6365
    %v6890 = vpack.c.b16 %v6370, %v6368
    %v6891 = vpack.c.b16 %v6371, %v6369
    %v6892 = vpack.c.b16 %v6374, %v6372
    %v6893 = vpack.c.b16 %v6375, %v6373
    %v6894 = vpack.c.b16 %v6378, %v6376
    %v6895 = vpack.c.b16 %v6379, %v6377
    %v6896 = vpack.c.b16 %v6382, %v6380
    %v6897 = vpack.c.b16 %v6383, %v6381
    %v6898 = vpack.c.b16 %v6386, %v6384
    %v6899 = vpack.c.b16 %v6387, %v6385
    %v6900 = vpack.c.b16 %v6390, %v6388
    %v6901 = vpack.c.b16 %v6391, %v6389
    %v6902 = vpack.c.b16 %v6394, %v6392
    %v6903 = vpack.c.b16 %v6395, %v6393
    %v6904 = vpack.c.b16 %v6398, %v6396
    %v6905 = vpack.c.b16 %v6399, %v6397
    %v6906 = vpack.c.b16 %v6402, %v6400
    %v6907 = vpack.c.b16 %v6403, %v6401
    %v6908 = vpack.c.b16 %v6406, %v6404
    %v6909 = vpack.c.b16 %v6407, %v6405
    %v6910 = vpack.c.b16 %v6410, %v6408
    %v6911 = vpack.c.b16 %v6411, %v6409
    %v6912 = vpack.c.b16 %v6414, %v6412
    %v6913 = vpack.c.b16 %v6415, %v6413
    %v6914 = vpack.c.b16 %v6418, %v6416
    %v6915 = vpack.c.b16 %v6419, %v6417
    %v6916 = vpack.c.b16 %v6422, %v6420
    %v6917 = vpack.c.b16 %v6423, %v6421
    %v6918 = vpack.c.b16 %v6426, %v6424
    %v6919 = vpack.c.b16 %v6427, %v6425
    %v6920 = vpack.c.b16 %v6430, %v6428
    %v6921 = vpack.c.b16 %v6431, %v6429
    %v6922 = vpack.c.b16 %v6434, %v6432
    %v6923 = vpack.c.b16 %v6435, %v6433
    %v6924 = vpack.c.b16 %v6438, %v6436
    %v6925 = vpack.c.b16 %v6439, %v6437
    %v6926 = vpack.c.b16 %v6442, %v6440
    %v6927 = vpack.c.b16 %v6443, %v6441
    %v6928 = vpack.c.b16 %v6446, %v6444
    %v6929 = vpack.c.b16 %v6447, %v6445
    %v6930 = vpack.c.b16 %v6450, %v6448
    %v6931 = vpack.c.b16 %v6451, %v6449
    %v6932 = vpack.c.b16 %v6454, %v6452
    %v6933 = vpack.c.b16 %v6455, %v6453
    %v6934 = vpack.c.b16 %v6458, %v6456
    %v6935 = vpack.c.b16 %v6459, %v6457
    %v6936 = vpack.c.b16 %v6462, %v6460
    %v6937 = vpack.c.b16 %v6463, %v6461
    %v6938 = vpack.c.b16 %v6466, %v6464
    %v6939 = vpack.c.b16 %v6467, %v6465
    %v6940 = vpack.c.b16 %v6470, %v6468
    %v6941 = vpack.c.b16 %v6471, %v6469
    %v6942 = vpack.c.b16 %v6474, %v6472
    %v6943 = vpack.c.b16 %v6475, %v6473
    %v6944 = vpack.c.b16 %v6478, %v6476
    %v6945 = vpack.c.b16 %v6479, %v6477
    %v6946 = vpack.c.b16 %v6482, %v6480
    %v6947 = vpack.c.b16 %v6483, %v6481
    %v6948 = vpack.c.b16 %v6486, %v6484
    %v6949 = vpack.c.b16 %v6487, %v6485
    %v6950 = vpack.c.b16 %v6490, %v6488
    %v6951 = vpack.c.b16 %v6491, %v6489
    %v6952 = vpack.c.b16 %v6494, %v6492
    %v6953 = vpack.c.b16 %v6495, %v6493
    %v6954 = vpack.c.b16 %v6498, %v6496
    %v6955 = vpack.c.b16 %v6499, %v6497
    %v6956 = vpack.c.b16 %v6502, %v6500
    %v6957 = vpack.c.b16 %v6503, %v6501
    %v6958 = vpack.c.b16 %v6506, %v6504
    %v6959 = vpack.c.b16 %v6507, %v6505
    %v6960 = vpack.c.b16 %v6510, %v6508
    %v6961 = vpack.c.b16 %v6511, %v6509
    %v6962 = vpack.c.b16 %v6514, %v6512
    %v6963 = vpack.c.b16 %v6515, %v6513
    %v6964 = vpack.c.b16 %v6518, %v6516
    %v6965 = vpack.c.b16 %v6519, %v6517
    %v6966 = vpack.c.b16 %v6522, %v6520
    %v6967 = vpack.c.b16 %v6523, %v6521
    %v6968 = vpack.c.b16 %v6526, %v6524
    %v6969 = vpack.c.b16 %v6527, %v6525
    %v6970 = vpack.c.b16 %v6530, %v6528
    %v6971 = vpack.c.b16 %v6531, %v6529
    %v6972 = vpack.c.b16 %v6534, %v6532
    %v6973 = vpack.c.b16 %v6535, %v6533
    %v6974 = vpack.c.b16 %v6538, %v6536
    %v6975 = vpack.c.b16 %v6539, %v6537
    %v6976 = vpack.c.b16 %v6542, %v6540
    %v6977 = vpack.c.b16 %v6543, %v6541
    %v6978 = vpack.c.b16 %v6546, %v6544
    %v6979 = vpack.c.b16 %v6547, %v6545
    %v6980 = vpack.c.b16 %v6550, %v6548
    %v6981 = vpack.c.b16 %v6551, %v6549
    %v6982 = vpack.c.b16 %v6554, %v6552
    %v6983 = vpack.c.b16 %v6555, %v6553
    %v6984 = vpack.c.b16 %v6558, %v6556
    %v6985 = vpack.c.b16 %v6559, %v6557
    %v6986 = vpack.c.b16 %v6562, %v6560
    %v6987 = vpack.c.b16 %v6563, %v6561
    %v6988 = vpack.c.b16 %v6566, %v6564
    %v6989 = vpack.c.b16 %v6567, %v6565
    %v6990 = vpack.c.b16 %v6570, %v6568
    %v6991 = vpack.c.b16 %v6571, %v6569
    %v6992 = vpack.c.b16 %v6574, %v6572
    %v6993 = vpack.c.b16 %v6575, %v6573
    %v6994 = vpack.c.b16 %v6578, %v6576
    %v6995 = vpack.c.b16 %v6579, %v6577
    %v6996 = vpack.c.b16 %v6582, %v6580
    %v6997 = vpack.c.b16 %v6583, %v6581
    %v6998 = vpack.c.b16 %v6586, %v6584
    %v6999 = vpack.c.b16 %v6587, %v6585
    %v7000 = vpack.c.b16 %v6590, %v6588
    %v7001 = vpack.c.b16 %v6591, %v6589
    %v7002 = vpack.c.b16 %v6594, %v6592
    %v7003 = vpack.c.b16 %v6595, %v6593
    %v7004 = vpack.c.b16 %v6598, %v6596
    %v7005 = vpack.c.b16 %v6599, %v6597
    %v7006 = vpack.c.b16 %v6602, %v6600
    %v7007 = vpack.c.b16 %v6603, %v6601
    %v7008 = vpack.c.b16 %v6606, %v6604
    %v7009 = vpack.c.b16 %v6607, %v6605
    %v7010 = vpack.c.b16 %v6610, %v6608
    %v7011 = vpack.c.b16 %v6611, %v6609
    %v7012 = vpack.c.b16 %v6614, %v6612
    %v7013 = vpack.c.b16 %v6615, %v6613
    %v7014 = vpack.c.b16 %v6618, %v6616
    %v7015 = vpack.c.b16 %v6619, %v6617
    %v7016 = vpack.c.b16 %v6622, %v6620
    %v7017 = vpack.c.b16 %v6623, %v6621
    %v7018 = vpack.c.b16 %v6626, %v6624
    %v7019 = vpack.c.b16 %v6627, %v6625
    %v7020 = vpack.c.b16 %v6630, %v6628
    %v7021 = vpack.c.b16 %v6631, %v6629
    %v7022 = vpack.c.b16 %v6634, %v6632
    %v7023 = vpack.c.b16 %v6635, %v6633
    %v7024 = vpack.c.b16 %v6638, %v6636
    %v7025 = vpack.c.b16 %v6639, %v6637
    %v7026 = vpack.c.b16 %v6642, %v6640
    %v7027 = vpack.c.b16 %v6643, %v6641
    %v7028 = vpack.c.b16 %v6646, %v6644
    %v7029 = vpack.c.b16 %v6647, %v6645
    %v7030 = vpack.c.b16 %v6650, %v6648
    %v7031 = vpack.c.b16 %v6651, %v6649
    %v7032 = vpack.c.b16 %v6654, %v6652
    %v7033 = vpack.c.b16 %v6655, %v6653
    %v7034 = vpack.c.b16 %v6658, %v6656
    %v7035 = vpack.c.b16 %v6659, %v6657
    %v7036 = vpack.c.b16 %v6662, %v6660
    %v7037 = vpack.c.b16 %v6663, %v6661
    %v7038 = vpack.c.b16 %v6666, %v6664
    %v7039 = vpack.c.b16 %v6667, %v6665
    %v7040 = vpack.c.b16 %v6670, %v6668
    %v7041 = vpack.c.b16 %v6671, %v6669
    %v7042 = vpack.c.b16 %v6674, %v6672
    %v7043 = vpack.c.b16 %v6675, %v6673
    %v7044 = vpack.c.b16 %v6678, %v6676
    %v7045 = vpack.c.b16 %v6679, %v6677
    %v7046 = vpack.c.b16 %v6682, %v6680
    %v7047 = vpack.c.b16 %v6683, %v6681
    %v7048 = vpack.c.b16 %v6686, %v6684
    %v7049 = vpack.c.b16 %v6687, %v6685
    %v7050 = vpack.c.b16 %v6690, %v6688
    %v7051 = vpack.c.b16 %v6691, %v6689
    %v7052 = vpack.c.b16 %v6694, %v6692
    %v7053 = vpack.c.b16 %v6695, %v6693
    %v7054 = vpack.c.b16 %v6698, %v6696
    %v7055 = vpack.c.b16 %v6699, %v6697
    %v7056 = vpack.c.b16 %v6702, %v6700
    %v7057 = vpack.c.b16 %v6703, %v6701
    %v7058 = vpack.c.b16 %v6706, %v6704
    %v7059 = vpack.c.b16 %v6707, %v6705
    %v7060 = vpack.c.b16 %v6710, %v6708
    %v7061 = vpack.c.b16 %v6711, %v6709
    %v7062 = vpack.c.b16 %v6714, %v6712
    %v7063 = vpack.c.b16 %v6715, %v6713
    %v7064 = vpack.c.b16 %v6718, %v6716
    %v7065 = vpack.c.b16 %v6719, %v6717
    %v7066 = vpack.c.b16 %v6722, %v6720
    %v7067 = vpack.c.b16 %v6723, %v6721
    %v7068 = vpack.c.b16 %v6726, %v6724
    %v7069 = vpack.c.b16 %v6727, %v6725
    %v7070 = vpack.c.b16 %v6730, %v6728
    %v7071 = vpack.c.b16 %v6731, %v6729
    %v7072 = vpack.c.b16 %v6734, %v6732
    %v7073 = vpack.c.b16 %v6735, %v6733
    %v7074 = vpack.c.b16 %v6738, %v6736
    %v7075 = vpack.c.b16 %v6739, %v6737
    %v7076 = vpack.c.b16 %v6742, %v6740
    %v7077 = vpack.c.b16 %v6743, %v6741
    %v7078 = vpack.c.b16 %v6746, %v6744
    %v7079 = vpack.c.b16 %v6747, %v6745
    %v7080 = vpack.c.b16 %v6750, %v6748
    %v7081 = vpack.c.b16 %v6751, %v6749
    %v7082 = vpack.c.b16 %v6754, %v6752
    %v7083 = vpack.c.b16 %v6755, %v6753
    %v7084 = vpack.c.b16 %v6758, %v6756
    %v7085 = vpack.c.b16 %v6759, %v6757
    %v7086 = vpack.c.b16 %v6762, %v6760
    %v7087 = vpack.c.b16 %v6763, %v6761
    %v7088 = vpack.c.b16 %v6766, %v6764
    %v7089 = vpack.c.b16 %v6767, %v6765
    %v7090 = vpack.c.b16 %v6770, %v6768
    %v7091 = vpack.c.b16 %v6771, %v6769
    %v7092 = vpack.c.b16 %v6774, %v6772
    %v7093 = vpack.c.b16 %v6775, %v6773
    %v7094 = vpack.c.b16 %v6778, %v6776
    %v7095 = vpack.c.b16 %v6779, %v6777
    %v7096 = vpack.c.b16 %v6782, %v6780
    %v7097 = vpack.c.b16 %v6783, %v6781
    %v7098 = vpack.c.b16 %v6786, %v6784
    %v7099 = vpack.c.b16 %v6787, %v6785
    %v7100 = vpack.c.b16 %v6790, %v6788
    %v7101 = vpack.c.b16 %v6791, %v6789
    %v7102 = vpack.c.b16 %v6794, %v6792
    %v7103 = vpack.c.b16 %v6795, %v6793
    %v7104 = vpack.c.b16 %v6798, %v6796
    %v7105 = vpack.c.b16 %v6799, %v6797
    %v7106 = vpack.c.b16 %v6802, %v6800
    %v7107 = vpack.c.b16 %v6803, %v6801
    %v7108 = vpack.c.b16 %v6806, %v6804
    %v7109 = vpack.c.b16 %v6807, %v6805
    %v7110 = vpack.c.b16 %v6810, %v6808
    %v7111 = vpack.c.b16 %v6811, %v6809
    %v7112 = vpack.c.b16 %v6814, %v6812
    %v7113 = vpack.c.b16 %v6815, %v6813
    %v7114 = vpack.c.b16 %v6818, %v6816
    %v7115 = vpack.c.b16 %v6819, %v6817
    %v7116 = vpack.c.b16 %v6822, %v6820
    %v7117 = vpack.c.b16 %v6823, %v6821
    %v7118 = vpack.c.b16 %v6826, %v6824
    %v7119 = vpack.c.b16 %v6827, %v6825
    %v7120 = vpack.c.b16 %v6830, %v6828
    %v7121 = vpack.c.b16 %v6831, %v6829
    %v7122 = vpack.c.b16 %v6834, %v6832
    %v7123 = vpack.c.b16 %v6835, %v6833
    %7412 = vmatprep.subr.bf16.mxu0 %v6837
    %7413 = vmatpush1.bf16.msra.mxu0 %v6836
    %7414 = vmatprep.subr.bf16.mxu0 %v6839
    %7415 = vmatpush1.bf16.msra.mxu0 %v6838
    %7416 = vmatprep.subr.bf16.mxu0 %v6841
    %7417 = vmatpush1.bf16.msra.mxu0 %v6840
    %7418 = vmatprep.subr.bf16.mxu0 %v6843
    %7419 = vmatpush1.bf16.msra.mxu0 %v6842
    %7420 = vmatprep.subr.bf16.mxu0 %v6845
    %7421 = vmatpush1.bf16.msra.mxu0 %v6844
    %7422 = vmatprep.subr.bf16.mxu0 %v6847
    %7423 = vmatpush1.bf16.msra.mxu0 %v6846
    %7424 = vmatprep.subr.bf16.mxu0 %v6849
    %7425 = vmatpush1.bf16.msra.mxu0 %v6848
    %7426 = vmatprep.subr.bf16.mxu0 %v6851
    %7427 = vmatpush1.bf16.msra.mxu0 %v6850
    %7428 = vmatprep.subr.bf16.mxu0 %v6853
    %7429 = vmatpush1.bf16.msra.mxu0 %v6852
    %7430 = vmatprep.subr.bf16.mxu0 %v6855
    %7431 = vmatpush1.bf16.msra.mxu0 %v6854
    %7432 = vmatprep.subr.bf16.mxu0 %v6857
    %7433 = vmatpush1.bf16.msra.mxu0 %v6856
    %7434 = vmatprep.subr.bf16.mxu0 %v6859
    %7435 = vmatpush1.bf16.msra.mxu0 %v6858
    %7436 = vmatprep.subr.bf16.mxu0 %v6861
    %7437 = vmatpush1.bf16.msra.mxu0 %v6860
    %7438 = vmatprep.subr.bf16.mxu0 %v6863
    %7439 = vmatpush1.bf16.msra.mxu0 %v6862
    %7440 = vmatprep.subr.bf16.mxu0 %v6865
    %7441 = vmatpush1.bf16.msra.mxu0 %v6864
    %7442 = vmatprep.subr.bf16.mxu0 %v6867
    %7443 = vmatpush1.bf16.msra.mxu0 %v6866
    %7444 = vmatprep.mubr.bf16.mxu0 %v5389
    %7445 = vmatmul.mubr.bf16.gmra.mrb[0].mxu0 %v5388
    %v7446 = vpop.f32.mrb[0].mxu0
    %v7447 = vadd.f32 0.0, %v7446
    %v7448 = vpop.f32.mrb[0].mxu0
    %v7449 = vadd.f32 0.0, %v7448
    %v7450 = vpop.f32.mrb[0].mxu0
    %v7451 = vadd.f32 0.0, %v7450
    %v7452 = vpop.f32.mrb[0].mxu0
    %v7453 = vadd.f32 0.0, %v7452
    %7454 = vmatprep.mubr.bf16.mxu0 %v5391
    %7455 = vmatmul.mubr.bf16.gmra.mrb[0].mxu0 %v5390
    %v7456 = vpop.f32.mrb[0].mxu0
    %v7457 = vadd.f32 0.0, %v7456
    %v7458 = vpop.f32.mrb[0].mxu0
    %v7459 = vadd.f32 0.0, %v7458
    %v7460 = vpop.f32.mrb[0].mxu0
    %v7461 = vadd.f32 0.0, %v7460
    %v7462 = vpop.f32.mrb[0].mxu0
    %v7463 = vadd.f32 0.0, %v7462
    %7464 = vmatprep.mubr.bf16.mxu0 %v5393
    %7465 = vmatmul.mubr.bf16.gmra.mrb[0].mxu0 %v5392
    %v7466 = vpop.f32.mrb[0].mxu0
    %v7467 = vadd.f32 0.0, %v7466
    %v7468 = vpop.f32.mrb[0].mxu0
    %v7469 = vadd.f32 0.0, %v7468
    %v7470 = vpop.f32.mrb[0].mxu0
    %v7471 = vadd.f32 0.0, %v7470
    %v7472 = vpop.f32.mrb[0].mxu0
    %v7473 = vadd.f32 0.0, %v7472
    %7474 = vmatprep.mubr.bf16.mxu0 %v5395
    %7475 = vmatmul.mubr.bf16.gmra.mrb[0].mxu0 %v5394
    %v7476 = vpop.f32.mrb[0].mxu0
    %v7477 = vadd.f32 0.0, %v7476
    %v7478 = vpop.f32.mrb[0].mxu0
    %v7479 = vadd.f32 0.0, %v7478
    %v7480 = vpop.f32.mrb[0].mxu0
    %v7481 = vadd.f32 0.0, %v7480
    %v7482 = vpop.f32.mrb[0].mxu0
    %v7483 = vadd.f32 0.0, %v7482
    %7484 = vmatprep.mubr.bf16.mxu0 %v5397
    %7485 = vmatmul.mubr.bf16.gmra.mrb[0].mxu0 %v5396
    %v7486 = vpop.f32.mrb[0].mxu0
    %v7487 = vadd.f32 0.0, %v7486
    %v7488 = vpop.f32.mrb[0].mxu0
    %v7489 = vadd.f32 0.0, %v7488
    %v7490 = vpop.f32.mrb[0].mxu0
    %v7491 = vadd.f32 0.0, %v7490
    %v7492 = vpop.f32.mrb[0].mxu0
    %v7493 = vadd.f32 0.0, %v7492
    %7494 = vmatprep.mubr.bf16.mxu0 %v5399
    %7495 = vmatmul.mubr.bf16.gmra.mrb[0].mxu0 %v5398
    %v7496 = vpop.f32.mrb[0].mxu0
    %v7497 = vadd.f32 0.0, %v7496
    %v7498 = vpop.f32.mrb[0].mxu0
    %v7499 = vadd.f32 0.0, %v7498
    %v7500 = vpop.f32.mrb[0].mxu0
    %v7501 = vadd.f32 0.0, %v7500
    %v7502 = vpop.f32.mrb[0].mxu0
    %v7503 = vadd.f32 0.0, %v7502
    %7504 = vmatprep.mubr.bf16.mxu0 %v5401
    %7505 = vmatmul.mubr.bf16.gmra.mrb[0].mxu0 %v5400
    %v7506 = vpop.f32.mrb[0].mxu0
    %v7507 = vadd.f32 0.0, %v7506
    %v7508 = vpop.f32.mrb[0].mxu0
    %v7509 = vadd.f32 0.0, %v7508
    %v7510 = vpop.f32.mrb[0].mxu0
    %v7511 = vadd.f32 0.0, %v7510
    %v7512 = vpop.f32.mrb[0].mxu0
    %v7513 = vadd.f32 0.0, %v7512
    %7514 = vmatprep.mubr.bf16.mxu0 %v5403
    %7515 = vmatmul.mubr.bf16.gmra.mrb[0].mxu0 %v5402
    %v7516 = vpop.f32.mrb[0].mxu0
    %v7517 = vadd.f32 0.0, %v7516
    %v7518 = vpop.f32.mrb[0].mxu0
    %v7519 = vadd.f32 0.0, %v7518
    %v7520 = vpop.f32.mrb[0].mxu0
    %v7521 = vadd.f32 0.0, %v7520
    %v7522 = vpop.f32.mrb[0].mxu0
    %v7523 = vadd.f32 0.0, %v7522
    %7524 = vdwg.mxu0
    %7525 = vmatprep.subr.bf16.mxu0 %v6869
    %7526 = vmatpush1.bf16.msra.mxu0 %v6868
    %7527 = vmatprep.subr.bf16.mxu0 %v6871
    %7528 = vmatpush1.bf16.msra.mxu0 %v6870
    %7529 = vmatprep.subr.bf16.mxu0 %v6873
    %7530 = vmatpush1.bf16.msra.mxu0 %v6872
    %7531 = vmatprep.subr.bf16.mxu0 %v6875
    %7532 = vmatpush1.bf16.msra.mxu0 %v6874
    %7533 = vmatprep.subr.bf16.mxu0 %v6877
    %7534 = vmatpush1.bf16.msra.mxu0 %v6876
    %7535 = vmatprep.subr.bf16.mxu0 %v6879
    %7536 = vmatpush1.bf16.msra.mxu0 %v6878
    %7537 = vmatprep.subr.bf16.mxu0 %v6881
    %7538 = vmatpush1.bf16.msra.mxu0 %v6880
    %7539 = vmatprep.subr.bf16.mxu0 %v6883
    %7540 = vmatpush1.bf16.msra.mxu0 %v6882
    %7541 = vmatprep.subr.bf16.mxu0 %v6885
    %7542 = vmatpush1.bf16.msra.mxu0 %v6884
    %7543 = vmatprep.subr.bf16.mxu0 %v6887
    %7544 = vmatpush1.bf16.msra.mxu0 %v6886
    %7545 = vmatprep.subr.bf16.mxu0 %v6889
    %7546 = vmatpush1.bf16.msra.mxu0 %v6888
    %7547 = vmatprep.subr.bf16.mxu0 %v6891
    %7548 = vmatpush1.bf16.msra.mxu0 %v6890
    %7549 = vmatprep.subr.bf16.mxu0 %v6893
    %7550 = vmatpush1.bf16.msra.mxu0 %v6892
    %7551 = vmatprep.subr.bf16.mxu0 %v6895
    %7552 = vmatpush1.bf16.msra.mxu0 %v6894
    %7553 = vmatprep.subr.bf16.mxu0 %v6897
    %7554 = vmatpush1.bf16.msra.mxu0 %v6896
    %7555 = vmatprep.subr.bf16.mxu0 %v6899
    %7556 = vmatpush1.bf16.msra.mxu0 %v6898
    %7557 = vmatprep.mubr.bf16.mxu0 %v5453
    %7558 = vmatmul.mubr.bf16.gmra.mrb[0].mxu0 %v5452
    %v7559 = vpop.f32.mrb[0].mxu0
    %v7560 = vadd.f32 %v7447, %v7559
    %v7561 = vpop.f32.mrb[0].mxu0
    %v7562 = vadd.f32 %v7449, %v7561
    %v7563 = vpop.f32.mrb[0].mxu0
    %v7564 = vadd.f32 %v7451, %v7563
    %v7565 = vpop.f32.mrb[0].mxu0
    %v7566 = vadd.f32 %v7453, %v7565
    %7567 = vmatprep.mubr.bf16.mxu0 %v5455
    %7568 = vmatmul.mubr.bf16.gmra.mrb[0].mxu0 %v5454
    %v7569 = vpop.f32.mrb[0].mxu0
    %v7570 = vadd.f32 %v7457, %v7569
    %v7571 = vpop.f32.mrb[0].mxu0
    %v7572 = vadd.f32 %v7459, %v7571
    %v7573 = vpop.f32.mrb[0].mxu0
    %v7574 = vadd.f32 %v7461, %v7573
    %v7575 = vpop.f32.mrb[0].mxu0
    %v7576 = vadd.f32 %v7463, %v7575
    %7577 = vmatprep.mubr.bf16.mxu0 %v5457
    %7578 = vmatmul.mubr.bf16.gmra.mrb[0].mxu0 %v5456
    %v7579 = vpop.f32.mrb[0].mxu0
    %v7580 = vadd.f32 %v7467, %v7579
    %v7581 = vpop.f32.mrb[0].mxu0
    %v7582 = vadd.f32 %v7469, %v7581
    %v7583 = vpop.f32.mrb[0].mxu0
    %v7584 = vadd.f32 %v7471, %v7583
    %v7585 = vpop.f32.mrb[0].mxu0
    %v7586 = vadd.f32 %v7473, %v7585
    %7587 = vmatprep.mubr.bf16.mxu0 %v5459
    %7588 = vmatmul.mubr.bf16.gmra.mrb[0].mxu0 %v5458
    %v7589 = vpop.f32.mrb[0].mxu0
    %v7590 = vadd.f32 %v7477, %v7589
    %v7591 = vpop.f32.mrb[0].mxu0
    %v7592 = vadd.f32 %v7479, %v7591
    %v7593 = vpop.f32.mrb[0].mxu0
    %v7594 = vadd.f32 %v7481, %v7593
    %v7595 = vpop.f32.mrb[0].mxu0
    %v7596 = vadd.f32 %v7483, %v7595
    %7597 = vmatprep.mubr.bf16.mxu0 %v5461
    %7598 = vmatmul.mubr.bf16.gmra.mrb[0].mxu0 %v5460
    %v7599 = vpop.f32.mrb[0].mxu0
    %v7600 = vadd.f32 %v7487, %v7599
    %v7601 = vpop.f32.mrb[0].mxu0
    %v7602 = vadd.f32 %v7489, %v7601
    %v7603 = vpop.f32.mrb[0].mxu0
    %v7604 = vadd.f32 %v7491, %v7603
    %v7605 = vpop.f32.mrb[0].mxu0
    %v7606 = vadd.f32 %v7493, %v7605
    %7607 = vmatprep.mubr.bf16.mxu0 %v5463
    %7608 = vmatmul.mubr.bf16.gmra.mrb[0].mxu0 %v5462
    %v7609 = vpop.f32.mrb[0].mxu0
    %v7610 = vadd.f32 %v7497, %v7609
    %v7611 = vpop.f32.mrb[0].mxu0
    %v7612 = vadd.f32 %v7499, %v7611
    %v7613 = vpop.f32.mrb[0].mxu0
    %v7614 = vadd.f32 %v7501, %v7613
    %v7615 = vpop.f32.mrb[0].mxu0
    %v7616 = vadd.f32 %v7503, %v7615
    %7617 = vmatprep.mubr.bf16.mxu0 %v5465
    %7618 = vmatmul.mubr.bf16.gmra.mrb[0].mxu0 %v5464
    %v7619 = vpop.f32.mrb[0].mxu0
    %v7620 = vadd.f32 %v7507, %v7619
    %v7621 = vpop.f32.mrb[0].mxu0
    %v7622 = vadd.f32 %v7509, %v7621
    %v7623 = vpop.f32.mrb[0].mxu0
    %v7624 = vadd.f32 %v7511, %v7623
    %v7625 = vpop.f32.mrb[0].mxu0
    %v7626 = vadd.f32 %v7513, %v7625
    %7627 = vmatprep.mubr.bf16.mxu0 %v5467
    %7628 = vmatmul.mubr.bf16.gmra.mrb[0].mxu0 %v5466
    %v7629 = vpop.f32.mrb[0].mxu0
    %v7630 = vadd.f32 %v7517, %v7629
    %v7631 = vpop.f32.mrb[0].mxu0
    %v7632 = vadd.f32 %v7519, %v7631
    %v7633 = vpop.f32.mrb[0].mxu0
    %v7634 = vadd.f32 %v7521, %v7633
    %v7635 = vpop.f32.mrb[0].mxu0
    %v7636 = vadd.f32 %v7523, %v7635
    %7637 = vdwg.mxu0
    %7638 = vmatprep.subr.bf16.mxu0 %v6901
    %7639 = vmatpush1.bf16.msra.mxu0 %v6900
    %7640 = vmatprep.subr.bf16.mxu0 %v6903
    %7641 = vmatpush1.bf16.msra.mxu0 %v6902
    %7642 = vmatprep.subr.bf16.mxu0 %v6905
    %7643 = vmatpush1.bf16.msra.mxu0 %v6904
    %7644 = vmatprep.subr.bf16.mxu0 %v6907
    %7645 = vmatpush1.bf16.msra.mxu0 %v6906
    %7646 = vmatprep.subr.bf16.mxu0 %v6909
    %7647 = vmatpush1.bf16.msra.mxu0 %v6908
    %7648 = vmatprep.subr.bf16.mxu0 %v6911
    %7649 = vmatpush1.bf16.msra.mxu0 %v6910
    %7650 = vmatprep.subr.bf16.mxu0 %v6913
    %7651 = vmatpush1.bf16.msra.mxu0 %v6912
    %7652 = vmatprep.subr.bf16.mxu0 %v6915
    %7653 = vmatpush1.bf16.msra.mxu0 %v6914
    %7654 = vmatprep.subr.bf16.mxu0 %v6917
    %7655 = vmatpush1.bf16.msra.mxu0 %v6916
    %7656 = vmatprep.subr.bf16.mxu0 %v6919
    %7657 = vmatpush1.bf16.msra.mxu0 %v6918
    %7658 = vmatprep.subr.bf16.mxu0 %v6921
    %7659 = vmatpush1.bf16.msra.mxu0 %v6920
    %7660 = vmatprep.subr.bf16.mxu0 %v6923
    %7661 = vmatpush1.bf16.msra.mxu0 %v6922
    %7662 = vmatprep.subr.bf16.mxu0 %v6925
    %7663 = vmatpush1.bf16.msra.mxu0 %v6924
    %7664 = vmatprep.subr.bf16.mxu0 %v6927
    %7665 = vmatpush1.bf16.msra.mxu0 %v6926
    %7666 = vmatprep.subr.bf16.mxu0 %v6929
    %7667 = vmatpush1.bf16.msra.mxu0 %v6928
    %7668 = vmatprep.subr.bf16.mxu0 %v6931
    %7669 = vmatpush1.bf16.msra.mxu0 %v6930
    %7670 = vmatprep.mubr.bf16.mxu0 %v5517
    %7671 = vmatmul.mubr.bf16.gmra.mrb[0].mxu0 %v5516
    %v7672 = vpop.f32.mrb[0].mxu0
    %v7673 = vadd.f32 %v7560, %v7672
    %v7674 = vpop.f32.mrb[0].mxu0
    %v7675 = vadd.f32 %v7562, %v7674
    %v7676 = vpop.f32.mrb[0].mxu0
    %v7677 = vadd.f32 %v7564, %v7676
    %v7678 = vpop.f32.mrb[0].mxu0
    %v7679 = vadd.f32 %v7566, %v7678
    %7680 = vmatprep.mubr.bf16.mxu0 %v5519
    %7681 = vmatmul.mubr.bf16.gmra.mrb[0].mxu0 %v5518
    %v7682 = vpop.f32.mrb[0].mxu0
    %v7683 = vadd.f32 %v7570, %v7682
    %v7684 = vpop.f32.mrb[0].mxu0
    %v7685 = vadd.f32 %v7572, %v7684
    %v7686 = vpop.f32.mrb[0].mxu0
    %v7687 = vadd.f32 %v7574, %v7686
    %v7688 = vpop.f32.mrb[0].mxu0
    %v7689 = vadd.f32 %v7576, %v7688
    %7690 = vmatprep.mubr.bf16.mxu0 %v5521
    %7691 = vmatmul.mubr.bf16.gmra.mrb[0].mxu0 %v5520
    %v7692 = vpop.f32.mrb[0].mxu0
    %v7693 = vadd.f32 %v7580, %v7692
    %v7694 = vpop.f32.mrb[0].mxu0
    %v7695 = vadd.f32 %v7582, %v7694
    %v7696 = vpop.f32.mrb[0].mxu0
    %v7697 = vadd.f32 %v7584, %v7696
    %v7698 = vpop.f32.mrb[0].mxu0
    %v7699 = vadd.f32 %v7586, %v7698
    %7700 = vmatprep.mubr.bf16.mxu0 %v5523
    %7701 = vmatmul.mubr.bf16.gmra.mrb[0].mxu0 %v5522
    %v7702 = vpop.f32.mrb[0].mxu0
    %v7703 = vadd.f32 %v7590, %v7702
    %v7704 = vpop.f32.mrb[0].mxu0
    %v7705 = vadd.f32 %v7592, %v7704
    %v7706 = vpop.f32.mrb[0].mxu0
    %v7707 = vadd.f32 %v7594, %v7706
    %v7708 = vpop.f32.mrb[0].mxu0
    %v7709 = vadd.f32 %v7596, %v7708
    %7710 = vmatprep.mubr.bf16.mxu0 %v5525
    %7711 = vmatmul.mubr.bf16.gmra.mrb[0].mxu0 %v5524
    %v7712 = vpop.f32.mrb[0].mxu0
    %v7713 = vadd.f32 %v7600, %v7712
    %v7714 = vpop.f32.mrb[0].mxu0
    %v7715 = vadd.f32 %v7602, %v7714
    %v7716 = vpop.f32.mrb[0].mxu0
    %v7717 = vadd.f32 %v7604, %v7716
    %v7718 = vpop.f32.mrb[0].mxu0
    %v7719 = vadd.f32 %v7606, %v7718
    %7720 = vmatprep.mubr.bf16.mxu0 %v5527
    %7721 = vmatmul.mubr.bf16.gmra.mrb[0].mxu0 %v5526
    %v7722 = vpop.f32.mrb[0].mxu0
    %v7723 = vadd.f32 %v7610, %v7722
    %v7724 = vpop.f32.mrb[0].mxu0
    %v7725 = vadd.f32 %v7612, %v7724
    %v7726 = vpop.f32.mrb[0].mxu0
    %v7727 = vadd.f32 %v7614, %v7726
    %v7728 = vpop.f32.mrb[0].mxu0
    %v7729 = vadd.f32 %v7616, %v7728
    %7730 = vmatprep.mubr.bf16.mxu0 %v5529
    %7731 = vmatmul.mubr.bf16.gmra.mrb[0].mxu0 %v5528
    %v7732 = vpop.f32.mrb[0].mxu0
    %v7733 = vadd.f32 %v7620, %v7732
    %v7734 = vpop.f32.mrb[0].mxu0
    %v7735 = vadd.f32 %v7622, %v7734
    %v7736 = vpop.f32.mrb[0].mxu0
    %v7737 = vadd.f32 %v7624, %v7736
    %v7738 = vpop.f32.mrb[0].mxu0
    %v7739 = vadd.f32 %v7626, %v7738
    %7740 = vmatprep.mubr.bf16.mxu0 %v5531
    %7741 = vmatmul.mubr.bf16.gmra.mrb[0].mxu0 %v5530
    %v7742 = vpop.f32.mrb[0].mxu0
    %v7743 = vadd.f32 %v7630, %v7742
    %v7744 = vpop.f32.mrb[0].mxu0
    %v7745 = vadd.f32 %v7632, %v7744
    %v7746 = vpop.f32.mrb[0].mxu0
    %v7747 = vadd.f32 %v7634, %v7746
    %v7748 = vpop.f32.mrb[0].mxu0
    %v7749 = vadd.f32 %v7636, %v7748
    %7750 = vdwg.mxu0
    %7751 = vmatprep.subr.bf16.mxu0 %v6933
    %7752 = vmatpush1.bf16.msra.mxu0 %v6932
    %7753 = vmatprep.subr.bf16.mxu0 %v6935
    %7754 = vmatpush1.bf16.msra.mxu0 %v6934
    %7755 = vmatprep.subr.bf16.mxu0 %v6937
    %7756 = vmatpush1.bf16.msra.mxu0 %v6936
    %7757 = vmatprep.subr.bf16.mxu0 %v6939
    %7758 = vmatpush1.bf16.msra.mxu0 %v6938
    %7759 = vmatprep.subr.bf16.mxu0 %v6941
    %7760 = vmatpush1.bf16.msra.mxu0 %v6940
    %7761 = vmatprep.subr.bf16.mxu0 %v6943
    %7762 = vmatpush1.bf16.msra.mxu0 %v6942
    %7763 = vmatprep.subr.bf16.mxu0 %v6945
    %7764 = vmatpush1.bf16.msra.mxu0 %v6944
    %7765 = vmatprep.subr.bf16.mxu0 %v6947
    %7766 = vmatpush1.bf16.msra.mxu0 %v6946
    %7767 = vmatprep.subr.bf16.mxu0 %v6949
    %7768 = vmatpush1.bf16.msra.mxu0 %v6948
    %7769 = vmatprep.subr.bf16.mxu0 %v6951
    %7770 = vmatpush1.bf16.msra.mxu0 %v6950
    %7771 = vmatprep.subr.bf16.mxu0 %v6953
    %7772 = vmatpush1.bf16.msra.mxu0 %v6952
    %7773 = vmatprep.subr.bf16.mxu0 %v6955
    %7774 = vmatpush1.bf16.msra.mxu0 %v6954
    %7775 = vmatprep.subr.bf16.mxu0 %v6957
    %7776 = vmatpush1.bf16.msra.mxu0 %v6956
    %7777 = vmatprep.subr.bf16.mxu0 %v6959
    %7778 = vmatpush1.bf16.msra.mxu0 %v6958
    %7779 = vmatprep.subr.bf16.mxu0 %v6961
    %7780 = vmatpush1.bf16.msra.mxu0 %v6960
    %7781 = vmatprep.subr.bf16.mxu0 %v6963
    %7782 = vmatpush1.bf16.msra.mxu0 %v6962
    %7783 = vmatprep.mubr.bf16.mxu0 %v5549
    %7784 = vmatmul.mubr.bf16.gmra.mrb[0].mxu0 %v5548
    %v7785 = vpop.f32.mrb[0].mxu0
    %v7786 = vadd.f32 %v7673, %v7785
    %v7787 = vpop.f32.mrb[0].mxu0
    %v7788 = vadd.f32 %v7675, %v7787
    %v7789 = vpop.f32.mrb[0].mxu0
    %v7790 = vadd.f32 %v7677, %v7789
    %v7791 = vpop.f32.mrb[0].mxu0
    %v7792 = vadd.f32 %v7679, %v7791
    %7793 = vmatprep.mubr.bf16.mxu0 %v5551
    %7794 = vmatmul.mubr.bf16.gmra.mrb[0].mxu0 %v5550
    %v7795 = vpop.f32.mrb[0].mxu0
    %v7796 = vadd.f32 %v7683, %v7795
    %v7797 = vpop.f32.mrb[0].mxu0
    %v7798 = vadd.f32 %v7685, %v7797
    %v7799 = vpop.f32.mrb[0].mxu0
    %v7800 = vadd.f32 %v7687, %v7799
    %v7801 = vpop.f32.mrb[0].mxu0
    %v7802 = vadd.f32 %v7689, %v7801
    %7803 = vmatprep.mubr.bf16.mxu0 %v5553
    %7804 = vmatmul.mubr.bf16.gmra.mrb[0].mxu0 %v5552
    %v7805 = vpop.f32.mrb[0].mxu0
    %v7806 = vadd.f32 %v7693, %v7805
    %v7807 = vpop.f32.mrb[0].mxu0
    %v7808 = vadd.f32 %v7695, %v7807
    %v7809 = vpop.f32.mrb[0].mxu0
    %v7810 = vadd.f32 %v7697, %v7809
    %v7811 = vpop.f32.mrb[0].mxu0
    %v7812 = vadd.f32 %v7699, %v7811
    %7813 = vmatprep.mubr.bf16.mxu0 %v5555
    %7814 = vmatmul.mubr.bf16.gmra.mrb[0].mxu0 %v5554
    %v7815 = vpop.f32.mrb[0].mxu0
    %v7816 = vadd.f32 %v7703, %v7815
    %v7817 = vpop.f32.mrb[0].mxu0
    %v7818 = vadd.f32 %v7705, %v7817
    %v7819 = vpop.f32.mrb[0].mxu0
    %v7820 = vadd.f32 %v7707, %v7819
    %v7821 = vpop.f32.mrb[0].mxu0
    %v7822 = vadd.f32 %v7709, %v7821
    %7823 = vmatprep.mubr.bf16.mxu0 %v5557
    %7824 = vmatmul.mubr.bf16.gmra.mrb[0].mxu0 %v5556
    %v7825 = vpop.f32.mrb[0].mxu0
    %v7826 = vadd.f32 %v7713, %v7825
    %v7827 = vpop.f32.mrb[0].mxu0
    %v7828 = vadd.f32 %v7715, %v7827
    %v7829 = vpop.f32.mrb[0].mxu0
    %v7830 = vadd.f32 %v7717, %v7829
    %v7831 = vpop.f32.mrb[0].mxu0
    %v7832 = vadd.f32 %v7719, %v7831
    %7833 = vmatprep.mubr.bf16.mxu0 %v5559
    %7834 = vmatmul.mubr.bf16.gmra.mrb[0].mxu0 %v5558
    %v7835 = vpop.f32.mrb[0].mxu0
    %v7836 = vadd.f32 %v7723, %v7835
    %v7837 = vpop.f32.mrb[0].mxu0
    %v7838 = vadd.f32 %v7725, %v7837
    %v7839 = vpop.f32.mrb[0].mxu0
    %v7840 = vadd.f32 %v7727, %v7839
    %v7841 = vpop.f32.mrb[0].mxu0
    %v7842 = vadd.f32 %v7729, %v7841
    %7843 = vmatprep.mubr.bf16.mxu0 %v5561
    %7844 = vmatmul.mubr.bf16.gmra.mrb[0].mxu0 %v5560
    %v7845 = vpop.f32.mrb[0].mxu0
    %v7846 = vadd.f32 %v7733, %v7845
    %v7847 = vpop.f32.mrb[0].mxu0
    %v7848 = vadd.f32 %v7735, %v7847
    %v7849 = vpop.f32.mrb[0].mxu0
    %v7850 = vadd.f32 %v7737, %v7849
    %v7851 = vpop.f32.mrb[0].mxu0
    %v7852 = vadd.f32 %v7739, %v7851
    %7853 = vmatprep.mubr.bf16.mxu0 %v5563
    %7854 = vmatmul.mubr.bf16.gmra.mrb[0].mxu0 %v5562
    %v7855 = vpop.f32.mrb[0].mxu0
    %v7856 = vadd.f32 %v7743, %v7855
    %v7857 = vpop.f32.mrb[0].mxu0
    %v7858 = vadd.f32 %v7745, %v7857
    %v7859 = vpop.f32.mrb[0].mxu0
    %v7860 = vadd.f32 %v7747, %v7859
    %v7861 = vpop.f32.mrb[0].mxu0
    %v7862 = vadd.f32 %v7749, %v7861
    %7863 = vdwg.mxu0
    %7864 = vmatprep.subr.bf16.mxu0 %v6965
    %7865 = vmatpush1.bf16.msra.mxu0 %v6964
    %7866 = vmatprep.subr.bf16.mxu0 %v6967
    %7867 = vmatpush1.bf16.msra.mxu0 %v6966
    %7868 = vmatprep.subr.bf16.mxu0 %v6969
    %7869 = vmatpush1.bf16.msra.mxu0 %v6968
    %7870 = vmatprep.subr.bf16.mxu0 %v6971
    %7871 = vmatpush1.bf16.msra.mxu0 %v6970
    %7872 = vmatprep.subr.bf16.mxu0 %v6973
    %7873 = vmatpush1.bf16.msra.mxu0 %v6972
    %7874 = vmatprep.subr.bf16.mxu0 %v6975
    %7875 = vmatpush1.bf16.msra.mxu0 %v6974
    %7876 = vmatprep.subr.bf16.mxu0 %v6977
    %7877 = vmatpush1.bf16.msra.mxu0 %v6976
    %7878 = vmatprep.subr.bf16.mxu0 %v6979
    %7879 = vmatpush1.bf16.msra.mxu0 %v6978
    %7880 = vmatprep.subr.bf16.mxu0 %v6981
    %7881 = vmatpush1.bf16.msra.mxu0 %v6980
    %7882 = vmatprep.subr.bf16.mxu0 %v6983
    %7883 = vmatpush1.bf16.msra.mxu0 %v6982
    %7884 = vmatprep.subr.bf16.mxu0 %v6985
    %7885 = vmatpush1.bf16.msra.mxu0 %v6984
    %7886 = vmatprep.subr.bf16.mxu0 %v6987
    %7887 = vmatpush1.bf16.msra.mxu0 %v6986
    %7888 = vmatprep.subr.bf16.mxu0 %v6989
    %7889 = vmatpush1.bf16.msra.mxu0 %v6988
    %7890 = vmatprep.subr.bf16.mxu0 %v6991
    %7891 = vmatpush1.bf16.msra.mxu0 %v6990
    %7892 = vmatprep.subr.bf16.mxu0 %v6993
    %7893 = vmatpush1.bf16.msra.mxu0 %v6992
    %7894 = vmatprep.subr.bf16.mxu0 %v6995
    %7895 = vmatpush1.bf16.msra.mxu0 %v6994
    %7896 = vmatprep.mubr.bf16.mxu0 %v5585
    %7897 = vmatmul.mubr.bf16.gmra.mrb[0].mxu0 %v5584
    %v7898 = vpop.f32.mrb[0].mxu0
    %v7899 = vadd.f32 %v7786, %v7898
    %v7900 = vpop.f32.mrb[0].mxu0
    %v7901 = vadd.f32 %v7788, %v7900
    %v7902 = vpop.f32.mrb[0].mxu0
    %v7903 = vadd.f32 %v7790, %v7902
    %v7904 = vpop.f32.mrb[0].mxu0
    %v7905 = vadd.f32 %v7792, %v7904
    %7906 = vmatprep.mubr.bf16.mxu0 %v5587
    %7907 = vmatmul.mubr.bf16.gmra.mrb[0].mxu0 %v5586
    %v7908 = vpop.f32.mrb[0].mxu0
    %v7909 = vadd.f32 %v7796, %v7908
    %v7910 = vpop.f32.mrb[0].mxu0
    %v7911 = vadd.f32 %v7798, %v7910
    %v7912 = vpop.f32.mrb[0].mxu0
    %v7913 = vadd.f32 %v7800, %v7912
    %v7914 = vpop.f32.mrb[0].mxu0
    %v7915 = vadd.f32 %v7802, %v7914
    %7916 = vmatprep.mubr.bf16.mxu0 %v5589
    %7917 = vmatmul.mubr.bf16.gmra.mrb[0].mxu0 %v5588
    %v7918 = vpop.f32.mrb[0].mxu0
    %v7919 = vadd.f32 %v7806, %v7918
    %v7920 = vpop.f32.mrb[0].mxu0
    %v7921 = vadd.f32 %v7808, %v7920
    %v7922 = vpop.f32.mrb[0].mxu0
    %v7923 = vadd.f32 %v7810, %v7922
    %v7924 = vpop.f32.mrb[0].mxu0
    %v7925 = vadd.f32 %v7812, %v7924
    %7926 = vmatprep.mubr.bf16.mxu0 %v5591
    %7927 = vmatmul.mubr.bf16.gmra.mrb[0].mxu0 %v5590
    %v7928 = vpop.f32.mrb[0].mxu0
    %v7929 = vadd.f32 %v7816, %v7928
    %v7930 = vpop.f32.mrb[0].mxu0
    %v7931 = vadd.f32 %v7818, %v7930
    %v7932 = vpop.f32.mrb[0].mxu0
    %v7933 = vadd.f32 %v7820, %v7932
    %v7934 = vpop.f32.mrb[0].mxu0
    %v7935 = vadd.f32 %v7822, %v7934
    %7936 = vmatprep.mubr.bf16.mxu0 %v5593
    %7937 = vmatmul.mubr.bf16.gmra.mrb[0].mxu0 %v5592
    %v7938 = vpop.f32.mrb[0].mxu0
    %v7939 = vadd.f32 %v7826, %v7938
    %v7940 = vpop.f32.mrb[0].mxu0
    %v7941 = vadd.f32 %v7828, %v7940
    %v7942 = vpop.f32.mrb[0].mxu0
    %v7943 = vadd.f32 %v7830, %v7942
    %v7944 = vpop.f32.mrb[0].mxu0
    %v7945 = vadd.f32 %v7832, %v7944
    %7946 = vmatprep.mubr.bf16.mxu0 %v5595
    %7947 = vmatmul.mubr.bf16.gmra.mrb[0].mxu0 %v5594
    %v7948 = vpop.f32.mrb[0].mxu0
    %v7949 = vadd.f32 %v7836, %v7948
    %v7950 = vpop.f32.mrb[0].mxu0
    %v7951 = vadd.f32 %v7838, %v7950
    %v7952 = vpop.f32.mrb[0].mxu0
    %v7953 = vadd.f32 %v7840, %v7952
    %v7954 = vpop.f32.mrb[0].mxu0
    %v7955 = vadd.f32 %v7842, %v7954
    %7956 = vmatprep.mubr.bf16.mxu0 %v5597
    %7957 = vmatmul.mubr.bf16.gmra.mrb[0].mxu0 %v5596
    %v7958 = vpop.f32.mrb[0].mxu0
    %v7959 = vadd.f32 %v7846, %v7958
    %v7960 = vpop.f32.mrb[0].mxu0
    %v7961 = vadd.f32 %v7848, %v7960
    %v7962 = vpop.f32.mrb[0].mxu0
    %v7963 = vadd.f32 %v7850, %v7962
    %v7964 = vpop.f32.mrb[0].mxu0
    %v7965 = vadd.f32 %v7852, %v7964
    %7966 = vmatprep.mubr.bf16.mxu0 %v5599
    %7967 = vmatmul.mubr.bf16.gmra.mrb[0].mxu0 %v5598
    %v7968 = vpop.f32.mrb[0].mxu0
    %v7969 = vadd.f32 %v7856, %v7968
    %v7970 = vpop.f32.mrb[0].mxu0
    %v7971 = vadd.f32 %v7858, %v7970
    %v7972 = vpop.f32.mrb[0].mxu0
    %v7973 = vadd.f32 %v7860, %v7972
    %v7974 = vpop.f32.mrb[0].mxu0
    %v7975 = vadd.f32 %v7862, %v7974
    %7976 = vdwg.mxu0
    %7977 = vmatprep.subr.bf16.mxu0 %v6997
    %7978 = vmatpush1.bf16.msra.mxu0 %v6996
    %7979 = vmatprep.subr.bf16.mxu0 %v6999
    %7980 = vmatpush1.bf16.msra.mxu0 %v6998
    %7981 = vmatprep.subr.bf16.mxu0 %v7001
    %7982 = vmatpush1.bf16.msra.mxu0 %v7000
    %7983 = vmatprep.subr.bf16.mxu0 %v7003
    %7984 = vmatpush1.bf16.msra.mxu0 %v7002
    %7985 = vmatprep.subr.bf16.mxu0 %v7005
    %7986 = vmatpush1.bf16.msra.mxu0 %v7004
    %7987 = vmatprep.subr.bf16.mxu0 %v7007
    %7988 = vmatpush1.bf16.msra.mxu0 %v7006
    %7989 = vmatprep.subr.bf16.mxu0 %v7009
    %7990 = vmatpush1.bf16.msra.mxu0 %v7008
    %7991 = vmatprep.subr.bf16.mxu0 %v7011
    %7992 = vmatpush1.bf16.msra.mxu0 %v7010
    %7993 = vmatprep.subr.bf16.mxu0 %v7013
    %7994 = vmatpush1.bf16.msra.mxu0 %v7012
    %7995 = vmatprep.subr.bf16.mxu0 %v7015
    %7996 = vmatpush1.bf16.msra.mxu0 %v7014
    %7997 = vmatprep.subr.bf16.mxu0 %v7017
    %7998 = vmatpush1.bf16.msra.mxu0 %v7016
    %7999 = vmatprep.subr.bf16.mxu0 %v7019
    %8000 = vmatpush1.bf16.msra.mxu0 %v7018
    %8001 = vmatprep.subr.bf16.mxu0 %v7021
    %8002 = vmatpush1.bf16.msra.mxu0 %v7020
    %8003 = vmatprep.subr.bf16.mxu0 %v7023
    %8004 = vmatpush1.bf16.msra.mxu0 %v7022
    %8005 = vmatprep.subr.bf16.mxu0 %v7025
    %8006 = vmatpush1.bf16.msra.mxu0 %v7024
    %8007 = vmatprep.subr.bf16.mxu0 %v7027
    %8008 = vmatpush1.bf16.msra.mxu0 %v7026
    %8009 = vmatprep.mubr.bf16.mxu0 %v5621
    %8010 = vmatmul.mubr.bf16.gmra.mrb[0].mxu0 %v5620
    %v8011 = vpop.f32.mrb[0].mxu0
    %v8012 = vadd.f32 %v7899, %v8011
    %v8013 = vpop.f32.mrb[0].mxu0
    %v8014 = vadd.f32 %v7901, %v8013
    %v8015 = vpop.f32.mrb[0].mxu0
    %v8016 = vadd.f32 %v7903, %v8015
    %v8017 = vpop.f32.mrb[0].mxu0
    %v8018 = vadd.f32 %v7905, %v8017
    %8019 = vmatprep.mubr.bf16.mxu0 %v5623
    %8020 = vmatmul.mubr.bf16.gmra.mrb[0].mxu0 %v5622
    %v8021 = vpop.f32.mrb[0].mxu0
    %v8022 = vadd.f32 %v7909, %v8021
    %v8023 = vpop.f32.mrb[0].mxu0
    %v8024 = vadd.f32 %v7911, %v8023
    %v8025 = vpop.f32.mrb[0].mxu0
    %v8026 = vadd.f32 %v7913, %v8025
    %v8027 = vpop.f32.mrb[0].mxu0
    %v8028 = vadd.f32 %v7915, %v8027
    %8029 = vmatprep.mubr.bf16.mxu0 %v5625
    %8030 = vmatmul.mubr.bf16.gmra.mrb[0].mxu0 %v5624
    %v8031 = vpop.f32.mrb[0].mxu0
    %v8032 = vadd.f32 %v7919, %v8031
    %v8033 = vpop.f32.mrb[0].mxu0
    %v8034 = vadd.f32 %v7921, %v8033
    %v8035 = vpop.f32.mrb[0].mxu0
    %v8036 = vadd.f32 %v7923, %v8035
    %v8037 = vpop.f32.mrb[0].mxu0
    %v8038 = vadd.f32 %v7925, %v8037
    %8039 = vmatprep.mubr.bf16.mxu0 %v5627
    %8040 = vmatmul.mubr.bf16.gmra.mrb[0].mxu0 %v5626
    %v8041 = vpop.f32.mrb[0].mxu0
    %v8042 = vadd.f32 %v7929, %v8041
    %v8043 = vpop.f32.mrb[0].mxu0
    %v8044 = vadd.f32 %v7931, %v8043
    %v8045 = vpop.f32.mrb[0].mxu0
    %v8046 = vadd.f32 %v7933, %v8045
    %v8047 = vpop.f32.mrb[0].mxu0
    %v8048 = vadd.f32 %v7935, %v8047
    %8049 = vmatprep.mubr.bf16.mxu0 %v5629
    %8050 = vmatmul.mubr.bf16.gmra.mrb[0].mxu0 %v5628
    %v8051 = vpop.f32.mrb[0].mxu0
    %v8052 = vadd.f32 %v7939, %v8051
    %v8053 = vpop.f32.mrb[0].mxu0
    %v8054 = vadd.f32 %v7941, %v8053
    %v8055 = vpop.f32.mrb[0].mxu0
    %v8056 = vadd.f32 %v7943, %v8055
    %v8057 = vpop.f32.mrb[0].mxu0
    %v8058 = vadd.f32 %v7945, %v8057
    %8059 = vmatprep.mubr.bf16.mxu0 %v5631
    %8060 = vmatmul.mubr.bf16.gmra.mrb[0].mxu0 %v5630
    %v8061 = vpop.f32.mrb[0].mxu0
    %v8062 = vadd.f32 %v7949, %v8061
    %v8063 = vpop.f32.mrb[0].mxu0
    %v8064 = vadd.f32 %v7951, %v8063
    %v8065 = vpop.f32.mrb[0].mxu0
    %v8066 = vadd.f32 %v7953, %v8065
    %v8067 = vpop.f32.mrb[0].mxu0
    %v8068 = vadd.f32 %v7955, %v8067
    %8069 = vmatprep.mubr.bf16.mxu0 %v5633
    %8070 = vmatmul.mubr.bf16.gmra.mrb[0].mxu0 %v5632
    %v8071 = vpop.f32.mrb[0].mxu0
    %v8072 = vadd.f32 %v7959, %v8071
    %v8073 = vpop.f32.mrb[0].mxu0
    %v8074 = vadd.f32 %v7961, %v8073
    %v8075 = vpop.f32.mrb[0].mxu0
    %v8076 = vadd.f32 %v7963, %v8075
    %v8077 = vpop.f32.mrb[0].mxu0
    %v8078 = vadd.f32 %v7965, %v8077
    %8079 = vmatprep.mubr.bf16.mxu0 %v5635
    %8080 = vmatmul.mubr.bf16.gmra.mrb[0].mxu0 %v5634
    %v8081 = vpop.f32.mrb[0].mxu0
    %v8082 = vadd.f32 %v7969, %v8081
    %v8083 = vpop.f32.mrb[0].mxu0
    %v8084 = vadd.f32 %v7971, %v8083
    %v8085 = vpop.f32.mrb[0].mxu0
    %v8086 = vadd.f32 %v7973, %v8085
    %v8087 = vpop.f32.mrb[0].mxu0
    %v8088 = vadd.f32 %v7975, %v8087
    %8089 = vdwg.mxu0
    %8090 = vmatprep.subr.bf16.mxu0 %v7029
    %8091 = vmatpush1.bf16.msra.mxu0 %v7028
    %8092 = vmatprep.subr.bf16.mxu0 %v7031
    %8093 = vmatpush1.bf16.msra.mxu0 %v7030
    %8094 = vmatprep.subr.bf16.mxu0 %v7033
    %8095 = vmatpush1.bf16.msra.mxu0 %v7032
    %8096 = vmatprep.subr.bf16.mxu0 %v7035
    %8097 = vmatpush1.bf16.msra.mxu0 %v7034
    %8098 = vmatprep.subr.bf16.mxu0 %v7037
    %8099 = vmatpush1.bf16.msra.mxu0 %v7036
    %8100 = vmatprep.subr.bf16.mxu0 %v7039
    %8101 = vmatpush1.bf16.msra.mxu0 %v7038
    %8102 = vmatprep.subr.bf16.mxu0 %v7041
    %8103 = vmatpush1.bf16.msra.mxu0 %v7040
    %8104 = vmatprep.subr.bf16.mxu0 %v7043
    %8105 = vmatpush1.bf16.msra.mxu0 %v7042
    %8106 = vmatprep.subr.bf16.mxu0 %v7045
    %8107 = vmatpush1.bf16.msra.mxu0 %v7044
    %8108 = vmatprep.subr.bf16.mxu0 %v7047
    %8109 = vmatpush1.bf16.msra.mxu0 %v7046
    %8110 = vmatprep.subr.bf16.mxu0 %v7049
    %8111 = vmatpush1.bf16.msra.mxu0 %v7048
    %8112 = vmatprep.subr.bf16.mxu0 %v7051
    %8113 = vmatpush1.bf16.msra.mxu0 %v7050
    %8114 = vmatprep.subr.bf16.mxu0 %v7053
    %8115 = vmatpush1.bf16.msra.mxu0 %v7052
    %8116 = vmatprep.subr.bf16.mxu0 %v7055
    %8117 = vmatpush1.bf16.msra.mxu0 %v7054
    %8118 = vmatprep.subr.bf16.mxu0 %v7057
    %8119 = vmatpush1.bf16.msra.mxu0 %v7056
    %8120 = vmatprep.subr.bf16.mxu0 %v7059
    %8121 = vmatpush1.bf16.msra.mxu0 %v7058
    %8122 = vmatprep.mubr.bf16.mxu0 %v5391
    %8123 = vmatmul.mubr.bf16.gmra.mrb[0].mxu0 %v5390
    %v8124 = vpop.f32.mrb[0].mxu0
    %v8125 = vadd.f32 %v8012, %v8124
    %v8126 = vpop.f32.mrb[0].mxu0
    %v8127 = vadd.f32 %v8014, %v8126
    %v8128 = vpop.f32.mrb[0].mxu0
    %v8129 = vadd.f32 %v8016, %v8128
    %v8130 = vpop.f32.mrb[0].mxu0
    %v8131 = vadd.f32 %v8018, %v8130
    %8132 = vmatprep.mubr.bf16.mxu0 %v5393
    %8133 = vmatmul.mubr.bf16.gmra.mrb[0].mxu0 %v5392
    %v8134 = vpop.f32.mrb[0].mxu0
    %v8135 = vadd.f32 %v8022, %v8134
    %v8136 = vpop.f32.mrb[0].mxu0
    %v8137 = vadd.f32 %v8024, %v8136
    %v8138 = vpop.f32.mrb[0].mxu0
    %v8139 = vadd.f32 %v8026, %v8138
    %v8140 = vpop.f32.mrb[0].mxu0
    %v8141 = vadd.f32 %v8028, %v8140
    %8142 = vmatprep.mubr.bf16.mxu0 %v5395
    %8143 = vmatmul.mubr.bf16.gmra.mrb[0].mxu0 %v5394
    %v8144 = vpop.f32.mrb[0].mxu0
    %v8145 = vadd.f32 %v8032, %v8144
    %v8146 = vpop.f32.mrb[0].mxu0
    %v8147 = vadd.f32 %v8034, %v8146
    %v8148 = vpop.f32.mrb[0].mxu0
    %v8149 = vadd.f32 %v8036, %v8148
    %v8150 = vpop.f32.mrb[0].mxu0
    %v8151 = vadd.f32 %v8038, %v8150
    %8152 = vmatprep.mubr.bf16.mxu0 %v5653
    %8153 = vmatmul.mubr.bf16.gmra.mrb[0].mxu0 %v5652
    %v8154 = vpop.f32.mrb[0].mxu0
    %v8155 = vadd.f32 %v8042, %v8154
    %v8156 = vpop.f32.mrb[0].mxu0
    %v8157 = vadd.f32 %v8044, %v8156
    %v8158 = vpop.f32.mrb[0].mxu0
    %v8159 = vadd.f32 %v8046, %v8158
    %v8160 = vpop.f32.mrb[0].mxu0
    %v8161 = vadd.f32 %v8048, %v8160
    %8162 = vmatprep.mubr.bf16.mxu0 %v5399
    %8163 = vmatmul.mubr.bf16.gmra.mrb[0].mxu0 %v5398
    %v8164 = vpop.f32.mrb[0].mxu0
    %v8165 = vadd.f32 %v8052, %v8164
    %v8166 = vpop.f32.mrb[0].mxu0
    %v8167 = vadd.f32 %v8054, %v8166
    %v8168 = vpop.f32.mrb[0].mxu0
    %v8169 = vadd.f32 %v8056, %v8168
    %v8170 = vpop.f32.mrb[0].mxu0
    %v8171 = vadd.f32 %v8058, %v8170
    %8172 = vmatprep.mubr.bf16.mxu0 %v5401
    %8173 = vmatmul.mubr.bf16.gmra.mrb[0].mxu0 %v5400
    %v8174 = vpop.f32.mrb[0].mxu0
    %v8175 = vadd.f32 %v8062, %v8174
    %v8176 = vpop.f32.mrb[0].mxu0
    %v8177 = vadd.f32 %v8064, %v8176
    %v8178 = vpop.f32.mrb[0].mxu0
    %v8179 = vadd.f32 %v8066, %v8178
    %v8180 = vpop.f32.mrb[0].mxu0
    %v8181 = vadd.f32 %v8068, %v8180
    %8182 = vmatprep.mubr.bf16.mxu0 %v5403
    %8183 = vmatmul.mubr.bf16.gmra.mrb[0].mxu0 %v5402
    %v8184 = vpop.f32.mrb[0].mxu0
    %v8185 = vadd.f32 %v8072, %v8184
    %v8186 = vpop.f32.mrb[0].mxu0
    %v8187 = vadd.f32 %v8074, %v8186
    %v8188 = vpop.f32.mrb[0].mxu0
    %v8189 = vadd.f32 %v8076, %v8188
    %v8190 = vpop.f32.mrb[0].mxu0
    %v8191 = vadd.f32 %v8078, %v8190
    %8192 = vmatprep.mubr.bf16.mxu0 %v5655
    %8193 = vmatmul.mubr.bf16.gmra.mrb[0].mxu0 %v5654
    %v8194 = vpop.f32.mrb[0].mxu0
    %v8195 = vadd.f32 %v8082, %v8194
    %v8196 = vpop.f32.mrb[0].mxu0
    %v8197 = vadd.f32 %v8084, %v8196
    %v8198 = vpop.f32.mrb[0].mxu0
    %v8199 = vadd.f32 %v8086, %v8198
    %v8200 = vpop.f32.mrb[0].mxu0
    %v8201 = vadd.f32 %v8088, %v8200
    %8202 = vdwg.mxu0
    %8203 = vmatprep.subr.bf16.mxu0 %v7061
    %8204 = vmatpush1.bf16.msra.mxu0 %v7060
    %8205 = vmatprep.subr.bf16.mxu0 %v7063
    %8206 = vmatpush1.bf16.msra.mxu0 %v7062
    %8207 = vmatprep.subr.bf16.mxu0 %v7065
    %8208 = vmatpush1.bf16.msra.mxu0 %v7064
    %8209 = vmatprep.subr.bf16.mxu0 %v7067
    %8210 = vmatpush1.bf16.msra.mxu0 %v7066
    %8211 = vmatprep.subr.bf16.mxu0 %v7069
    %8212 = vmatpush1.bf16.msra.mxu0 %v7068
    %8213 = vmatprep.subr.bf16.mxu0 %v7071
    %8214 = vmatpush1.bf16.msra.mxu0 %v7070
    %8215 = vmatprep.subr.bf16.mxu0 %v7073
    %8216 = vmatpush1.bf16.msra.mxu0 %v7072
    %8217 = vmatprep.subr.bf16.mxu0 %v7075
    %8218 = vmatpush1.bf16.msra.mxu0 %v7074
    %8219 = vmatprep.subr.bf16.mxu0 %v7077
    %8220 = vmatpush1.bf16.msra.mxu0 %v7076
    %8221 = vmatprep.subr.bf16.mxu0 %v7079
    %8222 = vmatpush1.bf16.msra.mxu0 %v7078
    %8223 = vmatprep.subr.bf16.mxu0 %v7081
    %8224 = vmatpush1.bf16.msra.mxu0 %v7080
    %8225 = vmatprep.subr.bf16.mxu0 %v7083
    %8226 = vmatpush1.bf16.msra.mxu0 %v7082
    %8227 = vmatprep.subr.bf16.mxu0 %v7085
    %8228 = vmatpush1.bf16.msra.mxu0 %v7084
    %8229 = vmatprep.subr.bf16.mxu0 %v7087
    %8230 = vmatpush1.bf16.msra.mxu0 %v7086
    %8231 = vmatprep.subr.bf16.mxu0 %v7089
    %8232 = vmatpush1.bf16.msra.mxu0 %v7088
    %8233 = vmatprep.subr.bf16.mxu0 %v7091
    %8234 = vmatpush1.bf16.msra.mxu0 %v7090
    %8235 = vmatprep.mubr.bf16.mxu0 %v5455
    %8236 = vmatmul.mubr.bf16.gmra.mrb[0].mxu0 %v5454
    %v8237 = vpop.f32.mrb[0].mxu0
    %v8238 = vadd.f32 %v8125, %v8237
    %v8239 = vpop.f32.mrb[0].mxu0
    %v8240 = vadd.f32 %v8127, %v8239
    %v8241 = vpop.f32.mrb[0].mxu0
    %v8242 = vadd.f32 %v8129, %v8241
    %v8243 = vpop.f32.mrb[0].mxu0
    %v8244 = vadd.f32 %v8131, %v8243
    %8245 = vmatprep.mubr.bf16.mxu0 %v5457
    %8246 = vmatmul.mubr.bf16.gmra.mrb[0].mxu0 %v5456
    %v8247 = vpop.f32.mrb[0].mxu0
    %v8248 = vadd.f32 %v8135, %v8247
    %v8249 = vpop.f32.mrb[0].mxu0
    %v8250 = vadd.f32 %v8137, %v8249
    %v8251 = vpop.f32.mrb[0].mxu0
    %v8252 = vadd.f32 %v8139, %v8251
    %v8253 = vpop.f32.mrb[0].mxu0
    %v8254 = vadd.f32 %v8141, %v8253
    %8255 = vmatprep.mubr.bf16.mxu0 %v5459
    %8256 = vmatmul.mubr.bf16.gmra.mrb[0].mxu0 %v5458
    %v8257 = vpop.f32.mrb[0].mxu0
    %v8258 = vadd.f32 %v8145, %v8257
    %v8259 = vpop.f32.mrb[0].mxu0
    %v8260 = vadd.f32 %v8147, %v8259
    %v8261 = vpop.f32.mrb[0].mxu0
    %v8262 = vadd.f32 %v8149, %v8261
    %v8263 = vpop.f32.mrb[0].mxu0
    %v8264 = vadd.f32 %v8151, %v8263
    %8265 = vmatprep.mubr.bf16.mxu0 %v5665
    %8266 = vmatmul.mubr.bf16.gmra.mrb[0].mxu0 %v5664
    %v8267 = vpop.f32.mrb[0].mxu0
    %v8268 = vadd.f32 %v8155, %v8267
    %v8269 = vpop.f32.mrb[0].mxu0
    %v8270 = vadd.f32 %v8157, %v8269
    %v8271 = vpop.f32.mrb[0].mxu0
    %v8272 = vadd.f32 %v8159, %v8271
    %v8273 = vpop.f32.mrb[0].mxu0
    %v8274 = vadd.f32 %v8161, %v8273
    %8275 = vmatprep.mubr.bf16.mxu0 %v5463
    %8276 = vmatmul.mubr.bf16.gmra.mrb[0].mxu0 %v5462
    %v8277 = vpop.f32.mrb[0].mxu0
    %v8278 = vadd.f32 %v8165, %v8277
    %v8279 = vpop.f32.mrb[0].mxu0
    %v8280 = vadd.f32 %v8167, %v8279
    %v8281 = vpop.f32.mrb[0].mxu0
    %v8282 = vadd.f32 %v8169, %v8281
    %v8283 = vpop.f32.mrb[0].mxu0
    %v8284 = vadd.f32 %v8171, %v8283
    %8285 = vmatprep.mubr.bf16.mxu0 %v5465
    %8286 = vmatmul.mubr.bf16.gmra.mrb[0].mxu0 %v5464
    %v8287 = vpop.f32.mrb[0].mxu0
    %v8288 = vadd.f32 %v8175, %v8287
    %v8289 = vpop.f32.mrb[0].mxu0
    %v8290 = vadd.f32 %v8177, %v8289
    %v8291 = vpop.f32.mrb[0].mxu0
    %v8292 = vadd.f32 %v8179, %v8291
    %v8293 = vpop.f32.mrb[0].mxu0
    %v8294 = vadd.f32 %v8181, %v8293
    %8295 = vmatprep.mubr.bf16.mxu0 %v5467
    %8296 = vmatmul.mubr.bf16.gmra.mrb[0].mxu0 %v5466
    %v8297 = vpop.f32.mrb[0].mxu0
    %v8298 = vadd.f32 %v8185, %v8297
    %v8299 = vpop.f32.mrb[0].mxu0
    %v8300 = vadd.f32 %v8187, %v8299
    %v8301 = vpop.f32.mrb[0].mxu0
    %v8302 = vadd.f32 %v8189, %v8301
    %v8303 = vpop.f32.mrb[0].mxu0
    %v8304 = vadd.f32 %v8191, %v8303
    %8305 = vmatprep.mubr.bf16.mxu0 %v5667
    %8306 = vmatmul.mubr.bf16.gmra.mrb[0].mxu0 %v5666
    %v8307 = vpop.f32.mrb[0].mxu0
    %v8308 = vadd.f32 %v8195, %v8307
    %v8309 = vpop.f32.mrb[0].mxu0
    %v8310 = vadd.f32 %v8197, %v8309
    %v8311 = vpop.f32.mrb[0].mxu0
    %v8312 = vadd.f32 %v8199, %v8311
    %v8313 = vpop.f32.mrb[0].mxu0
    %v8314 = vadd.f32 %v8201, %v8313
    %8315 = vdwg.mxu0
    %8316 = vmatprep.subr.bf16.mxu0 %v7093
    %8317 = vmatpush1.bf16.msra.mxu0 %v7092
    %8318 = vmatprep.subr.bf16.mxu0 %v7095
    %8319 = vmatpush1.bf16.msra.mxu0 %v7094
    %8320 = vmatprep.subr.bf16.mxu0 %v7097
    %8321 = vmatpush1.bf16.msra.mxu0 %v7096
    %8322 = vmatprep.subr.bf16.mxu0 %v7099
    %8323 = vmatpush1.bf16.msra.mxu0 %v7098
    %8324 = vmatprep.subr.bf16.mxu0 %v7101
    %8325 = vmatpush1.bf16.msra.mxu0 %v7100
    %8326 = vmatprep.subr.bf16.mxu0 %v7103
    %8327 = vmatpush1.bf16.msra.mxu0 %v7102
    %8328 = vmatprep.subr.bf16.mxu0 %v7105
    %8329 = vmatpush1.bf16.msra.mxu0 %v7104
    %8330 = vmatprep.subr.bf16.mxu0 %v7107
    %8331 = vmatpush1.bf16.msra.mxu0 %v7106
    %8332 = vmatprep.subr.bf16.mxu0 %v7109
    %8333 = vmatpush1.bf16.msra.mxu0 %v7108
    %8334 = vmatprep.subr.bf16.mxu0 %v7111
    %8335 = vmatpush1.bf16.msra.mxu0 %v7110
    %8336 = vmatprep.subr.bf16.mxu0 %v7113
    %8337 = vmatpush1.bf16.msra.mxu0 %v7112
    %8338 = vmatprep.subr.bf16.mxu0 %v7115
    %8339 = vmatpush1.bf16.msra.mxu0 %v7114
    %8340 = vmatprep.subr.bf16.mxu0 %v7117
    %8341 = vmatpush1.bf16.msra.mxu0 %v7116
    %8342 = vmatprep.subr.bf16.mxu0 %v7119
    %8343 = vmatpush1.bf16.msra.mxu0 %v7118
    %8344 = vmatprep.subr.bf16.mxu0 %v7121
    %8345 = vmatpush1.bf16.msra.mxu0 %v7120
    %8346 = vmatprep.subr.bf16.mxu0 %v7123
    %8347 = vmatpush1.bf16.msra.mxu0 %v7122
    %8348 = vmatprep.mubr.bf16.mxu0 %v5519
    %8349 = vmatmul.mubr.bf16.gmra.mrb[0].mxu0 %v5518
    %v8350 = vpop.f32.mrb[0].mxu0
    %v8351 = vadd.f32 %v8238, %v8350
    %v8352 = vpop.f32.mrb[0].mxu0
    %v8353 = vadd.f32 %v8240, %v8352
    %v8354 = vpop.f32.mrb[0].mxu0
    %v8355 = vadd.f32 %v8242, %v8354
    %v8356 = vpop.f32.mrb[0].mxu0
    %v8357 = vadd.f32 %v8244, %v8356
    %8358 = vmatprep.mubr.bf16.mxu0 %v5521
    %8359 = vmatmul.mubr.bf16.gmra.mrb[0].mxu0 %v5520
    %v8360 = vpop.f32.mrb[0].mxu0
    %v8361 = vadd.f32 %v8248, %v8360
    %v8362 = vpop.f32.mrb[0].mxu0
    %v8363 = vadd.f32 %v8250, %v8362
    %v8364 = vpop.f32.mrb[0].mxu0
    %v8365 = vadd.f32 %v8252, %v8364
    %v8366 = vpop.f32.mrb[0].mxu0
    %v8367 = vadd.f32 %v8254, %v8366
    %8368 = vmatprep.mubr.bf16.mxu0 %v5523
    %8369 = vmatmul.mubr.bf16.gmra.mrb[0].mxu0 %v5522
    %v8370 = vpop.f32.mrb[0].mxu0
    %v8371 = vadd.f32 %v8258, %v8370
    %v8372 = vpop.f32.mrb[0].mxu0
    %v8373 = vadd.f32 %v8260, %v8372
    %v8374 = vpop.f32.mrb[0].mxu0
    %v8375 = vadd.f32 %v8262, %v8374
    %v8376 = vpop.f32.mrb[0].mxu0
    %v8377 = vadd.f32 %v8264, %v8376
    %8378 = vmatprep.mubr.bf16.mxu0 %v5677
    %8379 = vmatmul.mubr.bf16.gmra.mrb[0].mxu0 %v5676
    %v8380 = vpop.f32.mrb[0].mxu0
    %v8381 = vadd.f32 %v8268, %v8380
    %v8382 = vpop.f32.mrb[0].mxu0
    %v8383 = vadd.f32 %v8270, %v8382
    %v8384 = vpop.f32.mrb[0].mxu0
    %v8385 = vadd.f32 %v8272, %v8384
    %v8386 = vpop.f32.mrb[0].mxu0
    %v8387 = vadd.f32 %v8274, %v8386
    %8388 = vmatprep.mubr.bf16.mxu0 %v5527
    %8389 = vmatmul.mubr.bf16.gmra.mrb[0].mxu0 %v5526
    %v8390 = vpop.f32.mrb[0].mxu0
    %v8391 = vadd.f32 %v8278, %v8390
    %v8392 = vpop.f32.mrb[0].mxu0
    %v8393 = vadd.f32 %v8280, %v8392
    %v8394 = vpop.f32.mrb[0].mxu0
    %v8395 = vadd.f32 %v8282, %v8394
    %v8396 = vpop.f32.mrb[0].mxu0
    %v8397 = vadd.f32 %v8284, %v8396
    %8398 = vmatprep.mubr.bf16.mxu0 %v5529
    %8399 = vmatmul.mubr.bf16.gmra.mrb[0].mxu0 %v5528
    %v8400 = vpop.f32.mrb[0].mxu0
    %v8401 = vadd.f32 %v8288, %v8400
    %v8402 = vpop.f32.mrb[0].mxu0
    %v8403 = vadd.f32 %v8290, %v8402
    %v8404 = vpop.f32.mrb[0].mxu0
    %v8405 = vadd.f32 %v8292, %v8404
    %v8406 = vpop.f32.mrb[0].mxu0
    %v8407 = vadd.f32 %v8294, %v8406
    %8408 = vmatprep.mubr.bf16.mxu0 %v5531
    %8409 = vmatmul.mubr.bf16.gmra.mrb[0].mxu0 %v5530
    %v8410 = vpop.f32.mrb[0].mxu0
    %v8411 = vadd.f32 %v8298, %v8410
    %v8412 = vpop.f32.mrb[0].mxu0
    %v8413 = vadd.f32 %v8300, %v8412
    %v8414 = vpop.f32.mrb[0].mxu0
    %v8415 = vadd.f32 %v8302, %v8414
    %v8416 = vpop.f32.mrb[0].mxu0
    %v8417 = vadd.f32 %v8304, %v8416
    %8418 = vmatprep.mubr.bf16.mxu0 %v5679
    %8419 = vmatmul.mubr.bf16.gmra.mrb[0].mxu0 %v5678
    %v8420 = vpop.f32.mrb[0].mxu0
    %v8421 = vadd.f32 %v8308, %v8420
    %v8422 = vpop.f32.mrb[0].mxu0
    %v8423 = vadd.f32 %v8310, %v8422
    %v8424 = vpop.f32.mrb[0].mxu0
    %v8425 = vadd.f32 %v8312, %v8424
    %v8426 = vpop.f32.mrb[0].mxu0
    %v8427 = vadd.f32 %v8314, %v8426
    %8428 = vdwg.mxu0
    %v8429 = vadd.f32 %v8351, %v8355
    %v8430 = vadd.f32 %v8429, %v8361
    %v8431 = vadd.f32 %v8430, %v8365
    %v8432 = vadd.f32 %v8431, %v8371
    %v8433 = vadd.f32 %v8432, %v8375
    %v8434 = vadd.f32 %v8433, %v8381
    %v8435 = vadd.f32 %v8434, %v8385
    %v8436 = vrot.slane %v8435, 4
    %v8437 = vadd.f32 %v8435, %v8436
    %v8438 = vrot.slane %v8437, 2
    %v8439 = vadd.f32 %v8437, %v8438
    %v8440 = vrot.slane %v8439, 1
    %v8441 = vadd.f32 %v8439, %v8440
    %v8442 = vadd.f32 %v8353, %v8357
    %v8443 = vadd.f32 %v8442, %v8363
    %v8444 = vadd.f32 %v8443, %v8367
    %v8445 = vadd.f32 %v8444, %v8373
    %v8446 = vadd.f32 %v8445, %v8377
    %v8447 = vadd.f32 %v8446, %v8383
    %v8448 = vadd.f32 %v8447, %v8387
    %v8449 = vrot.slane %v8448, 4
    %v8450 = vadd.f32 %v8448, %v8449
    %v8451 = vrot.slane %v8450, 2
    %v8452 = vadd.f32 %v8450, %v8451
    %v8453 = vrot.slane %v8452, 1
    %v8454 = vadd.f32 %v8452, %v8453
    %v8455 = vadd.f32 %v8391, %v8395
    %v8456 = vadd.f32 %v8455, %v8401
    %v8457 = vadd.f32 %v8456, %v8405
    %v8458 = vadd.f32 %v8457, %v8411
    %v8459 = vadd.f32 %v8458, %v8415
    %v8460 = vadd.f32 %v8459, %v8421
    %v8461 = vadd.f32 %v8460, %v8425
    %v8462 = vrot.slane %v8461, 4
    %v8463 = vadd.f32 %v8461, %v8462
    %v8464 = vrot.slane %v8463, 2
    %v8465 = vadd.f32 %v8463, %v8464
    %v8466 = vrot.slane %v8465, 1
    %v8467 = vadd.f32 %v8465, %v8466
    %v8468 = vadd.f32 %v8393, %v8397
    %v8469 = vadd.f32 %v8468, %v8403
    %v8470 = vadd.f32 %v8469, %v8407
    %v8471 = vadd.f32 %v8470, %v8413
    %v8472 = vadd.f32 %v8471, %v8417
    %v8473 = vadd.f32 %v8472, %v8423
    %v8474 = vadd.f32 %v8473, %v8427
    %v8475 = vrot.slane %v8474, 4
    %v8476 = vadd.f32 %v8474, %v8475
    %v8477 = vrot.slane %v8476, 2
    %v8478 = vadd.f32 %v8476, %v8477
    %v8479 = vrot.slane %v8478, 1
    %v8480 = vadd.f32 %v8478, %v8479
    %v8481 = vmul.f32 %v8351, %v8351
    %v8482 = vmul.f32 %v8353, %v8353
    %v8483 = vmul.f32 %v8355, %v8355
    %v8484 = vmul.f32 %v8357, %v8357
    %v8485 = vmul.f32 %v8361, %v8361
    %v8486 = vmul.f32 %v8363, %v8363
    %v8487 = vmul.f32 %v8365, %v8365
    %v8488 = vmul.f32 %v8367, %v8367
    %v8489 = vmul.f32 %v8371, %v8371
    %v8490 = vmul.f32 %v8373, %v8373
    %v8491 = vmul.f32 %v8375, %v8375
    %v8492 = vmul.f32 %v8377, %v8377
    %v8493 = vmul.f32 %v8381, %v8381
    %v8494 = vmul.f32 %v8383, %v8383
    %v8495 = vmul.f32 %v8385, %v8385
    %v8496 = vmul.f32 %v8387, %v8387
    %v8497 = vmul.f32 %v8391, %v8391
    %v8498 = vmul.f32 %v8393, %v8393
    %v8499 = vmul.f32 %v8395, %v8395
    %v8500 = vmul.f32 %v8397, %v8397
    %v8501 = vmul.f32 %v8401, %v8401
    %v8502 = vmul.f32 %v8403, %v8403
    %v8503 = vmul.f32 %v8405, %v8405
    %v8504 = vmul.f32 %v8407, %v8407
    %v8505 = vmul.f32 %v8411, %v8411
    %v8506 = vmul.f32 %v8413, %v8413
    %v8507 = vmul.f32 %v8415, %v8415
    %v8508 = vmul.f32 %v8417, %v8417
    %v8509 = vmul.f32 %v8421, %v8421
    %v8510 = vmul.f32 %v8423, %v8423
    %v8511 = vmul.f32 %v8425, %v8425
    %v8512 = vmul.f32 %v8427, %v8427
    %v8513 = vadd.f32 %v8481, %v8483
    %v8514 = vadd.f32 %v8513, %v8485
    %v8515 = vadd.f32 %v8514, %v8487
    %v8516 = vadd.f32 %v8515, %v8489
    %v8517 = vadd.f32 %v8516, %v8491
    %v8518 = vadd.f32 %v8517, %v8493
    %v8519 = vadd.f32 %v8518, %v8495
    %v8520 = vrot.slane %v8519, 4
    %v8521 = vadd.f32 %v8519, %v8520
    %v8522 = vrot.slane %v8521, 2
    %v8523 = vadd.f32 %v8521, %v8522
    %v8524 = vrot.slane %v8523, 1
    %v8525 = vadd.f32 %v8523, %v8524
    %v8526 = vadd.f32 %v8482, %v8484
    %v8527 = vadd.f32 %v8526, %v8486
    %v8528 = vadd.f32 %v8527, %v8488
    %v8529 = vadd.f32 %v8528, %v8490
    %v8530 = vadd.f32 %v8529, %v8492
    %v8531 = vadd.f32 %v8530, %v8494
    %v8532 = vadd.f32 %v8531, %v8496
    %v8533 = vrot.slane %v8532, 4
    %v8534 = vadd.f32 %v8532, %v8533
    %v8535 = vrot.slane %v8534, 2
    %v8536 = vadd.f32 %v8534, %v8535
    %v8537 = vrot.slane %v8536, 1
    %v8538 = vadd.f32 %v8536, %v8537
    %v8539 = vadd.f32 %v8497, %v8499
    %v8540 = vadd.f32 %v8539, %v8501
    %v8541 = vadd.f32 %v8540, %v8503
    %v8542 = vadd.f32 %v8541, %v8505
    %v8543 = vadd.f32 %v8542, %v8507
    %v8544 = vadd.f32 %v8543, %v8509
    %v8545 = vadd.f32 %v8544, %v8511
    %v8546 = vrot.slane %v8545, 4
    %v8547 = vadd.f32 %v8545, %v8546
    %v8548 = vrot.slane %v8547, 2
    %v8549 = vadd.f32 %v8547, %v8548
    %v8550 = vrot.slane %v8549, 1
    %v8551 = vadd.f32 %v8549, %v8550
    %v8552 = vadd.f32 %v8498, %v8500
    %v8553 = vadd.f32 %v8552, %v8502
    %v8554 = vadd.f32 %v8553, %v8504
    %v8555 = vadd.f32 %v8554, %v8506
    %v8556 = vadd.f32 %v8555, %v8508
    %v8557 = vadd.f32 %v8556, %v8510
    %v8558 = vadd.f32 %v8557, %v8512
    %v8559 = vrot.slane %v8558, 4
    %v8560 = vadd.f32 %v8558, %v8559
    %v8561 = vrot.slane %v8560, 2
    %v8562 = vadd.f32 %v8560, %v8561
    %v8563 = vrot.slane %v8562, 1
    %v8564 = vadd.f32 %v8562, %v8563
    %v8565 = vmul.f32 %v8441, 0.015625
    %v8566 = vmul.f32 %v8454, 0.015625
    %v8567 = vmul.f32 %v8467, 0.015625
    %v8568 = vmul.f32 %v8480, 0.015625
    %v8569 = vmul.f32 %v8525, 0.015625
    %v8570 = vmul.f32 %v8538, 0.015625
    %v8571 = vmul.f32 %v8551, 0.015625
    %v8572 = vmul.f32 %v8564, 0.015625
    %v8573 = vmul.f32 %v8565, %v8565
    %v8574 = vmul.f32 %v8566, %v8566
    %v8575 = vmul.f32 %v8567, %v8567
    %v8576 = vmul.f32 %v8568, %v8568
    %v8577 = vsub.f32 %v8569, %v8573
    %v8578 = vsub.f32 %v8570, %v8574
    %v8579 = vsub.f32 %v8571, %v8575
    %v8580 = vsub.f32 %v8572, %v8576
    %v8581 = vsub.f32 %v8351, %v8565
    %v8582 = vsub.f32 %v8353, %v8566
    %v8583 = vsub.f32 %v8355, %v8565
    %v8584 = vsub.f32 %v8357, %v8566
    %v8585 = vsub.f32 %v8361, %v8565
    %v8586 = vsub.f32 %v8363, %v8566
    %v8587 = vsub.f32 %v8365, %v8565
    %v8588 = vsub.f32 %v8367, %v8566
    %v8589 = vsub.f32 %v8371, %v8565
    %v8590 = vsub.f32 %v8373, %v8566
    %v8591 = vsub.f32 %v8375, %v8565
    %v8592 = vsub.f32 %v8377, %v8566
    %v8593 = vsub.f32 %v8381, %v8565
    %v8594 = vsub.f32 %v8383, %v8566
    %v8595 = vsub.f32 %v8385, %v8565
    %v8596 = vsub.f32 %v8387, %v8566
    %v8597 = vsub.f32 %v8391, %v8567
    %v8598 = vsub.f32 %v8393, %v8568
    %v8599 = vsub.f32 %v8395, %v8567
    %v8600 = vsub.f32 %v8397, %v8568
    %v8601 = vsub.f32 %v8401, %v8567
    %v8602 = vsub.f32 %v8403, %v8568
    %v8603 = vsub.f32 %v8405, %v8567
    %v8604 = vsub.f32 %v8407, %v8568
    %v8605 = vsub.f32 %v8411, %v8567
    %v8606 = vsub.f32 %v8413, %v8568
    %v8607 = vsub.f32 %v8415, %v8567
    %v8608 = vsub.f32 %v8417, %v8568
    %v8609 = vsub.f32 %v8421, %v8567
    %v8610 = vsub.f32 %v8423, %v8568
    %v8611 = vsub.f32 %v8425, %v8567
    %v8612 = vsub.f32 %v8427, %v8568
    %v8613 = vadd.f32 %v8577, 1e-05
    %v8614 = vadd.f32 %v8578, 1e-05
    %v8615 = vadd.f32 %v8579, 1e-05
    %v8616 = vadd.f32 %v8580, 1e-05
    %v8617 = vrsqrt.pop %v8613
    %v8618 = vrsqrt.pop %v8614
    %v8619 = vrsqrt.pop %v8615
    %v8620 = vrsqrt.pop %v8616
    %v8621 = vmul.f32 %v8581, %v8617
    %v8622 = vmul.f32 %v8582, %v8618
    %v8623 = vmul.f32 %v8583, %v8617
    %v8624 = vmul.f32 %v8584, %v8618
    %v8625 = vmul.f32 %v8585, %v8617
    %v8626 = vmul.f32 %v8586, %v8618
    %v8627 = vmul.f32 %v8587, %v8617
    %v8628 = vmul.f32 %v8588, %v8618
    %v8629 = vmul.f32 %v8589, %v8617
    %v8630 = vmul.f32 %v8590, %v8618
    %v8631 = vmul.f32 %v8591, %v8617
    %v8632 = vmul.f32 %v8592, %v8618
    %v8633 = vmul.f32 %v8593, %v8617
    %v8634 = vmul.f32 %v8594, %v8618
    %v8635 = vmul.f32 %v8595, %v8617
    %v8636 = vmul.f32 %v8596, %v8618
    %v8637 = vmul.f32 %v8597, %v8619
    %v8638 = vmul.f32 %v8598, %v8620
    %v8639 = vmul.f32 %v8599, %v8619
    %v8640 = vmul.f32 %v8600, %v8620
    %v8641 = vmul.f32 %v8601, %v8619
    %v8642 = vmul.f32 %v8602, %v8620
    %v8643 = vmul.f32 %v8603, %v8619
    %v8644 = vmul.f32 %v8604, %v8620
    %v8645 = vmul.f32 %v8605, %v8619
    %v8646 = vmul.f32 %v8606, %v8620
    %v8647 = vmul.f32 %v8607, %v8619
    %v8648 = vmul.f32 %v8608, %v8620
    %v8649 = vmul.f32 %v8609, %v8619
    %v8650 = vmul.f32 %v8610, %v8620
    %v8651 = vmul.f32 %v8611, %v8619
    %v8652 = vmul.f32 %v8612, %v8620
    %v8653 = vadd.f32 %v97, %v8621
    %v8654 = vadd.f32 %v98, %v8622
    %v8655 = vadd.f32 %v99, %v8623
    %v8656 = vadd.f32 %v100, %v8624
    %v8657 = vadd.f32 %v101, %v8625
    %v8658 = vadd.f32 %v102, %v8626
    %v8659 = vadd.f32 %v103, %v8627
    %v8660 = vadd.f32 %v104, %v8628
    %v8661 = vadd.f32 %v105, %v8629
    %v8662 = vadd.f32 %v106, %v8630
    %v8663 = vadd.f32 %v107, %v8631
    %v8664 = vadd.f32 %v108, %v8632
    %v8665 = vadd.f32 %v109, %v8633
    %v8666 = vadd.f32 %v110, %v8634
    %v8667 = vadd.f32 %v111, %v8635
    %v8668 = vadd.f32 %v112, %v8636
    %v8669 = vadd.f32 %v113, %v8637
    %v8670 = vadd.f32 %v114, %v8638
    %v8671 = vadd.f32 %v115, %v8639
    %v8672 = vadd.f32 %v116, %v8640
    %v8673 = vadd.f32 %v117, %v8641
    %v8674 = vadd.f32 %v118, %v8642
    %v8675 = vadd.f32 %v119, %v8643
    %v8676 = vadd.f32 %v120, %v8644
    %v8677 = vadd.f32 %v121, %v8645
    %v8678 = vadd.f32 %v122, %v8646
    %v8679 = vadd.f32 %v123, %v8647
    %v8680 = vadd.f32 %v124, %v8648
    %v8681 = vadd.f32 %v125, %v8649
    %v8682 = vadd.f32 %v126, %v8650
    %v8683 = vadd.f32 %v127, %v8651
    %v8684 = vadd.f32 %v128, %v8652
    %8685 = vst [vmem:[#allocation9] sm:$0xff] %v8653
    %8686 = vst [vmem:[#allocation9 + $0x8] sm:$0xff] %v8654
    %8687 = vst [vmem:[#allocation9 + $0x10] sm:$0xff] %v8655
    %8688 = vst [vmem:[#allocation9 + $0x18] sm:$0xff] %v8656
    %8689 = vst [vmem:[#allocation9 + $0x20] sm:$0xff] %v8657
    %8690 = vst [vmem:[#allocation9 + $0x28] sm:$0xff] %v8658
    %8691 = vst [vmem:[#allocation9 + $0x30] sm:$0xff] %v8659
    %8692 = vst [vmem:[#allocation9 + $0x38] sm:$0xff] %v8660
    %8693 = vst [vmem:[#allocation9 + $0x40] sm:$0xff] %v8661
    %8694 = vst [vmem:[#allocation9 + $0x48] sm:$0xff] %v8662
    %8695 = vst [vmem:[#allocation9 + $0x50] sm:$0xff] %v8663
    %8696 = vst [vmem:[#allocation9 + $0x58] sm:$0xff] %v8664
    %8697 = vst [vmem:[#allocation9 + $0x60] sm:$0xff] %v8665
    %8698 = vst [vmem:[#allocation9 + $0x68] sm:$0xff] %v8666
    %8699 = vst [vmem:[#allocation9 + $0x70] sm:$0xff] %v8667
    %8700 = vst [vmem:[#allocation9 + $0x78] sm:$0xff] %v8668
    %8701 = vst [vmem:[#allocation9 + $0x80] sm:$0xff] %v8669
    %8702 = vst [vmem:[#allocation9 + $0x88] sm:$0xff] %v8670
    %8703 = vst [vmem:[#allocation9 + $0x90] sm:$0xff] %v8671
    %8704 = vst [vmem:[#allocation9 + $0x98] sm:$0xff] %v8672
    %8705 = vst [vmem:[#allocation9 + $0xa0] sm:$0xff] %v8673
    %8706 = vst [vmem:[#allocation9 + $0xa8] sm:$0xff] %v8674
    %8707 = vst [vmem:[#allocation9 + $0xb0] sm:$0xff] %v8675
    %8708 = vst [vmem:[#allocation9 + $0xb8] sm:$0xff] %v8676
    %8709 = vst [vmem:[#allocation9 + $0xc0] sm:$0xff] %v8677
    %8710 = vst [vmem:[#allocation9 + $0xc8] sm:$0xff] %v8678
    %8711 = vst [vmem:[#allocation9 + $0xd0] sm:$0xff] %v8679
    %8712 = vst [vmem:[#allocation9 + $0xd8] sm:$0xff] %v8680
    %8713 = vst [vmem:[#allocation9 + $0xe0] sm:$0xff] %v8681
    %8714 = vst [vmem:[#allocation9 + $0xe8] sm:$0xff] %v8682
    %8715 = vst [vmem:[#allocation9 + $0xf0] sm:$0xff] %v8683
    %8716 = vst [vmem:[#allocation9 + $0xf8] sm:$0xff] %v8684
    // Predicated region
    $region26: #{tpu_custom_call.1} parent=1 // pred_check
      _
    $region27: #{tpu_custom_call.1} parent=1 // pred_check_branch
      %8718 = sbr.rel (0) target = $region29
    $region28: #{tpu_custom_call.1} parent=1 // pred_region
      %s8720 = ssub.s32 4096, 4096
      %8721 = vsyncadd [#allocation5], %s8720
      %s8722 = sshll.u32 [#allocation9], 4
      %s8723 = int_to_ptr.vmem [resolvable:$true] %s8722
      %8728 = dma.vmem_to_hbm [thread:$0]  %s8723, 4096, %s3, [#allocation5], 256, 256, 16
    $region29: #{tpu_custom_call.1} parent=1 // pred_fallthru
      _
    // Predicated region
    $region30: #{tpu_custom_call.1} parent=1 // pred_check
      _
    $region31: #{tpu_custom_call.1} parent=1 // pred_check_branch
      %8730 = sbr.rel (0) target = $region33
    $region32: #{tpu_custom_call.1} parent=1 // pred_region
      %8731 = dma.done [#allocation5], 4096
    $region33: #{tpu_custom_call.1} parent=1 // pred_fallthru
      _
    %8732 = vsyncpa [#allocation4], 1
    %8733 = vsyncpa [#allocation7], 1
    %8734 = vsyncpa [#allocation5], 1

</llo_original>
